<compile_context>
chip_gen: v7x
topology: tpu7x:2x2x1
jax: 0.10.0
libtpu: 0.0.40
codegen_flags: <defaults>
</compile_context>

<pallas_src>
import functools

import jax
import jax.numpy as jnp
from jax.experimental import pallas as pl
from jax.experimental.pallas import tpu as pltpu


# ----------------------------- small helpers -----------------------------

def _round_up(x, m):
    return (x + m - 1) // m * m


def _layernorm(x, gamma, beta, d_real, eps=1e-5):
    # x is zero-padded beyond d_real along lanes; compute stats over real dims.
    s = jnp.sum(x, axis=-1, keepdims=True)
    s2 = jnp.sum(x * x, axis=-1, keepdims=True)
    mean = s / d_real
    var = jnp.maximum(s2 / d_real - mean * mean, 0.0)
    inv = jax.lax.rsqrt(var + eps)
    return (x - mean) * inv * gamma + beta


def _erf(x):
    # Abramowitz & Stegun 7.1.26 polynomial approximation of erf.
    a1, a2, a3, a4, a5 = (0.254829592, -0.284496736, 1.421413741,
                          -1.453152027, 1.061405429)
    p = 0.3275911
    ax = jnp.abs(x)
    t = 1.0 / (1.0 + p * ax)
    poly = ((((a5 * t + a4) * t + a3) * t + a2) * t + a1) * t
    y = 1.0 - poly * jnp.exp(-ax * ax)
    return jnp.where(x >= 0, y, -y)


def _gelu_exact(x):
    return 0.5 * x * (1.0 + _erf(x * 0.7071067811865476))


# --------------------------- fused transformer kernel ---------------------------

def fused_transformer_kernel(
        x_ref, wq_ref, wk_ref, wv_ref, wo_ref, w1_ref, w2_ref, vecs_ref, b1_ref,
        o_ref, xs_ref,
        *, heads, dim_head, batch, n_pad, n_real, d_real):
    l = pl.program_id(0)

    # Load the residual stream once (index-invariant x block, fetched once).
    @pl.when(l == 0)
    def _():
        xs_ref[...] = x_ref[...]

    x = xs_ref[...]                                       # (B*Np, Dp) f32
    dp = x.shape[1]

    vecs = vecs_ref[0]                                    # (R, Dp) f32
    g1, be1, bo, ls1 = vecs[0:1], vecs[1:2], vecs[2:3], vecs[3:4]
    g2, be2, b2, ls2 = vecs[4:5], vecs[5:6], vecs[6:7], vecs[7:8]

    # ------------------------- attention sublayer -------------------------
    xn = _layernorm(x, g1, be1, d_real)                   # PreNorm (f32 stats)
    xnb = xn.astype(jnp.bfloat16)

    wq = wq_ref[0]                                        # scale folded into Wq
    wk = wk_ref[0]
    wv = wv_ref[0]
    wo = wo_ref[0]

    # Full-width projections, M = B*Np rows (good MXU fill).
    q = jnp.dot(xnb, wq, preferred_element_type=jnp.float32).astype(jnp.bfloat16)
    k = jnp.dot(xnb, wk, preferred_element_type=jnp.float32).astype(jnp.bfloat16)
    v = jnp.dot(xnb, wv, preferred_element_type=jnp.float32).astype(jnp.bfloat16)

    need_mask = n_pad > n_real
    if need_mask:
        # Additive key bias, hoisted out of the per-head loops.
        key_bias = jnp.where(
            jax.lax.broadcasted_iota(jnp.int32, (1, n_pad), 1) < n_real,
            0.0, -1e30).astype(jnp.float32)

    ys = []
    for b in range(batch):                                # attention is per-batch
        r0 = b * n_pad
        qb = q[r0:r0 + n_pad, :]
        kb = k[r0:r0 + n_pad, :]
        vb = v[r0:r0 + n_pad, :]

        # Per-head logits (scale already folded into Wq).
        dots = []
        for h in range(heads):
            c0 = h * dim_head
            dots.append(jax.lax.dot_general(
                qb[:, c0:c0 + dim_head], kb[:, c0:c0 + dim_head],
                (((1,), (1,)), ((), ())),
                preferred_element_type=jnp.float32))      # (Np, Np) f32

        # Talking-heads pre-mix -> softmax.
        attn = []
        for g in range(heads):
            dg = dots[0] * vecs[8:9, g:g + 1]
            for h in range(1, heads):
                dg = dg + dots[h] * vecs[8 + h:9 + h, g:g + 1]
            if need_mask:
                dg = dg + key_bias
            m = jnp.max(dg, axis=-1, keepdims=True)
            e = jnp.exp(dg - m)
            attn.append(
                e * pl.reciprocal(jnp.sum(e, axis=-1, keepdims=True), approx=True))

        # Talking-heads post-mix -> V -> Wo (accumulated per head; no concat).
        y_b = jnp.zeros((n_pad, dp), jnp.float32)
        for g in range(heads):
            ag = attn[0] * vecs[8 + heads:9 + heads, g:g + 1]
            for h in range(1, heads):
                ag = ag + attn[h] * vecs[8 + heads + h:9 + heads + h, g:g + 1]
            c0 = g * dim_head
            ov = jnp.dot(ag.astype(jnp.bfloat16), vb[:, c0:c0 + dim_head],
                         preferred_element_type=jnp.float32)          # (Np, dh)
            y_b = y_b + jnp.dot(ov.astype(jnp.bfloat16), wo[c0:c0 + dim_head, :],
                                preferred_element_type=jnp.float32)   # (Np, Dp)
        ys.append(y_b)

    y = jnp.concatenate(ys, axis=0) if batch > 1 else ys[0]
    x = x + (y + bo) * ls1                                # to_out bias + LayerScale + residual

    # ------------------------- feed-forward sublayer -------------------------
    xn2 = _layernorm(x, g2, be2, d_real)
    h1 = jnp.dot(xn2.astype(jnp.bfloat16), w1_ref[0],
                 preferred_element_type=jnp.float32) + b1_ref[0]
    a = _gelu_exact(h1)
    y2 = jnp.dot(a.astype(jnp.bfloat16), w2_ref[0],
                 preferred_element_type=jnp.float32) + b2
    x = x + y2 * ls2                                      # LayerScale + residual

    xs_ref[...] = x

    @pl.when(l == pl.num_programs(0) - 1)
    def _():
        o_ref[...] = x


# ------------------------------ params + packing ------------------------------

def init_transformer_params(key, *, dim, depth, heads, dim_head, mlp_dim):
    inner = heads * dim_head
    layers = []
    for ind in range(depth):
        d = ind + 1
        init_eps = 0.1 if d <= 18 else (1e-5 if d <= 24 else 1e-6)
        key, *ks = jax.random.split(key, 9)
        attn = dict(
            gamma=jnp.ones((1, dim), jnp.float32),
            beta=jnp.zeros((1, dim), jnp.float32),
            wq=0.02 * jax.random.normal(ks[0], (dim, inner), jnp.float32),
            wk=0.02 * jax.random.normal(ks[1], (dim, inner), jnp.float32),
            wv=0.02 * jax.random.normal(ks[2], (dim, inner), jnp.float32),
            wo=0.02 * jax.random.normal(ks[3], (inner, dim), jnp.float32),
            bo=jnp.zeros((1, dim), jnp.float32),
            mix_pre=jax.random.normal(ks[4], (heads, heads), jnp.float32),
            mix_post=jax.random.normal(ks[5], (heads, heads), jnp.float32),
            ls=jnp.full((1, dim), init_eps, jnp.float32),
        )
        ff = dict(
            gamma=jnp.ones((1, dim), jnp.float32),
            beta=jnp.zeros((1, dim), jnp.float32),
            w1=0.02 * jax.random.normal(ks[6], (dim, mlp_dim), jnp.float32),
            b1=jnp.zeros((1, mlp_dim), jnp.float32),
            w2=0.02 * jax.random.normal(ks[7], (mlp_dim, dim), jnp.float32),
            b2=jnp.zeros((1, dim), jnp.float32),
            ls=jnp.full((1, dim), init_eps, jnp.float32),
        )
        layers.append({"attn": attn, "ff": ff})
    return {"layers": layers}


def pack_transformer_params(params, *, dim, heads, dim_head, mlp_dim):
    """Pad to lane-dense shapes, fold only the softmax scale into Wq, cast the
    big matmul weights to bf16, pack all small per-layer vectors + the two
    (heads x heads) talking-heads matrices into one tensor, stack over layers."""
    inner = heads * dim_head
    dp = max(_round_up(dim, 128), 128)
    ip = max(_round_up(inner, 128), 128)
    hp = max(_round_up(mlp_dim, 128), 128)
    rr = _round_up(8 + 2 * heads, 8)
    scale = dim_head ** (-0.5)

    def pad2(a, r, c):
        return jnp.pad(a, ((0, r - a.shape[0]), (0, c - a.shape[1])))

    keys = ("wq", "wk", "wv", "wo", "w1", "w2", "vec", "b1")
    packed = {k: [] for k in keys}
    for layer in params["layers"]:
        a, f = layer["attn"], layer["ff"]
        packed["wq"].append(pad2(a["wq"] * scale, dp, ip).astype(jnp.bfloat16))
        packed["wk"].append(pad2(a["wk"], dp, ip).astype(jnp.bfloat16))
        packed["wv"].append(pad2(a["wv"], dp, ip).astype(jnp.bfloat16))
        packed["wo"].append(pad2(a["wo"], ip, dp).astype(jnp.bfloat16))
        packed["w1"].append(pad2(f["w1"], dp, hp).astype(jnp.bfloat16))
        packed["w2"].append(pad2(f["w2"], hp, dp).astype(jnp.bfloat16))

        vec = jnp.zeros((rr, dp), jnp.float32)
        vec = vec.at[0, :dim].set(a["gamma"][0])
        vec = vec.at[1, :dim].set(a["beta"][0])
        vec = vec.at[2, :dim].set(a["bo"][0])
        vec = vec.at[3, :dim].set(a["ls"][0])
        vec = vec.at[4, :dim].set(f["gamma"][0])
        vec = vec.at[5, :dim].set(f["beta"][0])
        vec = vec.at[6, :dim].set(f["b2"][0])
        vec = vec.at[7, :dim].set(f["ls"][0])
        vec = vec.at[8:8 + heads, :heads].set(a["mix_pre"])
        vec = vec.at[8 + heads:8 + 2 * heads, :heads].set(a["mix_post"])
        packed["vec"].append(vec)

        packed["b1"].append(pad2(f["b1"], 1, hp))
    return {k: jnp.stack(v) for k, v in packed.items()}


# ---------------------------------- forward ----------------------------------

def transformer_forward(x, params, *, heads, dim_head, mlp_dim):
    B, N, D = x.shape
    depth = len(params["layers"])
    p = pack_transformer_params(params, dim=D, heads=heads,
                                dim_head=dim_head, mlp_dim=mlp_dim)
    dp = p["wq"].shape[1]
    ip = p["wq"].shape[2]
    hp = p["w1"].shape[2]
    rr = p["vec"].shape[1]

    np_ = max(_round_up(N, 128), 128)     # lane-dense attention logits
    bn = B * np_

    xp = jnp.pad(x.astype(jnp.float32),
                 ((0, 0), (0, np_ - N), (0, dp - D))).reshape(bn, dp)

    kern = functools.partial(fused_transformer_kernel, heads=heads,
                             dim_head=dim_head, batch=B, n_pad=np_,
                             n_real=N, d_real=D)

    def wspec(r, c):
        return pl.BlockSpec((1, r, c), lambda l: (l, 0, 0))

    xspec = pl.BlockSpec((bn, dp), lambda l: (0, 0))

    # VMEM budget: double-buffered per-layer weights + x/out blocks + scratch.
    w_bytes = 2 * (3 * dp * ip + ip * dp + dp * hp + hp * dp)   # bf16, one layer
    vec_bytes = 4 * (rr * dp + hp)
    io_bytes = 4 * bn * dp * 4
    scratch_bytes = 4 * bn * dp
    needed = 2 * (w_bytes + vec_bytes) + io_bytes + scratch_bytes
    vmem_limit = int(min(max(2 * needed, 32 * 1024 * 1024), 100 * 1024 * 1024))

    out = pl.pallas_call(
        kern,
        out_shape=jax.ShapeDtypeStruct((bn, dp), jnp.float32),
        grid=(depth,),
        in_specs=[
            xspec,                 # residual stream (fetched once)
            wspec(dp, ip),         # Wq (softmax scale folded)
            wspec(dp, ip),         # Wk
            wspec(dp, ip),         # Wv
            wspec(ip, dp),         # Wo
            wspec(dp, hp),         # W1
            wspec(hp, dp),         # W2
            wspec(rr, dp),         # packed LN/bias/LayerScale/mix vectors
            wspec(1, hp),          # b1
        ],
        out_specs=xspec,
        scratch_shapes=[pltpu.VMEM((bn, dp), jnp.float32)],
        compiler_params=pltpu.CompilerParams(
            dimension_semantics=("arbitrary",),
            vmem_limit_bytes=vmem_limit),
    )(xp, p["wq"], p["wk"], p["wv"], p["wo"], p["w1"], p["w2"],
      p["vec"], p["b1"])

    return out.reshape(B, np_, dp)[:, :N, :D]


if __name__ == "__main__":
    B, N, DIM = 2, 8, 32
    HEADS, DIM_HEAD, MLP_DIM, DEPTH = 4, 8, 64, 2

    key = jax.random.PRNGKey(0)
    kx, kp = jax.random.split(key)
    x = jax.random.normal(kx, (B, N, DIM), jnp.float32)
    params = init_transformer_params(kp, dim=DIM, depth=DEPTH, heads=HEADS,
                                     dim_head=DIM_HEAD, mlp_dim=MLP_DIM)

    fwd = jax.jit(functools.partial(transformer_forward, heads=HEADS,
                                    dim_head=DIM_HEAD, mlp_dim=MLP_DIM))
    out = fwd(x, params)
    jax.block_until_ready(out)
    assert out.shape == (B, N, DIM) and out.dtype == jnp.float32
    assert bool(jnp.all(jnp.isfinite(out)))
    print("KERNEL_OK")
</pallas_src>

<mosaic_0001>
module attributes {stable_mosaic.version = 11 : i64} {
  func.func @fused_transformer_kernel(%arg0: i32, %arg1: memref<256x128xf32, #tpu.memory_space<vmem>>, %arg2: memref<1x128x128xbf16, #tpu.memory_space<vmem>>, %arg3: memref<1x128x128xbf16, #tpu.memory_space<vmem>>, %arg4: memref<1x128x128xbf16, #tpu.memory_space<vmem>>, %arg5: memref<1x128x128xbf16, #tpu.memory_space<vmem>>, %arg6: memref<1x128x128xbf16, #tpu.memory_space<vmem>>, %arg7: memref<1x128x128xbf16, #tpu.memory_space<vmem>>, %arg8: memref<1x16x128xf32, #tpu.memory_space<vmem>>, %arg9: memref<1x1x128xf32, #tpu.memory_space<vmem>>, %arg10: memref<256x128xf32, #tpu.memory_space<vmem>>, %arg11: memref<256x128xf32, #tpu.memory_space<vmem>>) attributes {dimension_semantics = [#tpu.dimension_semantics<arbitrary>], iteration_bounds = array<i64: 2>, scalar_prefetch = 0 : i64, scratch_operands = 1 : i64, tpu.core_type = #tpu.core_type<tc>, window_params = [{pipeline_mode = #tpu.pipeline_mode<synchronous>, transform_indices = @transform_0, window_bounds = array<i64: 256, 128>}, {transform_indices = @transform_1, window_bounds = array<i64: 1, 128, 128>}, {transform_indices = @transform_2, window_bounds = array<i64: 1, 128, 128>}, {transform_indices = @transform_3, window_bounds = array<i64: 1, 128, 128>}, {transform_indices = @transform_4, window_bounds = array<i64: 1, 128, 128>}, {transform_indices = @transform_5, window_bounds = array<i64: 1, 128, 128>}, {transform_indices = @transform_6, window_bounds = array<i64: 1, 128, 128>}, {transform_indices = @transform_7, window_bounds = array<i64: 1, 16, 128>}, {transform_indices = @transform_8, window_bounds = array<i64: 1, 1, 128>}, {pipeline_mode = #tpu.pipeline_mode<synchronous>, transform_indices = @transform_9, window_bounds = array<i64: 256, 128>}]} {
    %c0_i32 = arith.constant 0 : i32
    %0 = arith.cmpi eq, %arg0, %c0_i32 : i32
    %1 = arith.extui %0 : i1 to i32
    %c0_i32_0 = arith.constant 0 : i32
    %2 = arith.cmpi ne, %1, %c0_i32_0 : i32
    scf.if %2 {
      %c0_104 = arith.constant 0 : index
      %c0_105 = arith.constant 0 : index
      %574 = vector.load %arg1[%c0_104, %c0_105] : memref<256x128xf32, #tpu.memory_space<vmem>>, vector<256x128xf32>
      %c0_106 = arith.constant 0 : index
      %c0_107 = arith.constant 0 : index
      %575 = vector.load %arg11[%c0_106, %c0_107] : memref<256x128xf32, #tpu.memory_space<vmem>>, vector<256x128xf32>
      tpu.vector_store %arg11[%c0_106, %c0_107], %574 {strides = array<i32>} : memref<256x128xf32, #tpu.memory_space<vmem>>, vector<256x128xf32>,
    } else {
    }
    %c0 = arith.constant 0 : index
    %c0_1 = arith.constant 0 : index
    %3 = vector.load %arg11[%c0, %c0_1] : memref<256x128xf32, #tpu.memory_space<vmem>>, vector<256x128xf32>
    %c0_2 = arith.constant 0 : index
    %c0_3 = arith.constant 0 : index
    %c0_4 = arith.constant 0 : index
    %4 = vector.load %arg8[%c0_2, %c0_3, %c0_4] : memref<1x16x128xf32, #tpu.memory_space<vmem>>, vector<1x16x128xf32>
    %5 = vector.shape_cast %4 : vector<1x16x128xf32> to vector<16x128xf32>
    %6 = vector.extract_strided_slice %5 {offsets = [0, 0], sizes = [1, 128], strides = [1, 1]} : vector<16x128xf32> to vector<1x128xf32>
    %7 = vector.extract_strided_slice %5 {offsets = [1, 0], sizes = [1, 128], strides = [1, 1]} : vector<16x128xf32> to vector<1x128xf32>
    %8 = vector.extract_strided_slice %5 {offsets = [2, 0], sizes = [1, 128], strides = [1, 1]} : vector<16x128xf32> to vector<1x128xf32>
    %9 = vector.extract_strided_slice %5 {offsets = [3, 0], sizes = [1, 128], strides = [1, 1]} : vector<16x128xf32> to vector<1x128xf32>
    %10 = vector.extract_strided_slice %5 {offsets = [4, 0], sizes = [1, 128], strides = [1, 1]} : vector<16x128xf32> to vector<1x128xf32>
    %11 = vector.extract_strided_slice %5 {offsets = [5, 0], sizes = [1, 128], strides = [1, 1]} : vector<16x128xf32> to vector<1x128xf32>
    %12 = vector.extract_strided_slice %5 {offsets = [6, 0], sizes = [1, 128], strides = [1, 1]} : vector<16x128xf32> to vector<1x128xf32>
    %13 = vector.extract_strided_slice %5 {offsets = [7, 0], sizes = [1, 128], strides = [1, 1]} : vector<16x128xf32> to vector<1x128xf32>
    %cst = arith.constant dense<0.000000e+00> : vector<256xf32>
    %14 = vector.multi_reduction <add>, %3, %cst [1] : vector<256x128xf32> to vector<256xf32>
    %15 = vector.shape_cast %14 : vector<256xf32> to vector<256x1xf32>
    %16 = arith.mulf %3, %3 : vector<256x128xf32>
    %cst_5 = arith.constant dense<0.000000e+00> : vector<256xf32>
    %17 = vector.multi_reduction <add>, %16, %cst_5 [1] : vector<256x128xf32> to vector<256xf32>
    %18 = vector.shape_cast %17 : vector<256xf32> to vector<256x1xf32>
    %cst_6 = arith.constant 3.200000e+01 : f32
    %19 = vector.broadcast %cst_6 : f32 to vector<256x1xf32>
    %20 = arith.divf %15, %19 : vector<256x1xf32>
    %cst_7 = arith.constant 3.200000e+01 : f32
    %21 = vector.broadcast %cst_7 : f32 to vector<256x1xf32>
    %22 = arith.divf %18, %21 : vector<256x1xf32>
    %23 = arith.mulf %20, %20 : vector<256x1xf32>
    %24 = arith.subf %22, %23 : vector<256x1xf32>
    %cst_8 = arith.constant 0.000000e+00 : f32
    %25 = vector.broadcast %cst_8 : f32 to vector<256x1xf32>
    %26 = arith.maximumf %24, %25 : vector<256x1xf32>
    %cst_9 = arith.constant 9.99999974E-6 : f32
    %27 = vector.broadcast %cst_9 : f32 to vector<256x1xf32>
    %28 = arith.addf %26, %27 : vector<256x1xf32>
    %29 = math.rsqrt %28 : vector<256x1xf32>
    %30 = vector.broadcast %20 : vector<256x1xf32> to vector<256x128xf32>
    %31 = arith.subf %3, %30 : vector<256x128xf32>
    %32 = vector.broadcast %29 : vector<256x1xf32> to vector<256x128xf32>
    %33 = arith.mulf %31, %32 : vector<256x128xf32>
    %34 = vector.broadcast %6 : vector<1x128xf32> to vector<256x128xf32>
    %35 = arith.mulf %33, %34 : vector<256x128xf32>
    %36 = vector.broadcast %7 : vector<1x128xf32> to vector<256x128xf32>
    %37 = arith.addf %35, %36 : vector<256x128xf32>
    %38 = arith.truncf %37 : vector<256x128xf32> to vector<256x128xbf16>
    %c0_10 = arith.constant 0 : index
    %c0_11 = arith.constant 0 : index
    %c0_12 = arith.constant 0 : index
    %39 = vector.load %arg2[%c0_10, %c0_11, %c0_12] : memref<1x128x128xbf16, #tpu.memory_space<vmem>>, vector<1x128x128xbf16>
    %40 = vector.shape_cast %39 : vector<1x128x128xbf16> to vector<128x128xbf16>
    %c0_13 = arith.constant 0 : index
    %c0_14 = arith.constant 0 : index
    %c0_15 = arith.constant 0 : index
    %41 = vector.load %arg3[%c0_13, %c0_14, %c0_15] : memref<1x128x128xbf16, #tpu.memory_space<vmem>>, vector<1x128x128xbf16>
    %42 = vector.shape_cast %41 : vector<1x128x128xbf16> to vector<128x128xbf16>
    %c0_16 = arith.constant 0 : index
    %c0_17 = arith.constant 0 : index
    %c0_18 = arith.constant 0 : index
    %43 = vector.load %arg4[%c0_16, %c0_17, %c0_18] : memref<1x128x128xbf16, #tpu.memory_space<vmem>>, vector<1x128x128xbf16>
    %44 = vector.shape_cast %43 : vector<1x128x128xbf16> to vector<128x128xbf16>
    %c0_19 = arith.constant 0 : index
    %c0_20 = arith.constant 0 : index
    %c0_21 = arith.constant 0 : index
    %45 = vector.load %arg5[%c0_19, %c0_20, %c0_21] : memref<1x128x128xbf16, #tpu.memory_space<vmem>>, vector<1x128x128xbf16>
    %46 = vector.shape_cast %45 : vector<1x128x128xbf16> to vector<128x128xbf16>
    %cst_22 = arith.constant dense<0.000000e+00> : vector<256x128xf32>
    %47 = tpu.matmul %38, %40, %cst_22 {dimension_numbers = #tpu.dot_dimension_numbers<[1], [0], [0], [1], [0, 0, 1, 1], [], []>} : vector<256x128xbf16>, vector<128x128xbf16>, vector<256x128xf32> -> vector<256x128xf32>
    %48 = arith.truncf %47 : vector<256x128xf32> to vector<256x128xbf16>
    %cst_23 = arith.constant dense<0.000000e+00> : vector<256x128xf32>
    %49 = tpu.matmul %38, %42, %cst_23 {dimension_numbers = #tpu.dot_dimension_numbers<[1], [0], [0], [1], [0, 0, 1, 1], [], []>} : vector<256x128xbf16>, vector<128x128xbf16>, vector<256x128xf32> -> vector<256x128xf32>
    %50 = arith.truncf %49 : vector<256x128xf32> to vector<256x128xbf16>
    %cst_24 = arith.constant dense<0.000000e+00> : vector<256x128xf32>
    %51 = tpu.matmul %38, %44, %cst_24 {dimension_numbers = #tpu.dot_dimension_numbers<[1], [0], [0], [1], [0, 0, 1, 1], [], []>} : vector<256x128xbf16>, vector<128x128xbf16>, vector<256x128xf32> -> vector<256x128xf32>
    %52 = arith.truncf %51 : vector<256x128xf32> to vector<256x128xbf16>
    %53 = tpu.iota {dimensions = array<i32: 1>} : vector<1x128xi32>
    %c8_i32 = arith.constant 8 : i32
    %54 = vector.broadcast %c8_i32 : i32 to vector<1x128xi32>
    %55 = arith.cmpi slt, %53, %54 : vector<1x128xi32>
    %cst_25 = arith.constant 0.000000e+00 : f32
    %cst_26 = arith.constant -1.000000e+30 : f32
    %56 = vector.broadcast %cst_25 : f32 to vector<1x128xf32>
    %57 = vector.broadcast %cst_26 : f32 to vector<1x128xf32>
    %58 = arith.select %55, %56, %57 : vector<1x128xi1>, vector<1x128xf32>
    %59 = vector.extract_strided_slice %48 {offsets = [0, 0], sizes = [128, 128], strides = [1, 1]} : vector<256x128xbf16> to vector<128x128xbf16>
    %60 = vector.extract_strided_slice %50 {offsets = [0, 0], sizes = [128, 128], strides = [1, 1]} : vector<256x128xbf16> to vector<128x128xbf16>
    %61 = vector.extract_strided_slice %52 {offsets = [0, 0], sizes = [128, 128], strides = [1, 1]} : vector<256x128xbf16> to vector<128x128xbf16>
    %62 = vector.extract_strided_slice %59 {offsets = [0, 0], sizes = [128, 8], strides = [1, 1]} : vector<128x128xbf16> to vector<128x8xbf16>
    %63 = vector.extract_strided_slice %60 {offsets = [0, 0], sizes = [128, 8], strides = [1, 1]} : vector<128x128xbf16> to vector<128x8xbf16>
    %cst_27 = arith.constant dense<0.000000e+00> : vector<128x128xf32>
    %64 = tpu.matmul %62, %63, %cst_27 {dimension_numbers = #tpu.dot_dimension_numbers<[1], [1], [0], [0], [0, 0, 1, 0], [], []>} : vector<128x8xbf16>, vector<128x8xbf16>, vector<128x128xf32> -> vector<128x128xf32>
    %65 = vector.extract_strided_slice %59 {offsets = [0, 8], sizes = [128, 8], strides = [1, 1]} : vector<128x128xbf16> to vector<128x8xbf16>
    %66 = vector.extract_strided_slice %60 {offsets = [0, 8], sizes = [128, 8], strides = [1, 1]} : vector<128x128xbf16> to vector<128x8xbf16>
    %cst_28 = arith.constant dense<0.000000e+00> : vector<128x128xf32>
    %67 = tpu.matmul %65, %66, %cst_28 {dimension_numbers = #tpu.dot_dimension_numbers<[1], [1], [0], [0], [0, 0, 1, 0], [], []>} : vector<128x8xbf16>, vector<128x8xbf16>, vector<128x128xf32> -> vector<128x128xf32>
    %68 = vector.extract_strided_slice %59 {offsets = [0, 16], sizes = [128, 8], strides = [1, 1]} : vector<128x128xbf16> to vector<128x8xbf16>
    %69 = vector.extract_strided_slice %60 {offsets = [0, 16], sizes = [128, 8], strides = [1, 1]} : vector<128x128xbf16> to vector<128x8xbf16>
    %cst_29 = arith.constant dense<0.000000e+00> : vector<128x128xf32>
    %70 = tpu.matmul %68, %69, %cst_29 {dimension_numbers = #tpu.dot_dimension_numbers<[1], [1], [0], [0], [0, 0, 1, 0], [], []>} : vector<128x8xbf16>, vector<128x8xbf16>, vector<128x128xf32> -> vector<128x128xf32>
    %71 = vector.extract_strided_slice %59 {offsets = [0, 24], sizes = [128, 8], strides = [1, 1]} : vector<128x128xbf16> to vector<128x8xbf16>
    %72 = vector.extract_strided_slice %60 {offsets = [0, 24], sizes = [128, 8], strides = [1, 1]} : vector<128x128xbf16> to vector<128x8xbf16>
    %cst_30 = arith.constant dense<0.000000e+00> : vector<128x128xf32>
    %73 = tpu.matmul %71, %72, %cst_30 {dimension_numbers = #tpu.dot_dimension_numbers<[1], [1], [0], [0], [0, 0, 1, 0], [], []>} : vector<128x8xbf16>, vector<128x8xbf16>, vector<128x128xf32> -> vector<128x128xf32>
    %74 = vector.extract_strided_slice %5 {offsets = [8, 0], sizes = [1, 1], strides = [1, 1]} : vector<16x128xf32> to vector<1x1xf32>
    %75 = vector.broadcast %74 : vector<1x1xf32> to vector<128x128xf32>
    %76 = arith.mulf %64, %75 : vector<128x128xf32>
    %77 = vector.extract_strided_slice %5 {offsets = [9, 0], sizes = [1, 1], strides = [1, 1]} : vector<16x128xf32> to vector<1x1xf32>
    %78 = vector.broadcast %77 : vector<1x1xf32> to vector<128x128xf32>
    %79 = arith.mulf %67, %78 : vector<128x128xf32>
    %80 = arith.addf %76, %79 : vector<128x128xf32>
    %81 = vector.extract_strided_slice %5 {offsets = [10, 0], sizes = [1, 1], strides = [1, 1]} : vector<16x128xf32> to vector<1x1xf32>
    %82 = vector.broadcast %81 : vector<1x1xf32> to vector<128x128xf32>
    %83 = arith.mulf %70, %82 : vector<128x128xf32>
    %84 = arith.addf %80, %83 : vector<128x128xf32>
    %85 = vector.extract_strided_slice %5 {offsets = [11, 0], sizes = [1, 1], strides = [1, 1]} : vector<16x128xf32> to vector<1x1xf32>
    %86 = vector.broadcast %85 : vector<1x1xf32> to vector<128x128xf32>
    %87 = arith.mulf %73, %86 : vector<128x128xf32>
    %88 = arith.addf %84, %87 : vector<128x128xf32>
    %89 = vector.broadcast %58 : vector<1x128xf32> to vector<128x128xf32>
    %90 = arith.addf %88, %89 : vector<128x128xf32>
    %cst_31 = arith.constant dense<0xFF800000> : vector<128xf32>
    %91 = vector.multi_reduction <maximumf>, %90, %cst_31 [1] : vector<128x128xf32> to vector<128xf32>
    %92 = vector.shape_cast %91 : vector<128xf32> to vector<128x1xf32>
    %93 = vector.broadcast %92 : vector<128x1xf32> to vector<128x128xf32>
    %94 = arith.subf %90, %93 : vector<128x128xf32>
    %95 = math.exp %94 : vector<128x128xf32>
    %cst_32 = arith.constant dense<0.000000e+00> : vector<128xf32>
    %96 = vector.multi_reduction <add>, %95, %cst_32 [1] : vector<128x128xf32> to vector<128xf32>
    %97 = vector.shape_cast %96 : vector<128xf32> to vector<128x1xf32>
    %98 = tpu.reciprocal %97 {approx = true} : vector<128x1xf32> -> vector<128x1xf32>
    %99 = vector.broadcast %98 : vector<128x1xf32> to vector<128x128xf32>
    %100 = arith.mulf %95, %99 : vector<128x128xf32>
    %101 = vector.extract_strided_slice %5 {offsets = [8, 1], sizes = [1, 1], strides = [1, 1]} : vector<16x128xf32> to vector<1x1xf32>
    %102 = vector.broadcast %101 : vector<1x1xf32> to vector<128x128xf32>
    %103 = arith.mulf %64, %102 : vector<128x128xf32>
    %104 = vector.extract_strided_slice %5 {offsets = [9, 1], sizes = [1, 1], strides = [1, 1]} : vector<16x128xf32> to vector<1x1xf32>
    %105 = vector.broadcast %104 : vector<1x1xf32> to vector<128x128xf32>
    %106 = arith.mulf %67, %105 : vector<128x128xf32>
    %107 = arith.addf %103, %106 : vector<128x128xf32>
    %108 = vector.extract_strided_slice %5 {offsets = [10, 1], sizes = [1, 1], strides = [1, 1]} : vector<16x128xf32> to vector<1x1xf32>
    %109 = vector.broadcast %108 : vector<1x1xf32> to vector<128x128xf32>
    %110 = arith.mulf %70, %109 : vector<128x128xf32>
    %111 = arith.addf %107, %110 : vector<128x128xf32>
    %112 = vector.extract_strided_slice %5 {offsets = [11, 1], sizes = [1, 1], strides = [1, 1]} : vector<16x128xf32> to vector<1x1xf32>
    %113 = vector.broadcast %112 : vector<1x1xf32> to vector<128x128xf32>
    %114 = arith.mulf %73, %113 : vector<128x128xf32>
    %115 = arith.addf %111, %114 : vector<128x128xf32>
    %116 = vector.broadcast %58 : vector<1x128xf32> to vector<128x128xf32>
    %117 = arith.addf %115, %116 : vector<128x128xf32>
    %cst_33 = arith.constant dense<0xFF800000> : vector<128xf32>
    %118 = vector.multi_reduction <maximumf>, %117, %cst_33 [1] : vector<128x128xf32> to vector<128xf32>
    %119 = vector.shape_cast %118 : vector<128xf32> to vector<128x1xf32>
    %120 = vector.broadcast %119 : vector<128x1xf32> to vector<128x128xf32>
    %121 = arith.subf %117, %120 : vector<128x128xf32>
    %122 = math.exp %121 : vector<128x128xf32>
    %cst_34 = arith.constant dense<0.000000e+00> : vector<128xf32>
    %123 = vector.multi_reduction <add>, %122, %cst_34 [1] : vector<128x128xf32> to vector<128xf32>
    %124 = vector.shape_cast %123 : vector<128xf32> to vector<128x1xf32>
    %125 = tpu.reciprocal %124 {approx = true} : vector<128x1xf32> -> vector<128x1xf32>
    %126 = vector.broadcast %125 : vector<128x1xf32> to vector<128x128xf32>
    %127 = arith.mulf %122, %126 : vector<128x128xf32>
    %128 = vector.extract_strided_slice %5 {offsets = [8, 2], sizes = [1, 1], strides = [1, 1]} : vector<16x128xf32> to vector<1x1xf32>
    %129 = vector.broadcast %128 : vector<1x1xf32> to vector<128x128xf32>
    %130 = arith.mulf %64, %129 : vector<128x128xf32>
    %131 = vector.extract_strided_slice %5 {offsets = [9, 2], sizes = [1, 1], strides = [1, 1]} : vector<16x128xf32> to vector<1x1xf32>
    %132 = vector.broadcast %131 : vector<1x1xf32> to vector<128x128xf32>
    %133 = arith.mulf %67, %132 : vector<128x128xf32>
    %134 = arith.addf %130, %133 : vector<128x128xf32>
    %135 = vector.extract_strided_slice %5 {offsets = [10, 2], sizes = [1, 1], strides = [1, 1]} : vector<16x128xf32> to vector<1x1xf32>
    %136 = vector.broadcast %135 : vector<1x1xf32> to vector<128x128xf32>
    %137 = arith.mulf %70, %136 : vector<128x128xf32>
    %138 = arith.addf %134, %137 : vector<128x128xf32>
    %139 = vector.extract_strided_slice %5 {offsets = [11, 2], sizes = [1, 1], strides = [1, 1]} : vector<16x128xf32> to vector<1x1xf32>
    %140 = vector.broadcast %139 : vector<1x1xf32> to vector<128x128xf32>
    %141 = arith.mulf %73, %140 : vector<128x128xf32>
    %142 = arith.addf %138, %141 : vector<128x128xf32>
    %143 = vector.broadcast %58 : vector<1x128xf32> to vector<128x128xf32>
    %144 = arith.addf %142, %143 : vector<128x128xf32>
    %cst_35 = arith.constant dense<0xFF800000> : vector<128xf32>
    %145 = vector.multi_reduction <maximumf>, %144, %cst_35 [1] : vector<128x128xf32> to vector<128xf32>
    %146 = vector.shape_cast %145 : vector<128xf32> to vector<128x1xf32>
    %147 = vector.broadcast %146 : vector<128x1xf32> to vector<128x128xf32>
    %148 = arith.subf %144, %147 : vector<128x128xf32>
    %149 = math.exp %148 : vector<128x128xf32>
    %cst_36 = arith.constant dense<0.000000e+00> : vector<128xf32>
    %150 = vector.multi_reduction <add>, %149, %cst_36 [1] : vector<128x128xf32> to vector<128xf32>
    %151 = vector.shape_cast %150 : vector<128xf32> to vector<128x1xf32>
    %152 = tpu.reciprocal %151 {approx = true} : vector<128x1xf32> -> vector<128x1xf32>
    %153 = vector.broadcast %152 : vector<128x1xf32> to vector<128x128xf32>
    %154 = arith.mulf %149, %153 : vector<128x128xf32>
    %155 = vector.extract_strided_slice %5 {offsets = [8, 3], sizes = [1, 1], strides = [1, 1]} : vector<16x128xf32> to vector<1x1xf32>
    %156 = vector.broadcast %155 : vector<1x1xf32> to vector<128x128xf32>
    %157 = arith.mulf %64, %156 : vector<128x128xf32>
    %158 = vector.extract_strided_slice %5 {offsets = [9, 3], sizes = [1, 1], strides = [1, 1]} : vector<16x128xf32> to vector<1x1xf32>
    %159 = vector.broadcast %158 : vector<1x1xf32> to vector<128x128xf32>
    %160 = arith.mulf %67, %159 : vector<128x128xf32>
    %161 = arith.addf %157, %160 : vector<128x128xf32>
    %162 = vector.extract_strided_slice %5 {offsets = [10, 3], sizes = [1, 1], strides = [1, 1]} : vector<16x128xf32> to vector<1x1xf32>
    %163 = vector.broadcast %162 : vector<1x1xf32> to vector<128x128xf32>
    %164 = arith.mulf %70, %163 : vector<128x128xf32>
    %165 = arith.addf %161, %164 : vector<128x128xf32>
    %166 = vector.extract_strided_slice %5 {offsets = [11, 3], sizes = [1, 1], strides = [1, 1]} : vector<16x128xf32> to vector<1x1xf32>
    %167 = vector.broadcast %166 : vector<1x1xf32> to vector<128x128xf32>
    %168 = arith.mulf %73, %167 : vector<128x128xf32>
    %169 = arith.addf %165, %168 : vector<128x128xf32>
    %170 = vector.broadcast %58 : vector<1x128xf32> to vector<128x128xf32>
    %171 = arith.addf %169, %170 : vector<128x128xf32>
    %cst_37 = arith.constant dense<0xFF800000> : vector<128xf32>
    %172 = vector.multi_reduction <maximumf>, %171, %cst_37 [1] : vector<128x128xf32> to vector<128xf32>
    %173 = vector.shape_cast %172 : vector<128xf32> to vector<128x1xf32>
    %174 = vector.broadcast %173 : vector<128x1xf32> to vector<128x128xf32>
    %175 = arith.subf %171, %174 : vector<128x128xf32>
    %176 = math.exp %175 : vector<128x128xf32>
    %cst_38 = arith.constant dense<0.000000e+00> : vector<128xf32>
    %177 = vector.multi_reduction <add>, %176, %cst_38 [1] : vector<128x128xf32> to vector<128xf32>
    %178 = vector.shape_cast %177 : vector<128xf32> to vector<128x1xf32>
    %179 = tpu.reciprocal %178 {approx = true} : vector<128x1xf32> -> vector<128x1xf32>
    %180 = vector.broadcast %179 : vector<128x1xf32> to vector<128x128xf32>
    %181 = arith.mulf %176, %180 : vector<128x128xf32>
    %cst_39 = arith.constant 0.000000e+00 : f32
    %182 = vector.broadcast %cst_39 : f32 to vector<128x128xf32>
    %183 = vector.extract_strided_slice %5 {offsets = [12, 0], sizes = [1, 1], strides = [1, 1]} : vector<16x128xf32> to vector<1x1xf32>
    %184 = vector.broadcast %183 : vector<1x1xf32> to vector<128x128xf32>
    %185 = arith.mulf %100, %184 : vector<128x128xf32>
    %186 = vector.extract_strided_slice %5 {offsets = [13, 0], sizes = [1, 1], strides = [1, 1]} : vector<16x128xf32> to vector<1x1xf32>
    %187 = vector.broadcast %186 : vector<1x1xf32> to vector<128x128xf32>
    %188 = arith.mulf %127, %187 : vector<128x128xf32>
    %189 = arith.addf %185, %188 : vector<128x128xf32>
    %190 = vector.extract_strided_slice %5 {offsets = [14, 0], sizes = [1, 1], strides = [1, 1]} : vector<16x128xf32> to vector<1x1xf32>
    %191 = vector.broadcast %190 : vector<1x1xf32> to vector<128x128xf32>
    %192 = arith.mulf %154, %191 : vector<128x128xf32>
    %193 = arith.addf %189, %192 : vector<128x128xf32>
    %194 = vector.extract_strided_slice %5 {offsets = [15, 0], sizes = [1, 1], strides = [1, 1]} : vector<16x128xf32> to vector<1x1xf32>
    %195 = vector.broadcast %194 : vector<1x1xf32> to vector<128x128xf32>
    %196 = arith.mulf %181, %195 : vector<128x128xf32>
    %197 = arith.addf %193, %196 : vector<128x128xf32>
    %198 = arith.truncf %197 : vector<128x128xf32> to vector<128x128xbf16>
    %199 = vector.extract_strided_slice %61 {offsets = [0, 0], sizes = [128, 8], strides = [1, 1]} : vector<128x128xbf16> to vector<128x8xbf16>
    %cst_40 = arith.constant dense<0.000000e+00> : vector<128x8xf32>
    %200 = tpu.matmul %198, %199, %cst_40 {dimension_numbers = #tpu.dot_dimension_numbers<[1], [0], [0], [1], [0, 0, 1, 1], [], []>} : vector<128x128xbf16>, vector<128x8xbf16>, vector<128x8xf32> -> vector<128x8xf32>
    %201 = arith.truncf %200 : vector<128x8xf32> to vector<128x8xbf16>
    %202 = vector.extract_strided_slice %46 {offsets = [0, 0], sizes = [8, 128], strides = [1, 1]} : vector<128x128xbf16> to vector<8x128xbf16>
    %cst_41 = arith.constant dense<0.000000e+00> : vector<128x128xf32>
    %203 = tpu.matmul %201, %202, %cst_41 {dimension_numbers = #tpu.dot_dimension_numbers<[1], [0], [0], [1], [0, 0, 1, 1], [], []>} : vector<128x8xbf16>, vector<8x128xbf16>, vector<128x128xf32> -> vector<128x128xf32>
    %204 = arith.addf %182, %203 : vector<128x128xf32>
    %205 = vector.extract_strided_slice %5 {offsets = [12, 1], sizes = [1, 1], strides = [1, 1]} : vector<16x128xf32> to vector<1x1xf32>
    %206 = vector.broadcast %205 : vector<1x1xf32> to vector<128x128xf32>
    %207 = arith.mulf %100, %206 : vector<128x128xf32>
    %208 = vector.extract_strided_slice %5 {offsets = [13, 1], sizes = [1, 1], strides = [1, 1]} : vector<16x128xf32> to vector<1x1xf32>
    %209 = vector.broadcast %208 : vector<1x1xf32> to vector<128x128xf32>
    %210 = arith.mulf %127, %209 : vector<128x128xf32>
    %211 = arith.addf %207, %210 : vector<128x128xf32>
    %212 = vector.extract_strided_slice %5 {offsets = [14, 1], sizes = [1, 1], strides = [1, 1]} : vector<16x128xf32> to vector<1x1xf32>
    %213 = vector.broadcast %212 : vector<1x1xf32> to vector<128x128xf32>
    %214 = arith.mulf %154, %213 : vector<128x128xf32>
    %215 = arith.addf %211, %214 : vector<128x128xf32>
    %216 = vector.extract_strided_slice %5 {offsets = [15, 1], sizes = [1, 1], strides = [1, 1]} : vector<16x128xf32> to vector<1x1xf32>
    %217 = vector.broadcast %216 : vector<1x1xf32> to vector<128x128xf32>
    %218 = arith.mulf %181, %217 : vector<128x128xf32>
    %219 = arith.addf %215, %218 : vector<128x128xf32>
    %220 = arith.truncf %219 : vector<128x128xf32> to vector<128x128xbf16>
    %221 = vector.extract_strided_slice %61 {offsets = [0, 8], sizes = [128, 8], strides = [1, 1]} : vector<128x128xbf16> to vector<128x8xbf16>
    %cst_42 = arith.constant dense<0.000000e+00> : vector<128x8xf32>
    %222 = tpu.matmul %220, %221, %cst_42 {dimension_numbers = #tpu.dot_dimension_numbers<[1], [0], [0], [1], [0, 0, 1, 1], [], []>} : vector<128x128xbf16>, vector<128x8xbf16>, vector<128x8xf32> -> vector<128x8xf32>
    %223 = arith.truncf %222 : vector<128x8xf32> to vector<128x8xbf16>
    %224 = vector.extract_strided_slice %46 {offsets = [8, 0], sizes = [8, 128], strides = [1, 1]} : vector<128x128xbf16> to vector<8x128xbf16>
    %cst_43 = arith.constant dense<0.000000e+00> : vector<128x128xf32>
    %225 = tpu.matmul %223, %224, %cst_43 {dimension_numbers = #tpu.dot_dimension_numbers<[1], [0], [0], [1], [0, 0, 1, 1], [], []>} : vector<128x8xbf16>, vector<8x128xbf16>, vector<128x128xf32> -> vector<128x128xf32>
    %226 = arith.addf %204, %225 : vector<128x128xf32>
    %227 = vector.extract_strided_slice %5 {offsets = [12, 2], sizes = [1, 1], strides = [1, 1]} : vector<16x128xf32> to vector<1x1xf32>
    %228 = vector.broadcast %227 : vector<1x1xf32> to vector<128x128xf32>
    %229 = arith.mulf %100, %228 : vector<128x128xf32>
    %230 = vector.extract_strided_slice %5 {offsets = [13, 2], sizes = [1, 1], strides = [1, 1]} : vector<16x128xf32> to vector<1x1xf32>
    %231 = vector.broadcast %230 : vector<1x1xf32> to vector<128x128xf32>
    %232 = arith.mulf %127, %231 : vector<128x128xf32>
    %233 = arith.addf %229, %232 : vector<128x128xf32>
    %234 = vector.extract_strided_slice %5 {offsets = [14, 2], sizes = [1, 1], strides = [1, 1]} : vector<16x128xf32> to vector<1x1xf32>
    %235 = vector.broadcast %234 : vector<1x1xf32> to vector<128x128xf32>
    %236 = arith.mulf %154, %235 : vector<128x128xf32>
    %237 = arith.addf %233, %236 : vector<128x128xf32>
    %238 = vector.extract_strided_slice %5 {offsets = [15, 2], sizes = [1, 1], strides = [1, 1]} : vector<16x128xf32> to vector<1x1xf32>
    %239 = vector.broadcast %238 : vector<1x1xf32> to vector<128x128xf32>
    %240 = arith.mulf %181, %239 : vector<128x128xf32>
    %241 = arith.addf %237, %240 : vector<128x128xf32>
    %242 = arith.truncf %241 : vector<128x128xf32> to vector<128x128xbf16>
    %243 = vector.extract_strided_slice %61 {offsets = [0, 16], sizes = [128, 8], strides = [1, 1]} : vector<128x128xbf16> to vector<128x8xbf16>
    %cst_44 = arith.constant dense<0.000000e+00> : vector<128x8xf32>
    %244 = tpu.matmul %242, %243, %cst_44 {dimension_numbers = #tpu.dot_dimension_numbers<[1], [0], [0], [1], [0, 0, 1, 1], [], []>} : vector<128x128xbf16>, vector<128x8xbf16>, vector<128x8xf32> -> vector<128x8xf32>
    %245 = arith.truncf %244 : vector<128x8xf32> to vector<128x8xbf16>
    %246 = vector.extract_strided_slice %46 {offsets = [16, 0], sizes = [8, 128], strides = [1, 1]} : vector<128x128xbf16> to vector<8x128xbf16>
    %cst_45 = arith.constant dense<0.000000e+00> : vector<128x128xf32>
    %247 = tpu.matmul %245, %246, %cst_45 {dimension_numbers = #tpu.dot_dimension_numbers<[1], [0], [0], [1], [0, 0, 1, 1], [], []>} : vector<128x8xbf16>, vector<8x128xbf16>, vector<128x128xf32> -> vector<128x128xf32>
    %248 = arith.addf %226, %247 : vector<128x128xf32>
    %249 = vector.extract_strided_slice %5 {offsets = [12, 3], sizes = [1, 1], strides = [1, 1]} : vector<16x128xf32> to vector<1x1xf32>
    %250 = vector.broadcast %249 : vector<1x1xf32> to vector<128x128xf32>
    %251 = arith.mulf %100, %250 : vector<128x128xf32>
    %252 = vector.extract_strided_slice %5 {offsets = [13, 3], sizes = [1, 1], strides = [1, 1]} : vector<16x128xf32> to vector<1x1xf32>
    %253 = vector.broadcast %252 : vector<1x1xf32> to vector<128x128xf32>
    %254 = arith.mulf %127, %253 : vector<128x128xf32>
    %255 = arith.addf %251, %254 : vector<128x128xf32>
    %256 = vector.extract_strided_slice %5 {offsets = [14, 3], sizes = [1, 1], strides = [1, 1]} : vector<16x128xf32> to vector<1x1xf32>
    %257 = vector.broadcast %256 : vector<1x1xf32> to vector<128x128xf32>
    %258 = arith.mulf %154, %257 : vector<128x128xf32>
    %259 = arith.addf %255, %258 : vector<128x128xf32>
    %260 = vector.extract_strided_slice %5 {offsets = [15, 3], sizes = [1, 1], strides = [1, 1]} : vector<16x128xf32> to vector<1x1xf32>
    %261 = vector.broadcast %260 : vector<1x1xf32> to vector<128x128xf32>
    %262 = arith.mulf %181, %261 : vector<128x128xf32>
    %263 = arith.addf %259, %262 : vector<128x128xf32>
    %264 = arith.truncf %263 : vector<128x128xf32> to vector<128x128xbf16>
    %265 = vector.extract_strided_slice %61 {offsets = [0, 24], sizes = [128, 8], strides = [1, 1]} : vector<128x128xbf16> to vector<128x8xbf16>
    %cst_46 = arith.constant dense<0.000000e+00> : vector<128x8xf32>
    %266 = tpu.matmul %264, %265, %cst_46 {dimension_numbers = #tpu.dot_dimension_numbers<[1], [0], [0], [1], [0, 0, 1, 1], [], []>} : vector<128x128xbf16>, vector<128x8xbf16>, vector<128x8xf32> -> vector<128x8xf32>
    %267 = arith.truncf %266 : vector<128x8xf32> to vector<128x8xbf16>
    %268 = vector.extract_strided_slice %46 {offsets = [24, 0], sizes = [8, 128], strides = [1, 1]} : vector<128x128xbf16> to vector<8x128xbf16>
    %cst_47 = arith.constant dense<0.000000e+00> : vector<128x128xf32>
    %269 = tpu.matmul %267, %268, %cst_47 {dimension_numbers = #tpu.dot_dimension_numbers<[1], [0], [0], [1], [0, 0, 1, 1], [], []>} : vector<128x8xbf16>, vector<8x128xbf16>, vector<128x128xf32> -> vector<128x128xf32>
    %270 = arith.addf %248, %269 : vector<128x128xf32>
    %271 = vector.extract_strided_slice %48 {offsets = [128, 0], sizes = [128, 128], strides = [1, 1]} : vector<256x128xbf16> to vector<128x128xbf16>
    %272 = vector.extract_strided_slice %50 {offsets = [128, 0], sizes = [128, 128], strides = [1, 1]} : vector<256x128xbf16> to vector<128x128xbf16>
    %273 = vector.extract_strided_slice %52 {offsets = [128, 0], sizes = [128, 128], strides = [1, 1]} : vector<256x128xbf16> to vector<128x128xbf16>
    %274 = vector.extract_strided_slice %271 {offsets = [0, 0], sizes = [128, 8], strides = [1, 1]} : vector<128x128xbf16> to vector<128x8xbf16>
    %275 = vector.extract_strided_slice %272 {offsets = [0, 0], sizes = [128, 8], strides = [1, 1]} : vector<128x128xbf16> to vector<128x8xbf16>
    %cst_48 = arith.constant dense<0.000000e+00> : vector<128x128xf32>
    %276 = tpu.matmul %274, %275, %cst_48 {dimension_numbers = #tpu.dot_dimension_numbers<[1], [1], [0], [0], [0, 0, 1, 0], [], []>} : vector<128x8xbf16>, vector<128x8xbf16>, vector<128x128xf32> -> vector<128x128xf32>
    %277 = vector.extract_strided_slice %271 {offsets = [0, 8], sizes = [128, 8], strides = [1, 1]} : vector<128x128xbf16> to vector<128x8xbf16>
    %278 = vector.extract_strided_slice %272 {offsets = [0, 8], sizes = [128, 8], strides = [1, 1]} : vector<128x128xbf16> to vector<128x8xbf16>
    %cst_49 = arith.constant dense<0.000000e+00> : vector<128x128xf32>
    %279 = tpu.matmul %277, %278, %cst_49 {dimension_numbers = #tpu.dot_dimension_numbers<[1], [1], [0], [0], [0, 0, 1, 0], [], []>} : vector<128x8xbf16>, vector<128x8xbf16>, vector<128x128xf32> -> vector<128x128xf32>
    %280 = vector.extract_strided_slice %271 {offsets = [0, 16], sizes = [128, 8], strides = [1, 1]} : vector<128x128xbf16> to vector<128x8xbf16>
    %281 = vector.extract_strided_slice %272 {offsets = [0, 16], sizes = [128, 8], strides = [1, 1]} : vector<128x128xbf16> to vector<128x8xbf16>
    %cst_50 = arith.constant dense<0.000000e+00> : vector<128x128xf32>
    %282 = tpu.matmul %280, %281, %cst_50 {dimension_numbers = #tpu.dot_dimension_numbers<[1], [1], [0], [0], [0, 0, 1, 0], [], []>} : vector<128x8xbf16>, vector<128x8xbf16>, vector<128x128xf32> -> vector<128x128xf32>
    %283 = vector.extract_strided_slice %271 {offsets = [0, 24], sizes = [128, 8], strides = [1, 1]} : vector<128x128xbf16> to vector<128x8xbf16>
    %284 = vector.extract_strided_slice %272 {offsets = [0, 24], sizes = [128, 8], strides = [1, 1]} : vector<128x128xbf16> to vector<128x8xbf16>
    %cst_51 = arith.constant dense<0.000000e+00> : vector<128x128xf32>
    %285 = tpu.matmul %283, %284, %cst_51 {dimension_numbers = #tpu.dot_dimension_numbers<[1], [1], [0], [0], [0, 0, 1, 0], [], []>} : vector<128x8xbf16>, vector<128x8xbf16>, vector<128x128xf32> -> vector<128x128xf32>
    %286 = vector.extract_strided_slice %5 {offsets = [8, 0], sizes = [1, 1], strides = [1, 1]} : vector<16x128xf32> to vector<1x1xf32>
    %287 = vector.broadcast %286 : vector<1x1xf32> to vector<128x128xf32>
    %288 = arith.mulf %276, %287 : vector<128x128xf32>
    %289 = vector.extract_strided_slice %5 {offsets = [9, 0], sizes = [1, 1], strides = [1, 1]} : vector<16x128xf32> to vector<1x1xf32>
    %290 = vector.broadcast %289 : vector<1x1xf32> to vector<128x128xf32>
    %291 = arith.mulf %279, %290 : vector<128x128xf32>
    %292 = arith.addf %288, %291 : vector<128x128xf32>
    %293 = vector.extract_strided_slice %5 {offsets = [10, 0], sizes = [1, 1], strides = [1, 1]} : vector<16x128xf32> to vector<1x1xf32>
    %294 = vector.broadcast %293 : vector<1x1xf32> to vector<128x128xf32>
    %295 = arith.mulf %282, %294 : vector<128x128xf32>
    %296 = arith.addf %292, %295 : vector<128x128xf32>
    %297 = vector.extract_strided_slice %5 {offsets = [11, 0], sizes = [1, 1], strides = [1, 1]} : vector<16x128xf32> to vector<1x1xf32>
    %298 = vector.broadcast %297 : vector<1x1xf32> to vector<128x128xf32>
    %299 = arith.mulf %285, %298 : vector<128x128xf32>
    %300 = arith.addf %296, %299 : vector<128x128xf32>
    %301 = vector.broadcast %58 : vector<1x128xf32> to vector<128x128xf32>
    %302 = arith.addf %300, %301 : vector<128x128xf32>
    %cst_52 = arith.constant dense<0xFF800000> : vector<128xf32>
    %303 = vector.multi_reduction <maximumf>, %302, %cst_52 [1] : vector<128x128xf32> to vector<128xf32>
    %304 = vector.shape_cast %303 : vector<128xf32> to vector<128x1xf32>
    %305 = vector.broadcast %304 : vector<128x1xf32> to vector<128x128xf32>
    %306 = arith.subf %302, %305 : vector<128x128xf32>
    %307 = math.exp %306 : vector<128x128xf32>
    %cst_53 = arith.constant dense<0.000000e+00> : vector<128xf32>
    %308 = vector.multi_reduction <add>, %307, %cst_53 [1] : vector<128x128xf32> to vector<128xf32>
    %309 = vector.shape_cast %308 : vector<128xf32> to vector<128x1xf32>
    %310 = tpu.reciprocal %309 {approx = true} : vector<128x1xf32> -> vector<128x1xf32>
    %311 = vector.broadcast %310 : vector<128x1xf32> to vector<128x128xf32>
    %312 = arith.mulf %307, %311 : vector<128x128xf32>
    %313 = vector.extract_strided_slice %5 {offsets = [8, 1], sizes = [1, 1], strides = [1, 1]} : vector<16x128xf32> to vector<1x1xf32>
    %314 = vector.broadcast %313 : vector<1x1xf32> to vector<128x128xf32>
    %315 = arith.mulf %276, %314 : vector<128x128xf32>
    %316 = vector.extract_strided_slice %5 {offsets = [9, 1], sizes = [1, 1], strides = [1, 1]} : vector<16x128xf32> to vector<1x1xf32>
    %317 = vector.broadcast %316 : vector<1x1xf32> to vector<128x128xf32>
    %318 = arith.mulf %279, %317 : vector<128x128xf32>
    %319 = arith.addf %315, %318 : vector<128x128xf32>
    %320 = vector.extract_strided_slice %5 {offsets = [10, 1], sizes = [1, 1], strides = [1, 1]} : vector<16x128xf32> to vector<1x1xf32>
    %321 = vector.broadcast %320 : vector<1x1xf32> to vector<128x128xf32>
    %322 = arith.mulf %282, %321 : vector<128x128xf32>
    %323 = arith.addf %319, %322 : vector<128x128xf32>
    %324 = vector.extract_strided_slice %5 {offsets = [11, 1], sizes = [1, 1], strides = [1, 1]} : vector<16x128xf32> to vector<1x1xf32>
    %325 = vector.broadcast %324 : vector<1x1xf32> to vector<128x128xf32>
    %326 = arith.mulf %285, %325 : vector<128x128xf32>
    %327 = arith.addf %323, %326 : vector<128x128xf32>
    %328 = vector.broadcast %58 : vector<1x128xf32> to vector<128x128xf32>
    %329 = arith.addf %327, %328 : vector<128x128xf32>
    %cst_54 = arith.constant dense<0xFF800000> : vector<128xf32>
    %330 = vector.multi_reduction <maximumf>, %329, %cst_54 [1] : vector<128x128xf32> to vector<128xf32>
    %331 = vector.shape_cast %330 : vector<128xf32> to vector<128x1xf32>
    %332 = vector.broadcast %331 : vector<128x1xf32> to vector<128x128xf32>
    %333 = arith.subf %329, %332 : vector<128x128xf32>
    %334 = math.exp %333 : vector<128x128xf32>
    %cst_55 = arith.constant dense<0.000000e+00> : vector<128xf32>
    %335 = vector.multi_reduction <add>, %334, %cst_55 [1] : vector<128x128xf32> to vector<128xf32>
    %336 = vector.shape_cast %335 : vector<128xf32> to vector<128x1xf32>
    %337 = tpu.reciprocal %336 {approx = true} : vector<128x1xf32> -> vector<128x1xf32>
    %338 = vector.broadcast %337 : vector<128x1xf32> to vector<128x128xf32>
    %339 = arith.mulf %334, %338 : vector<128x128xf32>
    %340 = vector.extract_strided_slice %5 {offsets = [8, 2], sizes = [1, 1], strides = [1, 1]} : vector<16x128xf32> to vector<1x1xf32>
    %341 = vector.broadcast %340 : vector<1x1xf32> to vector<128x128xf32>
    %342 = arith.mulf %276, %341 : vector<128x128xf32>
    %343 = vector.extract_strided_slice %5 {offsets = [9, 2], sizes = [1, 1], strides = [1, 1]} : vector<16x128xf32> to vector<1x1xf32>
    %344 = vector.broadcast %343 : vector<1x1xf32> to vector<128x128xf32>
    %345 = arith.mulf %279, %344 : vector<128x128xf32>
    %346 = arith.addf %342, %345 : vector<128x128xf32>
    %347 = vector.extract_strided_slice %5 {offsets = [10, 2], sizes = [1, 1], strides = [1, 1]} : vector<16x128xf32> to vector<1x1xf32>
    %348 = vector.broadcast %347 : vector<1x1xf32> to vector<128x128xf32>
    %349 = arith.mulf %282, %348 : vector<128x128xf32>
    %350 = arith.addf %346, %349 : vector<128x128xf32>
    %351 = vector.extract_strided_slice %5 {offsets = [11, 2], sizes = [1, 1], strides = [1, 1]} : vector<16x128xf32> to vector<1x1xf32>
    %352 = vector.broadcast %351 : vector<1x1xf32> to vector<128x128xf32>
    %353 = arith.mulf %285, %352 : vector<128x128xf32>
    %354 = arith.addf %350, %353 : vector<128x128xf32>
    %355 = vector.broadcast %58 : vector<1x128xf32> to vector<128x128xf32>
    %356 = arith.addf %354, %355 : vector<128x128xf32>
    %cst_56 = arith.constant dense<0xFF800000> : vector<128xf32>
    %357 = vector.multi_reduction <maximumf>, %356, %cst_56 [1] : vector<128x128xf32> to vector<128xf32>
    %358 = vector.shape_cast %357 : vector<128xf32> to vector<128x1xf32>
    %359 = vector.broadcast %358 : vector<128x1xf32> to vector<128x128xf32>
    %360 = arith.subf %356, %359 : vector<128x128xf32>
    %361 = math.exp %360 : vector<128x128xf32>
    %cst_57 = arith.constant dense<0.000000e+00> : vector<128xf32>
    %362 = vector.multi_reduction <add>, %361, %cst_57 [1] : vector<128x128xf32> to vector<128xf32>
    %363 = vector.shape_cast %362 : vector<128xf32> to vector<128x1xf32>
    %364 = tpu.reciprocal %363 {approx = true} : vector<128x1xf32> -> vector<128x1xf32>
    %365 = vector.broadcast %364 : vector<128x1xf32> to vector<128x128xf32>
    %366 = arith.mulf %361, %365 : vector<128x128xf32>
    %367 = vector.extract_strided_slice %5 {offsets = [8, 3], sizes = [1, 1], strides = [1, 1]} : vector<16x128xf32> to vector<1x1xf32>
    %368 = vector.broadcast %367 : vector<1x1xf32> to vector<128x128xf32>
    %369 = arith.mulf %276, %368 : vector<128x128xf32>
    %370 = vector.extract_strided_slice %5 {offsets = [9, 3], sizes = [1, 1], strides = [1, 1]} : vector<16x128xf32> to vector<1x1xf32>
    %371 = vector.broadcast %370 : vector<1x1xf32> to vector<128x128xf32>
    %372 = arith.mulf %279, %371 : vector<128x128xf32>
    %373 = arith.addf %369, %372 : vector<128x128xf32>
    %374 = vector.extract_strided_slice %5 {offsets = [10, 3], sizes = [1, 1], strides = [1, 1]} : vector<16x128xf32> to vector<1x1xf32>
    %375 = vector.broadcast %374 : vector<1x1xf32> to vector<128x128xf32>
    %376 = arith.mulf %282, %375 : vector<128x128xf32>
    %377 = arith.addf %373, %376 : vector<128x128xf32>
    %378 = vector.extract_strided_slice %5 {offsets = [11, 3], sizes = [1, 1], strides = [1, 1]} : vector<16x128xf32> to vector<1x1xf32>
    %379 = vector.broadcast %378 : vector<1x1xf32> to vector<128x128xf32>
    %380 = arith.mulf %285, %379 : vector<128x128xf32>
    %381 = arith.addf %377, %380 : vector<128x128xf32>
    %382 = vector.broadcast %58 : vector<1x128xf32> to vector<128x128xf32>
    %383 = arith.addf %381, %382 : vector<128x128xf32>
    %cst_58 = arith.constant dense<0xFF800000> : vector<128xf32>
    %384 = vector.multi_reduction <maximumf>, %383, %cst_58 [1] : vector<128x128xf32> to vector<128xf32>
    %385 = vector.shape_cast %384 : vector<128xf32> to vector<128x1xf32>
    %386 = vector.broadcast %385 : vector<128x1xf32> to vector<128x128xf32>
    %387 = arith.subf %383, %386 : vector<128x128xf32>
    %388 = math.exp %387 : vector<128x128xf32>
    %cst_59 = arith.constant dense<0.000000e+00> : vector<128xf32>
    %389 = vector.multi_reduction <add>, %388, %cst_59 [1] : vector<128x128xf32> to vector<128xf32>
    %390 = vector.shape_cast %389 : vector<128xf32> to vector<128x1xf32>
    %391 = tpu.reciprocal %390 {approx = true} : vector<128x1xf32> -> vector<128x1xf32>
    %392 = vector.broadcast %391 : vector<128x1xf32> to vector<128x128xf32>
    %393 = arith.mulf %388, %392 : vector<128x128xf32>
    %cst_60 = arith.constant 0.000000e+00 : f32
    %394 = vector.broadcast %cst_60 : f32 to vector<128x128xf32>
    %395 = vector.extract_strided_slice %5 {offsets = [12, 0], sizes = [1, 1], strides = [1, 1]} : vector<16x128xf32> to vector<1x1xf32>
    %396 = vector.broadcast %395 : vector<1x1xf32> to vector<128x128xf32>
    %397 = arith.mulf %312, %396 : vector<128x128xf32>
    %398 = vector.extract_strided_slice %5 {offsets = [13, 0], sizes = [1, 1], strides = [1, 1]} : vector<16x128xf32> to vector<1x1xf32>
    %399 = vector.broadcast %398 : vector<1x1xf32> to vector<128x128xf32>
    %400 = arith.mulf %339, %399 : vector<128x128xf32>
    %401 = arith.addf %397, %400 : vector<128x128xf32>
    %402 = vector.extract_strided_slice %5 {offsets = [14, 0], sizes = [1, 1], strides = [1, 1]} : vector<16x128xf32> to vector<1x1xf32>
    %403 = vector.broadcast %402 : vector<1x1xf32> to vector<128x128xf32>
    %404 = arith.mulf %366, %403 : vector<128x128xf32>
    %405 = arith.addf %401, %404 : vector<128x128xf32>
    %406 = vector.extract_strided_slice %5 {offsets = [15, 0], sizes = [1, 1], strides = [1, 1]} : vector<16x128xf32> to vector<1x1xf32>
    %407 = vector.broadcast %406 : vector<1x1xf32> to vector<128x128xf32>
    %408 = arith.mulf %393, %407 : vector<128x128xf32>
    %409 = arith.addf %405, %408 : vector<128x128xf32>
    %410 = arith.truncf %409 : vector<128x128xf32> to vector<128x128xbf16>
    %411 = vector.extract_strided_slice %273 {offsets = [0, 0], sizes = [128, 8], strides = [1, 1]} : vector<128x128xbf16> to vector<128x8xbf16>
    %cst_61 = arith.constant dense<0.000000e+00> : vector<128x8xf32>
    %412 = tpu.matmul %410, %411, %cst_61 {dimension_numbers = #tpu.dot_dimension_numbers<[1], [0], [0], [1], [0, 0, 1, 1], [], []>} : vector<128x128xbf16>, vector<128x8xbf16>, vector<128x8xf32> -> vector<128x8xf32>
    %413 = arith.truncf %412 : vector<128x8xf32> to vector<128x8xbf16>
    %414 = vector.extract_strided_slice %46 {offsets = [0, 0], sizes = [8, 128], strides = [1, 1]} : vector<128x128xbf16> to vector<8x128xbf16>
    %cst_62 = arith.constant dense<0.000000e+00> : vector<128x128xf32>
    %415 = tpu.matmul %413, %414, %cst_62 {dimension_numbers = #tpu.dot_dimension_numbers<[1], [0], [0], [1], [0, 0, 1, 1], [], []>} : vector<128x8xbf16>, vector<8x128xbf16>, vector<128x128xf32> -> vector<128x128xf32>
    %416 = arith.addf %394, %415 : vector<128x128xf32>
    %417 = vector.extract_strided_slice %5 {offsets = [12, 1], sizes = [1, 1], strides = [1, 1]} : vector<16x128xf32> to vector<1x1xf32>
    %418 = vector.broadcast %417 : vector<1x1xf32> to vector<128x128xf32>
    %419 = arith.mulf %312, %418 : vector<128x128xf32>
    %420 = vector.extract_strided_slice %5 {offsets = [13, 1], sizes = [1, 1], strides = [1, 1]} : vector<16x128xf32> to vector<1x1xf32>
    %421 = vector.broadcast %420 : vector<1x1xf32> to vector<128x128xf32>
    %422 = arith.mulf %339, %421 : vector<128x128xf32>
    %423 = arith.addf %419, %422 : vector<128x128xf32>
    %424 = vector.extract_strided_slice %5 {offsets = [14, 1], sizes = [1, 1], strides = [1, 1]} : vector<16x128xf32> to vector<1x1xf32>
    %425 = vector.broadcast %424 : vector<1x1xf32> to vector<128x128xf32>
    %426 = arith.mulf %366, %425 : vector<128x128xf32>
    %427 = arith.addf %423, %426 : vector<128x128xf32>
    %428 = vector.extract_strided_slice %5 {offsets = [15, 1], sizes = [1, 1], strides = [1, 1]} : vector<16x128xf32> to vector<1x1xf32>
    %429 = vector.broadcast %428 : vector<1x1xf32> to vector<128x128xf32>
    %430 = arith.mulf %393, %429 : vector<128x128xf32>
    %431 = arith.addf %427, %430 : vector<128x128xf32>
    %432 = arith.truncf %431 : vector<128x128xf32> to vector<128x128xbf16>
    %433 = vector.extract_strided_slice %273 {offsets = [0, 8], sizes = [128, 8], strides = [1, 1]} : vector<128x128xbf16> to vector<128x8xbf16>
    %cst_63 = arith.constant dense<0.000000e+00> : vector<128x8xf32>
    %434 = tpu.matmul %432, %433, %cst_63 {dimension_numbers = #tpu.dot_dimension_numbers<[1], [0], [0], [1], [0, 0, 1, 1], [], []>} : vector<128x128xbf16>, vector<128x8xbf16>, vector<128x8xf32> -> vector<128x8xf32>
    %435 = arith.truncf %434 : vector<128x8xf32> to vector<128x8xbf16>
    %436 = vector.extract_strided_slice %46 {offsets = [8, 0], sizes = [8, 128], strides = [1, 1]} : vector<128x128xbf16> to vector<8x128xbf16>
    %cst_64 = arith.constant dense<0.000000e+00> : vector<128x128xf32>
    %437 = tpu.matmul %435, %436, %cst_64 {dimension_numbers = #tpu.dot_dimension_numbers<[1], [0], [0], [1], [0, 0, 1, 1], [], []>} : vector<128x8xbf16>, vector<8x128xbf16>, vector<128x128xf32> -> vector<128x128xf32>
    %438 = arith.addf %416, %437 : vector<128x128xf32>
    %439 = vector.extract_strided_slice %5 {offsets = [12, 2], sizes = [1, 1], strides = [1, 1]} : vector<16x128xf32> to vector<1x1xf32>
    %440 = vector.broadcast %439 : vector<1x1xf32> to vector<128x128xf32>
    %441 = arith.mulf %312, %440 : vector<128x128xf32>
    %442 = vector.extract_strided_slice %5 {offsets = [13, 2], sizes = [1, 1], strides = [1, 1]} : vector<16x128xf32> to vector<1x1xf32>
    %443 = vector.broadcast %442 : vector<1x1xf32> to vector<128x128xf32>
    %444 = arith.mulf %339, %443 : vector<128x128xf32>
    %445 = arith.addf %441, %444 : vector<128x128xf32>
    %446 = vector.extract_strided_slice %5 {offsets = [14, 2], sizes = [1, 1], strides = [1, 1]} : vector<16x128xf32> to vector<1x1xf32>
    %447 = vector.broadcast %446 : vector<1x1xf32> to vector<128x128xf32>
    %448 = arith.mulf %366, %447 : vector<128x128xf32>
    %449 = arith.addf %445, %448 : vector<128x128xf32>
    %450 = vector.extract_strided_slice %5 {offsets = [15, 2], sizes = [1, 1], strides = [1, 1]} : vector<16x128xf32> to vector<1x1xf32>
    %451 = vector.broadcast %450 : vector<1x1xf32> to vector<128x128xf32>
    %452 = arith.mulf %393, %451 : vector<128x128xf32>
    %453 = arith.addf %449, %452 : vector<128x128xf32>
    %454 = arith.truncf %453 : vector<128x128xf32> to vector<128x128xbf16>
    %455 = vector.extract_strided_slice %273 {offsets = [0, 16], sizes = [128, 8], strides = [1, 1]} : vector<128x128xbf16> to vector<128x8xbf16>
    %cst_65 = arith.constant dense<0.000000e+00> : vector<128x8xf32>
    %456 = tpu.matmul %454, %455, %cst_65 {dimension_numbers = #tpu.dot_dimension_numbers<[1], [0], [0], [1], [0, 0, 1, 1], [], []>} : vector<128x128xbf16>, vector<128x8xbf16>, vector<128x8xf32> -> vector<128x8xf32>
    %457 = arith.truncf %456 : vector<128x8xf32> to vector<128x8xbf16>
    %458 = vector.extract_strided_slice %46 {offsets = [16, 0], sizes = [8, 128], strides = [1, 1]} : vector<128x128xbf16> to vector<8x128xbf16>
    %cst_66 = arith.constant dense<0.000000e+00> : vector<128x128xf32>
    %459 = tpu.matmul %457, %458, %cst_66 {dimension_numbers = #tpu.dot_dimension_numbers<[1], [0], [0], [1], [0, 0, 1, 1], [], []>} : vector<128x8xbf16>, vector<8x128xbf16>, vector<128x128xf32> -> vector<128x128xf32>
    %460 = arith.addf %438, %459 : vector<128x128xf32>
    %461 = vector.extract_strided_slice %5 {offsets = [12, 3], sizes = [1, 1], strides = [1, 1]} : vector<16x128xf32> to vector<1x1xf32>
    %462 = vector.broadcast %461 : vector<1x1xf32> to vector<128x128xf32>
    %463 = arith.mulf %312, %462 : vector<128x128xf32>
    %464 = vector.extract_strided_slice %5 {offsets = [13, 3], sizes = [1, 1], strides = [1, 1]} : vector<16x128xf32> to vector<1x1xf32>
    %465 = vector.broadcast %464 : vector<1x1xf32> to vector<128x128xf32>
    %466 = arith.mulf %339, %465 : vector<128x128xf32>
    %467 = arith.addf %463, %466 : vector<128x128xf32>
    %468 = vector.extract_strided_slice %5 {offsets = [14, 3], sizes = [1, 1], strides = [1, 1]} : vector<16x128xf32> to vector<1x1xf32>
    %469 = vector.broadcast %468 : vector<1x1xf32> to vector<128x128xf32>
    %470 = arith.mulf %366, %469 : vector<128x128xf32>
    %471 = arith.addf %467, %470 : vector<128x128xf32>
    %472 = vector.extract_strided_slice %5 {offsets = [15, 3], sizes = [1, 1], strides = [1, 1]} : vector<16x128xf32> to vector<1x1xf32>
    %473 = vector.broadcast %472 : vector<1x1xf32> to vector<128x128xf32>
    %474 = arith.mulf %393, %473 : vector<128x128xf32>
    %475 = arith.addf %471, %474 : vector<128x128xf32>
    %476 = arith.truncf %475 : vector<128x128xf32> to vector<128x128xbf16>
    %477 = vector.extract_strided_slice %273 {offsets = [0, 24], sizes = [128, 8], strides = [1, 1]} : vector<128x128xbf16> to vector<128x8xbf16>
    %cst_67 = arith.constant dense<0.000000e+00> : vector<128x8xf32>
    %478 = tpu.matmul %476, %477, %cst_67 {dimension_numbers = #tpu.dot_dimension_numbers<[1], [0], [0], [1], [0, 0, 1, 1], [], []>} : vector<128x128xbf16>, vector<128x8xbf16>, vector<128x8xf32> -> vector<128x8xf32>
    %479 = arith.truncf %478 : vector<128x8xf32> to vector<128x8xbf16>
    %480 = vector.extract_strided_slice %46 {offsets = [24, 0], sizes = [8, 128], strides = [1, 1]} : vector<128x128xbf16> to vector<8x128xbf16>
    %cst_68 = arith.constant dense<0.000000e+00> : vector<128x128xf32>
    %481 = tpu.matmul %479, %480, %cst_68 {dimension_numbers = #tpu.dot_dimension_numbers<[1], [0], [0], [1], [0, 0, 1, 1], [], []>} : vector<128x8xbf16>, vector<8x128xbf16>, vector<128x128xf32> -> vector<128x128xf32>
    %482 = arith.addf %460, %481 : vector<128x128xf32>
    %483 = tpu.concatenate %270, %482 in 0 : vector<128x128xf32>, vector<128x128xf32> -> vector<256x128xf32>
    %484 = vector.broadcast %8 : vector<1x128xf32> to vector<256x128xf32>
    %485 = arith.addf %483, %484 : vector<256x128xf32>
    %486 = vector.broadcast %9 : vector<1x128xf32> to vector<256x128xf32>
    %487 = arith.mulf %485, %486 : vector<256x128xf32>
    %488 = arith.addf %3, %487 : vector<256x128xf32>
    %cst_69 = arith.constant dense<0.000000e+00> : vector<256xf32>
    %489 = vector.multi_reduction <add>, %488, %cst_69 [1] : vector<256x128xf32> to vector<256xf32>
    %490 = vector.shape_cast %489 : vector<256xf32> to vector<256x1xf32>
    %491 = arith.mulf %488, %488 : vector<256x128xf32>
    %cst_70 = arith.constant dense<0.000000e+00> : vector<256xf32>
    %492 = vector.multi_reduction <add>, %491, %cst_70 [1] : vector<256x128xf32> to vector<256xf32>
    %493 = vector.shape_cast %492 : vector<256xf32> to vector<256x1xf32>
    %cst_71 = arith.constant 3.200000e+01 : f32
    %494 = vector.broadcast %cst_71 : f32 to vector<256x1xf32>
    %495 = arith.divf %490, %494 : vector<256x1xf32>
    %cst_72 = arith.constant 3.200000e+01 : f32
    %496 = vector.broadcast %cst_72 : f32 to vector<256x1xf32>
    %497 = arith.divf %493, %496 : vector<256x1xf32>
    %498 = arith.mulf %495, %495 : vector<256x1xf32>
    %499 = arith.subf %497, %498 : vector<256x1xf32>
    %cst_73 = arith.constant 0.000000e+00 : f32
    %500 = vector.broadcast %cst_73 : f32 to vector<256x1xf32>
    %501 = arith.maximumf %499, %500 : vector<256x1xf32>
    %cst_74 = arith.constant 9.99999974E-6 : f32
    %502 = vector.broadcast %cst_74 : f32 to vector<256x1xf32>
    %503 = arith.addf %501, %502 : vector<256x1xf32>
    %504 = math.rsqrt %503 : vector<256x1xf32>
    %505 = vector.broadcast %495 : vector<256x1xf32> to vector<256x128xf32>
    %506 = arith.subf %488, %505 : vector<256x128xf32>
    %507 = vector.broadcast %504 : vector<256x1xf32> to vector<256x128xf32>
    %508 = arith.mulf %506, %507 : vector<256x128xf32>
    %509 = vector.broadcast %10 : vector<1x128xf32> to vector<256x128xf32>
    %510 = arith.mulf %508, %509 : vector<256x128xf32>
    %511 = vector.broadcast %11 : vector<1x128xf32> to vector<256x128xf32>
    %512 = arith.addf %510, %511 : vector<256x128xf32>
    %513 = arith.truncf %512 : vector<256x128xf32> to vector<256x128xbf16>
    %c0_75 = arith.constant 0 : index
    %c0_76 = arith.constant 0 : index
    %c0_77 = arith.constant 0 : index
    %514 = vector.load %arg6[%c0_75, %c0_76, %c0_77] : memref<1x128x128xbf16, #tpu.memory_space<vmem>>, vector<1x128x128xbf16>
    %515 = vector.shape_cast %514 : vector<1x128x128xbf16> to vector<128x128xbf16>
    %cst_78 = arith.constant dense<0.000000e+00> : vector<256x128xf32>
    %516 = tpu.matmul %513, %515, %cst_78 {dimension_numbers = #tpu.dot_dimension_numbers<[1], [0], [0], [1], [0, 0, 1, 1], [], []>} : vector<256x128xbf16>, vector<128x128xbf16>, vector<256x128xf32> -> vector<256x128xf32>
    %c0_79 = arith.constant 0 : index
    %c0_80 = arith.constant 0 : index
    %c0_81 = arith.constant 0 : index
    %517 = vector.load %arg9[%c0_79, %c0_80, %c0_81] : memref<1x1x128xf32, #tpu.memory_space<vmem>>, vector<1x1x128xf32>
    %518 = vector.shape_cast %517 : vector<1x1x128xf32> to vector<1x128xf32>
    %519 = vector.broadcast %518 : vector<1x128xf32> to vector<256x128xf32>
    %520 = arith.addf %516, %519 : vector<256x128xf32>
    %cst_82 = arith.constant 5.000000e-01 : f32
    %521 = vector.broadcast %cst_82 : f32 to vector<256x128xf32>
    %522 = arith.mulf %521, %520 : vector<256x128xf32>
    %cst_83 = arith.constant 0.707106769 : f32
    %523 = vector.broadcast %cst_83 : f32 to vector<256x128xf32>
    %524 = arith.mulf %520, %523 : vector<256x128xf32>
    %525 = math.absf %524 : vector<256x128xf32>
    %cst_84 = arith.constant 0.327591091 : f32
    %526 = vector.broadcast %cst_84 : f32 to vector<256x128xf32>
    %527 = arith.mulf %526, %525 : vector<256x128xf32>
    %cst_85 = arith.constant 1.000000e+00 : f32
    %528 = vector.broadcast %cst_85 : f32 to vector<256x128xf32>
    %529 = arith.addf %528, %527 : vector<256x128xf32>
    %cst_86 = arith.constant 1.000000e+00 : f32
    %530 = vector.broadcast %cst_86 : f32 to vector<256x128xf32>
    %531 = arith.divf %530, %529 : vector<256x128xf32>
    %cst_87 = arith.constant 1.06140542 : f32
    %532 = vector.broadcast %cst_87 : f32 to vector<256x128xf32>
    %533 = arith.mulf %532, %531 : vector<256x128xf32>
    %cst_88 = arith.constant -1.45315206 : f32
    %534 = vector.broadcast %cst_88 : f32 to vector<256x128xf32>
    %535 = arith.addf %533, %534 : vector<256x128xf32>
    %536 = arith.mulf %535, %531 : vector<256x128xf32>
    %cst_89 = arith.constant 1.42141378 : f32
    %537 = vector.broadcast %cst_89 : f32 to vector<256x128xf32>
    %538 = arith.addf %536, %537 : vector<256x128xf32>
    %539 = arith.mulf %538, %531 : vector<256x128xf32>
    %cst_90 = arith.constant -0.284496725 : f32
    %540 = vector.broadcast %cst_90 : f32 to vector<256x128xf32>
    %541 = arith.addf %539, %540 : vector<256x128xf32>
    %542 = arith.mulf %541, %531 : vector<256x128xf32>
    %cst_91 = arith.constant 0.254829586 : f32
    %543 = vector.broadcast %cst_91 : f32 to vector<256x128xf32>
    %544 = arith.addf %542, %543 : vector<256x128xf32>
    %545 = arith.mulf %544, %531 : vector<256x128xf32>
    %cst_92 = arith.constant 0.000000e+00 : f32
    %546 = vector.broadcast %cst_92 : f32 to vector<256x128xf32>
    %547 = arith.subf %546, %525 : vector<256x128xf32>
    %548 = arith.mulf %547, %525 : vector<256x128xf32>
    %549 = math.exp %548 : vector<256x128xf32>
    %550 = arith.mulf %545, %549 : vector<256x128xf32>
    %cst_93 = arith.constant 1.000000e+00 : f32
    %551 = vector.broadcast %cst_93 : f32 to vector<256x128xf32>
    %552 = arith.subf %551, %550 : vector<256x128xf32>
    %cst_94 = arith.constant 0.000000e+00 : f32
    %553 = vector.broadcast %cst_94 : f32 to vector<256x128xf32>
    %554 = arith.cmpf oge, %524, %553 : vector<256x128xf32>
    %cst_95 = arith.constant 0.000000e+00 : f32
    %555 = vector.broadcast %cst_95 : f32 to vector<256x128xf32>
    %556 = arith.subf %555, %552 : vector<256x128xf32>
    %557 = arith.select %554, %552, %556 : vector<256x128xi1>, vector<256x128xf32>
    %cst_96 = arith.constant 1.000000e+00 : f32
    %558 = vector.broadcast %cst_96 : f32 to vector<256x128xf32>
    %559 = arith.addf %558, %557 : vector<256x128xf32>
    %560 = arith.mulf %522, %559 : vector<256x128xf32>
    %561 = arith.truncf %560 : vector<256x128xf32> to vector<256x128xbf16>
    %c0_97 = arith.constant 0 : index
    %c0_98 = arith.constant 0 : index
    %c0_99 = arith.constant 0 : index
    %562 = vector.load %arg7[%c0_97, %c0_98, %c0_99] : memref<1x128x128xbf16, #tpu.memory_space<vmem>>, vector<1x128x128xbf16>
    %563 = vector.shape_cast %562 : vector<1x128x128xbf16> to vector<128x128xbf16>
    %cst_100 = arith.constant dense<0.000000e+00> : vector<256x128xf32>
    %564 = tpu.matmul %561, %563, %cst_100 {dimension_numbers = #tpu.dot_dimension_numbers<[1], [0], [0], [1], [0, 0, 1, 1], [], []>} : vector<256x128xbf16>, vector<128x128xbf16>, vector<256x128xf32> -> vector<256x128xf32>
    %565 = vector.broadcast %12 : vector<1x128xf32> to vector<256x128xf32>
    %566 = arith.addf %564, %565 : vector<256x128xf32>
    %567 = vector.broadcast %13 : vector<1x128xf32> to vector<256x128xf32>
    %568 = arith.mulf %566, %567 : vector<256x128xf32>
    %569 = arith.addf %488, %568 : vector<256x128xf32>
    %c0_101 = arith.constant 0 : index
    %c0_102 = arith.constant 0 : index
    %570 = vector.load %arg11[%c0_101, %c0_102] : memref<256x128xf32, #tpu.memory_space<vmem>>, vector<256x128xf32>
    tpu.vector_store %arg11[%c0_101, %c0_102], %569 {strides = array<i32>} : memref<256x128xf32, #tpu.memory_space<vmem>>, vector<256x128xf32>,
    %c1_i32 = arith.constant 1 : i32
    %571 = arith.cmpi eq, %arg0, %c1_i32 : i32
    %572 = arith.extui %571 : i1 to i32
    %c0_i32_103 = arith.constant 0 : i32
    %573 = arith.cmpi ne, %572, %c0_i32_103 : i32
    scf.if %573 {
      %c0_104 = arith.constant 0 : index
      %c0_105 = arith.constant 0 : index
      %574 = vector.load %arg10[%c0_104, %c0_105] : memref<256x128xf32, #tpu.memory_space<vmem>>, vector<256x128xf32>
      tpu.vector_store %arg10[%c0_104, %c0_105], %569 {strides = array<i32>} : memref<256x128xf32, #tpu.memory_space<vmem>>, vector<256x128xf32>,
    } else {
    }
    return
  }
  func.func @transform_0(%arg0: i32) -> (i32, i32) {
    %c0_i32 = arith.constant 0 : i32
    %c0_i32_0 = arith.constant 0 : i32
    %c0_i32_1 = arith.constant 0 : i32
    return %c0_i32, %c0_i32_0 : i32, i32
  }
  func.func @transform_1(%arg0: i32) -> (i32, i32, i32) {
    %c0_i32 = arith.constant 0 : i32
    %c0_i32_0 = arith.constant 0 : i32
    %c0_i32_1 = arith.constant 0 : i32
    return %arg0, %c0_i32, %c0_i32_0 : i32, i32, i32
  }
  func.func @transform_2(%arg0: i32) -> (i32, i32, i32) {
    %c0_i32 = arith.constant 0 : i32
    %c0_i32_0 = arith.constant 0 : i32
    %c0_i32_1 = arith.constant 0 : i32
    return %arg0, %c0_i32, %c0_i32_0 : i32, i32, i32
  }
  func.func @transform_3(%arg0: i32) -> (i32, i32, i32) {
    %c0_i32 = arith.constant 0 : i32
    %c0_i32_0 = arith.constant 0 : i32
    %c0_i32_1 = arith.constant 0 : i32
    return %arg0, %c0_i32, %c0_i32_0 : i32, i32, i32
  }
  func.func @transform_4(%arg0: i32) -> (i32, i32, i32) {
    %c0_i32 = arith.constant 0 : i32
    %c0_i32_0 = arith.constant 0 : i32
    %c0_i32_1 = arith.constant 0 : i32
    return %arg0, %c0_i32, %c0_i32_0 : i32, i32, i32
  }
  func.func @transform_5(%arg0: i32) -> (i32, i32, i32) {
    %c0_i32 = arith.constant 0 : i32
    %c0_i32_0 = arith.constant 0 : i32
    %c0_i32_1 = arith.constant 0 : i32
    return %arg0, %c0_i32, %c0_i32_0 : i32, i32, i32
  }
  func.func @transform_6(%arg0: i32) -> (i32, i32, i32) {
    %c0_i32 = arith.constant 0 : i32
    %c0_i32_0 = arith.constant 0 : i32
    %c0_i32_1 = arith.constant 0 : i32
    return %arg0, %c0_i32, %c0_i32_0 : i32, i32, i32
  }
  func.func @transform_7(%arg0: i32) -> (i32, i32, i32) {
    %c0_i32 = arith.constant 0 : i32
    %c0_i32_0 = arith.constant 0 : i32
    %c0_i32_1 = arith.constant 0 : i32
    return %arg0, %c0_i32, %c0_i32_0 : i32, i32, i32
  }
  func.func @transform_8(%arg0: i32) -> (i32, i32, i32) {
    %c0_i32 = arith.constant 0 : i32
    %c0_i32_0 = arith.constant 0 : i32
    %c0_i32_1 = arith.constant 0 : i32
    return %arg0, %c0_i32, %c0_i32_0 : i32, i32, i32
  }
  func.func @transform_9(%arg0: i32) -> (i32, i32) {
    %c0_i32 = arith.constant 0 : i32
    %c0_i32_0 = arith.constant 0 : i32
    %c0_i32_1 = arith.constant 0 : i32
    return %c0_i32, %c0_i32_0 : i32, i32
  }
}

</mosaic_0001>

<llo_original>
// kernel: transformer_forward.1
$region0: #{transformer_forward.1}
  #allocation0 [shape = 'u32[]', space=smem, size = 0x4, offset = 0x4, fixed_abs, tag = 'smem constant byte address 0x4 - core index']
  #allocation1 [shape = 'u32[144,128]{1,0:T(1,128)}', space=vmem, size = 0x12000, scoped, tag = 'internal scratch']
  #allocation2 [shape = 'f32[256,128]{1,0:T(8,128)}', space=vmem, size = 0x20000, scoped, tag = 'scratch operand']
  %s0 = inlined_call_operand.vmem [shape: f32[256,128], index: 0, kind: input, shape index: {}]
  %s1 = inlined_call_operand.vmem [shape: bf16[2,128,128], index: 1, kind: input, shape index: {}]
  %s2 = inlined_call_operand.vmem [shape: bf16[2,128,128], index: 2, kind: input, shape index: {}]
  %s3 = inlined_call_operand.vmem [shape: bf16[2,128,128], index: 3, kind: input, shape index: {}]
  %s4 = inlined_call_operand.vmem [shape: bf16[2,128,128], index: 4, kind: input, shape index: {}]
  %s5 = inlined_call_operand.vmem [shape: bf16[2,128,128], index: 5, kind: input, shape index: {}]
  %s6 = inlined_call_operand.vmem [shape: bf16[2,128,128], index: 6, kind: input, shape index: {}]
  %s7 = inlined_call_operand.vmem [shape: f32[2,16,128], index: 7, kind: input, shape index: {}]
  %s8 = inlined_call_operand.vmem [shape: f32[2,1,128], index: 8, kind: input, shape index: {}]
  %s9 = inlined_call_operand.vmem [shape: f32[256,128], index: 9, kind: output, shape index: {}]
  %s10 = sld [smem:[#allocation0]]
  $region77: #{transformer_forward.1} parent=0
    _
  %s12 = ssub.s32 1, %s10
  %s13 = scalar_select 0, %s12, %s10
  loop: start=0, step=1, limit=4
  $region2: #{transformer_forward.1} parent=0 // loop_pre_header
    _
  $region3: #{transformer_forward.1} parent=0 // loop_header
    %s15 = sphi 0, %s19
    %p16 = scmp.ge.s32.totalorder %s15, 4
    %s23 = sphi 0, %s23
    %s25 = sphi 0, %s23
    %s26 = sphi 0, %s25
    %s40 = sphi 0, %s26
    %s46 = sphi 0, %s48
    %s49 = sphi 0, %s46
    %s50 = sphi 0, %s49
    %s66 = sphi 0, %s50
    %s72 = sphi 0, %s74
    %s75 = sphi 0, %s72
    %s76 = sphi 0, %s75
    %s92 = sphi 0, %s76
    %s98 = sphi 0, %s100
    %s101 = sphi 0, %s98
    %s102 = sphi 0, %s101
    %s118 = sphi 0, %s102
    %s124 = sphi 0, %s126
    %s127 = sphi 0, %s124
    %s128 = sphi 0, %s127
    %s144 = sphi 0, %s128
    %s150 = sphi 0, %s152
    %s153 = sphi 0, %s150
    %s154 = sphi 0, %s153
    %s170 = sphi 0, %s154
    %s176 = sphi 0, %s178
    %s179 = sphi 0, %s176
    %s180 = sphi 0, %s179
    %s196 = sphi 0, %s180
    %s202 = sphi 0, %s204
    %s205 = sphi 0, %s202
    %s206 = sphi 0, %s205
    %s222 = sphi 0, %s206
    %s228 = sphi 0, %s230
    %s231 = sphi 0, %s228
    %s232 = sphi 0, %s231
    %s248 = sphi 0, %s232
    %s252 = sphi 0, %s252
    %s254 = sphi 0, %s252
    %s255 = sphi 0, %s254
    %s269 = sphi 0, %s255
  $region4: #{transformer_forward.1} parent=0 // loop_header_branch
    %18 = sbr.rel (%p16) target = $region8
  $region5: #{transformer_forward.1} parent=0 // loop_body
    %s20 = ssub.s32 %s15, 1
    %s21 = ssub.s32 %s15, 2
    %s22 = sadd.s32 %s15, 1
    %s24 = sadd.s32 %s23, 1
    %p27 = scmp.eq.s32.totalorder %s15, 1
    %p28 = scmp.ne.s32.totalorder %s23, %s25
    %p29 = scmp.eq.s32.totalorder %s15, 0
    %p30 = por %p28, %p29
    %p31 = scmp.ne.s32.totalorder %s23, %s25
    %p32 = scmp.eq.s32.totalorder %s20, 1
    %p33 = por %p31, %p32
    %p34 = scmp.ne.s32.totalorder %s25, %s26
    %p35 = scmp.eq.s32.totalorder %s20, 0
    %p36 = por %p34, %p35
    %p37 = scmp.ne.s32.totalorder %s25, %s26
    %p38 = scmp.eq.s32.totalorder %s21, 1
    %p39 = por %p37, %p38
    %p41 = scmp.ne.s32.totalorder %s26, %s40
    %p42 = scmp.eq.s32.totalorder %s21, 0
    %p43 = por %p41, %p42
    %s44 = ssub.s32 %s15, %s22
    %p45 = scmp.eq.s32.totalorder %s44, 0
    %s47 = sadd.s32 %s46, 1
    %s48 = scalar_select %p45, %s46, %s47
    %p51 = pneg %p45
    %p52 = scmp.eq.s32.totalorder %s15, 1
    %p53 = por %p51, %p52
    %p54 = scmp.ne.s32.totalorder %s46, %s49
    %p55 = scmp.eq.s32.totalorder %s15, 0
    %p56 = por %p54, %p55
    %p57 = scmp.ne.s32.totalorder %s46, %s49
    %p58 = scmp.eq.s32.totalorder %s20, 1
    %p59 = por %p57, %p58
    %p60 = scmp.ne.s32.totalorder %s49, %s50
    %p61 = scmp.eq.s32.totalorder %s20, 0
    %p62 = por %p60, %p61
    %p63 = scmp.ne.s32.totalorder %s49, %s50
    %p64 = scmp.eq.s32.totalorder %s21, 1
    %p65 = por %p63, %p64
    %p67 = scmp.ne.s32.totalorder %s50, %s66
    %p68 = scmp.eq.s32.totalorder %s21, 0
    %p69 = por %p67, %p68
    %s70 = ssub.s32 %s15, %s22
    %p71 = scmp.eq.s32.totalorder %s70, 0
    %s73 = sadd.s32 %s72, 1
    %s74 = scalar_select %p71, %s72, %s73
    %p77 = pneg %p71
    %p78 = scmp.eq.s32.totalorder %s15, 1
    %p79 = por %p77, %p78
    %p80 = scmp.ne.s32.totalorder %s72, %s75
    %p81 = scmp.eq.s32.totalorder %s15, 0
    %p82 = por %p80, %p81
    %p83 = scmp.ne.s32.totalorder %s72, %s75
    %p84 = scmp.eq.s32.totalorder %s20, 1
    %p85 = por %p83, %p84
    %p86 = scmp.ne.s32.totalorder %s75, %s76
    %p87 = scmp.eq.s32.totalorder %s20, 0
    %p88 = por %p86, %p87
    %p89 = scmp.ne.s32.totalorder %s75, %s76
    %p90 = scmp.eq.s32.totalorder %s21, 1
    %p91 = por %p89, %p90
    %p93 = scmp.ne.s32.totalorder %s76, %s92
    %p94 = scmp.eq.s32.totalorder %s21, 0
    %p95 = por %p93, %p94
    %s96 = ssub.s32 %s15, %s22
    %p97 = scmp.eq.s32.totalorder %s96, 0
    %s99 = sadd.s32 %s98, 1
    %s100 = scalar_select %p97, %s98, %s99
    %p103 = pneg %p97
    %p104 = scmp.eq.s32.totalorder %s15, 1
    %p105 = por %p103, %p104
    %p106 = scmp.ne.s32.totalorder %s98, %s101
    %p107 = scmp.eq.s32.totalorder %s15, 0
    %p108 = por %p106, %p107
    %p109 = scmp.ne.s32.totalorder %s98, %s101
    %p110 = scmp.eq.s32.totalorder %s20, 1
    %p111 = por %p109, %p110
    %p112 = scmp.ne.s32.totalorder %s101, %s102
    %p113 = scmp.eq.s32.totalorder %s20, 0
    %p114 = por %p112, %p113
    %p115 = scmp.ne.s32.totalorder %s101, %s102
    %p116 = scmp.eq.s32.totalorder %s21, 1
    %p117 = por %p115, %p116
    %p119 = scmp.ne.s32.totalorder %s102, %s118
    %p120 = scmp.eq.s32.totalorder %s21, 0
    %p121 = por %p119, %p120
    %s122 = ssub.s32 %s15, %s22
    %p123 = scmp.eq.s32.totalorder %s122, 0
    %s125 = sadd.s32 %s124, 1
    %s126 = scalar_select %p123, %s124, %s125
    %p129 = pneg %p123
    %p130 = scmp.eq.s32.totalorder %s15, 1
    %p131 = por %p129, %p130
    %p132 = scmp.ne.s32.totalorder %s124, %s127
    %p133 = scmp.eq.s32.totalorder %s15, 0
    %p134 = por %p132, %p133
    %p135 = scmp.ne.s32.totalorder %s124, %s127
    %p136 = scmp.eq.s32.totalorder %s20, 1
    %p137 = por %p135, %p136
    %p138 = scmp.ne.s32.totalorder %s127, %s128
    %p139 = scmp.eq.s32.totalorder %s20, 0
    %p140 = por %p138, %p139
    %p141 = scmp.ne.s32.totalorder %s127, %s128
    %p142 = scmp.eq.s32.totalorder %s21, 1
    %p143 = por %p141, %p142
    %p145 = scmp.ne.s32.totalorder %s128, %s144
    %p146 = scmp.eq.s32.totalorder %s21, 0
    %p147 = por %p145, %p146
    %s148 = ssub.s32 %s15, %s22
    %p149 = scmp.eq.s32.totalorder %s148, 0
    %s151 = sadd.s32 %s150, 1
    %s152 = scalar_select %p149, %s150, %s151
    %p155 = pneg %p149
    %p156 = scmp.eq.s32.totalorder %s15, 1
    %p157 = por %p155, %p156
    %p158 = scmp.ne.s32.totalorder %s150, %s153
    %p159 = scmp.eq.s32.totalorder %s15, 0
    %p160 = por %p158, %p159
    %p161 = scmp.ne.s32.totalorder %s150, %s153
    %p162 = scmp.eq.s32.totalorder %s20, 1
    %p163 = por %p161, %p162
    %p164 = scmp.ne.s32.totalorder %s153, %s154
    %p165 = scmp.eq.s32.totalorder %s20, 0
    %p166 = por %p164, %p165
    %p167 = scmp.ne.s32.totalorder %s153, %s154
    %p168 = scmp.eq.s32.totalorder %s21, 1
    %p169 = por %p167, %p168
    %p171 = scmp.ne.s32.totalorder %s154, %s170
    %p172 = scmp.eq.s32.totalorder %s21, 0
    %p173 = por %p171, %p172
    %s174 = ssub.s32 %s15, %s22
    %p175 = scmp.eq.s32.totalorder %s174, 0
    %s177 = sadd.s32 %s176, 1
    %s178 = scalar_select %p175, %s176, %s177
    %p181 = pneg %p175
    %p182 = scmp.eq.s32.totalorder %s15, 1
    %p183 = por %p181, %p182
    %p184 = scmp.ne.s32.totalorder %s176, %s179
    %p185 = scmp.eq.s32.totalorder %s15, 0
    %p186 = por %p184, %p185
    %p187 = scmp.ne.s32.totalorder %s176, %s179
    %p188 = scmp.eq.s32.totalorder %s20, 1
    %p189 = por %p187, %p188
    %p190 = scmp.ne.s32.totalorder %s179, %s180
    %p191 = scmp.eq.s32.totalorder %s20, 0
    %p192 = por %p190, %p191
    %p193 = scmp.ne.s32.totalorder %s179, %s180
    %p194 = scmp.eq.s32.totalorder %s21, 1
    %p195 = por %p193, %p194
    %p197 = scmp.ne.s32.totalorder %s180, %s196
    %p198 = scmp.eq.s32.totalorder %s21, 0
    %p199 = por %p197, %p198
    %s200 = ssub.s32 %s15, %s22
    %p201 = scmp.eq.s32.totalorder %s200, 0
    %s203 = sadd.s32 %s202, 1
    %s204 = scalar_select %p201, %s202, %s203
    %p207 = pneg %p201
    %p208 = scmp.eq.s32.totalorder %s15, 1
    %p209 = por %p207, %p208
    %p210 = scmp.ne.s32.totalorder %s202, %s205
    %p211 = scmp.eq.s32.totalorder %s15, 0
    %p212 = por %p210, %p211
    %p213 = scmp.ne.s32.totalorder %s202, %s205
    %p214 = scmp.eq.s32.totalorder %s20, 1
    %p215 = por %p213, %p214
    %p216 = scmp.ne.s32.totalorder %s205, %s206
    %p217 = scmp.eq.s32.totalorder %s20, 0
    %p218 = por %p216, %p217
    %p219 = scmp.ne.s32.totalorder %s205, %s206
    %p220 = scmp.eq.s32.totalorder %s21, 1
    %p221 = por %p219, %p220
    %p223 = scmp.ne.s32.totalorder %s206, %s222
    %p224 = scmp.eq.s32.totalorder %s21, 0
    %p225 = por %p223, %p224
    %s226 = ssub.s32 %s15, %s22
    %p227 = scmp.eq.s32.totalorder %s226, 0
    %s229 = sadd.s32 %s228, 1
    %s230 = scalar_select %p227, %s228, %s229
    %p233 = pneg %p227
    %p234 = scmp.eq.s32.totalorder %s15, 1
    %p235 = por %p233, %p234
    %p236 = scmp.ne.s32.totalorder %s228, %s231
    %p237 = scmp.eq.s32.totalorder %s15, 0
    %p238 = por %p236, %p237
    %p239 = scmp.ne.s32.totalorder %s228, %s231
    %p240 = scmp.eq.s32.totalorder %s20, 1
    %p241 = por %p239, %p240
    %p242 = scmp.ne.s32.totalorder %s231, %s232
    %p243 = scmp.eq.s32.totalorder %s20, 0
    %p244 = por %p242, %p243
    %p245 = scmp.ne.s32.totalorder %s231, %s232
    %p246 = scmp.eq.s32.totalorder %s21, 1
    %p247 = por %p245, %p246
    %p249 = scmp.ne.s32.totalorder %s232, %s248
    %p250 = scmp.eq.s32.totalorder %s21, 0
    %p251 = por %p249, %p250
    %s253 = sadd.s32 %s252, 1
    %p256 = scmp.eq.s32.totalorder %s15, 1
    %p257 = scmp.ne.s32.totalorder %s252, %s254
    %p258 = scmp.eq.s32.totalorder %s15, 0
    %p259 = por %p257, %p258
    %p260 = scmp.ne.s32.totalorder %s252, %s254
    %p261 = scmp.eq.s32.totalorder %s20, 1
    %p262 = por %p260, %p261
    %p263 = scmp.ne.s32.totalorder %s254, %s255
    %p264 = scmp.eq.s32.totalorder %s20, 0
    %p265 = por %p263, %p264
    %p266 = scmp.ne.s32.totalorder %s254, %s255
    %p267 = scmp.eq.s32.totalorder %s21, 1
    %p268 = por %p266, %p267
    %p270 = scmp.ne.s32.totalorder %s255, %s269
    %p271 = scmp.eq.s32.totalorder %s21, 0
    %p272 = por %p270, %p271
    %p273 = scmp.le.s32.totalorder 1, %s15
    %p274 = scmp.lt.s32.totalorder %s15, 3
    %p275 = pnand %p273, %p274
    %p276 = pneg %p275
    // Predicated region
    $region9: #{transformer_forward.1} parent=5 // pred_check
      _
    $region10: #{transformer_forward.1} parent=5 // pred_check_branch
      %278 = sbr.rel (%p275) target = $region12
    $region11: #{transformer_forward.1} parent=5 // pred_region
      %s279 = ssub.s32 %s15, 1
      // Predicated region
      $region13: #{transformer_forward.1} parent=11 // pred_check
        %p280 = pneg %p36
      $region14: #{transformer_forward.1} parent=11 // pred_check_branch
        %282 = sbr.rel (%p280) target = $region16
      $region15: #{transformer_forward.1} parent=11 // pred_region
        _
      $region16: #{transformer_forward.1} parent=11 // pred_fallthru
        _
    $region12: #{transformer_forward.1} parent=5 // pred_fallthru
      _
    %p283 = scmp.lt.s32.totalorder %s15, 2
    // Predicated region
    $region17: #{transformer_forward.1} parent=5 // pred_check
      %p284 = pneg %p283
    $region18: #{transformer_forward.1} parent=5 // pred_check_branch
      %286 = sbr.rel (%p284) target = $region20
    $region19: #{transformer_forward.1} parent=5 // pred_region
      // Predicated region
      $region21: #{transformer_forward.1} parent=19 // pred_check
        %p287 = pneg %p56
      $region22: #{transformer_forward.1} parent=19 // pred_check_branch
        %289 = sbr.rel (%p287) target = $region24
      $region23: #{transformer_forward.1} parent=19 // pred_region
        %p290 = scmp.lt.s32.totalorder %s15, 1
        %s291 = scalar_select %p290, %s15, 1
        %s292 = smul.addr %s291, 16
        %s293 = smul.addr %s292, 4
        %s294 = scalar_lea.vmem %s1, %s293
      $region24: #{transformer_forward.1} parent=19 // pred_fallthru
        _
      // Predicated region
      $region25: #{transformer_forward.1} parent=19 // pred_check
        %p295 = pneg %p82
      $region26: #{transformer_forward.1} parent=19 // pred_check_branch
        %297 = sbr.rel (%p295) target = $region28
      $region27: #{transformer_forward.1} parent=19 // pred_region
        %p298 = scmp.lt.s32.totalorder %s15, 1
        %s299 = scalar_select %p298, %s15, 1
        %s300 = smul.addr %s299, 16
        %s301 = smul.addr %s300, 4
        %s302 = scalar_lea.vmem %s2, %s301
      $region28: #{transformer_forward.1} parent=19 // pred_fallthru
        _
      // Predicated region
      $region29: #{transformer_forward.1} parent=19 // pred_check
        %p303 = pneg %p108
      $region30: #{transformer_forward.1} parent=19 // pred_check_branch
        %305 = sbr.rel (%p303) target = $region32
      $region31: #{transformer_forward.1} parent=19 // pred_region
        %p306 = scmp.lt.s32.totalorder %s15, 1
        %s307 = scalar_select %p306, %s15, 1
        %s308 = smul.addr %s307, 16
        %s309 = smul.addr %s308, 4
        %s310 = scalar_lea.vmem %s3, %s309
      $region32: #{transformer_forward.1} parent=19 // pred_fallthru
        _
      // Predicated region
      $region33: #{transformer_forward.1} parent=19 // pred_check
        %p311 = pneg %p134
      $region34: #{transformer_forward.1} parent=19 // pred_check_branch
        %313 = sbr.rel (%p311) target = $region36
      $region35: #{transformer_forward.1} parent=19 // pred_region
        %p314 = scmp.lt.s32.totalorder %s15, 1
        %s315 = scalar_select %p314, %s15, 1
        %s316 = smul.addr %s315, 16
        %s317 = smul.addr %s316, 4
        %s318 = scalar_lea.vmem %s4, %s317
      $region36: #{transformer_forward.1} parent=19 // pred_fallthru
        _
      // Predicated region
      $region37: #{transformer_forward.1} parent=19 // pred_check
        %p319 = pneg %p160
      $region38: #{transformer_forward.1} parent=19 // pred_check_branch
        %321 = sbr.rel (%p319) target = $region40
      $region39: #{transformer_forward.1} parent=19 // pred_region
        %p322 = scmp.lt.s32.totalorder %s15, 1
        %s323 = scalar_select %p322, %s15, 1
        %s324 = smul.addr %s323, 16
        %s325 = smul.addr %s324, 4
        %s326 = scalar_lea.vmem %s5, %s325
      $region40: #{transformer_forward.1} parent=19 // pred_fallthru
        _
      // Predicated region
      $region41: #{transformer_forward.1} parent=19 // pred_check
        %p327 = pneg %p186
      $region42: #{transformer_forward.1} parent=19 // pred_check_branch
        %329 = sbr.rel (%p327) target = $region44
      $region43: #{transformer_forward.1} parent=19 // pred_region
        %p330 = scmp.lt.s32.totalorder %s15, 1
        %s331 = scalar_select %p330, %s15, 1
        %s332 = smul.addr %s331, 16
        %s333 = smul.addr %s332, 4
        %s334 = scalar_lea.vmem %s6, %s333
      $region44: #{transformer_forward.1} parent=19 // pred_fallthru
        _
      // Predicated region
      $region45: #{transformer_forward.1} parent=19 // pred_check
        %p335 = pneg %p212
      $region46: #{transformer_forward.1} parent=19 // pred_check_branch
        %337 = sbr.rel (%p335) target = $region48
      $region47: #{transformer_forward.1} parent=19 // pred_region
        %p338 = scmp.lt.s32.totalorder %s15, 1
        %s339 = scalar_select %p338, %s15, 1
        %s340 = smul.addr %s339, 2
        %s341 = smul.addr %s340, 8
        %s342 = scalar_lea.vmem %s7, %s341
      $region48: #{transformer_forward.1} parent=19 // pred_fallthru
        _
      // Predicated region
      $region49: #{transformer_forward.1} parent=19 // pred_check
        %p343 = pneg %p238
      $region50: #{transformer_forward.1} parent=19 // pred_check_branch
        %345 = sbr.rel (%p343) target = $region52
      $region51: #{transformer_forward.1} parent=19 // pred_region
        %p346 = scmp.lt.s32.totalorder %s15, 1
        %s347 = scalar_select %p346, %s15, 1
        %s348 = scalar_lea.vmem %s8, %s347
      $region52: #{transformer_forward.1} parent=19 // pred_fallthru
        _
    $region20: #{transformer_forward.1} parent=5 // pred_fallthru
      _
    %p349 = scmp.le.s32.totalorder 1, %s15
    %p350 = scmp.lt.s32.totalorder %s15, 3
    %p351 = pnand %p349, %p350
    %p352 = pneg %p351
    // Predicated region
    $region53: #{transformer_forward.1} parent=5 // pred_check
      _
    $region54: #{transformer_forward.1} parent=5 // pred_check_branch
      %354 = sbr.rel (%p351) target = $region56
    $region55: #{transformer_forward.1} parent=5 // pred_region
      %s355 = ssub.s32 %s15, 1
      %p356 = pneg %p36
      %p357 = pneg %p33
      %p358 = scmp.lt.s32.totalorder %s20, 1
      %s359 = scalar_select %p358, %s20, 1
      %s360 = smul.addr %s359, 16
      %s361 = smul.addr %s360, 4
      %s362 = scalar_lea.vmem %s1, %s361
      %p363 = pneg %p62
      %p364 = pneg %p59
      %p365 = scmp.lt.s32.totalorder %s20, 1
      %s366 = scalar_select %p365, %s20, 1
      %s367 = smul.addr %s366, 16
      %s368 = smul.addr %s367, 4
      %s369 = scalar_lea.vmem %s2, %s368
      %p370 = pneg %p88
      %p371 = pneg %p85
      %p372 = scmp.lt.s32.totalorder %s20, 1
      %s373 = scalar_select %p372, %s20, 1
      %s374 = smul.addr %s373, 16
      %s375 = smul.addr %s374, 4
      %s376 = scalar_lea.vmem %s3, %s375
      %p377 = pneg %p114
      %p378 = pneg %p111
      %p379 = scmp.lt.s32.totalorder %s20, 1
      %s380 = scalar_select %p379, %s20, 1
      %s381 = smul.addr %s380, 16
      %s382 = smul.addr %s381, 4
      %s383 = scalar_lea.vmem %s4, %s382
      %p384 = pneg %p140
      %p385 = pneg %p137
      %p386 = scmp.lt.s32.totalorder %s20, 1
      %s387 = scalar_select %p386, %s20, 1
      %s388 = smul.addr %s387, 16
      %s389 = smul.addr %s388, 4
      %s390 = scalar_lea.vmem %s5, %s389
      %p391 = pneg %p166
      %p392 = pneg %p163
      %p393 = scmp.lt.s32.totalorder %s20, 1
      %s394 = scalar_select %p393, %s20, 1
      %s395 = smul.addr %s394, 16
      %s396 = smul.addr %s395, 4
      %s397 = scalar_lea.vmem %s6, %s396
      %p398 = pneg %p192
      %p399 = pneg %p189
      %p400 = scmp.lt.s32.totalorder %s20, 1
      %s401 = scalar_select %p400, %s20, 1
      %s402 = smul.addr %s401, 2
      %s403 = smul.addr %s402, 8
      %s404 = scalar_lea.vmem %s7, %s403
      %p405 = pneg %p218
      %p406 = pneg %p215
      %p407 = scmp.lt.s32.totalorder %s20, 1
      %s408 = scalar_select %p407, %s20, 1
      %s409 = scalar_lea.vmem %s8, %s408
      %p410 = pneg %p244
      %p411 = pneg %p241
      %p412 = pneg %p265
      %p413 = pneg %p262
      %p414 = scmp.lt.s32.totalorder %s20, 1
      %s415 = scalar_select %p414, %s20, 1
      %s416 = smul.addr %s415, 16
      %s417 = smul.addr %s416, 4
      %s418 = scalar_lea.vmem %s1, %s417
      %p419 = scmp.lt.s32.totalorder %s20, 1
      %s420 = scalar_select %p419, %s20, 1
      %s421 = smul.addr %s420, 16
      %s422 = smul.addr %s421, 4
      %s423 = scalar_lea.vmem %s2, %s422
      %p424 = scmp.lt.s32.totalorder %s20, 1
      %s425 = scalar_select %p424, %s20, 1
      %s426 = smul.addr %s425, 16
      %s427 = smul.addr %s426, 4
      %s428 = scalar_lea.vmem %s3, %s427
      %p429 = scmp.lt.s32.totalorder %s20, 1
      %s430 = scalar_select %p429, %s20, 1
      %s431 = smul.addr %s430, 16
      %s432 = smul.addr %s431, 4
      %s433 = scalar_lea.vmem %s4, %s432
      %p434 = scmp.lt.s32.totalorder %s20, 1
      %s435 = scalar_select %p434, %s20, 1
      %s436 = smul.addr %s435, 16
      %s437 = smul.addr %s436, 4
      %s438 = scalar_lea.vmem %s5, %s437
      %p439 = scmp.lt.s32.totalorder %s20, 1
      %s440 = scalar_select %p439, %s20, 1
      %s441 = smul.addr %s440, 16
      %s442 = smul.addr %s441, 4
      %s443 = scalar_lea.vmem %s6, %s442
      %p444 = scmp.lt.s32.totalorder %s20, 1
      %s445 = scalar_select %p444, %s20, 1
      %s446 = smul.addr %s445, 2
      %s447 = smul.addr %s446, 8
      %s448 = scalar_lea.vmem %s7, %s447
      %p449 = scmp.lt.s32.totalorder %s20, 1
      %s450 = scalar_select %p449, %s20, 1
      %s451 = scalar_lea.vmem %s8, %s450
      %p453 = scmp.eq.s32.totalorder %s20, 0
      // Predicated region
      $region57: #{transformer_forward.1} parent=55 // pred_check
        %p454 = pneg %p453
      $region58: #{transformer_forward.1} parent=55 // pred_check_branch
        %456 = sbr.rel (%p454) target = $region60
      $region59: #{transformer_forward.1} parent=55 // pred_region
        %v457 = vld [vmem:[%s0] sm:$0xff]
        %v458 = vld [vmem:[%s0 + $0x8] sm:$0xff]
        %v459 = vld [vmem:[%s0 + $0x10] sm:$0xff]
        %v460 = vld [vmem:[%s0 + $0x18] sm:$0xff]
        %v461 = vld [vmem:[%s0 + $0x20] sm:$0xff]
        %v462 = vld [vmem:[%s0 + $0x28] sm:$0xff]
        %v463 = vld [vmem:[%s0 + $0x30] sm:$0xff]
        %v464 = vld [vmem:[%s0 + $0x38] sm:$0xff]
        %v465 = vld [vmem:[%s0 + $0x40] sm:$0xff]
        %v466 = vld [vmem:[%s0 + $0x48] sm:$0xff]
        %v467 = vld [vmem:[%s0 + $0x50] sm:$0xff]
        %v468 = vld [vmem:[%s0 + $0x58] sm:$0xff]
        %v469 = vld [vmem:[%s0 + $0x60] sm:$0xff]
        %v470 = vld [vmem:[%s0 + $0x68] sm:$0xff]
        %v471 = vld [vmem:[%s0 + $0x70] sm:$0xff]
        %v472 = vld [vmem:[%s0 + $0x78] sm:$0xff]
        %v473 = vld [vmem:[%s0 + $0x80] sm:$0xff]
        %v474 = vld [vmem:[%s0 + $0x88] sm:$0xff]
        %v475 = vld [vmem:[%s0 + $0x90] sm:$0xff]
        %v476 = vld [vmem:[%s0 + $0x98] sm:$0xff]
        %v477 = vld [vmem:[%s0 + $0xa0] sm:$0xff]
        %v478 = vld [vmem:[%s0 + $0xa8] sm:$0xff]
        %v479 = vld [vmem:[%s0 + $0xb0] sm:$0xff]
        %v480 = vld [vmem:[%s0 + $0xb8] sm:$0xff]
        %v481 = vld [vmem:[%s0 + $0xc0] sm:$0xff]
        %v482 = vld [vmem:[%s0 + $0xc8] sm:$0xff]
        %v483 = vld [vmem:[%s0 + $0xd0] sm:$0xff]
        %v484 = vld [vmem:[%s0 + $0xd8] sm:$0xff]
        %v485 = vld [vmem:[%s0 + $0xe0] sm:$0xff]
        %v486 = vld [vmem:[%s0 + $0xe8] sm:$0xff]
        %v487 = vld [vmem:[%s0 + $0xf0] sm:$0xff]
        %v488 = vld [vmem:[%s0 + $0xf8] sm:$0xff]
        %489 = vst [vmem:[#allocation2] sm:$0xff] %v457
        %490 = vst [vmem:[#allocation2 + $0x8] sm:$0xff] %v458
        %491 = vst [vmem:[#allocation2 + $0x10] sm:$0xff] %v459
        %492 = vst [vmem:[#allocation2 + $0x18] sm:$0xff] %v460
        %493 = vst [vmem:[#allocation2 + $0x20] sm:$0xff] %v461
        %494 = vst [vmem:[#allocation2 + $0x28] sm:$0xff] %v462
        %495 = vst [vmem:[#allocation2 + $0x30] sm:$0xff] %v463
        %496 = vst [vmem:[#allocation2 + $0x38] sm:$0xff] %v464
        %497 = vst [vmem:[#allocation2 + $0x40] sm:$0xff] %v465
        %498 = vst [vmem:[#allocation2 + $0x48] sm:$0xff] %v466
        %499 = vst [vmem:[#allocation2 + $0x50] sm:$0xff] %v467
        %500 = vst [vmem:[#allocation2 + $0x58] sm:$0xff] %v468
        %501 = vst [vmem:[#allocation2 + $0x60] sm:$0xff] %v469
        %502 = vst [vmem:[#allocation2 + $0x68] sm:$0xff] %v470
        %503 = vst [vmem:[#allocation2 + $0x70] sm:$0xff] %v471
        %504 = vst [vmem:[#allocation2 + $0x78] sm:$0xff] %v472
        %505 = vst [vmem:[#allocation2 + $0x80] sm:$0xff] %v473
        %506 = vst [vmem:[#allocation2 + $0x88] sm:$0xff] %v474
        %507 = vst [vmem:[#allocation2 + $0x90] sm:$0xff] %v475
        %508 = vst [vmem:[#allocation2 + $0x98] sm:$0xff] %v476
        %509 = vst [vmem:[#allocation2 + $0xa0] sm:$0xff] %v477
        %510 = vst [vmem:[#allocation2 + $0xa8] sm:$0xff] %v478
        %511 = vst [vmem:[#allocation2 + $0xb0] sm:$0xff] %v479
        %512 = vst [vmem:[#allocation2 + $0xb8] sm:$0xff] %v480
        %513 = vst [vmem:[#allocation2 + $0xc0] sm:$0xff] %v481
        %514 = vst [vmem:[#allocation2 + $0xc8] sm:$0xff] %v482
        %515 = vst [vmem:[#allocation2 + $0xd0] sm:$0xff] %v483
        %516 = vst [vmem:[#allocation2 + $0xd8] sm:$0xff] %v484
        %517 = vst [vmem:[#allocation2 + $0xe0] sm:$0xff] %v485
        %518 = vst [vmem:[#allocation2 + $0xe8] sm:$0xff] %v486
        %519 = vst [vmem:[#allocation2 + $0xf0] sm:$0xff] %v487
        %520 = vst [vmem:[#allocation2 + $0xf8] sm:$0xff] %v488
      $region60: #{transformer_forward.1} parent=55 // pred_fallthru
        _
      %v521 = vld [vmem:[#allocation2] sm:$0xff]
      %v522 = vld [vmem:[#allocation2 + $0x8] sm:$0xff]
      %v523 = vld [vmem:[#allocation2 + $0x10] sm:$0xff]
      %v524 = vld [vmem:[#allocation2 + $0x18] sm:$0xff]
      %v525 = vld [vmem:[#allocation2 + $0x20] sm:$0xff]
      %v526 = vld [vmem:[#allocation2 + $0x28] sm:$0xff]
      %v527 = vld [vmem:[#allocation2 + $0x30] sm:$0xff]
      %v528 = vld [vmem:[#allocation2 + $0x38] sm:$0xff]
      %v529 = vld [vmem:[#allocation2 + $0x40] sm:$0xff]
      %v530 = vld [vmem:[#allocation2 + $0x48] sm:$0xff]
      %v531 = vld [vmem:[#allocation2 + $0x50] sm:$0xff]
      %v532 = vld [vmem:[#allocation2 + $0x58] sm:$0xff]
      %v533 = vld [vmem:[#allocation2 + $0x60] sm:$0xff]
      %v534 = vld [vmem:[#allocation2 + $0x68] sm:$0xff]
      %v535 = vld [vmem:[#allocation2 + $0x70] sm:$0xff]
      %v536 = vld [vmem:[#allocation2 + $0x78] sm:$0xff]
      %v537 = vld [vmem:[#allocation2 + $0x80] sm:$0xff]
      %v538 = vld [vmem:[#allocation2 + $0x88] sm:$0xff]
      %v539 = vld [vmem:[#allocation2 + $0x90] sm:$0xff]
      %v540 = vld [vmem:[#allocation2 + $0x98] sm:$0xff]
      %v541 = vld [vmem:[#allocation2 + $0xa0] sm:$0xff]
      %v542 = vld [vmem:[#allocation2 + $0xa8] sm:$0xff]
      %v543 = vld [vmem:[#allocation2 + $0xb0] sm:$0xff]
      %v544 = vld [vmem:[#allocation2 + $0xb8] sm:$0xff]
      %v545 = vld [vmem:[#allocation2 + $0xc0] sm:$0xff]
      %v546 = vld [vmem:[#allocation2 + $0xc8] sm:$0xff]
      %v547 = vld [vmem:[#allocation2 + $0xd0] sm:$0xff]
      %v548 = vld [vmem:[#allocation2 + $0xd8] sm:$0xff]
      %v549 = vld [vmem:[#allocation2 + $0xe0] sm:$0xff]
      %v550 = vld [vmem:[#allocation2 + $0xe8] sm:$0xff]
      %v551 = vld [vmem:[#allocation2 + $0xf0] sm:$0xff]
      %v552 = vld [vmem:[#allocation2 + $0xf8] sm:$0xff]
      %v553 = vld [vmem:[%s448] sm:$0xff]
      %v554 = vld [vmem:[%s448 + $0x8] sm:$0xff]
      %555 = vadd.xlane.f32.xlu0 %v521
      %v556 = vpop.xlane.xlu0 %555
      %557 = vadd.xlane.f32.xlu0 %v522
      %v558 = vpop.xlane.xlu0 %557
      %559 = vadd.xlane.f32.xlu0 %v523
      %v560 = vpop.xlane.xlu0 %559
      %561 = vadd.xlane.f32.xlu0 %v524
      %v562 = vpop.xlane.xlu0 %561
      %563 = vadd.xlane.f32.xlu0 %v525
      %v564 = vpop.xlane.xlu0 %563
      %565 = vadd.xlane.f32.xlu0 %v526
      %v566 = vpop.xlane.xlu0 %565
      %567 = vadd.xlane.f32.xlu0 %v527
      %v568 = vpop.xlane.xlu0 %567
      %569 = vadd.xlane.f32.xlu0 %v528
      %v570 = vpop.xlane.xlu0 %569
      %571 = vadd.xlane.f32.xlu0 %v529
      %v572 = vpop.xlane.xlu0 %571
      %573 = vadd.xlane.f32.xlu0 %v530
      %v574 = vpop.xlane.xlu0 %573
      %575 = vadd.xlane.f32.xlu0 %v531
      %v576 = vpop.xlane.xlu0 %575
      %577 = vadd.xlane.f32.xlu0 %v532
      %v578 = vpop.xlane.xlu0 %577
      %579 = vadd.xlane.f32.xlu0 %v533
      %v580 = vpop.xlane.xlu0 %579
      %581 = vadd.xlane.f32.xlu0 %v534
      %v582 = vpop.xlane.xlu0 %581
      %583 = vadd.xlane.f32.xlu0 %v535
      %v584 = vpop.xlane.xlu0 %583
      %585 = vadd.xlane.f32.xlu0 %v536
      %v586 = vpop.xlane.xlu0 %585
      %587 = vadd.xlane.f32.xlu0 %v537
      %v588 = vpop.xlane.xlu0 %587
      %589 = vadd.xlane.f32.xlu0 %v538
      %v590 = vpop.xlane.xlu0 %589
      %591 = vadd.xlane.f32.xlu0 %v539
      %v592 = vpop.xlane.xlu0 %591
      %593 = vadd.xlane.f32.xlu0 %v540
      %v594 = vpop.xlane.xlu0 %593
      %595 = vadd.xlane.f32.xlu0 %v541
      %v596 = vpop.xlane.xlu0 %595
      %597 = vadd.xlane.f32.xlu0 %v542
      %v598 = vpop.xlane.xlu0 %597
      %599 = vadd.xlane.f32.xlu0 %v543
      %v600 = vpop.xlane.xlu0 %599
      %601 = vadd.xlane.f32.xlu0 %v544
      %v602 = vpop.xlane.xlu0 %601
      %603 = vadd.xlane.f32.xlu0 %v545
      %v604 = vpop.xlane.xlu0 %603
      %605 = vadd.xlane.f32.xlu0 %v546
      %v606 = vpop.xlane.xlu0 %605
      %607 = vadd.xlane.f32.xlu0 %v547
      %v608 = vpop.xlane.xlu0 %607
      %609 = vadd.xlane.f32.xlu0 %v548
      %v610 = vpop.xlane.xlu0 %609
      %611 = vadd.xlane.f32.xlu0 %v549
      %v612 = vpop.xlane.xlu0 %611
      %613 = vadd.xlane.f32.xlu0 %v550
      %v614 = vpop.xlane.xlu0 %613
      %615 = vadd.xlane.f32.xlu0 %v551
      %v616 = vpop.xlane.xlu0 %615
      %617 = vadd.xlane.f32.xlu0 %v552
      %v618 = vpop.xlane.xlu0 %617
      %v619 = vmul.f32 %v521, %v521
      %v620 = vmul.f32 %v522, %v522
      %v621 = vmul.f32 %v523, %v523
      %v622 = vmul.f32 %v524, %v524
      %v623 = vmul.f32 %v525, %v525
      %v624 = vmul.f32 %v526, %v526
      %v625 = vmul.f32 %v527, %v527
      %v626 = vmul.f32 %v528, %v528
      %v627 = vmul.f32 %v529, %v529
      %v628 = vmul.f32 %v530, %v530
      %v629 = vmul.f32 %v531, %v531
      %v630 = vmul.f32 %v532, %v532
      %v631 = vmul.f32 %v533, %v533
      %v632 = vmul.f32 %v534, %v534
      %v633 = vmul.f32 %v535, %v535
      %v634 = vmul.f32 %v536, %v536
      %v635 = vmul.f32 %v537, %v537
      %v636 = vmul.f32 %v538, %v538
      %v637 = vmul.f32 %v539, %v539
      %v638 = vmul.f32 %v540, %v540
      %v639 = vmul.f32 %v541, %v541
      %v640 = vmul.f32 %v542, %v542
      %v641 = vmul.f32 %v543, %v543
      %v642 = vmul.f32 %v544, %v544
      %v643 = vmul.f32 %v545, %v545
      %v644 = vmul.f32 %v546, %v546
      %v645 = vmul.f32 %v547, %v547
      %v646 = vmul.f32 %v548, %v548
      %v647 = vmul.f32 %v549, %v549
      %v648 = vmul.f32 %v550, %v550
      %v649 = vmul.f32 %v551, %v551
      %v650 = vmul.f32 %v552, %v552
      %651 = vadd.xlane.f32.xlu0 %v619
      %v652 = vpop.xlane.xlu0 %651
      %653 = vadd.xlane.f32.xlu0 %v620
      %v654 = vpop.xlane.xlu0 %653
      %655 = vadd.xlane.f32.xlu0 %v621
      %v656 = vpop.xlane.xlu0 %655
      %657 = vadd.xlane.f32.xlu0 %v622
      %v658 = vpop.xlane.xlu0 %657
      %659 = vadd.xlane.f32.xlu0 %v623
      %v660 = vpop.xlane.xlu0 %659
      %661 = vadd.xlane.f32.xlu0 %v624
      %v662 = vpop.xlane.xlu0 %661
      %663 = vadd.xlane.f32.xlu0 %v625
      %v664 = vpop.xlane.xlu0 %663
      %665 = vadd.xlane.f32.xlu0 %v626
      %v666 = vpop.xlane.xlu0 %665
      %667 = vadd.xlane.f32.xlu0 %v627
      %v668 = vpop.xlane.xlu0 %667
      %669 = vadd.xlane.f32.xlu0 %v628
      %v670 = vpop.xlane.xlu0 %669
      %671 = vadd.xlane.f32.xlu0 %v629
      %v672 = vpop.xlane.xlu0 %671
      %673 = vadd.xlane.f32.xlu0 %v630
      %v674 = vpop.xlane.xlu0 %673
      %675 = vadd.xlane.f32.xlu0 %v631
      %v676 = vpop.xlane.xlu0 %675
      %677 = vadd.xlane.f32.xlu0 %v632
      %v678 = vpop.xlane.xlu0 %677
      %679 = vadd.xlane.f32.xlu0 %v633
      %v680 = vpop.xlane.xlu0 %679
      %681 = vadd.xlane.f32.xlu0 %v634
      %v682 = vpop.xlane.xlu0 %681
      %683 = vadd.xlane.f32.xlu0 %v635
      %v684 = vpop.xlane.xlu0 %683
      %685 = vadd.xlane.f32.xlu0 %v636
      %v686 = vpop.xlane.xlu0 %685
      %687 = vadd.xlane.f32.xlu0 %v637
      %v688 = vpop.xlane.xlu0 %687
      %689 = vadd.xlane.f32.xlu0 %v638
      %v690 = vpop.xlane.xlu0 %689
      %691 = vadd.xlane.f32.xlu0 %v639
      %v692 = vpop.xlane.xlu0 %691
      %693 = vadd.xlane.f32.xlu0 %v640
      %v694 = vpop.xlane.xlu0 %693
      %695 = vadd.xlane.f32.xlu0 %v641
      %v696 = vpop.xlane.xlu0 %695
      %697 = vadd.xlane.f32.xlu0 %v642
      %v698 = vpop.xlane.xlu0 %697
      %699 = vadd.xlane.f32.xlu0 %v643
      %v700 = vpop.xlane.xlu0 %699
      %701 = vadd.xlane.f32.xlu0 %v644
      %v702 = vpop.xlane.xlu0 %701
      %703 = vadd.xlane.f32.xlu0 %v645
      %v704 = vpop.xlane.xlu0 %703
      %705 = vadd.xlane.f32.xlu0 %v646
      %v706 = vpop.xlane.xlu0 %705
      %707 = vadd.xlane.f32.xlu0 %v647
      %v708 = vpop.xlane.xlu0 %707
      %709 = vadd.xlane.f32.xlu0 %v648
      %v710 = vpop.xlane.xlu0 %709
      %711 = vadd.xlane.f32.xlu0 %v649
      %v712 = vpop.xlane.xlu0 %711
      %713 = vadd.xlane.f32.xlu0 %v650
      %v714 = vpop.xlane.xlu0 %713
      %v715 = vrcp.pop 32.0
      %v716 = vmul.f32 %v556, %v715
      %v717 = vmul.f32 %v558, %v715
      %v718 = vmul.f32 %v560, %v715
      %v719 = vmul.f32 %v562, %v715
      %v720 = vmul.f32 %v564, %v715
      %v721 = vmul.f32 %v566, %v715
      %v722 = vmul.f32 %v568, %v715
      %v723 = vmul.f32 %v570, %v715
      %v724 = vmul.f32 %v572, %v715
      %v725 = vmul.f32 %v574, %v715
      %v726 = vmul.f32 %v576, %v715
      %v727 = vmul.f32 %v578, %v715
      %v728 = vmul.f32 %v580, %v715
      %v729 = vmul.f32 %v582, %v715
      %v730 = vmul.f32 %v584, %v715
      %v731 = vmul.f32 %v586, %v715
      %v732 = vmul.f32 %v588, %v715
      %v733 = vmul.f32 %v590, %v715
      %v734 = vmul.f32 %v592, %v715
      %v735 = vmul.f32 %v594, %v715
      %v736 = vmul.f32 %v596, %v715
      %v737 = vmul.f32 %v598, %v715
      %v738 = vmul.f32 %v600, %v715
      %v739 = vmul.f32 %v602, %v715
      %v740 = vmul.f32 %v604, %v715
      %v741 = vmul.f32 %v606, %v715
      %v742 = vmul.f32 %v608, %v715
      %v743 = vmul.f32 %v610, %v715
      %v744 = vmul.f32 %v612, %v715
      %v745 = vmul.f32 %v614, %v715
      %v746 = vmul.f32 %v616, %v715
      %v747 = vmul.f32 %v618, %v715
      %v748 = vmul.f32 %v652, %v715
      %v749 = vmul.f32 %v654, %v715
      %v750 = vmul.f32 %v656, %v715
      %v751 = vmul.f32 %v658, %v715
      %v752 = vmul.f32 %v660, %v715
      %v753 = vmul.f32 %v662, %v715
      %v754 = vmul.f32 %v664, %v715
      %v755 = vmul.f32 %v666, %v715
      %v756 = vmul.f32 %v668, %v715
      %v757 = vmul.f32 %v670, %v715
      %v758 = vmul.f32 %v672, %v715
      %v759 = vmul.f32 %v674, %v715
      %v760 = vmul.f32 %v676, %v715
      %v761 = vmul.f32 %v678, %v715
      %v762 = vmul.f32 %v680, %v715
      %v763 = vmul.f32 %v682, %v715
      %v764 = vmul.f32 %v684, %v715
      %v765 = vmul.f32 %v686, %v715
      %v766 = vmul.f32 %v688, %v715
      %v767 = vmul.f32 %v690, %v715
      %v768 = vmul.f32 %v692, %v715
      %v769 = vmul.f32 %v694, %v715
      %v770 = vmul.f32 %v696, %v715
      %v771 = vmul.f32 %v698, %v715
      %v772 = vmul.f32 %v700, %v715
      %v773 = vmul.f32 %v702, %v715
      %v774 = vmul.f32 %v704, %v715
      %v775 = vmul.f32 %v706, %v715
      %v776 = vmul.f32 %v708, %v715
      %v777 = vmul.f32 %v710, %v715
      %v778 = vmul.f32 %v712, %v715
      %v779 = vmul.f32 %v714, %v715
      %v780 = vmul.f32 %v716, %v716
      %v781 = vmul.f32 %v717, %v717
      %v782 = vmul.f32 %v718, %v718
      %v783 = vmul.f32 %v719, %v719
      %v784 = vmul.f32 %v720, %v720
      %v785 = vmul.f32 %v721, %v721
      %v786 = vmul.f32 %v722, %v722
      %v787 = vmul.f32 %v723, %v723
      %v788 = vmul.f32 %v724, %v724
      %v789 = vmul.f32 %v725, %v725
      %v790 = vmul.f32 %v726, %v726
      %v791 = vmul.f32 %v727, %v727
      %v792 = vmul.f32 %v728, %v728
      %v793 = vmul.f32 %v729, %v729
      %v794 = vmul.f32 %v730, %v730
      %v795 = vmul.f32 %v731, %v731
      %v796 = vmul.f32 %v732, %v732
      %v797 = vmul.f32 %v733, %v733
      %v798 = vmul.f32 %v734, %v734
      %v799 = vmul.f32 %v735, %v735
      %v800 = vmul.f32 %v736, %v736
      %v801 = vmul.f32 %v737, %v737
      %v802 = vmul.f32 %v738, %v738
      %v803 = vmul.f32 %v739, %v739
      %v804 = vmul.f32 %v740, %v740
      %v805 = vmul.f32 %v741, %v741
      %v806 = vmul.f32 %v742, %v742
      %v807 = vmul.f32 %v743, %v743
      %v808 = vmul.f32 %v744, %v744
      %v809 = vmul.f32 %v745, %v745
      %v810 = vmul.f32 %v746, %v746
      %v811 = vmul.f32 %v747, %v747
      %v812 = vsub.f32 %v748, %v780
      %v813 = vsub.f32 %v749, %v781
      %v814 = vsub.f32 %v750, %v782
      %v815 = vsub.f32 %v751, %v783
      %v816 = vsub.f32 %v752, %v784
      %v817 = vsub.f32 %v753, %v785
      %v818 = vsub.f32 %v754, %v786
      %v819 = vsub.f32 %v755, %v787
      %v820 = vsub.f32 %v756, %v788
      %v821 = vsub.f32 %v757, %v789
      %v822 = vsub.f32 %v758, %v790
      %v823 = vsub.f32 %v759, %v791
      %v824 = vsub.f32 %v760, %v792
      %v825 = vsub.f32 %v761, %v793
      %v826 = vsub.f32 %v762, %v794
      %v827 = vsub.f32 %v763, %v795
      %v828 = vsub.f32 %v764, %v796
      %v829 = vsub.f32 %v765, %v797
      %v830 = vsub.f32 %v766, %v798
      %v831 = vsub.f32 %v767, %v799
      %v832 = vsub.f32 %v768, %v800
      %v833 = vsub.f32 %v769, %v801
      %v834 = vsub.f32 %v770, %v802
      %v835 = vsub.f32 %v771, %v803
      %v836 = vsub.f32 %v772, %v804
      %v837 = vsub.f32 %v773, %v805
      %v838 = vsub.f32 %v774, %v806
      %v839 = vsub.f32 %v775, %v807
      %v840 = vsub.f32 %v776, %v808
      %v841 = vsub.f32 %v777, %v809
      %v842 = vsub.f32 %v778, %v810
      %v843 = vsub.f32 %v779, %v811
      %v844 = vmax.f32 %v812, 0.0
      %v845 = vmax.f32 %v813, 0.0
      %v846 = vmax.f32 %v814, 0.0
      %v847 = vmax.f32 %v815, 0.0
      %v848 = vmax.f32 %v816, 0.0
      %v849 = vmax.f32 %v817, 0.0
      %v850 = vmax.f32 %v818, 0.0
      %v851 = vmax.f32 %v819, 0.0
      %v852 = vmax.f32 %v820, 0.0
      %v853 = vmax.f32 %v821, 0.0
      %v854 = vmax.f32 %v822, 0.0
      %v855 = vmax.f32 %v823, 0.0
      %v856 = vmax.f32 %v824, 0.0
      %v857 = vmax.f32 %v825, 0.0
      %v858 = vmax.f32 %v826, 0.0
      %v859 = vmax.f32 %v827, 0.0
      %v860 = vmax.f32 %v828, 0.0
      %v861 = vmax.f32 %v829, 0.0
      %v862 = vmax.f32 %v830, 0.0
      %v863 = vmax.f32 %v831, 0.0
      %v864 = vmax.f32 %v832, 0.0
      %v865 = vmax.f32 %v833, 0.0
      %v866 = vmax.f32 %v834, 0.0
      %v867 = vmax.f32 %v835, 0.0
      %v868 = vmax.f32 %v836, 0.0
      %v869 = vmax.f32 %v837, 0.0
      %v870 = vmax.f32 %v838, 0.0
      %v871 = vmax.f32 %v839, 0.0
      %v872 = vmax.f32 %v840, 0.0
      %v873 = vmax.f32 %v841, 0.0
      %v874 = vmax.f32 %v842, 0.0
      %v875 = vmax.f32 %v843, 0.0
      %v876 = vadd.f32 %v844, 1e-05
      %v877 = vadd.f32 %v845, 1e-05
      %v878 = vadd.f32 %v846, 1e-05
      %v879 = vadd.f32 %v847, 1e-05
      %v880 = vadd.f32 %v848, 1e-05
      %v881 = vadd.f32 %v849, 1e-05
      %v882 = vadd.f32 %v850, 1e-05
      %v883 = vadd.f32 %v851, 1e-05
      %v884 = vadd.f32 %v852, 1e-05
      %v885 = vadd.f32 %v853, 1e-05
      %v886 = vadd.f32 %v854, 1e-05
      %v887 = vadd.f32 %v855, 1e-05
      %v888 = vadd.f32 %v856, 1e-05
      %v889 = vadd.f32 %v857, 1e-05
      %v890 = vadd.f32 %v858, 1e-05
      %v891 = vadd.f32 %v859, 1e-05
      %v892 = vadd.f32 %v860, 1e-05
      %v893 = vadd.f32 %v861, 1e-05
      %v894 = vadd.f32 %v862, 1e-05
      %v895 = vadd.f32 %v863, 1e-05
      %v896 = vadd.f32 %v864, 1e-05
      %v897 = vadd.f32 %v865, 1e-05
      %v898 = vadd.f32 %v866, 1e-05
      %v899 = vadd.f32 %v867, 1e-05
      %v900 = vadd.f32 %v868, 1e-05
      %v901 = vadd.f32 %v869, 1e-05
      %v902 = vadd.f32 %v870, 1e-05
      %v903 = vadd.f32 %v871, 1e-05
      %v904 = vadd.f32 %v872, 1e-05
      %v905 = vadd.f32 %v873, 1e-05
      %v906 = vadd.f32 %v874, 1e-05
      %v907 = vadd.f32 %v875, 1e-05
      %v908 = vrsqrt.pop %v876
      %v909 = vrsqrt.pop %v877
      %v910 = vrsqrt.pop %v878
      %v911 = vrsqrt.pop %v879
      %v912 = vrsqrt.pop %v880
      %v913 = vrsqrt.pop %v881
      %v914 = vrsqrt.pop %v882
      %v915 = vrsqrt.pop %v883
      %v916 = vrsqrt.pop %v884
      %v917 = vrsqrt.pop %v885
      %v918 = vrsqrt.pop %v886
      %v919 = vrsqrt.pop %v887
      %v920 = vrsqrt.pop %v888
      %v921 = vrsqrt.pop %v889
      %v922 = vrsqrt.pop %v890
      %v923 = vrsqrt.pop %v891
      %v924 = vrsqrt.pop %v892
      %v925 = vrsqrt.pop %v893
      %v926 = vrsqrt.pop %v894
      %v927 = vrsqrt.pop %v895
      %v928 = vrsqrt.pop %v896
      %v929 = vrsqrt.pop %v897
      %v930 = vrsqrt.pop %v898
      %v931 = vrsqrt.pop %v899
      %v932 = vrsqrt.pop %v900
      %v933 = vrsqrt.pop %v901
      %v934 = vrsqrt.pop %v902
      %v935 = vrsqrt.pop %v903
      %v936 = vrsqrt.pop %v904
      %v937 = vrsqrt.pop %v905
      %v938 = vrsqrt.pop %v906
      %v939 = vrsqrt.pop %v907
      %v940 = vsub.f32 %v521, %v716
      %v941 = vsub.f32 %v522, %v717
      %v942 = vsub.f32 %v523, %v718
      %v943 = vsub.f32 %v524, %v719
      %v944 = vsub.f32 %v525, %v720
      %v945 = vsub.f32 %v526, %v721
      %v946 = vsub.f32 %v527, %v722
      %v947 = vsub.f32 %v528, %v723
      %v948 = vsub.f32 %v529, %v724
      %v949 = vsub.f32 %v530, %v725
      %v950 = vsub.f32 %v531, %v726
      %v951 = vsub.f32 %v532, %v727
      %v952 = vsub.f32 %v533, %v728
      %v953 = vsub.f32 %v534, %v729
      %v954 = vsub.f32 %v535, %v730
      %v955 = vsub.f32 %v536, %v731
      %v956 = vsub.f32 %v537, %v732
      %v957 = vsub.f32 %v538, %v733
      %v958 = vsub.f32 %v539, %v734
      %v959 = vsub.f32 %v540, %v735
      %v960 = vsub.f32 %v541, %v736
      %v961 = vsub.f32 %v542, %v737
      %v962 = vsub.f32 %v543, %v738
      %v963 = vsub.f32 %v544, %v739
      %v964 = vsub.f32 %v545, %v740
      %v965 = vsub.f32 %v546, %v741
      %v966 = vsub.f32 %v547, %v742
      %v967 = vsub.f32 %v548, %v743
      %v968 = vsub.f32 %v549, %v744
      %v969 = vsub.f32 %v550, %v745
      %v970 = vsub.f32 %v551, %v746
      %v971 = vsub.f32 %v552, %v747
      %v972 = vmul.f32 %v940, %v908
      %v973 = vmul.f32 %v941, %v909
      %v974 = vmul.f32 %v942, %v910
      %v975 = vmul.f32 %v943, %v911
      %v976 = vmul.f32 %v944, %v912
      %v977 = vmul.f32 %v945, %v913
      %v978 = vmul.f32 %v946, %v914
      %v979 = vmul.f32 %v947, %v915
      %v980 = vmul.f32 %v948, %v916
      %v981 = vmul.f32 %v949, %v917
      %v982 = vmul.f32 %v950, %v918
      %v983 = vmul.f32 %v951, %v919
      %v984 = vmul.f32 %v952, %v920
      %v985 = vmul.f32 %v953, %v921
      %v986 = vmul.f32 %v954, %v922
      %v987 = vmul.f32 %v955, %v923
      %v988 = vmul.f32 %v956, %v924
      %v989 = vmul.f32 %v957, %v925
      %v990 = vmul.f32 %v958, %v926
      %v991 = vmul.f32 %v959, %v927
      %v992 = vmul.f32 %v960, %v928
      %v993 = vmul.f32 %v961, %v929
      %v994 = vmul.f32 %v962, %v930
      %v995 = vmul.f32 %v963, %v931
      %v996 = vmul.f32 %v964, %v932
      %v997 = vmul.f32 %v965, %v933
      %v998 = vmul.f32 %v966, %v934
      %v999 = vmul.f32 %v967, %v935
      %v1000 = vmul.f32 %v968, %v936
      %v1001 = vmul.f32 %v969, %v937
      %v1002 = vmul.f32 %v970, %v938
      %v1003 = vmul.f32 %v971, %v939
      %v1004 = vlaneseq
      %v1005 = vshrl.u32 %v1004, 7
      %v1006 = vsub.s32 0, %v1005
      %v1007 = vrot.slane %v553, %v1006
      %v1008 = vmul.f32 %v972, %v1007
      %v1009 = vmul.f32 %v973, %v1007
      %v1010 = vmul.f32 %v974, %v1007
      %v1011 = vmul.f32 %v975, %v1007
      %v1012 = vmul.f32 %v976, %v1007
      %v1013 = vmul.f32 %v977, %v1007
      %v1014 = vmul.f32 %v978, %v1007
      %v1015 = vmul.f32 %v979, %v1007
      %v1016 = vmul.f32 %v980, %v1007
      %v1017 = vmul.f32 %v981, %v1007
      %v1018 = vmul.f32 %v982, %v1007
      %v1019 = vmul.f32 %v983, %v1007
      %v1020 = vmul.f32 %v984, %v1007
      %v1021 = vmul.f32 %v985, %v1007
      %v1022 = vmul.f32 %v986, %v1007
      %v1023 = vmul.f32 %v987, %v1007
      %v1024 = vmul.f32 %v988, %v1007
      %v1025 = vmul.f32 %v989, %v1007
      %v1026 = vmul.f32 %v990, %v1007
      %v1027 = vmul.f32 %v991, %v1007
      %v1028 = vmul.f32 %v992, %v1007
      %v1029 = vmul.f32 %v993, %v1007
      %v1030 = vmul.f32 %v994, %v1007
      %v1031 = vmul.f32 %v995, %v1007
      %v1032 = vmul.f32 %v996, %v1007
      %v1033 = vmul.f32 %v997, %v1007
      %v1034 = vmul.f32 %v998, %v1007
      %v1035 = vmul.f32 %v999, %v1007
      %v1036 = vmul.f32 %v1000, %v1007
      %v1037 = vmul.f32 %v1001, %v1007
      %v1038 = vmul.f32 %v1002, %v1007
      %v1039 = vmul.f32 %v1003, %v1007
      %v1040 = vlaneseq
      %v1041 = vshrl.u32 %v1040, 7
      %v1042 = vsub.s32 1, %v1041
      %v1043 = vrot.slane %v553, %v1042
      %v1044 = vadd.f32 %v1008, %v1043
      %v1045 = vadd.f32 %v1009, %v1043
      %v1046 = vadd.f32 %v1010, %v1043
      %v1047 = vadd.f32 %v1011, %v1043
      %v1048 = vadd.f32 %v1012, %v1043
      %v1049 = vadd.f32 %v1013, %v1043
      %v1050 = vadd.f32 %v1014, %v1043
      %v1051 = vadd.f32 %v1015, %v1043
      %v1052 = vadd.f32 %v1016, %v1043
      %v1053 = vadd.f32 %v1017, %v1043
      %v1054 = vadd.f32 %v1018, %v1043
      %v1055 = vadd.f32 %v1019, %v1043
      %v1056 = vadd.f32 %v1020, %v1043
      %v1057 = vadd.f32 %v1021, %v1043
      %v1058 = vadd.f32 %v1022, %v1043
      %v1059 = vadd.f32 %v1023, %v1043
      %v1060 = vadd.f32 %v1024, %v1043
      %v1061 = vadd.f32 %v1025, %v1043
      %v1062 = vadd.f32 %v1026, %v1043
      %v1063 = vadd.f32 %v1027, %v1043
      %v1064 = vadd.f32 %v1028, %v1043
      %v1065 = vadd.f32 %v1029, %v1043
      %v1066 = vadd.f32 %v1030, %v1043
      %v1067 = vadd.f32 %v1031, %v1043
      %v1068 = vadd.f32 %v1032, %v1043
      %v1069 = vadd.f32 %v1033, %v1043
      %v1070 = vadd.f32 %v1034, %v1043
      %v1071 = vadd.f32 %v1035, %v1043
      %v1072 = vadd.f32 %v1036, %v1043
      %v1073 = vadd.f32 %v1037, %v1043
      %v1074 = vadd.f32 %v1038, %v1043
      %v1075 = vadd.f32 %v1039, %v1043
      %v1076 = vpack.c.bf16 %v1045, %v1044
      %v1077 = vpack.c.bf16 %v1047, %v1046
      %v1078 = vpack.c.bf16 %v1049, %v1048
      %v1079 = vpack.c.bf16 %v1051, %v1050
      %v1080 = vpack.c.bf16 %v1053, %v1052
      %v1081 = vpack.c.bf16 %v1055, %v1054
      %v1082 = vpack.c.bf16 %v1057, %v1056
      %v1083 = vpack.c.bf16 %v1059, %v1058
      %v1084 = vpack.c.bf16 %v1061, %v1060
      %v1085 = vpack.c.bf16 %v1063, %v1062
      %v1086 = vpack.c.bf16 %v1065, %v1064
      %v1087 = vpack.c.bf16 %v1067, %v1066
      %v1088 = vpack.c.bf16 %v1069, %v1068
      %v1089 = vpack.c.bf16 %v1071, %v1070
      %v1090 = vpack.c.bf16 %v1073, %v1072
      %v1091 = vpack.c.bf16 %v1075, %v1074
      %v1092 = vld [vmem:[%s418] sm:$0xf]
      %v1093 = vld [vmem:[%s418 + $0x4] sm:$0xf]
      %v1094 = vld [vmem:[%s418 + $0x8] sm:$0xf]
      %v1095 = vld [vmem:[%s418 + $0xc] sm:$0xf]
      %v1096 = vld [vmem:[%s418 + $0x10] sm:$0xf]
      %v1097 = vld [vmem:[%s418 + $0x14] sm:$0xf]
      %v1098 = vld [vmem:[%s418 + $0x18] sm:$0xf]
      %v1099 = vld [vmem:[%s418 + $0x1c] sm:$0xf]
      %v1100 = vld [vmem:[%s418 + $0x20] sm:$0xf]
      %v1101 = vld [vmem:[%s418 + $0x24] sm:$0xf]
      %v1102 = vld [vmem:[%s418 + $0x28] sm:$0xf]
      %v1103 = vld [vmem:[%s418 + $0x2c] sm:$0xf]
      %v1104 = vld [vmem:[%s418 + $0x30] sm:$0xf]
      %v1105 = vld [vmem:[%s418 + $0x34] sm:$0xf]
      %v1106 = vld [vmem:[%s418 + $0x38] sm:$0xf]
      %v1107 = vld [vmem:[%s418 + $0x3c] sm:$0xf]
      %v1108 = vld [vmem:[%s423] sm:$0xf]
      %v1109 = vld [vmem:[%s423 + $0x4] sm:$0xf]
      %v1110 = vld [vmem:[%s423 + $0x8] sm:$0xf]
      %v1111 = vld [vmem:[%s423 + $0xc] sm:$0xf]
      %v1112 = vld [vmem:[%s423 + $0x10] sm:$0xf]
      %v1113 = vld [vmem:[%s423 + $0x14] sm:$0xf]
      %v1114 = vld [vmem:[%s423 + $0x18] sm:$0xf]
      %v1115 = vld [vmem:[%s423 + $0x1c] sm:$0xf]
      %v1116 = vld [vmem:[%s423 + $0x20] sm:$0xf]
      %v1117 = vld [vmem:[%s423 + $0x24] sm:$0xf]
      %v1118 = vld [vmem:[%s423 + $0x28] sm:$0xf]
      %v1119 = vld [vmem:[%s423 + $0x2c] sm:$0xf]
      %v1120 = vld [vmem:[%s423 + $0x30] sm:$0xf]
      %v1121 = vld [vmem:[%s423 + $0x34] sm:$0xf]
      %v1122 = vld [vmem:[%s423 + $0x38] sm:$0xf]
      %v1123 = vld [vmem:[%s423 + $0x3c] sm:$0xf]
      %v1124 = vld [vmem:[%s428] sm:$0xf]
      %v1125 = vld [vmem:[%s428 + $0x4] sm:$0xf]
      %v1126 = vld [vmem:[%s428 + $0x8] sm:$0xf]
      %v1127 = vld [vmem:[%s428 + $0xc] sm:$0xf]
      %v1128 = vld [vmem:[%s428 + $0x10] sm:$0xf]
      %v1129 = vld [vmem:[%s428 + $0x14] sm:$0xf]
      %v1130 = vld [vmem:[%s428 + $0x18] sm:$0xf]
      %v1131 = vld [vmem:[%s428 + $0x1c] sm:$0xf]
      %v1132 = vld [vmem:[%s428 + $0x20] sm:$0xf]
      %v1133 = vld [vmem:[%s428 + $0x24] sm:$0xf]
      %v1134 = vld [vmem:[%s428 + $0x28] sm:$0xf]
      %v1135 = vld [vmem:[%s428 + $0x2c] sm:$0xf]
      %v1136 = vld [vmem:[%s428 + $0x30] sm:$0xf]
      %v1137 = vld [vmem:[%s428 + $0x34] sm:$0xf]
      %v1138 = vld [vmem:[%s428 + $0x38] sm:$0xf]
      %v1139 = vld [vmem:[%s428 + $0x3c] sm:$0xf]
      %v1140 = vld [vmem:[%s433] sm:$0xf]
      %v1141 = vld [vmem:[%s433 + $0x4] sm:$0xf]
      %v1142 = vld [vmem:[%s433 + $0x8] sm:$0xf]
      %v1143 = vld [vmem:[%s433 + $0xc] sm:$0xf]
      %v1160 = vunpack.c.l.b16 %v1092
      %v1161 = vunpack.c.l.b16 %v1093
      %v1162 = vunpack.c.l.b16 %v1094
      %v1163 = vunpack.c.l.b16 %v1095
      %v1164 = vunpack.c.l.b16 %v1096
      %v1165 = vunpack.c.l.b16 %v1097
      %v1166 = vunpack.c.l.b16 %v1098
      %v1167 = vunpack.c.l.b16 %v1099
      %v1168 = vunpack.c.l.b16 %v1100
      %v1169 = vunpack.c.l.b16 %v1101
      %v1170 = vunpack.c.l.b16 %v1102
      %v1171 = vunpack.c.l.b16 %v1103
      %v1172 = vunpack.c.l.b16 %v1104
      %v1173 = vunpack.c.l.b16 %v1105
      %v1174 = vunpack.c.l.b16 %v1106
      %v1175 = vunpack.c.l.b16 %v1107
      %v1176 = vpack.c.b16 %v1161, %v1160
      %v1177 = vpack.c.b16 %v1163, %v1162
      %v1178 = vpack.c.b16 %v1165, %v1164
      %v1179 = vpack.c.b16 %v1167, %v1166
      %v1180 = vpack.c.b16 %v1169, %v1168
      %v1181 = vpack.c.b16 %v1171, %v1170
      %v1182 = vpack.c.b16 %v1173, %v1172
      %v1183 = vpack.c.b16 %v1175, %v1174
      %1192 = vmatprep.subr.bf16.mxu0 0
      %1193 = vmatpush1.bf16.msra.mxu0 %v1176
      %1194 = vmatprep.subr.bf16.mxu0 0
      %1195 = vmatpush1.bf16.msra.mxu0 %v1177
      %1196 = vmatprep.subr.bf16.mxu0 0
      %1197 = vmatpush1.bf16.msra.mxu0 %v1178
      %1198 = vmatprep.subr.bf16.mxu0 0
      %1199 = vmatpush1.bf16.msra.mxu0 %v1179
      %1200 = vmatprep.subr.bf16.mxu0 0
      %1201 = vmatpush1.bf16.msra.mxu0 %v1180
      %1202 = vmatprep.subr.bf16.mxu0 0
      %1203 = vmatpush1.bf16.msra.mxu0 %v1181
      %1204 = vmatprep.subr.bf16.mxu0 0
      %1205 = vmatpush1.bf16.msra.mxu0 %v1182
      %1206 = vmatprep.subr.bf16.mxu0 0
      %1207 = vmatpush1.bf16.msra.mxu0 %v1183
      %1208 = vmatprep.subr.bf16.mxu0 0
      %1209 = vmatpush1.bf16.msra.mxu0 0
      %1210 = vmatprep.subr.bf16.mxu0 0
      %1211 = vmatpush1.bf16.msra.mxu0 0
      %1212 = vmatprep.subr.bf16.mxu0 0
      %1213 = vmatpush1.bf16.msra.mxu0 0
      %1214 = vmatprep.subr.bf16.mxu0 0
      %1215 = vmatpush1.bf16.msra.mxu0 0
      %1216 = vmatprep.subr.bf16.mxu0 0
      %1217 = vmatpush1.bf16.msra.mxu0 0
      %1218 = vmatprep.subr.bf16.mxu0 0
      %1219 = vmatpush1.bf16.msra.mxu0 0
      %1220 = vmatprep.subr.bf16.mxu0 0
      %1221 = vmatpush1.bf16.msra.mxu0 0
      %1222 = vmatprep.subr.bf16.mxu0 0
      %1223 = vmatpush1.bf16.msra.mxu0 0
      %1224 = vmatprep.mubr.bf16.mxu0 0
      %1225 = vmatmul.mubr.bf16.gmra.mrb[0].mxu0 %v1076
      %v1226 = vpop.f32.mrb[0].mxu0
      %v1227 = vadd.f32 0.0, %v1226
      %v1228 = vpop.f32.mrb[0].mxu0
      %v1229 = vpop.f32.mrb[0].mxu0
      %v1230 = vadd.f32 0.0, %v1229
      %v1231 = vpop.f32.mrb[0].mxu0
      %1232 = vmatprep.mubr.bf16.mxu0 0
      %1233 = vmatmul.mubr.bf16.gmra.mrb[0].mxu0 %v1077
      %v1234 = vpop.f32.mrb[0].mxu0
      %v1235 = vadd.f32 0.0, %v1234
      %v1236 = vpop.f32.mrb[0].mxu0
      %v1237 = vpop.f32.mrb[0].mxu0
      %v1238 = vadd.f32 0.0, %v1237
      %v1239 = vpop.f32.mrb[0].mxu0
      %1240 = vmatprep.mubr.bf16.mxu0 0
      %1241 = vmatmul.mubr.bf16.gmra.mrb[0].mxu0 %v1078
      %v1242 = vpop.f32.mrb[0].mxu0
      %v1243 = vadd.f32 0.0, %v1242
      %v1244 = vpop.f32.mrb[0].mxu0
      %v1245 = vpop.f32.mrb[0].mxu0
      %v1246 = vadd.f32 0.0, %v1245
      %v1247 = vpop.f32.mrb[0].mxu0
      %1248 = vmatprep.mubr.bf16.mxu0 0
      %1249 = vmatmul.mubr.bf16.gmra.mrb[0].mxu0 %v1079
      %v1250 = vpop.f32.mrb[0].mxu0
      %v1251 = vadd.f32 0.0, %v1250
      %v1252 = vpop.f32.mrb[0].mxu0
      %v1253 = vpop.f32.mrb[0].mxu0
      %v1254 = vadd.f32 0.0, %v1253
      %v1255 = vpop.f32.mrb[0].mxu0
      %1256 = vmatprep.mubr.bf16.mxu0 0
      %1257 = vmatmul.mubr.bf16.gmra.mrb[0].mxu0 %v1080
      %v1258 = vpop.f32.mrb[0].mxu0
      %v1259 = vadd.f32 0.0, %v1258
      %v1260 = vpop.f32.mrb[0].mxu0
      %v1261 = vpop.f32.mrb[0].mxu0
      %v1262 = vadd.f32 0.0, %v1261
      %v1263 = vpop.f32.mrb[0].mxu0
      %1264 = vmatprep.mubr.bf16.mxu0 0
      %1265 = vmatmul.mubr.bf16.gmra.mrb[0].mxu0 %v1081
      %v1266 = vpop.f32.mrb[0].mxu0
      %v1267 = vadd.f32 0.0, %v1266
      %v1268 = vpop.f32.mrb[0].mxu0
      %v1269 = vpop.f32.mrb[0].mxu0
      %v1270 = vadd.f32 0.0, %v1269
      %v1271 = vpop.f32.mrb[0].mxu0
      %1272 = vmatprep.mubr.bf16.mxu0 0
      %1273 = vmatmul.mubr.bf16.gmra.mrb[0].mxu0 %v1082
      %v1274 = vpop.f32.mrb[0].mxu0
      %v1275 = vadd.f32 0.0, %v1274
      %v1276 = vpop.f32.mrb[0].mxu0
      %v1277 = vpop.f32.mrb[0].mxu0
      %v1278 = vadd.f32 0.0, %v1277
      %v1279 = vpop.f32.mrb[0].mxu0
      %1280 = vmatprep.mubr.bf16.mxu0 0
      %1281 = vmatmul.mubr.bf16.gmra.mrb[0].mxu0 %v1083
      %v1282 = vpop.f32.mrb[0].mxu0
      %v1283 = vadd.f32 0.0, %v1282
      %v1284 = vpop.f32.mrb[0].mxu0
      %v1285 = vpop.f32.mrb[0].mxu0
      %v1286 = vadd.f32 0.0, %v1285
      %v1287 = vpop.f32.mrb[0].mxu0
      %1288 = vmatprep.mubr.bf16.mxu0 0
      %1289 = vmatmul.mubr.bf16.gmra.mrb[0].mxu0 %v1084
      %v1290 = vpop.f32.mrb[0].mxu0
      %v1291 = vadd.f32 0.0, %v1290
      %v1292 = vpop.f32.mrb[0].mxu0
      %v1293 = vpop.f32.mrb[0].mxu0
      %v1294 = vadd.f32 0.0, %v1293
      %v1295 = vpop.f32.mrb[0].mxu0
      %1296 = vmatprep.mubr.bf16.mxu0 0
      %1297 = vmatmul.mubr.bf16.gmra.mrb[0].mxu0 %v1085
      %v1298 = vpop.f32.mrb[0].mxu0
      %v1299 = vadd.f32 0.0, %v1298
      %v1300 = vpop.f32.mrb[0].mxu0
      %v1301 = vpop.f32.mrb[0].mxu0
      %v1302 = vadd.f32 0.0, %v1301
      %v1303 = vpop.f32.mrb[0].mxu0
      %1304 = vmatprep.mubr.bf16.mxu0 0
      %1305 = vmatmul.mubr.bf16.gmra.mrb[0].mxu0 %v1086
      %v1306 = vpop.f32.mrb[0].mxu0
      %v1307 = vadd.f32 0.0, %v1306
      %v1308 = vpop.f32.mrb[0].mxu0
      %v1309 = vpop.f32.mrb[0].mxu0
      %v1310 = vadd.f32 0.0, %v1309
      %v1311 = vpop.f32.mrb[0].mxu0
      %1312 = vmatprep.mubr.bf16.mxu0 0
      %1313 = vmatmul.mubr.bf16.gmra.mrb[0].mxu0 %v1087
      %v1314 = vpop.f32.mrb[0].mxu0
      %v1315 = vadd.f32 0.0, %v1314
      %v1316 = vpop.f32.mrb[0].mxu0
      %v1317 = vpop.f32.mrb[0].mxu0
      %v1318 = vadd.f32 0.0, %v1317
      %v1319 = vpop.f32.mrb[0].mxu0
      %1320 = vmatprep.mubr.bf16.mxu0 0
      %1321 = vmatmul.mubr.bf16.gmra.mrb[0].mxu0 %v1088
      %v1322 = vpop.f32.mrb[0].mxu0
      %v1323 = vadd.f32 0.0, %v1322
      %v1324 = vpop.f32.mrb[0].mxu0
      %v1325 = vpop.f32.mrb[0].mxu0
      %v1326 = vadd.f32 0.0, %v1325
      %v1327 = vpop.f32.mrb[0].mxu0
      %1328 = vmatprep.mubr.bf16.mxu0 0
      %1329 = vmatmul.mubr.bf16.gmra.mrb[0].mxu0 %v1089
      %v1330 = vpop.f32.mrb[0].mxu0
      %v1331 = vadd.f32 0.0, %v1330
      %v1332 = vpop.f32.mrb[0].mxu0
      %v1333 = vpop.f32.mrb[0].mxu0
      %v1334 = vadd.f32 0.0, %v1333
      %v1335 = vpop.f32.mrb[0].mxu0
      %1336 = vmatprep.mubr.bf16.mxu0 0
      %1337 = vmatmul.mubr.bf16.gmra.mrb[0].mxu0 %v1090
      %v1338 = vpop.f32.mrb[0].mxu0
      %v1339 = vadd.f32 0.0, %v1338
      %v1340 = vpop.f32.mrb[0].mxu0
      %v1341 = vpop.f32.mrb[0].mxu0
      %v1342 = vadd.f32 0.0, %v1341
      %v1343 = vpop.f32.mrb[0].mxu0
      %1344 = vmatprep.mubr.bf16.mxu0 0
      %1345 = vmatmul.mubr.bf16.gmra.mrb[0].mxu0 %v1091
      %v1346 = vpop.f32.mrb[0].mxu0
      %v1347 = vadd.f32 0.0, %v1346
      %v1348 = vpop.f32.mrb[0].mxu0
      %v1349 = vpop.f32.mrb[0].mxu0
      %v1350 = vadd.f32 0.0, %v1349
      %v1351 = vpop.f32.mrb[0].mxu0
      %1352 = vdwg.mxu0
      %v1353 = vpack.c.bf16 %v1230, %v1227
      %v1354 = vpack.c.bf16 %v1238, %v1235
      %v1355 = vpack.c.bf16 %v1246, %v1243
      %v1356 = vpack.c.bf16 %v1254, %v1251
      %v1357 = vpack.c.bf16 %v1262, %v1259
      %v1358 = vpack.c.bf16 %v1270, %v1267
      %v1359 = vpack.c.bf16 %v1278, %v1275
      %v1360 = vpack.c.bf16 %v1286, %v1283
      %v1361 = vpack.c.bf16 %v1294, %v1291
      %v1362 = vpack.c.bf16 %v1302, %v1299
      %v1363 = vpack.c.bf16 %v1310, %v1307
      %v1364 = vpack.c.bf16 %v1318, %v1315
      %v1365 = vpack.c.bf16 %v1326, %v1323
      %v1366 = vpack.c.bf16 %v1334, %v1331
      %v1367 = vpack.c.bf16 %v1342, %v1339
      %v1368 = vpack.c.bf16 %v1350, %v1347
      %v1385 = vunpack.c.l.b16 %v1108
      %v1386 = vunpack.c.l.b16 %v1109
      %v1387 = vunpack.c.l.b16 %v1110
      %v1388 = vunpack.c.l.b16 %v1111
      %v1389 = vunpack.c.l.b16 %v1112
      %v1390 = vunpack.c.l.b16 %v1113
      %v1391 = vunpack.c.l.b16 %v1114
      %v1392 = vunpack.c.l.b16 %v1115
      %v1393 = vunpack.c.l.b16 %v1116
      %v1394 = vunpack.c.l.b16 %v1117
      %v1395 = vunpack.c.l.b16 %v1118
      %v1396 = vunpack.c.l.b16 %v1119
      %v1397 = vunpack.c.l.b16 %v1120
      %v1398 = vunpack.c.l.b16 %v1121
      %v1399 = vunpack.c.l.b16 %v1122
      %v1400 = vunpack.c.l.b16 %v1123
      %v1401 = vpack.c.b16 %v1386, %v1385
      %v1402 = vpack.c.b16 %v1388, %v1387
      %v1403 = vpack.c.b16 %v1390, %v1389
      %v1404 = vpack.c.b16 %v1392, %v1391
      %v1405 = vpack.c.b16 %v1394, %v1393
      %v1406 = vpack.c.b16 %v1396, %v1395
      %v1407 = vpack.c.b16 %v1398, %v1397
      %v1408 = vpack.c.b16 %v1400, %v1399
      %1417 = vmatprep.subr.bf16.mxu0 0
      %1418 = vmatpush1.bf16.msra.mxu0 %v1401
      %1419 = vmatprep.subr.bf16.mxu0 0
      %1420 = vmatpush1.bf16.msra.mxu0 %v1402
      %1421 = vmatprep.subr.bf16.mxu0 0
      %1422 = vmatpush1.bf16.msra.mxu0 %v1403
      %1423 = vmatprep.subr.bf16.mxu0 0
      %1424 = vmatpush1.bf16.msra.mxu0 %v1404
      %1425 = vmatprep.subr.bf16.mxu0 0
      %1426 = vmatpush1.bf16.msra.mxu0 %v1405
      %1427 = vmatprep.subr.bf16.mxu0 0
      %1428 = vmatpush1.bf16.msra.mxu0 %v1406
      %1429 = vmatprep.subr.bf16.mxu0 0
      %1430 = vmatpush1.bf16.msra.mxu0 %v1407
      %1431 = vmatprep.subr.bf16.mxu0 0
      %1432 = vmatpush1.bf16.msra.mxu0 %v1408
      %1433 = vmatprep.subr.bf16.mxu0 0
      %1434 = vmatpush1.bf16.msra.mxu0 0
      %1435 = vmatprep.subr.bf16.mxu0 0
      %1436 = vmatpush1.bf16.msra.mxu0 0
      %1437 = vmatprep.subr.bf16.mxu0 0
      %1438 = vmatpush1.bf16.msra.mxu0 0
      %1439 = vmatprep.subr.bf16.mxu0 0
      %1440 = vmatpush1.bf16.msra.mxu0 0
      %1441 = vmatprep.subr.bf16.mxu0 0
      %1442 = vmatpush1.bf16.msra.mxu0 0
      %1443 = vmatprep.subr.bf16.mxu0 0
      %1444 = vmatpush1.bf16.msra.mxu0 0
      %1445 = vmatprep.subr.bf16.mxu0 0
      %1446 = vmatpush1.bf16.msra.mxu0 0
      %1447 = vmatprep.subr.bf16.mxu0 0
      %1448 = vmatpush1.bf16.msra.mxu0 0
      %1449 = vmatprep.mubr.bf16.mxu0 0
      %1450 = vmatmul.mubr.bf16.gmra.mrb[0].mxu0 %v1076
      %v1451 = vpop.f32.mrb[0].mxu0
      %v1452 = vadd.f32 0.0, %v1451
      %v1453 = vpop.f32.mrb[0].mxu0
      %v1454 = vpop.f32.mrb[0].mxu0
      %v1455 = vadd.f32 0.0, %v1454
      %v1456 = vpop.f32.mrb[0].mxu0
      %1457 = vmatprep.mubr.bf16.mxu0 0
      %1458 = vmatmul.mubr.bf16.gmra.mrb[0].mxu0 %v1077
      %v1459 = vpop.f32.mrb[0].mxu0
      %v1460 = vadd.f32 0.0, %v1459
      %v1461 = vpop.f32.mrb[0].mxu0
      %v1462 = vpop.f32.mrb[0].mxu0
      %v1463 = vadd.f32 0.0, %v1462
      %v1464 = vpop.f32.mrb[0].mxu0
      %1465 = vmatprep.mubr.bf16.mxu0 0
      %1466 = vmatmul.mubr.bf16.gmra.mrb[0].mxu0 %v1078
      %v1467 = vpop.f32.mrb[0].mxu0
      %v1468 = vadd.f32 0.0, %v1467
      %v1469 = vpop.f32.mrb[0].mxu0
      %v1470 = vpop.f32.mrb[0].mxu0
      %v1471 = vadd.f32 0.0, %v1470
      %v1472 = vpop.f32.mrb[0].mxu0
      %1473 = vmatprep.mubr.bf16.mxu0 0
      %1474 = vmatmul.mubr.bf16.gmra.mrb[0].mxu0 %v1079
      %v1475 = vpop.f32.mrb[0].mxu0
      %v1476 = vadd.f32 0.0, %v1475
      %v1477 = vpop.f32.mrb[0].mxu0
      %v1478 = vpop.f32.mrb[0].mxu0
      %v1479 = vadd.f32 0.0, %v1478
      %v1480 = vpop.f32.mrb[0].mxu0
      %1481 = vmatprep.mubr.bf16.mxu0 0
      %1482 = vmatmul.mubr.bf16.gmra.mrb[0].mxu0 %v1080
      %v1483 = vpop.f32.mrb[0].mxu0
      %v1484 = vadd.f32 0.0, %v1483
      %v1485 = vpop.f32.mrb[0].mxu0
      %v1486 = vpop.f32.mrb[0].mxu0
      %v1487 = vadd.f32 0.0, %v1486
      %v1488 = vpop.f32.mrb[0].mxu0
      %1489 = vmatprep.mubr.bf16.mxu0 0
      %1490 = vmatmul.mubr.bf16.gmra.mrb[0].mxu0 %v1081
      %v1491 = vpop.f32.mrb[0].mxu0
      %v1492 = vadd.f32 0.0, %v1491
      %v1493 = vpop.f32.mrb[0].mxu0
      %v1494 = vpop.f32.mrb[0].mxu0
      %v1495 = vadd.f32 0.0, %v1494
      %v1496 = vpop.f32.mrb[0].mxu0
      %1497 = vmatprep.mubr.bf16.mxu0 0
      %1498 = vmatmul.mubr.bf16.gmra.mrb[0].mxu0 %v1082
      %v1499 = vpop.f32.mrb[0].mxu0
      %v1500 = vadd.f32 0.0, %v1499
      %v1501 = vpop.f32.mrb[0].mxu0
      %v1502 = vpop.f32.mrb[0].mxu0
      %v1503 = vadd.f32 0.0, %v1502
      %v1504 = vpop.f32.mrb[0].mxu0
      %1505 = vmatprep.mubr.bf16.mxu0 0
      %1506 = vmatmul.mubr.bf16.gmra.mrb[0].mxu0 %v1083
      %v1507 = vpop.f32.mrb[0].mxu0
      %v1508 = vadd.f32 0.0, %v1507
      %v1509 = vpop.f32.mrb[0].mxu0
      %v1510 = vpop.f32.mrb[0].mxu0
      %v1511 = vadd.f32 0.0, %v1510
      %v1512 = vpop.f32.mrb[0].mxu0
      %1513 = vmatprep.mubr.bf16.mxu0 0
      %1514 = vmatmul.mubr.bf16.gmra.mrb[0].mxu0 %v1084
      %v1515 = vpop.f32.mrb[0].mxu0
      %v1516 = vadd.f32 0.0, %v1515
      %v1517 = vpop.f32.mrb[0].mxu0
      %v1518 = vpop.f32.mrb[0].mxu0
      %v1519 = vadd.f32 0.0, %v1518
      %v1520 = vpop.f32.mrb[0].mxu0
      %1521 = vmatprep.mubr.bf16.mxu0 0
      %1522 = vmatmul.mubr.bf16.gmra.mrb[0].mxu0 %v1085
      %v1523 = vpop.f32.mrb[0].mxu0
      %v1524 = vadd.f32 0.0, %v1523
      %v1525 = vpop.f32.mrb[0].mxu0
      %v1526 = vpop.f32.mrb[0].mxu0
      %v1527 = vadd.f32 0.0, %v1526
      %v1528 = vpop.f32.mrb[0].mxu0
      %1529 = vmatprep.mubr.bf16.mxu0 0
      %1530 = vmatmul.mubr.bf16.gmra.mrb[0].mxu0 %v1086
      %v1531 = vpop.f32.mrb[0].mxu0
      %v1532 = vadd.f32 0.0, %v1531
      %v1533 = vpop.f32.mrb[0].mxu0
      %v1534 = vpop.f32.mrb[0].mxu0
      %v1535 = vadd.f32 0.0, %v1534
      %v1536 = vpop.f32.mrb[0].mxu0
      %1537 = vmatprep.mubr.bf16.mxu0 0
      %1538 = vmatmul.mubr.bf16.gmra.mrb[0].mxu0 %v1087
      %v1539 = vpop.f32.mrb[0].mxu0
      %v1540 = vadd.f32 0.0, %v1539
      %v1541 = vpop.f32.mrb[0].mxu0
      %v1542 = vpop.f32.mrb[0].mxu0
      %v1543 = vadd.f32 0.0, %v1542
      %v1544 = vpop.f32.mrb[0].mxu0
      %1545 = vmatprep.mubr.bf16.mxu0 0
      %1546 = vmatmul.mubr.bf16.gmra.mrb[0].mxu0 %v1088
      %v1547 = vpop.f32.mrb[0].mxu0
      %v1548 = vadd.f32 0.0, %v1547
      %v1549 = vpop.f32.mrb[0].mxu0
      %v1550 = vpop.f32.mrb[0].mxu0
      %v1551 = vadd.f32 0.0, %v1550
      %v1552 = vpop.f32.mrb[0].mxu0
      %1553 = vmatprep.mubr.bf16.mxu0 0
      %1554 = vmatmul.mubr.bf16.gmra.mrb[0].mxu0 %v1089
      %v1555 = vpop.f32.mrb[0].mxu0
      %v1556 = vadd.f32 0.0, %v1555
      %v1557 = vpop.f32.mrb[0].mxu0
      %v1558 = vpop.f32.mrb[0].mxu0
      %v1559 = vadd.f32 0.0, %v1558
      %v1560 = vpop.f32.mrb[0].mxu0
      %1561 = vmatprep.mubr.bf16.mxu0 0
      %1562 = vmatmul.mubr.bf16.gmra.mrb[0].mxu0 %v1090
      %v1563 = vpop.f32.mrb[0].mxu0
      %v1564 = vadd.f32 0.0, %v1563
      %v1565 = vpop.f32.mrb[0].mxu0
      %v1566 = vpop.f32.mrb[0].mxu0
      %v1567 = vadd.f32 0.0, %v1566
      %v1568 = vpop.f32.mrb[0].mxu0
      %1569 = vmatprep.mubr.bf16.mxu0 0
      %1570 = vmatmul.mubr.bf16.gmra.mrb[0].mxu0 %v1091
      %v1571 = vpop.f32.mrb[0].mxu0
      %v1572 = vadd.f32 0.0, %v1571
      %v1573 = vpop.f32.mrb[0].mxu0
      %v1574 = vpop.f32.mrb[0].mxu0
      %v1575 = vadd.f32 0.0, %v1574
      %v1576 = vpop.f32.mrb[0].mxu0
      %1577 = vdwg.mxu0
      %v1578 = vpack.c.bf16 %v1455, %v1452
      %v1579 = vpack.c.bf16 %v1463, %v1460
      %v1580 = vpack.c.bf16 %v1471, %v1468
      %v1581 = vpack.c.bf16 %v1479, %v1476
      %v1582 = vpack.c.bf16 %v1487, %v1484
      %v1583 = vpack.c.bf16 %v1495, %v1492
      %v1584 = vpack.c.bf16 %v1503, %v1500
      %v1585 = vpack.c.bf16 %v1511, %v1508
      %v1586 = vpack.c.bf16 %v1519, %v1516
      %v1587 = vpack.c.bf16 %v1527, %v1524
      %v1588 = vpack.c.bf16 %v1535, %v1532
      %v1589 = vpack.c.bf16 %v1543, %v1540
      %v1590 = vpack.c.bf16 %v1551, %v1548
      %v1591 = vpack.c.bf16 %v1559, %v1556
      %v1592 = vpack.c.bf16 %v1567, %v1564
      %v1593 = vpack.c.bf16 %v1575, %v1572
      %v1610 = vunpack.c.l.b16 %v1124
      %v1611 = vunpack.c.l.b16 %v1125
      %v1612 = vunpack.c.l.b16 %v1126
      %v1613 = vunpack.c.l.b16 %v1127
      %v1614 = vunpack.c.l.b16 %v1128
      %v1615 = vunpack.c.l.b16 %v1129
      %v1616 = vunpack.c.l.b16 %v1130
      %v1617 = vunpack.c.l.b16 %v1131
      %v1618 = vunpack.c.l.b16 %v1132
      %v1619 = vunpack.c.l.b16 %v1133
      %v1620 = vunpack.c.l.b16 %v1134
      %v1621 = vunpack.c.l.b16 %v1135
      %v1622 = vunpack.c.l.b16 %v1136
      %v1623 = vunpack.c.l.b16 %v1137
      %v1624 = vunpack.c.l.b16 %v1138
      %v1625 = vunpack.c.l.b16 %v1139
      %v1626 = vpack.c.b16 %v1611, %v1610
      %v1627 = vpack.c.b16 %v1613, %v1612
      %v1628 = vpack.c.b16 %v1615, %v1614
      %v1629 = vpack.c.b16 %v1617, %v1616
      %v1630 = vpack.c.b16 %v1619, %v1618
      %v1631 = vpack.c.b16 %v1621, %v1620
      %v1632 = vpack.c.b16 %v1623, %v1622
      %v1633 = vpack.c.b16 %v1625, %v1624
      %1642 = vmatprep.subr.bf16.mxu0 0
      %1643 = vmatpush1.bf16.msra.mxu0 %v1626
      %1644 = vmatprep.subr.bf16.mxu0 0
      %1645 = vmatpush1.bf16.msra.mxu0 %v1627
      %1646 = vmatprep.subr.bf16.mxu0 0
      %1647 = vmatpush1.bf16.msra.mxu0 %v1628
      %1648 = vmatprep.subr.bf16.mxu0 0
      %1649 = vmatpush1.bf16.msra.mxu0 %v1629
      %1650 = vmatprep.subr.bf16.mxu0 0
      %1651 = vmatpush1.bf16.msra.mxu0 %v1630
      %1652 = vmatprep.subr.bf16.mxu0 0
      %1653 = vmatpush1.bf16.msra.mxu0 %v1631
      %1654 = vmatprep.subr.bf16.mxu0 0
      %1655 = vmatpush1.bf16.msra.mxu0 %v1632
      %1656 = vmatprep.subr.bf16.mxu0 0
      %1657 = vmatpush1.bf16.msra.mxu0 %v1633
      %1658 = vmatprep.subr.bf16.mxu0 0
      %1659 = vmatpush1.bf16.msra.mxu0 0
      %1660 = vmatprep.subr.bf16.mxu0 0
      %1661 = vmatpush1.bf16.msra.mxu0 0
      %1662 = vmatprep.subr.bf16.mxu0 0
      %1663 = vmatpush1.bf16.msra.mxu0 0
      %1664 = vmatprep.subr.bf16.mxu0 0
      %1665 = vmatpush1.bf16.msra.mxu0 0
      %1666 = vmatprep.subr.bf16.mxu0 0
      %1667 = vmatpush1.bf16.msra.mxu0 0
      %1668 = vmatprep.subr.bf16.mxu0 0
      %1669 = vmatpush1.bf16.msra.mxu0 0
      %1670 = vmatprep.subr.bf16.mxu0 0
      %1671 = vmatpush1.bf16.msra.mxu0 0
      %1672 = vmatprep.subr.bf16.mxu0 0
      %1673 = vmatpush1.bf16.msra.mxu0 0
      %1674 = vmatprep.mubr.bf16.mxu0 0
      %1675 = vmatmul.mubr.bf16.gmra.mrb[0].mxu0 %v1076
      %v1676 = vpop.f32.mrb[0].mxu0
      %v1677 = vadd.f32 0.0, %v1676
      %v1678 = vpop.f32.mrb[0].mxu0
      %v1679 = vpop.f32.mrb[0].mxu0
      %v1680 = vadd.f32 0.0, %v1679
      %v1681 = vpop.f32.mrb[0].mxu0
      %1682 = vmatprep.mubr.bf16.mxu0 0
      %1683 = vmatmul.mubr.bf16.gmra.mrb[0].mxu0 %v1077
      %v1684 = vpop.f32.mrb[0].mxu0
      %v1685 = vadd.f32 0.0, %v1684
      %v1686 = vpop.f32.mrb[0].mxu0
      %v1687 = vpop.f32.mrb[0].mxu0
      %v1688 = vadd.f32 0.0, %v1687
      %v1689 = vpop.f32.mrb[0].mxu0
      %1690 = vmatprep.mubr.bf16.mxu0 0
      %1691 = vmatmul.mubr.bf16.gmra.mrb[0].mxu0 %v1078
      %v1692 = vpop.f32.mrb[0].mxu0
      %v1693 = vadd.f32 0.0, %v1692
      %v1694 = vpop.f32.mrb[0].mxu0
      %v1695 = vpop.f32.mrb[0].mxu0
      %v1696 = vadd.f32 0.0, %v1695
      %v1697 = vpop.f32.mrb[0].mxu0
      %1698 = vmatprep.mubr.bf16.mxu0 0
      %1699 = vmatmul.mubr.bf16.gmra.mrb[0].mxu0 %v1079
      %v1700 = vpop.f32.mrb[0].mxu0
      %v1701 = vadd.f32 0.0, %v1700
      %v1702 = vpop.f32.mrb[0].mxu0
      %v1703 = vpop.f32.mrb[0].mxu0
      %v1704 = vadd.f32 0.0, %v1703
      %v1705 = vpop.f32.mrb[0].mxu0
      %1706 = vmatprep.mubr.bf16.mxu0 0
      %1707 = vmatmul.mubr.bf16.gmra.mrb[0].mxu0 %v1080
      %v1708 = vpop.f32.mrb[0].mxu0
      %v1709 = vadd.f32 0.0, %v1708
      %v1710 = vpop.f32.mrb[0].mxu0
      %v1711 = vpop.f32.mrb[0].mxu0
      %v1712 = vadd.f32 0.0, %v1711
      %v1713 = vpop.f32.mrb[0].mxu0
      %1714 = vmatprep.mubr.bf16.mxu0 0
      %1715 = vmatmul.mubr.bf16.gmra.mrb[0].mxu0 %v1081
      %v1716 = vpop.f32.mrb[0].mxu0
      %v1717 = vadd.f32 0.0, %v1716
      %v1718 = vpop.f32.mrb[0].mxu0
      %v1719 = vpop.f32.mrb[0].mxu0
      %v1720 = vadd.f32 0.0, %v1719
      %v1721 = vpop.f32.mrb[0].mxu0
      %1722 = vmatprep.mubr.bf16.mxu0 0
      %1723 = vmatmul.mubr.bf16.gmra.mrb[0].mxu0 %v1082
      %v1724 = vpop.f32.mrb[0].mxu0
      %v1725 = vadd.f32 0.0, %v1724
      %v1726 = vpop.f32.mrb[0].mxu0
      %v1727 = vpop.f32.mrb[0].mxu0
      %v1728 = vadd.f32 0.0, %v1727
      %v1729 = vpop.f32.mrb[0].mxu0
      %1730 = vmatprep.mubr.bf16.mxu0 0
      %1731 = vmatmul.mubr.bf16.gmra.mrb[0].mxu0 %v1083
      %v1732 = vpop.f32.mrb[0].mxu0
      %v1733 = vadd.f32 0.0, %v1732
      %v1734 = vpop.f32.mrb[0].mxu0
      %v1735 = vpop.f32.mrb[0].mxu0
      %v1736 = vadd.f32 0.0, %v1735
      %v1737 = vpop.f32.mrb[0].mxu0
      %1738 = vmatprep.mubr.bf16.mxu0 0
      %1739 = vmatmul.mubr.bf16.gmra.mrb[0].mxu0 %v1084
      %v1740 = vpop.f32.mrb[0].mxu0
      %v1741 = vadd.f32 0.0, %v1740
      %v1742 = vpop.f32.mrb[0].mxu0
      %v1743 = vpop.f32.mrb[0].mxu0
      %v1744 = vadd.f32 0.0, %v1743
      %v1745 = vpop.f32.mrb[0].mxu0
      %1746 = vmatprep.mubr.bf16.mxu0 0
      %1747 = vmatmul.mubr.bf16.gmra.mrb[0].mxu0 %v1085
      %v1748 = vpop.f32.mrb[0].mxu0
      %v1749 = vadd.f32 0.0, %v1748
      %v1750 = vpop.f32.mrb[0].mxu0
      %v1751 = vpop.f32.mrb[0].mxu0
      %v1752 = vadd.f32 0.0, %v1751
      %v1753 = vpop.f32.mrb[0].mxu0
      %1754 = vmatprep.mubr.bf16.mxu0 0
      %1755 = vmatmul.mubr.bf16.gmra.mrb[0].mxu0 %v1086
      %v1756 = vpop.f32.mrb[0].mxu0
      %v1757 = vadd.f32 0.0, %v1756
      %v1758 = vpop.f32.mrb[0].mxu0
      %v1759 = vpop.f32.mrb[0].mxu0
      %v1760 = vadd.f32 0.0, %v1759
      %v1761 = vpop.f32.mrb[0].mxu0
      %1762 = vmatprep.mubr.bf16.mxu0 0
      %1763 = vmatmul.mubr.bf16.gmra.mrb[0].mxu0 %v1087
      %v1764 = vpop.f32.mrb[0].mxu0
      %v1765 = vadd.f32 0.0, %v1764
      %v1766 = vpop.f32.mrb[0].mxu0
      %v1767 = vpop.f32.mrb[0].mxu0
      %v1768 = vadd.f32 0.0, %v1767
      %v1769 = vpop.f32.mrb[0].mxu0
      %1770 = vmatprep.mubr.bf16.mxu0 0
      %1771 = vmatmul.mubr.bf16.gmra.mrb[0].mxu0 %v1088
      %v1772 = vpop.f32.mrb[0].mxu0
      %v1773 = vadd.f32 0.0, %v1772
      %v1774 = vpop.f32.mrb[0].mxu0
      %v1775 = vpop.f32.mrb[0].mxu0
      %v1776 = vadd.f32 0.0, %v1775
      %v1777 = vpop.f32.mrb[0].mxu0
      %1778 = vmatprep.mubr.bf16.mxu0 0
      %1779 = vmatmul.mubr.bf16.gmra.mrb[0].mxu0 %v1089
      %v1780 = vpop.f32.mrb[0].mxu0
      %v1781 = vadd.f32 0.0, %v1780
      %v1782 = vpop.f32.mrb[0].mxu0
      %v1783 = vpop.f32.mrb[0].mxu0
      %v1784 = vadd.f32 0.0, %v1783
      %v1785 = vpop.f32.mrb[0].mxu0
      %1786 = vmatprep.mubr.bf16.mxu0 0
      %1787 = vmatmul.mubr.bf16.gmra.mrb[0].mxu0 %v1090
      %v1788 = vpop.f32.mrb[0].mxu0
      %v1789 = vadd.f32 0.0, %v1788
      %v1790 = vpop.f32.mrb[0].mxu0
      %v1791 = vpop.f32.mrb[0].mxu0
      %v1792 = vadd.f32 0.0, %v1791
      %v1793 = vpop.f32.mrb[0].mxu0
      %1794 = vmatprep.mubr.bf16.mxu0 0
      %1795 = vmatmul.mubr.bf16.gmra.mrb[0].mxu0 %v1091
      %v1796 = vpop.f32.mrb[0].mxu0
      %v1797 = vadd.f32 0.0, %v1796
      %v1798 = vpop.f32.mrb[0].mxu0
      %v1799 = vpop.f32.mrb[0].mxu0
      %v1800 = vadd.f32 0.0, %v1799
      %v1801 = vpop.f32.mrb[0].mxu0
      %1802 = vdwg.mxu0
      %v1803 = vpack.c.bf16 %v1680, %v1677
      %v1804 = vpack.c.bf16 %v1688, %v1685
      %v1805 = vpack.c.bf16 %v1696, %v1693
      %v1806 = vpack.c.bf16 %v1704, %v1701
      %v1807 = vpack.c.bf16 %v1712, %v1709
      %v1808 = vpack.c.bf16 %v1720, %v1717
      %v1809 = vpack.c.bf16 %v1728, %v1725
      %v1810 = vpack.c.bf16 %v1736, %v1733
      %v1811 = vpack.c.bf16 %v1744, %v1741
      %v1812 = vpack.c.bf16 %v1752, %v1749
      %v1813 = vpack.c.bf16 %v1760, %v1757
      %v1814 = vpack.c.bf16 %v1768, %v1765
      %v1815 = vpack.c.bf16 %v1776, %v1773
      %v1816 = vpack.c.bf16 %v1784, %v1781
      %v1817 = vpack.c.bf16 %v1792, %v1789
      %v1818 = vpack.c.bf16 %v1800, %v1797
      %v1819 = vlaneseq
      %v1820 = vand.u32 %v1819, 127
      %vm1821 = vcmp.lt.s32.totalorder %v1820, 8
      %v1822 = vsel %vm1821, 0.0, -1e+30
      %vm1823 = vcmask 64512
      %v1825 = vsel %vm1823, %v1353, 0
      %v1828 = vsel %vm1823, %v1354, 0
      %v1831 = vsel %vm1823, %v1355, 0
      %v1834 = vsel %vm1823, %v1356, 0
      %v1837 = vsel %vm1823, %v1357, 0
      %v1840 = vsel %vm1823, %v1358, 0
      %v1843 = vsel %vm1823, %v1359, 0
      %v1846 = vsel %vm1823, %v1360, 0
      %v1849 = vsel %vm1823, %v1578, 0
      %v1852 = vsel %vm1823, %v1579, 0
      %v1855 = vsel %vm1823, %v1580, 0
      %v1858 = vsel %vm1823, %v1581, 0
      %v1861 = vsel %vm1823, %v1582, 0
      %v1864 = vsel %vm1823, %v1583, 0
      %v1867 = vsel %vm1823, %v1584, 0
      %v1870 = vsel %vm1823, %v1585, 0
      %1872 = vmatprep.subr.bf16.mxu0 0
      %1873 = vmatpush1.bf16.xpose.msra.mxu0 %v1849
      %1874 = vmatprep.subr.bf16.mxu0 0
      %1875 = vmatpush1.bf16.xpose.msra.mxu0 %v1852
      %1876 = vmatprep.subr.bf16.mxu0 0
      %1877 = vmatpush1.bf16.xpose.msra.mxu0 %v1855
      %1878 = vmatprep.subr.bf16.mxu0 0
      %1879 = vmatpush1.bf16.xpose.msra.mxu0 %v1858
      %1880 = vmatprep.subr.bf16.mxu0 0
      %1881 = vmatpush1.bf16.xpose.msra.mxu0 %v1861
      %1882 = vmatprep.subr.bf16.mxu0 0
      %1883 = vmatpush1.bf16.xpose.msra.mxu0 %v1864
      %1884 = vmatprep.subr.bf16.mxu0 0
      %1885 = vmatpush1.bf16.xpose.msra.mxu0 %v1867
      %1886 = vmatprep.subr.bf16.mxu0 0
      %1887 = vmatpush1.bf16.xpose.msra.mxu0 %v1870
      %1888 = vmatprep.subr.bf16.mxu0 0
      %1889 = vmatpush1.bf16.xpose.msra.mxu0 0
      %1890 = vmatprep.subr.bf16.mxu0 0
      %1891 = vmatpush1.bf16.xpose.msra.mxu0 0
      %1892 = vmatprep.subr.bf16.mxu0 0
      %1893 = vmatpush1.bf16.xpose.msra.mxu0 0
      %1894 = vmatprep.subr.bf16.mxu0 0
      %1895 = vmatpush1.bf16.xpose.msra.mxu0 0
      %1896 = vmatprep.subr.bf16.mxu0 0
      %1897 = vmatpush1.bf16.xpose.msra.mxu0 0
      %1898 = vmatprep.subr.bf16.mxu0 0
      %1899 = vmatpush1.bf16.xpose.msra.mxu0 0
      %1900 = vmatprep.subr.bf16.mxu0 0
      %1901 = vmatpush1.bf16.xpose.msra.mxu0 0
      %1902 = vmatprep.subr.bf16.mxu0 0
      %1903 = vmatpush1.bf16.xpose.msra.mxu0 0
      %1904 = vmatprep.mubr.bf16.mxu0 0
      %1905 = vmatmul.mubr.bf16.gmra.mrb[0].mxu0 %v1825
      %v1906 = vpop.f32.mrb[0].mxu0
      %v1907 = vadd.f32 0.0, %v1906
      %v1908 = vpop.f32.mrb[0].mxu0
      %v1909 = vpop.f32.mrb[0].mxu0
      %v1910 = vadd.f32 0.0, %v1909
      %v1911 = vpop.f32.mrb[0].mxu0
      %1912 = vmatprep.mubr.bf16.mxu0 0
      %1913 = vmatmul.mubr.bf16.gmra.mrb[0].mxu0 %v1828
      %v1914 = vpop.f32.mrb[0].mxu0
      %v1915 = vadd.f32 0.0, %v1914
      %v1916 = vpop.f32.mrb[0].mxu0
      %v1917 = vpop.f32.mrb[0].mxu0
      %v1918 = vadd.f32 0.0, %v1917
      %v1919 = vpop.f32.mrb[0].mxu0
      %1920 = vmatprep.mubr.bf16.mxu0 0
      %1921 = vmatmul.mubr.bf16.gmra.mrb[0].mxu0 %v1831
      %v1922 = vpop.f32.mrb[0].mxu0
      %v1923 = vadd.f32 0.0, %v1922
      %v1924 = vpop.f32.mrb[0].mxu0
      %v1925 = vpop.f32.mrb[0].mxu0
      %v1926 = vadd.f32 0.0, %v1925
      %v1927 = vpop.f32.mrb[0].mxu0
      %1928 = vmatprep.mubr.bf16.mxu0 0
      %1929 = vmatmul.mubr.bf16.gmra.mrb[0].mxu0 %v1834
      %v1930 = vpop.f32.mrb[0].mxu0
      %v1931 = vadd.f32 0.0, %v1930
      %v1932 = vpop.f32.mrb[0].mxu0
      %v1933 = vpop.f32.mrb[0].mxu0
      %v1934 = vadd.f32 0.0, %v1933
      %v1935 = vpop.f32.mrb[0].mxu0
      %1936 = vmatprep.mubr.bf16.mxu0 0
      %1937 = vmatmul.mubr.bf16.gmra.mrb[0].mxu0 %v1837
      %v1938 = vpop.f32.mrb[0].mxu0
      %v1939 = vadd.f32 0.0, %v1938
      %v1940 = vpop.f32.mrb[0].mxu0
      %v1941 = vpop.f32.mrb[0].mxu0
      %v1942 = vadd.f32 0.0, %v1941
      %v1943 = vpop.f32.mrb[0].mxu0
      %1944 = vmatprep.mubr.bf16.mxu0 0
      %1945 = vmatmul.mubr.bf16.gmra.mrb[0].mxu0 %v1840
      %v1946 = vpop.f32.mrb[0].mxu0
      %v1947 = vadd.f32 0.0, %v1946
      %v1948 = vpop.f32.mrb[0].mxu0
      %v1949 = vpop.f32.mrb[0].mxu0
      %v1950 = vadd.f32 0.0, %v1949
      %v1951 = vpop.f32.mrb[0].mxu0
      %1952 = vmatprep.mubr.bf16.mxu0 0
      %1953 = vmatmul.mubr.bf16.gmra.mrb[0].mxu0 %v1843
      %v1954 = vpop.f32.mrb[0].mxu0
      %v1955 = vadd.f32 0.0, %v1954
      %v1956 = vpop.f32.mrb[0].mxu0
      %v1957 = vpop.f32.mrb[0].mxu0
      %v1958 = vadd.f32 0.0, %v1957
      %v1959 = vpop.f32.mrb[0].mxu0
      %1960 = vmatprep.mubr.bf16.mxu0 0
      %1961 = vmatmul.mubr.bf16.gmra.mrb[0].mxu0 %v1846
      %v1962 = vpop.f32.mrb[0].mxu0
      %v1963 = vadd.f32 0.0, %v1962
      %v1964 = vpop.f32.mrb[0].mxu0
      %v1965 = vpop.f32.mrb[0].mxu0
      %v1966 = vadd.f32 0.0, %v1965
      %v1967 = vpop.f32.mrb[0].mxu0
      %1968 = vdwg.mxu0
      %1977 = vrot.lane.b32.xlu0 %v1353, 120
      %v1978 = vpop.permute.xlu0 %1977
      %1979 = vrot.lane.b32.xlu0 %v1354, 120
      %v1980 = vpop.permute.xlu0 %1979
      %1981 = vrot.lane.b32.xlu0 %v1355, 120
      %v1982 = vpop.permute.xlu0 %1981
      %1983 = vrot.lane.b32.xlu0 %v1356, 120
      %v1984 = vpop.permute.xlu0 %1983
      %1985 = vrot.lane.b32.xlu0 %v1357, 120
      %v1986 = vpop.permute.xlu0 %1985
      %1987 = vrot.lane.b32.xlu0 %v1358, 120
      %v1988 = vpop.permute.xlu0 %1987
      %1989 = vrot.lane.b32.xlu0 %v1359, 120
      %v1990 = vpop.permute.xlu0 %1989
      %1991 = vrot.lane.b32.xlu0 %v1360, 120
      %v1992 = vpop.permute.xlu0 %1991
      %2001 = vrot.lane.b32.xlu0 %v1578, 120
      %v2002 = vpop.permute.xlu0 %2001
      %2003 = vrot.lane.b32.xlu0 %v1579, 120
      %v2004 = vpop.permute.xlu0 %2003
      %2005 = vrot.lane.b32.xlu0 %v1580, 120
      %v2006 = vpop.permute.xlu0 %2005
      %2007 = vrot.lane.b32.xlu0 %v1581, 120
      %v2008 = vpop.permute.xlu0 %2007
      %2009 = vrot.lane.b32.xlu0 %v1582, 120
      %v2010 = vpop.permute.xlu0 %2009
      %2011 = vrot.lane.b32.xlu0 %v1583, 120
      %v2012 = vpop.permute.xlu0 %2011
      %2013 = vrot.lane.b32.xlu0 %v1584, 120
      %v2014 = vpop.permute.xlu0 %2013
      %2015 = vrot.lane.b32.xlu0 %v1585, 120
      %v2016 = vpop.permute.xlu0 %2015
      %v2018 = vsel %vm1823, %v1978, 0
      %v2021 = vsel %vm1823, %v1980, 0
      %v2024 = vsel %vm1823, %v1982, 0
      %v2027 = vsel %vm1823, %v1984, 0
      %v2030 = vsel %vm1823, %v1986, 0
      %v2033 = vsel %vm1823, %v1988, 0
      %v2036 = vsel %vm1823, %v1990, 0
      %v2039 = vsel %vm1823, %v1992, 0
      %v2042 = vsel %vm1823, %v2002, 0
      %v2045 = vsel %vm1823, %v2004, 0
      %v2048 = vsel %vm1823, %v2006, 0
      %v2051 = vsel %vm1823, %v2008, 0
      %v2054 = vsel %vm1823, %v2010, 0
      %v2057 = vsel %vm1823, %v2012, 0
      %v2060 = vsel %vm1823, %v2014, 0
      %v2063 = vsel %vm1823, %v2016, 0
      %2065 = vmatprep.subr.bf16.mxu0 0
      %2066 = vmatpush1.bf16.xpose.msra.mxu0 %v2042
      %2067 = vmatprep.subr.bf16.mxu0 0
      %2068 = vmatpush1.bf16.xpose.msra.mxu0 %v2045
      %2069 = vmatprep.subr.bf16.mxu0 0
      %2070 = vmatpush1.bf16.xpose.msra.mxu0 %v2048
      %2071 = vmatprep.subr.bf16.mxu0 0
      %2072 = vmatpush1.bf16.xpose.msra.mxu0 %v2051
      %2073 = vmatprep.subr.bf16.mxu0 0
      %2074 = vmatpush1.bf16.xpose.msra.mxu0 %v2054
      %2075 = vmatprep.subr.bf16.mxu0 0
      %2076 = vmatpush1.bf16.xpose.msra.mxu0 %v2057
      %2077 = vmatprep.subr.bf16.mxu0 0
      %2078 = vmatpush1.bf16.xpose.msra.mxu0 %v2060
      %2079 = vmatprep.subr.bf16.mxu0 0
      %2080 = vmatpush1.bf16.xpose.msra.mxu0 %v2063
      %2081 = vmatprep.subr.bf16.mxu0 0
      %2082 = vmatpush1.bf16.xpose.msra.mxu0 0
      %2083 = vmatprep.subr.bf16.mxu0 0
      %2084 = vmatpush1.bf16.xpose.msra.mxu0 0
      %2085 = vmatprep.subr.bf16.mxu0 0
      %2086 = vmatpush1.bf16.xpose.msra.mxu0 0
      %2087 = vmatprep.subr.bf16.mxu0 0
      %2088 = vmatpush1.bf16.xpose.msra.mxu0 0
      %2089 = vmatprep.subr.bf16.mxu0 0
      %2090 = vmatpush1.bf16.xpose.msra.mxu0 0
      %2091 = vmatprep.subr.bf16.mxu0 0
      %2092 = vmatpush1.bf16.xpose.msra.mxu0 0
      %2093 = vmatprep.subr.bf16.mxu0 0
      %2094 = vmatpush1.bf16.xpose.msra.mxu0 0
      %2095 = vmatprep.subr.bf16.mxu0 0
      %2096 = vmatpush1.bf16.xpose.msra.mxu0 0
      %2097 = vmatprep.mubr.bf16.mxu0 0
      %2098 = vmatmul.mubr.bf16.gmra.mrb[0].mxu0 %v2018
      %v2099 = vpop.f32.mrb[0].mxu0
      %v2100 = vadd.f32 0.0, %v2099
      %v2101 = vpop.f32.mrb[0].mxu0
      %v2102 = vpop.f32.mrb[0].mxu0
      %v2103 = vadd.f32 0.0, %v2102
      %v2104 = vpop.f32.mrb[0].mxu0
      %2105 = vmatprep.mubr.bf16.mxu0 0
      %2106 = vmatmul.mubr.bf16.gmra.mrb[0].mxu0 %v2021
      %v2107 = vpop.f32.mrb[0].mxu0
      %v2108 = vadd.f32 0.0, %v2107
      %v2109 = vpop.f32.mrb[0].mxu0
      %v2110 = vpop.f32.mrb[0].mxu0
      %v2111 = vadd.f32 0.0, %v2110
      %v2112 = vpop.f32.mrb[0].mxu0
      %2113 = vmatprep.mubr.bf16.mxu0 0
      %2114 = vmatmul.mubr.bf16.gmra.mrb[0].mxu0 %v2024
      %v2115 = vpop.f32.mrb[0].mxu0
      %v2116 = vadd.f32 0.0, %v2115
      %v2117 = vpop.f32.mrb[0].mxu0
      %v2118 = vpop.f32.mrb[0].mxu0
      %v2119 = vadd.f32 0.0, %v2118
      %v2120 = vpop.f32.mrb[0].mxu0
      %2121 = vmatprep.mubr.bf16.mxu0 0
      %2122 = vmatmul.mubr.bf16.gmra.mrb[0].mxu0 %v2027
      %v2123 = vpop.f32.mrb[0].mxu0
      %v2124 = vadd.f32 0.0, %v2123
      %v2125 = vpop.f32.mrb[0].mxu0
      %v2126 = vpop.f32.mrb[0].mxu0
      %v2127 = vadd.f32 0.0, %v2126
      %v2128 = vpop.f32.mrb[0].mxu0
      %2129 = vmatprep.mubr.bf16.mxu0 0
      %2130 = vmatmul.mubr.bf16.gmra.mrb[0].mxu0 %v2030
      %v2131 = vpop.f32.mrb[0].mxu0
      %v2132 = vadd.f32 0.0, %v2131
      %v2133 = vpop.f32.mrb[0].mxu0
      %v2134 = vpop.f32.mrb[0].mxu0
      %v2135 = vadd.f32 0.0, %v2134
      %v2136 = vpop.f32.mrb[0].mxu0
      %2137 = vmatprep.mubr.bf16.mxu0 0
      %2138 = vmatmul.mubr.bf16.gmra.mrb[0].mxu0 %v2033
      %v2139 = vpop.f32.mrb[0].mxu0
      %v2140 = vadd.f32 0.0, %v2139
      %v2141 = vpop.f32.mrb[0].mxu0
      %v2142 = vpop.f32.mrb[0].mxu0
      %v2143 = vadd.f32 0.0, %v2142
      %v2144 = vpop.f32.mrb[0].mxu0
      %2145 = vmatprep.mubr.bf16.mxu0 0
      %2146 = vmatmul.mubr.bf16.gmra.mrb[0].mxu0 %v2036
      %v2147 = vpop.f32.mrb[0].mxu0
      %v2148 = vadd.f32 0.0, %v2147
      %v2149 = vpop.f32.mrb[0].mxu0
      %v2150 = vpop.f32.mrb[0].mxu0
      %v2151 = vadd.f32 0.0, %v2150
      %v2152 = vpop.f32.mrb[0].mxu0
      %2153 = vmatprep.mubr.bf16.mxu0 0
      %2154 = vmatmul.mubr.bf16.gmra.mrb[0].mxu0 %v2039
      %v2155 = vpop.f32.mrb[0].mxu0
      %v2156 = vadd.f32 0.0, %v2155
      %v2157 = vpop.f32.mrb[0].mxu0
      %v2158 = vpop.f32.mrb[0].mxu0
      %v2159 = vadd.f32 0.0, %v2158
      %v2160 = vpop.f32.mrb[0].mxu0
      %2161 = vdwg.mxu0
      %2162 = vrot.lane.b32.xlu0 %v1353, 112
      %v2163 = vpop.permute.xlu0 %2162
      %2164 = vrot.lane.b32.xlu0 %v1354, 112
      %v2165 = vpop.permute.xlu0 %2164
      %2166 = vrot.lane.b32.xlu0 %v1355, 112
      %v2167 = vpop.permute.xlu0 %2166
      %2168 = vrot.lane.b32.xlu0 %v1356, 112
      %v2169 = vpop.permute.xlu0 %2168
      %2170 = vrot.lane.b32.xlu0 %v1357, 112
      %v2171 = vpop.permute.xlu0 %2170
      %2172 = vrot.lane.b32.xlu0 %v1358, 112
      %v2173 = vpop.permute.xlu0 %2172
      %2174 = vrot.lane.b32.xlu0 %v1359, 112
      %v2175 = vpop.permute.xlu0 %2174
      %2176 = vrot.lane.b32.xlu0 %v1360, 112
      %v2177 = vpop.permute.xlu0 %2176
      %2178 = vrot.lane.b32.xlu0 %v1578, 112
      %v2179 = vpop.permute.xlu0 %2178
      %2180 = vrot.lane.b32.xlu0 %v1579, 112
      %v2181 = vpop.permute.xlu0 %2180
      %2182 = vrot.lane.b32.xlu0 %v1580, 112
      %v2183 = vpop.permute.xlu0 %2182
      %2184 = vrot.lane.b32.xlu0 %v1581, 112
      %v2185 = vpop.permute.xlu0 %2184
      %2186 = vrot.lane.b32.xlu0 %v1582, 112
      %v2187 = vpop.permute.xlu0 %2186
      %2188 = vrot.lane.b32.xlu0 %v1583, 112
      %v2189 = vpop.permute.xlu0 %2188
      %2190 = vrot.lane.b32.xlu0 %v1584, 112
      %v2191 = vpop.permute.xlu0 %2190
      %2192 = vrot.lane.b32.xlu0 %v1585, 112
      %v2193 = vpop.permute.xlu0 %2192
      %v2195 = vsel %vm1823, %v2163, 0
      %v2198 = vsel %vm1823, %v2165, 0
      %v2201 = vsel %vm1823, %v2167, 0
      %v2204 = vsel %vm1823, %v2169, 0
      %v2207 = vsel %vm1823, %v2171, 0
      %v2210 = vsel %vm1823, %v2173, 0
      %v2213 = vsel %vm1823, %v2175, 0
      %v2216 = vsel %vm1823, %v2177, 0
      %v2219 = vsel %vm1823, %v2179, 0
      %v2222 = vsel %vm1823, %v2181, 0
      %v2225 = vsel %vm1823, %v2183, 0
      %v2228 = vsel %vm1823, %v2185, 0
      %v2231 = vsel %vm1823, %v2187, 0
      %v2234 = vsel %vm1823, %v2189, 0
      %v2237 = vsel %vm1823, %v2191, 0
      %v2240 = vsel %vm1823, %v2193, 0
      %2242 = vmatprep.subr.bf16.mxu0 0
      %2243 = vmatpush1.bf16.xpose.msra.mxu0 %v2219
      %2244 = vmatprep.subr.bf16.mxu0 0
      %2245 = vmatpush1.bf16.xpose.msra.mxu0 %v2222
      %2246 = vmatprep.subr.bf16.mxu0 0
      %2247 = vmatpush1.bf16.xpose.msra.mxu0 %v2225
      %2248 = vmatprep.subr.bf16.mxu0 0
      %2249 = vmatpush1.bf16.xpose.msra.mxu0 %v2228
      %2250 = vmatprep.subr.bf16.mxu0 0
      %2251 = vmatpush1.bf16.xpose.msra.mxu0 %v2231
      %2252 = vmatprep.subr.bf16.mxu0 0
      %2253 = vmatpush1.bf16.xpose.msra.mxu0 %v2234
      %2254 = vmatprep.subr.bf16.mxu0 0
      %2255 = vmatpush1.bf16.xpose.msra.mxu0 %v2237
      %2256 = vmatprep.subr.bf16.mxu0 0
      %2257 = vmatpush1.bf16.xpose.msra.mxu0 %v2240
      %2258 = vmatprep.subr.bf16.mxu0 0
      %2259 = vmatpush1.bf16.xpose.msra.mxu0 0
      %2260 = vmatprep.subr.bf16.mxu0 0
      %2261 = vmatpush1.bf16.xpose.msra.mxu0 0
      %2262 = vmatprep.subr.bf16.mxu0 0
      %2263 = vmatpush1.bf16.xpose.msra.mxu0 0
      %2264 = vmatprep.subr.bf16.mxu0 0
      %2265 = vmatpush1.bf16.xpose.msra.mxu0 0
      %2266 = vmatprep.subr.bf16.mxu0 0
      %2267 = vmatpush1.bf16.xpose.msra.mxu0 0
      %2268 = vmatprep.subr.bf16.mxu0 0
      %2269 = vmatpush1.bf16.xpose.msra.mxu0 0
      %2270 = vmatprep.subr.bf16.mxu0 0
      %2271 = vmatpush1.bf16.xpose.msra.mxu0 0
      %2272 = vmatprep.subr.bf16.mxu0 0
      %2273 = vmatpush1.bf16.xpose.msra.mxu0 0
      %2274 = vmatprep.mubr.bf16.mxu0 0
      %2275 = vmatmul.mubr.bf16.gmra.mrb[0].mxu0 %v2195
      %v2276 = vpop.f32.mrb[0].mxu0
      %v2277 = vadd.f32 0.0, %v2276
      %v2278 = vpop.f32.mrb[0].mxu0
      %v2279 = vpop.f32.mrb[0].mxu0
      %v2280 = vadd.f32 0.0, %v2279
      %v2281 = vpop.f32.mrb[0].mxu0
      %2282 = vmatprep.mubr.bf16.mxu0 0
      %2283 = vmatmul.mubr.bf16.gmra.mrb[0].mxu0 %v2198
      %v2284 = vpop.f32.mrb[0].mxu0
      %v2285 = vadd.f32 0.0, %v2284
      %v2286 = vpop.f32.mrb[0].mxu0
      %v2287 = vpop.f32.mrb[0].mxu0
      %v2288 = vadd.f32 0.0, %v2287
      %v2289 = vpop.f32.mrb[0].mxu0
      %2290 = vmatprep.mubr.bf16.mxu0 0
      %2291 = vmatmul.mubr.bf16.gmra.mrb[0].mxu0 %v2201
      %v2292 = vpop.f32.mrb[0].mxu0
      %v2293 = vadd.f32 0.0, %v2292
      %v2294 = vpop.f32.mrb[0].mxu0
      %v2295 = vpop.f32.mrb[0].mxu0
      %v2296 = vadd.f32 0.0, %v2295
      %v2297 = vpop.f32.mrb[0].mxu0
      %2298 = vmatprep.mubr.bf16.mxu0 0
      %2299 = vmatmul.mubr.bf16.gmra.mrb[0].mxu0 %v2204
      %v2300 = vpop.f32.mrb[0].mxu0
      %v2301 = vadd.f32 0.0, %v2300
      %v2302 = vpop.f32.mrb[0].mxu0
      %v2303 = vpop.f32.mrb[0].mxu0
      %v2304 = vadd.f32 0.0, %v2303
      %v2305 = vpop.f32.mrb[0].mxu0
      %2306 = vmatprep.mubr.bf16.mxu0 0
      %2307 = vmatmul.mubr.bf16.gmra.mrb[0].mxu0 %v2207
      %v2308 = vpop.f32.mrb[0].mxu0
      %v2309 = vadd.f32 0.0, %v2308
      %v2310 = vpop.f32.mrb[0].mxu0
      %v2311 = vpop.f32.mrb[0].mxu0
      %v2312 = vadd.f32 0.0, %v2311
      %v2313 = vpop.f32.mrb[0].mxu0
      %2314 = vmatprep.mubr.bf16.mxu0 0
      %2315 = vmatmul.mubr.bf16.gmra.mrb[0].mxu0 %v2210
      %v2316 = vpop.f32.mrb[0].mxu0
      %v2317 = vadd.f32 0.0, %v2316
      %v2318 = vpop.f32.mrb[0].mxu0
      %v2319 = vpop.f32.mrb[0].mxu0
      %v2320 = vadd.f32 0.0, %v2319
      %v2321 = vpop.f32.mrb[0].mxu0
      %2322 = vmatprep.mubr.bf16.mxu0 0
      %2323 = vmatmul.mubr.bf16.gmra.mrb[0].mxu0 %v2213
      %v2324 = vpop.f32.mrb[0].mxu0
      %v2325 = vadd.f32 0.0, %v2324
      %v2326 = vpop.f32.mrb[0].mxu0
      %v2327 = vpop.f32.mrb[0].mxu0
      %v2328 = vadd.f32 0.0, %v2327
      %v2329 = vpop.f32.mrb[0].mxu0
      %2330 = vmatprep.mubr.bf16.mxu0 0
      %2331 = vmatmul.mubr.bf16.gmra.mrb[0].mxu0 %v2216
      %v2332 = vpop.f32.mrb[0].mxu0
      %v2333 = vadd.f32 0.0, %v2332
      %v2334 = vpop.f32.mrb[0].mxu0
      %v2335 = vpop.f32.mrb[0].mxu0
      %v2336 = vadd.f32 0.0, %v2335
      %v2337 = vpop.f32.mrb[0].mxu0
      %2338 = vdwg.mxu0
      %2339 = vrot.lane.b32.xlu0 %v1353, 104
      %v2340 = vpop.permute.xlu0 %2339
      %2341 = vrot.lane.b32.xlu0 %v1354, 104
      %v2342 = vpop.permute.xlu0 %2341
      %2343 = vrot.lane.b32.xlu0 %v1355, 104
      %v2344 = vpop.permute.xlu0 %2343
      %2345 = vrot.lane.b32.xlu0 %v1356, 104
      %v2346 = vpop.permute.xlu0 %2345
      %2347 = vrot.lane.b32.xlu0 %v1357, 104
      %v2348 = vpop.permute.xlu0 %2347
      %2349 = vrot.lane.b32.xlu0 %v1358, 104
      %v2350 = vpop.permute.xlu0 %2349
      %2351 = vrot.lane.b32.xlu0 %v1359, 104
      %v2352 = vpop.permute.xlu0 %2351
      %2353 = vrot.lane.b32.xlu0 %v1360, 104
      %v2354 = vpop.permute.xlu0 %2353
      %2355 = vrot.lane.b32.xlu0 %v1578, 104
      %v2356 = vpop.permute.xlu0 %2355
      %2357 = vrot.lane.b32.xlu0 %v1579, 104
      %v2358 = vpop.permute.xlu0 %2357
      %2359 = vrot.lane.b32.xlu0 %v1580, 104
      %v2360 = vpop.permute.xlu0 %2359
      %2361 = vrot.lane.b32.xlu0 %v1581, 104
      %v2362 = vpop.permute.xlu0 %2361
      %2363 = vrot.lane.b32.xlu0 %v1582, 104
      %v2364 = vpop.permute.xlu0 %2363
      %2365 = vrot.lane.b32.xlu0 %v1583, 104
      %v2366 = vpop.permute.xlu0 %2365
      %2367 = vrot.lane.b32.xlu0 %v1584, 104
      %v2368 = vpop.permute.xlu0 %2367
      %2369 = vrot.lane.b32.xlu0 %v1585, 104
      %v2370 = vpop.permute.xlu0 %2369
      %v2372 = vsel %vm1823, %v2340, 0
      %v2375 = vsel %vm1823, %v2342, 0
      %v2378 = vsel %vm1823, %v2344, 0
      %v2381 = vsel %vm1823, %v2346, 0
      %v2384 = vsel %vm1823, %v2348, 0
      %v2387 = vsel %vm1823, %v2350, 0
      %v2390 = vsel %vm1823, %v2352, 0
      %v2393 = vsel %vm1823, %v2354, 0
      %v2396 = vsel %vm1823, %v2356, 0
      %v2399 = vsel %vm1823, %v2358, 0
      %v2402 = vsel %vm1823, %v2360, 0
      %v2405 = vsel %vm1823, %v2362, 0
      %v2408 = vsel %vm1823, %v2364, 0
      %v2411 = vsel %vm1823, %v2366, 0
      %v2414 = vsel %vm1823, %v2368, 0
      %v2417 = vsel %vm1823, %v2370, 0
      %2419 = vmatprep.subr.bf16.mxu0 0
      %2420 = vmatpush1.bf16.xpose.msra.mxu0 %v2396
      %2421 = vmatprep.subr.bf16.mxu0 0
      %2422 = vmatpush1.bf16.xpose.msra.mxu0 %v2399
      %2423 = vmatprep.subr.bf16.mxu0 0
      %2424 = vmatpush1.bf16.xpose.msra.mxu0 %v2402
      %2425 = vmatprep.subr.bf16.mxu0 0
      %2426 = vmatpush1.bf16.xpose.msra.mxu0 %v2405
      %2427 = vmatprep.subr.bf16.mxu0 0
      %2428 = vmatpush1.bf16.xpose.msra.mxu0 %v2408
      %2429 = vmatprep.subr.bf16.mxu0 0
      %2430 = vmatpush1.bf16.xpose.msra.mxu0 %v2411
      %2431 = vmatprep.subr.bf16.mxu0 0
      %2432 = vmatpush1.bf16.xpose.msra.mxu0 %v2414
      %2433 = vmatprep.subr.bf16.mxu0 0
      %2434 = vmatpush1.bf16.xpose.msra.mxu0 %v2417
      %2435 = vmatprep.subr.bf16.mxu0 0
      %2436 = vmatpush1.bf16.xpose.msra.mxu0 0
      %2437 = vmatprep.subr.bf16.mxu0 0
      %2438 = vmatpush1.bf16.xpose.msra.mxu0 0
      %2439 = vmatprep.subr.bf16.mxu0 0
      %2440 = vmatpush1.bf16.xpose.msra.mxu0 0
      %2441 = vmatprep.subr.bf16.mxu0 0
      %2442 = vmatpush1.bf16.xpose.msra.mxu0 0
      %2443 = vmatprep.subr.bf16.mxu0 0
      %2444 = vmatpush1.bf16.xpose.msra.mxu0 0
      %2445 = vmatprep.subr.bf16.mxu0 0
      %2446 = vmatpush1.bf16.xpose.msra.mxu0 0
      %2447 = vmatprep.subr.bf16.mxu0 0
      %2448 = vmatpush1.bf16.xpose.msra.mxu0 0
      %2449 = vmatprep.subr.bf16.mxu0 0
      %2450 = vmatpush1.bf16.xpose.msra.mxu0 0
      %2451 = vmatprep.mubr.bf16.mxu0 0
      %2452 = vmatmul.mubr.bf16.gmra.mrb[0].mxu0 %v2372
      %v2453 = vpop.f32.mrb[0].mxu0
      %v2454 = vadd.f32 0.0, %v2453
      %v2455 = vpop.f32.mrb[0].mxu0
      %v2456 = vpop.f32.mrb[0].mxu0
      %v2457 = vadd.f32 0.0, %v2456
      %v2458 = vpop.f32.mrb[0].mxu0
      %2459 = vmatprep.mubr.bf16.mxu0 0
      %2460 = vmatmul.mubr.bf16.gmra.mrb[0].mxu0 %v2375
      %v2461 = vpop.f32.mrb[0].mxu0
      %v2462 = vadd.f32 0.0, %v2461
      %v2463 = vpop.f32.mrb[0].mxu0
      %v2464 = vpop.f32.mrb[0].mxu0
      %v2465 = vadd.f32 0.0, %v2464
      %v2466 = vpop.f32.mrb[0].mxu0
      %2467 = vmatprep.mubr.bf16.mxu0 0
      %2468 = vmatmul.mubr.bf16.gmra.mrb[0].mxu0 %v2378
      %v2469 = vpop.f32.mrb[0].mxu0
      %v2470 = vadd.f32 0.0, %v2469
      %v2471 = vpop.f32.mrb[0].mxu0
      %v2472 = vpop.f32.mrb[0].mxu0
      %v2473 = vadd.f32 0.0, %v2472
      %v2474 = vpop.f32.mrb[0].mxu0
      %2475 = vmatprep.mubr.bf16.mxu0 0
      %2476 = vmatmul.mubr.bf16.gmra.mrb[0].mxu0 %v2381
      %v2477 = vpop.f32.mrb[0].mxu0
      %v2478 = vadd.f32 0.0, %v2477
      %v2479 = vpop.f32.mrb[0].mxu0
      %v2480 = vpop.f32.mrb[0].mxu0
      %v2481 = vadd.f32 0.0, %v2480
      %v2482 = vpop.f32.mrb[0].mxu0
      %2483 = vmatprep.mubr.bf16.mxu0 0
      %2484 = vmatmul.mubr.bf16.gmra.mrb[0].mxu0 %v2384
      %v2485 = vpop.f32.mrb[0].mxu0
      %v2486 = vadd.f32 0.0, %v2485
      %v2487 = vpop.f32.mrb[0].mxu0
      %v2488 = vpop.f32.mrb[0].mxu0
      %v2489 = vadd.f32 0.0, %v2488
      %v2490 = vpop.f32.mrb[0].mxu0
      %2491 = vmatprep.mubr.bf16.mxu0 0
      %2492 = vmatmul.mubr.bf16.gmra.mrb[0].mxu0 %v2387
      %v2493 = vpop.f32.mrb[0].mxu0
      %v2494 = vadd.f32 0.0, %v2493
      %v2495 = vpop.f32.mrb[0].mxu0
      %v2496 = vpop.f32.mrb[0].mxu0
      %v2497 = vadd.f32 0.0, %v2496
      %v2498 = vpop.f32.mrb[0].mxu0
      %2499 = vmatprep.mubr.bf16.mxu0 0
      %2500 = vmatmul.mubr.bf16.gmra.mrb[0].mxu0 %v2390
      %v2501 = vpop.f32.mrb[0].mxu0
      %v2502 = vadd.f32 0.0, %v2501
      %v2503 = vpop.f32.mrb[0].mxu0
      %v2504 = vpop.f32.mrb[0].mxu0
      %v2505 = vadd.f32 0.0, %v2504
      %v2506 = vpop.f32.mrb[0].mxu0
      %2507 = vmatprep.mubr.bf16.mxu0 0
      %2508 = vmatmul.mubr.bf16.gmra.mrb[0].mxu0 %v2393
      %v2509 = vpop.f32.mrb[0].mxu0
      %v2510 = vadd.f32 0.0, %v2509
      %v2511 = vpop.f32.mrb[0].mxu0
      %v2512 = vpop.f32.mrb[0].mxu0
      %v2513 = vadd.f32 0.0, %v2512
      %v2514 = vpop.f32.mrb[0].mxu0
      %2515 = vdwg.mxu0
      %s2517 = vtos %v554
      %v2518 = vstv %s2517
      %v2520 = vmul.f32 %v1907, %v2518
      %v2521 = vmul.f32 %v1910, %v2518
      %v2522 = vmul.f32 %v1915, %v2518
      %v2523 = vmul.f32 %v1918, %v2518
      %v2524 = vmul.f32 %v1923, %v2518
      %v2525 = vmul.f32 %v1926, %v2518
      %v2526 = vmul.f32 %v1931, %v2518
      %v2527 = vmul.f32 %v1934, %v2518
      %v2528 = vmul.f32 %v1939, %v2518
      %v2529 = vmul.f32 %v1942, %v2518
      %v2530 = vmul.f32 %v1947, %v2518
      %v2531 = vmul.f32 %v1950, %v2518
      %v2532 = vmul.f32 %v1955, %v2518
      %v2533 = vmul.f32 %v1958, %v2518
      %v2534 = vmul.f32 %v1963, %v2518
      %v2535 = vmul.f32 %v1966, %v2518
      %v2536 = vrot.slane %v554, 1
      %s2537 = vtos %v2536
      %v2538 = vstv %s2537
      %v2540 = vmul.f32 %v2100, %v2538
      %v2541 = vmul.f32 %v2103, %v2538
      %v2542 = vmul.f32 %v2108, %v2538
      %v2543 = vmul.f32 %v2111, %v2538
      %v2544 = vmul.f32 %v2116, %v2538
      %v2545 = vmul.f32 %v2119, %v2538
      %v2546 = vmul.f32 %v2124, %v2538
      %v2547 = vmul.f32 %v2127, %v2538
      %v2548 = vmul.f32 %v2132, %v2538
      %v2549 = vmul.f32 %v2135, %v2538
      %v2550 = vmul.f32 %v2140, %v2538
      %v2551 = vmul.f32 %v2143, %v2538
      %v2552 = vmul.f32 %v2148, %v2538
      %v2553 = vmul.f32 %v2151, %v2538
      %v2554 = vmul.f32 %v2156, %v2538
      %v2555 = vmul.f32 %v2159, %v2538
      %v2556 = vadd.f32 %v2520, %v2540
      %v2557 = vadd.f32 %v2521, %v2541
      %v2558 = vadd.f32 %v2522, %v2542
      %v2559 = vadd.f32 %v2523, %v2543
      %v2560 = vadd.f32 %v2524, %v2544
      %v2561 = vadd.f32 %v2525, %v2545
      %v2562 = vadd.f32 %v2526, %v2546
      %v2563 = vadd.f32 %v2527, %v2547
      %v2564 = vadd.f32 %v2528, %v2548
      %v2565 = vadd.f32 %v2529, %v2549
      %v2566 = vadd.f32 %v2530, %v2550
      %v2567 = vadd.f32 %v2531, %v2551
      %v2568 = vadd.f32 %v2532, %v2552
      %v2569 = vadd.f32 %v2533, %v2553
      %v2570 = vadd.f32 %v2534, %v2554
      %v2571 = vadd.f32 %v2535, %v2555
      %v2572 = vrot.slane %v554, 2
      %s2573 = vtos %v2572
      %v2574 = vstv %s2573
      %v2576 = vmul.f32 %v2277, %v2574
      %v2577 = vmul.f32 %v2280, %v2574
      %v2578 = vmul.f32 %v2285, %v2574
      %v2579 = vmul.f32 %v2288, %v2574
      %v2580 = vmul.f32 %v2293, %v2574
      %v2581 = vmul.f32 %v2296, %v2574
      %v2582 = vmul.f32 %v2301, %v2574
      %v2583 = vmul.f32 %v2304, %v2574
      %v2584 = vmul.f32 %v2309, %v2574
      %v2585 = vmul.f32 %v2312, %v2574
      %v2586 = vmul.f32 %v2317, %v2574
      %v2587 = vmul.f32 %v2320, %v2574
      %v2588 = vmul.f32 %v2325, %v2574
      %v2589 = vmul.f32 %v2328, %v2574
      %v2590 = vmul.f32 %v2333, %v2574
      %v2591 = vmul.f32 %v2336, %v2574
      %v2592 = vadd.f32 %v2556, %v2576
      %v2593 = vadd.f32 %v2557, %v2577
      %v2594 = vadd.f32 %v2558, %v2578
      %v2595 = vadd.f32 %v2559, %v2579
      %v2596 = vadd.f32 %v2560, %v2580
      %v2597 = vadd.f32 %v2561, %v2581
      %v2598 = vadd.f32 %v2562, %v2582
      %v2599 = vadd.f32 %v2563, %v2583
      %v2600 = vadd.f32 %v2564, %v2584
      %v2601 = vadd.f32 %v2565, %v2585
      %v2602 = vadd.f32 %v2566, %v2586
      %v2603 = vadd.f32 %v2567, %v2587
      %v2604 = vadd.f32 %v2568, %v2588
      %v2605 = vadd.f32 %v2569, %v2589
      %v2606 = vadd.f32 %v2570, %v2590
      %v2607 = vadd.f32 %v2571, %v2591
      %v2608 = vrot.slane %v554, 3
      %s2609 = vtos %v2608
      %v2610 = vstv %s2609
      %v2612 = vmul.f32 %v2454, %v2610
      %v2613 = vmul.f32 %v2457, %v2610
      %v2614 = vmul.f32 %v2462, %v2610
      %v2615 = vmul.f32 %v2465, %v2610
      %v2616 = vmul.f32 %v2470, %v2610
      %v2617 = vmul.f32 %v2473, %v2610
      %v2618 = vmul.f32 %v2478, %v2610
      %v2619 = vmul.f32 %v2481, %v2610
      %v2620 = vmul.f32 %v2486, %v2610
      %v2621 = vmul.f32 %v2489, %v2610
      %v2622 = vmul.f32 %v2494, %v2610
      %v2623 = vmul.f32 %v2497, %v2610
      %v2624 = vmul.f32 %v2502, %v2610
      %v2625 = vmul.f32 %v2505, %v2610
      %v2626 = vmul.f32 %v2510, %v2610
      %v2627 = vmul.f32 %v2513, %v2610
      %v2628 = vadd.f32 %v2592, %v2612
      %v2629 = vadd.f32 %v2593, %v2613
      %v2630 = vadd.f32 %v2594, %v2614
      %v2631 = vadd.f32 %v2595, %v2615
      %v2632 = vadd.f32 %v2596, %v2616
      %v2633 = vadd.f32 %v2597, %v2617
      %v2634 = vadd.f32 %v2598, %v2618
      %v2635 = vadd.f32 %v2599, %v2619
      %v2636 = vadd.f32 %v2600, %v2620
      %v2637 = vadd.f32 %v2601, %v2621
      %v2638 = vadd.f32 %v2602, %v2622
      %v2639 = vadd.f32 %v2603, %v2623
      %v2640 = vadd.f32 %v2604, %v2624
      %v2641 = vadd.f32 %v2605, %v2625
      %v2642 = vadd.f32 %v2606, %v2626
      %v2643 = vadd.f32 %v2607, %v2627
      %v2644 = vadd.f32 %v2628, %v1822
      %v2645 = vadd.f32 %v2629, %v1822
      %v2646 = vadd.f32 %v2630, %v1822
      %v2647 = vadd.f32 %v2631, %v1822
      %v2648 = vadd.f32 %v2632, %v1822
      %v2649 = vadd.f32 %v2633, %v1822
      %v2650 = vadd.f32 %v2634, %v1822
      %v2651 = vadd.f32 %v2635, %v1822
      %v2652 = vadd.f32 %v2636, %v1822
      %v2653 = vadd.f32 %v2637, %v1822
      %v2654 = vadd.f32 %v2638, %v1822
      %v2655 = vadd.f32 %v2639, %v1822
      %v2656 = vadd.f32 %v2640, %v1822
      %v2657 = vadd.f32 %v2641, %v1822
      %v2658 = vadd.f32 %v2642, %v1822
      %v2659 = vadd.f32 %v2643, %v1822
      %2660 = vmax.xlane.f32.xlu0 %v2644
      %v2661 = vpop.xlane.xlu0 %2660
      %2662 = vmax.xlane.f32.xlu0 %v2645
      %v2663 = vpop.xlane.xlu0 %2662
      %2664 = vmax.xlane.f32.xlu0 %v2646
      %v2665 = vpop.xlane.xlu0 %2664
      %2666 = vmax.xlane.f32.xlu0 %v2647
      %v2667 = vpop.xlane.xlu0 %2666
      %2668 = vmax.xlane.f32.xlu0 %v2648
      %v2669 = vpop.xlane.xlu0 %2668
      %2670 = vmax.xlane.f32.xlu0 %v2649
      %v2671 = vpop.xlane.xlu0 %2670
      %2672 = vmax.xlane.f32.xlu0 %v2650
      %v2673 = vpop.xlane.xlu0 %2672
      %2674 = vmax.xlane.f32.xlu0 %v2651
      %v2675 = vpop.xlane.xlu0 %2674
      %2676 = vmax.xlane.f32.xlu0 %v2652
      %v2677 = vpop.xlane.xlu0 %2676
      %2678 = vmax.xlane.f32.xlu0 %v2653
      %v2679 = vpop.xlane.xlu0 %2678
      %2680 = vmax.xlane.f32.xlu0 %v2654
      %v2681 = vpop.xlane.xlu0 %2680
      %2682 = vmax.xlane.f32.xlu0 %v2655
      %v2683 = vpop.xlane.xlu0 %2682
      %2684 = vmax.xlane.f32.xlu0 %v2656
      %v2685 = vpop.xlane.xlu0 %2684
      %2686 = vmax.xlane.f32.xlu0 %v2657
      %v2687 = vpop.xlane.xlu0 %2686
      %2688 = vmax.xlane.f32.xlu0 %v2658
      %v2689 = vpop.xlane.xlu0 %2688
      %2690 = vmax.xlane.f32.xlu0 %v2659
      %v2691 = vpop.xlane.xlu0 %2690
      %v2692 = vsub.f32 %v2644, %v2661
      %v2693 = vsub.f32 %v2645, %v2663
      %v2694 = vsub.f32 %v2646, %v2665
      %v2695 = vsub.f32 %v2647, %v2667
      %v2696 = vsub.f32 %v2648, %v2669
      %v2697 = vsub.f32 %v2649, %v2671
      %v2698 = vsub.f32 %v2650, %v2673
      %v2699 = vsub.f32 %v2651, %v2675
      %v2700 = vsub.f32 %v2652, %v2677
      %v2701 = vsub.f32 %v2653, %v2679
      %v2702 = vsub.f32 %v2654, %v2681
      %v2703 = vsub.f32 %v2655, %v2683
      %v2704 = vsub.f32 %v2656, %v2685
      %v2705 = vsub.f32 %v2657, %v2687
      %v2706 = vsub.f32 %v2658, %v2689
      %v2707 = vsub.f32 %v2659, %v2691
      %v2708 = vmul.f32 %v2692, 1.442695
      %v2709 = vpow.pop %v2708
      %v2710 = vmul.f32 %v2693, 1.442695
      %v2711 = vpow.pop %v2710
      %v2712 = vmul.f32 %v2694, 1.442695
      %v2713 = vpow.pop %v2712
      %v2714 = vmul.f32 %v2695, 1.442695
      %v2715 = vpow.pop %v2714
      %v2716 = vmul.f32 %v2696, 1.442695
      %v2717 = vpow.pop %v2716
      %v2718 = vmul.f32 %v2697, 1.442695
      %v2719 = vpow.pop %v2718
      %v2720 = vmul.f32 %v2698, 1.442695
      %v2721 = vpow.pop %v2720
      %v2722 = vmul.f32 %v2699, 1.442695
      %v2723 = vpow.pop %v2722
      %v2724 = vmul.f32 %v2700, 1.442695
      %v2725 = vpow.pop %v2724
      %v2726 = vmul.f32 %v2701, 1.442695
      %v2727 = vpow.pop %v2726
      %v2728 = vmul.f32 %v2702, 1.442695
      %v2729 = vpow.pop %v2728
      %v2730 = vmul.f32 %v2703, 1.442695
      %v2731 = vpow.pop %v2730
      %v2732 = vmul.f32 %v2704, 1.442695
      %v2733 = vpow.pop %v2732
      %v2734 = vmul.f32 %v2705, 1.442695
      %v2735 = vpow.pop %v2734
      %v2736 = vmul.f32 %v2706, 1.442695
      %v2737 = vpow.pop %v2736
      %v2738 = vmul.f32 %v2707, 1.442695
      %v2739 = vpow.pop %v2738
      %2740 = vadd.xlane.f32.xlu0 %v2709
      %v2741 = vpop.xlane.xlu0 %2740
      %2742 = vadd.xlane.f32.xlu0 %v2711
      %v2743 = vpop.xlane.xlu0 %2742
      %2744 = vadd.xlane.f32.xlu0 %v2713
      %v2745 = vpop.xlane.xlu0 %2744
      %2746 = vadd.xlane.f32.xlu0 %v2715
      %v2747 = vpop.xlane.xlu0 %2746
      %2748 = vadd.xlane.f32.xlu0 %v2717
      %v2749 = vpop.xlane.xlu0 %2748
      %2750 = vadd.xlane.f32.xlu0 %v2719
      %v2751 = vpop.xlane.xlu0 %2750
      %2752 = vadd.xlane.f32.xlu0 %v2721
      %v2753 = vpop.xlane.xlu0 %2752
      %2754 = vadd.xlane.f32.xlu0 %v2723
      %v2755 = vpop.xlane.xlu0 %2754
      %2756 = vadd.xlane.f32.xlu0 %v2725
      %v2757 = vpop.xlane.xlu0 %2756
      %2758 = vadd.xlane.f32.xlu0 %v2727
      %v2759 = vpop.xlane.xlu0 %2758
      %2760 = vadd.xlane.f32.xlu0 %v2729
      %v2761 = vpop.xlane.xlu0 %2760
      %2762 = vadd.xlane.f32.xlu0 %v2731
      %v2763 = vpop.xlane.xlu0 %2762
      %2764 = vadd.xlane.f32.xlu0 %v2733
      %v2765 = vpop.xlane.xlu0 %2764
      %2766 = vadd.xlane.f32.xlu0 %v2735
      %v2767 = vpop.xlane.xlu0 %2766
      %2768 = vadd.xlane.f32.xlu0 %v2737
      %v2769 = vpop.xlane.xlu0 %2768
      %2770 = vadd.xlane.f32.xlu0 %v2739
      %v2771 = vpop.xlane.xlu0 %2770
      %v2772 = vrcp.pop %v2741
      %v2773 = vrcp.pop %v2743
      %v2774 = vrcp.pop %v2745
      %v2775 = vrcp.pop %v2747
      %v2776 = vrcp.pop %v2749
      %v2777 = vrcp.pop %v2751
      %v2778 = vrcp.pop %v2753
      %v2779 = vrcp.pop %v2755
      %v2780 = vrcp.pop %v2757
      %v2781 = vrcp.pop %v2759
      %v2782 = vrcp.pop %v2761
      %v2783 = vrcp.pop %v2763
      %v2784 = vrcp.pop %v2765
      %v2785 = vrcp.pop %v2767
      %v2786 = vrcp.pop %v2769
      %v2787 = vrcp.pop %v2771
      %v2788 = vmul.f32 %v2709, %v2772
      %v2789 = vmul.f32 %v2711, %v2773
      %v2790 = vmul.f32 %v2713, %v2774
      %v2791 = vmul.f32 %v2715, %v2775
      %v2792 = vmul.f32 %v2717, %v2776
      %v2793 = vmul.f32 %v2719, %v2777
      %v2794 = vmul.f32 %v2721, %v2778
      %v2795 = vmul.f32 %v2723, %v2779
      %v2796 = vmul.f32 %v2725, %v2780
      %v2797 = vmul.f32 %v2727, %v2781
      %v2798 = vmul.f32 %v2729, %v2782
      %v2799 = vmul.f32 %v2731, %v2783
      %v2800 = vmul.f32 %v2733, %v2784
      %v2801 = vmul.f32 %v2735, %v2785
      %v2802 = vmul.f32 %v2737, %v2786
      %v2803 = vmul.f32 %v2739, %v2787
      %2804 = vrot.lane.b32.xlu0 %v554, 127
      %v2805 = vpop.permute.xlu0 %2804
      %s2806 = vtos %v2805
      %v2807 = vstv %s2806
      %v2809 = vmul.f32 %v1907, %v2807
      %v2810 = vmul.f32 %v1910, %v2807
      %v2811 = vmul.f32 %v1915, %v2807
      %v2812 = vmul.f32 %v1918, %v2807
      %v2813 = vmul.f32 %v1923, %v2807
      %v2814 = vmul.f32 %v1926, %v2807
      %v2815 = vmul.f32 %v1931, %v2807
      %v2816 = vmul.f32 %v1934, %v2807
      %v2817 = vmul.f32 %v1939, %v2807
      %v2818 = vmul.f32 %v1942, %v2807
      %v2819 = vmul.f32 %v1947, %v2807
      %v2820 = vmul.f32 %v1950, %v2807
      %v2821 = vmul.f32 %v1955, %v2807
      %v2822 = vmul.f32 %v1958, %v2807
      %v2823 = vmul.f32 %v1963, %v2807
      %v2824 = vmul.f32 %v1966, %v2807
      %2825 = vrot.lane.b32.xlu0 %v2536, 127
      %v2826 = vpop.permute.xlu0 %2825
      %s2827 = vtos %v2826
      %v2828 = vstv %s2827
      %v2830 = vmul.f32 %v2100, %v2828
      %v2831 = vmul.f32 %v2103, %v2828
      %v2832 = vmul.f32 %v2108, %v2828
      %v2833 = vmul.f32 %v2111, %v2828
      %v2834 = vmul.f32 %v2116, %v2828
      %v2835 = vmul.f32 %v2119, %v2828
      %v2836 = vmul.f32 %v2124, %v2828
      %v2837 = vmul.f32 %v2127, %v2828
      %v2838 = vmul.f32 %v2132, %v2828
      %v2839 = vmul.f32 %v2135, %v2828
      %v2840 = vmul.f32 %v2140, %v2828
      %v2841 = vmul.f32 %v2143, %v2828
      %v2842 = vmul.f32 %v2148, %v2828
      %v2843 = vmul.f32 %v2151, %v2828
      %v2844 = vmul.f32 %v2156, %v2828
      %v2845 = vmul.f32 %v2159, %v2828
      %v2846 = vadd.f32 %v2809, %v2830
      %v2847 = vadd.f32 %v2810, %v2831
      %v2848 = vadd.f32 %v2811, %v2832
      %v2849 = vadd.f32 %v2812, %v2833
      %v2850 = vadd.f32 %v2813, %v2834
      %v2851 = vadd.f32 %v2814, %v2835
      %v2852 = vadd.f32 %v2815, %v2836
      %v2853 = vadd.f32 %v2816, %v2837
      %v2854 = vadd.f32 %v2817, %v2838
      %v2855 = vadd.f32 %v2818, %v2839
      %v2856 = vadd.f32 %v2819, %v2840
      %v2857 = vadd.f32 %v2820, %v2841
      %v2858 = vadd.f32 %v2821, %v2842
      %v2859 = vadd.f32 %v2822, %v2843
      %v2860 = vadd.f32 %v2823, %v2844
      %v2861 = vadd.f32 %v2824, %v2845
      %2862 = vrot.lane.b32.xlu0 %v2572, 127
      %v2863 = vpop.permute.xlu0 %2862
      %s2864 = vtos %v2863
      %v2865 = vstv %s2864
      %v2867 = vmul.f32 %v2277, %v2865
      %v2868 = vmul.f32 %v2280, %v2865
      %v2869 = vmul.f32 %v2285, %v2865
      %v2870 = vmul.f32 %v2288, %v2865
      %v2871 = vmul.f32 %v2293, %v2865
      %v2872 = vmul.f32 %v2296, %v2865
      %v2873 = vmul.f32 %v2301, %v2865
      %v2874 = vmul.f32 %v2304, %v2865
      %v2875 = vmul.f32 %v2309, %v2865
      %v2876 = vmul.f32 %v2312, %v2865
      %v2877 = vmul.f32 %v2317, %v2865
      %v2878 = vmul.f32 %v2320, %v2865
      %v2879 = vmul.f32 %v2325, %v2865
      %v2880 = vmul.f32 %v2328, %v2865
      %v2881 = vmul.f32 %v2333, %v2865
      %v2882 = vmul.f32 %v2336, %v2865
      %v2883 = vadd.f32 %v2846, %v2867
      %v2884 = vadd.f32 %v2847, %v2868
      %v2885 = vadd.f32 %v2848, %v2869
      %v2886 = vadd.f32 %v2849, %v2870
      %v2887 = vadd.f32 %v2850, %v2871
      %v2888 = vadd.f32 %v2851, %v2872
      %v2889 = vadd.f32 %v2852, %v2873
      %v2890 = vadd.f32 %v2853, %v2874
      %v2891 = vadd.f32 %v2854, %v2875
      %v2892 = vadd.f32 %v2855, %v2876
      %v2893 = vadd.f32 %v2856, %v2877
      %v2894 = vadd.f32 %v2857, %v2878
      %v2895 = vadd.f32 %v2858, %v2879
      %v2896 = vadd.f32 %v2859, %v2880
      %v2897 = vadd.f32 %v2860, %v2881
      %v2898 = vadd.f32 %v2861, %v2882
      %2899 = vrot.lane.b32.xlu0 %v2608, 127
      %v2900 = vpop.permute.xlu0 %2899
      %s2901 = vtos %v2900
      %v2902 = vstv %s2901
      %v2904 = vmul.f32 %v2454, %v2902
      %v2905 = vmul.f32 %v2457, %v2902
      %v2906 = vmul.f32 %v2462, %v2902
      %v2907 = vmul.f32 %v2465, %v2902
      %v2908 = vmul.f32 %v2470, %v2902
      %v2909 = vmul.f32 %v2473, %v2902
      %v2910 = vmul.f32 %v2478, %v2902
      %v2911 = vmul.f32 %v2481, %v2902
      %v2912 = vmul.f32 %v2486, %v2902
      %v2913 = vmul.f32 %v2489, %v2902
      %v2914 = vmul.f32 %v2494, %v2902
      %v2915 = vmul.f32 %v2497, %v2902
      %v2916 = vmul.f32 %v2502, %v2902
      %v2917 = vmul.f32 %v2505, %v2902
      %v2918 = vmul.f32 %v2510, %v2902
      %v2919 = vmul.f32 %v2513, %v2902
      %v2920 = vadd.f32 %v2883, %v2904
      %v2921 = vadd.f32 %v2884, %v2905
      %v2922 = vadd.f32 %v2885, %v2906
      %v2923 = vadd.f32 %v2886, %v2907
      %v2924 = vadd.f32 %v2887, %v2908
      %v2925 = vadd.f32 %v2888, %v2909
      %v2926 = vadd.f32 %v2889, %v2910
      %v2927 = vadd.f32 %v2890, %v2911
      %v2928 = vadd.f32 %v2891, %v2912
      %v2929 = vadd.f32 %v2892, %v2913
      %v2930 = vadd.f32 %v2893, %v2914
      %v2931 = vadd.f32 %v2894, %v2915
      %v2932 = vadd.f32 %v2895, %v2916
      %v2933 = vadd.f32 %v2896, %v2917
      %v2934 = vadd.f32 %v2897, %v2918
      %v2935 = vadd.f32 %v2898, %v2919
      %v2936 = vadd.f32 %v2920, %v1822
      %v2937 = vadd.f32 %v2921, %v1822
      %v2938 = vadd.f32 %v2922, %v1822
      %v2939 = vadd.f32 %v2923, %v1822
      %v2940 = vadd.f32 %v2924, %v1822
      %v2941 = vadd.f32 %v2925, %v1822
      %v2942 = vadd.f32 %v2926, %v1822
      %v2943 = vadd.f32 %v2927, %v1822
      %v2944 = vadd.f32 %v2928, %v1822
      %v2945 = vadd.f32 %v2929, %v1822
      %v2946 = vadd.f32 %v2930, %v1822
      %v2947 = vadd.f32 %v2931, %v1822
      %v2948 = vadd.f32 %v2932, %v1822
      %v2949 = vadd.f32 %v2933, %v1822
      %v2950 = vadd.f32 %v2934, %v1822
      %v2951 = vadd.f32 %v2935, %v1822
      %2952 = vmax.xlane.f32.xlu0 %v2936
      %v2953 = vpop.xlane.xlu0 %2952
      %2954 = vmax.xlane.f32.xlu0 %v2937
      %v2955 = vpop.xlane.xlu0 %2954
      %2956 = vmax.xlane.f32.xlu0 %v2938
      %v2957 = vpop.xlane.xlu0 %2956
      %2958 = vmax.xlane.f32.xlu0 %v2939
      %v2959 = vpop.xlane.xlu0 %2958
      %2960 = vmax.xlane.f32.xlu0 %v2940
      %v2961 = vpop.xlane.xlu0 %2960
      %2962 = vmax.xlane.f32.xlu0 %v2941
      %v2963 = vpop.xlane.xlu0 %2962
      %2964 = vmax.xlane.f32.xlu0 %v2942
      %v2965 = vpop.xlane.xlu0 %2964
      %2966 = vmax.xlane.f32.xlu0 %v2943
      %v2967 = vpop.xlane.xlu0 %2966
      %2968 = vmax.xlane.f32.xlu0 %v2944
      %v2969 = vpop.xlane.xlu0 %2968
      %2970 = vmax.xlane.f32.xlu0 %v2945
      %v2971 = vpop.xlane.xlu0 %2970
      %2972 = vmax.xlane.f32.xlu0 %v2946
      %v2973 = vpop.xlane.xlu0 %2972
      %2974 = vmax.xlane.f32.xlu0 %v2947
      %v2975 = vpop.xlane.xlu0 %2974
      %2976 = vmax.xlane.f32.xlu0 %v2948
      %v2977 = vpop.xlane.xlu0 %2976
      %2978 = vmax.xlane.f32.xlu0 %v2949
      %v2979 = vpop.xlane.xlu0 %2978
      %2980 = vmax.xlane.f32.xlu0 %v2950
      %v2981 = vpop.xlane.xlu0 %2980
      %2982 = vmax.xlane.f32.xlu0 %v2951
      %v2983 = vpop.xlane.xlu0 %2982
      %v2984 = vsub.f32 %v2936, %v2953
      %v2985 = vsub.f32 %v2937, %v2955
      %v2986 = vsub.f32 %v2938, %v2957
      %v2987 = vsub.f32 %v2939, %v2959
      %v2988 = vsub.f32 %v2940, %v2961
      %v2989 = vsub.f32 %v2941, %v2963
      %v2990 = vsub.f32 %v2942, %v2965
      %v2991 = vsub.f32 %v2943, %v2967
      %v2992 = vsub.f32 %v2944, %v2969
      %v2993 = vsub.f32 %v2945, %v2971
      %v2994 = vsub.f32 %v2946, %v2973
      %v2995 = vsub.f32 %v2947, %v2975
      %v2996 = vsub.f32 %v2948, %v2977
      %v2997 = vsub.f32 %v2949, %v2979
      %v2998 = vsub.f32 %v2950, %v2981
      %v2999 = vsub.f32 %v2951, %v2983
      %v3000 = vmul.f32 %v2984, 1.442695
      %v3001 = vpow.pop %v3000
      %v3002 = vmul.f32 %v2985, 1.442695
      %v3003 = vpow.pop %v3002
      %v3004 = vmul.f32 %v2986, 1.442695
      %v3005 = vpow.pop %v3004
      %v3006 = vmul.f32 %v2987, 1.442695
      %v3007 = vpow.pop %v3006
      %v3008 = vmul.f32 %v2988, 1.442695
      %v3009 = vpow.pop %v3008
      %v3010 = vmul.f32 %v2989, 1.442695
      %v3011 = vpow.pop %v3010
      %v3012 = vmul.f32 %v2990, 1.442695
      %v3013 = vpow.pop %v3012
      %v3014 = vmul.f32 %v2991, 1.442695
      %v3015 = vpow.pop %v3014
      %v3016 = vmul.f32 %v2992, 1.442695
      %v3017 = vpow.pop %v3016
      %v3018 = vmul.f32 %v2993, 1.442695
      %v3019 = vpow.pop %v3018
      %v3020 = vmul.f32 %v2994, 1.442695
      %v3021 = vpow.pop %v3020
      %v3022 = vmul.f32 %v2995, 1.442695
      %v3023 = vpow.pop %v3022
      %v3024 = vmul.f32 %v2996, 1.442695
      %v3025 = vpow.pop %v3024
      %v3026 = vmul.f32 %v2997, 1.442695
      %v3027 = vpow.pop %v3026
      %v3028 = vmul.f32 %v2998, 1.442695
      %v3029 = vpow.pop %v3028
      %v3030 = vmul.f32 %v2999, 1.442695
      %v3031 = vpow.pop %v3030
      %3032 = vadd.xlane.f32.xlu0 %v3001
      %v3033 = vpop.xlane.xlu0 %3032
      %3034 = vadd.xlane.f32.xlu0 %v3003
      %v3035 = vpop.xlane.xlu0 %3034
      %3036 = vadd.xlane.f32.xlu0 %v3005
      %v3037 = vpop.xlane.xlu0 %3036
      %3038 = vadd.xlane.f32.xlu0 %v3007
      %v3039 = vpop.xlane.xlu0 %3038
      %3040 = vadd.xlane.f32.xlu0 %v3009
      %v3041 = vpop.xlane.xlu0 %3040
      %3042 = vadd.xlane.f32.xlu0 %v3011
      %v3043 = vpop.xlane.xlu0 %3042
      %3044 = vadd.xlane.f32.xlu0 %v3013
      %v3045 = vpop.xlane.xlu0 %3044
      %3046 = vadd.xlane.f32.xlu0 %v3015
      %v3047 = vpop.xlane.xlu0 %3046
      %3048 = vadd.xlane.f32.xlu0 %v3017
      %v3049 = vpop.xlane.xlu0 %3048
      %3050 = vadd.xlane.f32.xlu0 %v3019
      %v3051 = vpop.xlane.xlu0 %3050
      %3052 = vadd.xlane.f32.xlu0 %v3021
      %v3053 = vpop.xlane.xlu0 %3052
      %3054 = vadd.xlane.f32.xlu0 %v3023
      %v3055 = vpop.xlane.xlu0 %3054
      %3056 = vadd.xlane.f32.xlu0 %v3025
      %v3057 = vpop.xlane.xlu0 %3056
      %3058 = vadd.xlane.f32.xlu0 %v3027
      %v3059 = vpop.xlane.xlu0 %3058
      %3060 = vadd.xlane.f32.xlu0 %v3029
      %v3061 = vpop.xlane.xlu0 %3060
      %3062 = vadd.xlane.f32.xlu0 %v3031
      %v3063 = vpop.xlane.xlu0 %3062
      %v3064 = vrcp.pop %v3033
      %v3065 = vrcp.pop %v3035
      %v3066 = vrcp.pop %v3037
      %v3067 = vrcp.pop %v3039
      %v3068 = vrcp.pop %v3041
      %v3069 = vrcp.pop %v3043
      %v3070 = vrcp.pop %v3045
      %v3071 = vrcp.pop %v3047
      %v3072 = vrcp.pop %v3049
      %v3073 = vrcp.pop %v3051
      %v3074 = vrcp.pop %v3053
      %v3075 = vrcp.pop %v3055
      %v3076 = vrcp.pop %v3057
      %v3077 = vrcp.pop %v3059
      %v3078 = vrcp.pop %v3061
      %v3079 = vrcp.pop %v3063
      %v3080 = vmul.f32 %v3001, %v3064
      %v3081 = vmul.f32 %v3003, %v3065
      %v3082 = vmul.f32 %v3005, %v3066
      %v3083 = vmul.f32 %v3007, %v3067
      %v3084 = vmul.f32 %v3009, %v3068
      %v3085 = vmul.f32 %v3011, %v3069
      %v3086 = vmul.f32 %v3013, %v3070
      %v3087 = vmul.f32 %v3015, %v3071
      %v3088 = vmul.f32 %v3017, %v3072
      %v3089 = vmul.f32 %v3019, %v3073
      %v3090 = vmul.f32 %v3021, %v3074
      %v3091 = vmul.f32 %v3023, %v3075
      %v3092 = vmul.f32 %v3025, %v3076
      %v3093 = vmul.f32 %v3027, %v3077
      %v3094 = vmul.f32 %v3029, %v3078
      %v3095 = vmul.f32 %v3031, %v3079
      %3096 = vrot.lane.b32.xlu0 %v554, 126
      %v3097 = vpop.permute.xlu0 %3096
      %s3098 = vtos %v3097
      %v3099 = vstv %s3098
      %v3101 = vmul.f32 %v1907, %v3099
      %v3102 = vmul.f32 %v1910, %v3099
      %v3103 = vmul.f32 %v1915, %v3099
      %v3104 = vmul.f32 %v1918, %v3099
      %v3105 = vmul.f32 %v1923, %v3099
      %v3106 = vmul.f32 %v1926, %v3099
      %v3107 = vmul.f32 %v1931, %v3099
      %v3108 = vmul.f32 %v1934, %v3099
      %v3109 = vmul.f32 %v1939, %v3099
      %v3110 = vmul.f32 %v1942, %v3099
      %v3111 = vmul.f32 %v1947, %v3099
      %v3112 = vmul.f32 %v1950, %v3099
      %v3113 = vmul.f32 %v1955, %v3099
      %v3114 = vmul.f32 %v1958, %v3099
      %v3115 = vmul.f32 %v1963, %v3099
      %v3116 = vmul.f32 %v1966, %v3099
      %3117 = vrot.lane.b32.xlu0 %v2536, 126
      %v3118 = vpop.permute.xlu0 %3117
      %s3119 = vtos %v3118
      %v3120 = vstv %s3119
      %v3122 = vmul.f32 %v2100, %v3120
      %v3123 = vmul.f32 %v2103, %v3120
      %v3124 = vmul.f32 %v2108, %v3120
      %v3125 = vmul.f32 %v2111, %v3120
      %v3126 = vmul.f32 %v2116, %v3120
      %v3127 = vmul.f32 %v2119, %v3120
      %v3128 = vmul.f32 %v2124, %v3120
      %v3129 = vmul.f32 %v2127, %v3120
      %v3130 = vmul.f32 %v2132, %v3120
      %v3131 = vmul.f32 %v2135, %v3120
      %v3132 = vmul.f32 %v2140, %v3120
      %v3133 = vmul.f32 %v2143, %v3120
      %v3134 = vmul.f32 %v2148, %v3120
      %v3135 = vmul.f32 %v2151, %v3120
      %v3136 = vmul.f32 %v2156, %v3120
      %v3137 = vmul.f32 %v2159, %v3120
      %v3138 = vadd.f32 %v3101, %v3122
      %v3139 = vadd.f32 %v3102, %v3123
      %v3140 = vadd.f32 %v3103, %v3124
      %v3141 = vadd.f32 %v3104, %v3125
      %v3142 = vadd.f32 %v3105, %v3126
      %v3143 = vadd.f32 %v3106, %v3127
      %v3144 = vadd.f32 %v3107, %v3128
      %v3145 = vadd.f32 %v3108, %v3129
      %v3146 = vadd.f32 %v3109, %v3130
      %v3147 = vadd.f32 %v3110, %v3131
      %v3148 = vadd.f32 %v3111, %v3132
      %v3149 = vadd.f32 %v3112, %v3133
      %v3150 = vadd.f32 %v3113, %v3134
      %v3151 = vadd.f32 %v3114, %v3135
      %v3152 = vadd.f32 %v3115, %v3136
      %v3153 = vadd.f32 %v3116, %v3137
      %3154 = vrot.lane.b32.xlu0 %v2572, 126
      %v3155 = vpop.permute.xlu0 %3154
      %s3156 = vtos %v3155
      %v3157 = vstv %s3156
      %v3159 = vmul.f32 %v2277, %v3157
      %v3160 = vmul.f32 %v2280, %v3157
      %v3161 = vmul.f32 %v2285, %v3157
      %v3162 = vmul.f32 %v2288, %v3157
      %v3163 = vmul.f32 %v2293, %v3157
      %v3164 = vmul.f32 %v2296, %v3157
      %v3165 = vmul.f32 %v2301, %v3157
      %v3166 = vmul.f32 %v2304, %v3157
      %v3167 = vmul.f32 %v2309, %v3157
      %v3168 = vmul.f32 %v2312, %v3157
      %v3169 = vmul.f32 %v2317, %v3157
      %v3170 = vmul.f32 %v2320, %v3157
      %v3171 = vmul.f32 %v2325, %v3157
      %v3172 = vmul.f32 %v2328, %v3157
      %v3173 = vmul.f32 %v2333, %v3157
      %v3174 = vmul.f32 %v2336, %v3157
      %v3175 = vadd.f32 %v3138, %v3159
      %v3176 = vadd.f32 %v3139, %v3160
      %v3177 = vadd.f32 %v3140, %v3161
      %v3178 = vadd.f32 %v3141, %v3162
      %v3179 = vadd.f32 %v3142, %v3163
      %v3180 = vadd.f32 %v3143, %v3164
      %v3181 = vadd.f32 %v3144, %v3165
      %v3182 = vadd.f32 %v3145, %v3166
      %v3183 = vadd.f32 %v3146, %v3167
      %v3184 = vadd.f32 %v3147, %v3168
      %v3185 = vadd.f32 %v3148, %v3169
      %v3186 = vadd.f32 %v3149, %v3170
      %v3187 = vadd.f32 %v3150, %v3171
      %v3188 = vadd.f32 %v3151, %v3172
      %v3189 = vadd.f32 %v3152, %v3173
      %v3190 = vadd.f32 %v3153, %v3174
      %3191 = vrot.lane.b32.xlu0 %v2608, 126
      %v3192 = vpop.permute.xlu0 %3191
      %s3193 = vtos %v3192
      %v3194 = vstv %s3193
      %v3196 = vmul.f32 %v2454, %v3194
      %v3197 = vmul.f32 %v2457, %v3194
      %v3198 = vmul.f32 %v2462, %v3194
      %v3199 = vmul.f32 %v2465, %v3194
      %v3200 = vmul.f32 %v2470, %v3194
      %v3201 = vmul.f32 %v2473, %v3194
      %v3202 = vmul.f32 %v2478, %v3194
      %v3203 = vmul.f32 %v2481, %v3194
      %v3204 = vmul.f32 %v2486, %v3194
      %v3205 = vmul.f32 %v2489, %v3194
      %v3206 = vmul.f32 %v2494, %v3194
      %v3207 = vmul.f32 %v2497, %v3194
      %v3208 = vmul.f32 %v2502, %v3194
      %v3209 = vmul.f32 %v2505, %v3194
      %v3210 = vmul.f32 %v2510, %v3194
      %v3211 = vmul.f32 %v2513, %v3194
      %v3212 = vadd.f32 %v3175, %v3196
      %v3213 = vadd.f32 %v3176, %v3197
      %v3214 = vadd.f32 %v3177, %v3198
      %v3215 = vadd.f32 %v3178, %v3199
      %v3216 = vadd.f32 %v3179, %v3200
      %v3217 = vadd.f32 %v3180, %v3201
      %v3218 = vadd.f32 %v3181, %v3202
      %v3219 = vadd.f32 %v3182, %v3203
      %v3220 = vadd.f32 %v3183, %v3204
      %v3221 = vadd.f32 %v3184, %v3205
      %v3222 = vadd.f32 %v3185, %v3206
      %v3223 = vadd.f32 %v3186, %v3207
      %v3224 = vadd.f32 %v3187, %v3208
      %v3225 = vadd.f32 %v3188, %v3209
      %v3226 = vadd.f32 %v3189, %v3210
      %v3227 = vadd.f32 %v3190, %v3211
      %v3228 = vadd.f32 %v3212, %v1822
      %v3229 = vadd.f32 %v3213, %v1822
      %v3230 = vadd.f32 %v3214, %v1822
      %v3231 = vadd.f32 %v3215, %v1822
      %v3232 = vadd.f32 %v3216, %v1822
      %v3233 = vadd.f32 %v3217, %v1822
      %v3234 = vadd.f32 %v3218, %v1822
      %v3235 = vadd.f32 %v3219, %v1822
      %v3236 = vadd.f32 %v3220, %v1822
      %v3237 = vadd.f32 %v3221, %v1822
      %v3238 = vadd.f32 %v3222, %v1822
      %v3239 = vadd.f32 %v3223, %v1822
      %v3240 = vadd.f32 %v3224, %v1822
      %v3241 = vadd.f32 %v3225, %v1822
      %v3242 = vadd.f32 %v3226, %v1822
      %v3243 = vadd.f32 %v3227, %v1822
      %3244 = vmax.xlane.f32.xlu0 %v3228
      %v3245 = vpop.xlane.xlu0 %3244
      %3246 = vmax.xlane.f32.xlu0 %v3229
      %v3247 = vpop.xlane.xlu0 %3246
      %3248 = vmax.xlane.f32.xlu0 %v3230
      %v3249 = vpop.xlane.xlu0 %3248
      %3250 = vmax.xlane.f32.xlu0 %v3231
      %v3251 = vpop.xlane.xlu0 %3250
      %3252 = vmax.xlane.f32.xlu0 %v3232
      %v3253 = vpop.xlane.xlu0 %3252
      %3254 = vmax.xlane.f32.xlu0 %v3233
      %v3255 = vpop.xlane.xlu0 %3254
      %3256 = vmax.xlane.f32.xlu0 %v3234
      %v3257 = vpop.xlane.xlu0 %3256
      %3258 = vmax.xlane.f32.xlu0 %v3235
      %v3259 = vpop.xlane.xlu0 %3258
      %3260 = vmax.xlane.f32.xlu0 %v3236
      %v3261 = vpop.xlane.xlu0 %3260
      %3262 = vmax.xlane.f32.xlu0 %v3237
      %v3263 = vpop.xlane.xlu0 %3262
      %3264 = vmax.xlane.f32.xlu0 %v3238
      %v3265 = vpop.xlane.xlu0 %3264
      %3266 = vmax.xlane.f32.xlu0 %v3239
      %v3267 = vpop.xlane.xlu0 %3266
      %3268 = vmax.xlane.f32.xlu0 %v3240
      %v3269 = vpop.xlane.xlu0 %3268
      %3270 = vmax.xlane.f32.xlu0 %v3241
      %v3271 = vpop.xlane.xlu0 %3270
      %3272 = vmax.xlane.f32.xlu0 %v3242
      %v3273 = vpop.xlane.xlu0 %3272
      %3274 = vmax.xlane.f32.xlu0 %v3243
      %v3275 = vpop.xlane.xlu0 %3274
      %v3276 = vsub.f32 %v3228, %v3245
      %v3277 = vsub.f32 %v3229, %v3247
      %v3278 = vsub.f32 %v3230, %v3249
      %v3279 = vsub.f32 %v3231, %v3251
      %v3280 = vsub.f32 %v3232, %v3253
      %v3281 = vsub.f32 %v3233, %v3255
      %v3282 = vsub.f32 %v3234, %v3257
      %v3283 = vsub.f32 %v3235, %v3259
      %v3284 = vsub.f32 %v3236, %v3261
      %v3285 = vsub.f32 %v3237, %v3263
      %v3286 = vsub.f32 %v3238, %v3265
      %v3287 = vsub.f32 %v3239, %v3267
      %v3288 = vsub.f32 %v3240, %v3269
      %v3289 = vsub.f32 %v3241, %v3271
      %v3290 = vsub.f32 %v3242, %v3273
      %v3291 = vsub.f32 %v3243, %v3275
      %v3292 = vmul.f32 %v3276, 1.442695
      %v3293 = vpow.pop %v3292
      %v3294 = vmul.f32 %v3277, 1.442695
      %v3295 = vpow.pop %v3294
      %v3296 = vmul.f32 %v3278, 1.442695
      %v3297 = vpow.pop %v3296
      %v3298 = vmul.f32 %v3279, 1.442695
      %v3299 = vpow.pop %v3298
      %v3300 = vmul.f32 %v3280, 1.442695
      %v3301 = vpow.pop %v3300
      %v3302 = vmul.f32 %v3281, 1.442695
      %v3303 = vpow.pop %v3302
      %v3304 = vmul.f32 %v3282, 1.442695
      %v3305 = vpow.pop %v3304
      %v3306 = vmul.f32 %v3283, 1.442695
      %v3307 = vpow.pop %v3306
      %v3308 = vmul.f32 %v3284, 1.442695
      %v3309 = vpow.pop %v3308
      %v3310 = vmul.f32 %v3285, 1.442695
      %v3311 = vpow.pop %v3310
      %v3312 = vmul.f32 %v3286, 1.442695
      %v3313 = vpow.pop %v3312
      %v3314 = vmul.f32 %v3287, 1.442695
      %v3315 = vpow.pop %v3314
      %v3316 = vmul.f32 %v3288, 1.442695
      %v3317 = vpow.pop %v3316
      %v3318 = vmul.f32 %v3289, 1.442695
      %v3319 = vpow.pop %v3318
      %v3320 = vmul.f32 %v3290, 1.442695
      %v3321 = vpow.pop %v3320
      %v3322 = vmul.f32 %v3291, 1.442695
      %v3323 = vpow.pop %v3322
      %3324 = vadd.xlane.f32.xlu0 %v3293
      %v3325 = vpop.xlane.xlu0 %3324
      %3326 = vadd.xlane.f32.xlu0 %v3295
      %v3327 = vpop.xlane.xlu0 %3326
      %3328 = vadd.xlane.f32.xlu0 %v3297
      %v3329 = vpop.xlane.xlu0 %3328
      %3330 = vadd.xlane.f32.xlu0 %v3299
      %v3331 = vpop.xlane.xlu0 %3330
      %3332 = vadd.xlane.f32.xlu0 %v3301
      %v3333 = vpop.xlane.xlu0 %3332
      %3334 = vadd.xlane.f32.xlu0 %v3303
      %v3335 = vpop.xlane.xlu0 %3334
      %3336 = vadd.xlane.f32.xlu0 %v3305
      %v3337 = vpop.xlane.xlu0 %3336
      %3338 = vadd.xlane.f32.xlu0 %v3307
      %v3339 = vpop.xlane.xlu0 %3338
      %3340 = vadd.xlane.f32.xlu0 %v3309
      %v3341 = vpop.xlane.xlu0 %3340
      %3342 = vadd.xlane.f32.xlu0 %v3311
      %v3343 = vpop.xlane.xlu0 %3342
      %3344 = vadd.xlane.f32.xlu0 %v3313
      %v3345 = vpop.xlane.xlu0 %3344
      %3346 = vadd.xlane.f32.xlu0 %v3315
      %v3347 = vpop.xlane.xlu0 %3346
      %3348 = vadd.xlane.f32.xlu0 %v3317
      %v3349 = vpop.xlane.xlu0 %3348
      %3350 = vadd.xlane.f32.xlu0 %v3319
      %v3351 = vpop.xlane.xlu0 %3350
      %3352 = vadd.xlane.f32.xlu0 %v3321
      %v3353 = vpop.xlane.xlu0 %3352
      %3354 = vadd.xlane.f32.xlu0 %v3323
      %v3355 = vpop.xlane.xlu0 %3354
      %v3356 = vrcp.pop %v3325
      %v3357 = vrcp.pop %v3327
      %v3358 = vrcp.pop %v3329
      %v3359 = vrcp.pop %v3331
      %v3360 = vrcp.pop %v3333
      %v3361 = vrcp.pop %v3335
      %v3362 = vrcp.pop %v3337
      %v3363 = vrcp.pop %v3339
      %v3364 = vrcp.pop %v3341
      %v3365 = vrcp.pop %v3343
      %v3366 = vrcp.pop %v3345
      %v3367 = vrcp.pop %v3347
      %v3368 = vrcp.pop %v3349
      %v3369 = vrcp.pop %v3351
      %v3370 = vrcp.pop %v3353
      %v3371 = vrcp.pop %v3355
      %v3372 = vmul.f32 %v3293, %v3356
      %v3373 = vmul.f32 %v3295, %v3357
      %v3374 = vmul.f32 %v3297, %v3358
      %v3375 = vmul.f32 %v3299, %v3359
      %v3376 = vmul.f32 %v3301, %v3360
      %v3377 = vmul.f32 %v3303, %v3361
      %v3378 = vmul.f32 %v3305, %v3362
      %v3379 = vmul.f32 %v3307, %v3363
      %v3380 = vmul.f32 %v3309, %v3364
      %v3381 = vmul.f32 %v3311, %v3365
      %v3382 = vmul.f32 %v3313, %v3366
      %v3383 = vmul.f32 %v3315, %v3367
      %v3384 = vmul.f32 %v3317, %v3368
      %v3385 = vmul.f32 %v3319, %v3369
      %v3386 = vmul.f32 %v3321, %v3370
      %v3387 = vmul.f32 %v3323, %v3371
      %3388 = vrot.lane.b32.xlu0 %v554, 125
      %v3389 = vpop.permute.xlu0 %3388
      %s3390 = vtos %v3389
      %v3391 = vstv %s3390
      %v3393 = vmul.f32 %v1907, %v3391
      %v3394 = vmul.f32 %v1910, %v3391
      %v3395 = vmul.f32 %v1915, %v3391
      %v3396 = vmul.f32 %v1918, %v3391
      %v3397 = vmul.f32 %v1923, %v3391
      %v3398 = vmul.f32 %v1926, %v3391
      %v3399 = vmul.f32 %v1931, %v3391
      %v3400 = vmul.f32 %v1934, %v3391
      %v3401 = vmul.f32 %v1939, %v3391
      %v3402 = vmul.f32 %v1942, %v3391
      %v3403 = vmul.f32 %v1947, %v3391
      %v3404 = vmul.f32 %v1950, %v3391
      %v3405 = vmul.f32 %v1955, %v3391
      %v3406 = vmul.f32 %v1958, %v3391
      %v3407 = vmul.f32 %v1963, %v3391
      %v3408 = vmul.f32 %v1966, %v3391
      %3409 = vrot.lane.b32.xlu0 %v2536, 125
      %v3410 = vpop.permute.xlu0 %3409
      %s3411 = vtos %v3410
      %v3412 = vstv %s3411
      %v3414 = vmul.f32 %v2100, %v3412
      %v3415 = vmul.f32 %v2103, %v3412
      %v3416 = vmul.f32 %v2108, %v3412
      %v3417 = vmul.f32 %v2111, %v3412
      %v3418 = vmul.f32 %v2116, %v3412
      %v3419 = vmul.f32 %v2119, %v3412
      %v3420 = vmul.f32 %v2124, %v3412
      %v3421 = vmul.f32 %v2127, %v3412
      %v3422 = vmul.f32 %v2132, %v3412
      %v3423 = vmul.f32 %v2135, %v3412
      %v3424 = vmul.f32 %v2140, %v3412
      %v3425 = vmul.f32 %v2143, %v3412
      %v3426 = vmul.f32 %v2148, %v3412
      %v3427 = vmul.f32 %v2151, %v3412
      %v3428 = vmul.f32 %v2156, %v3412
      %v3429 = vmul.f32 %v2159, %v3412
      %v3430 = vadd.f32 %v3393, %v3414
      %v3431 = vadd.f32 %v3394, %v3415
      %v3432 = vadd.f32 %v3395, %v3416
      %v3433 = vadd.f32 %v3396, %v3417
      %v3434 = vadd.f32 %v3397, %v3418
      %v3435 = vadd.f32 %v3398, %v3419
      %v3436 = vadd.f32 %v3399, %v3420
      %v3437 = vadd.f32 %v3400, %v3421
      %v3438 = vadd.f32 %v3401, %v3422
      %v3439 = vadd.f32 %v3402, %v3423
      %v3440 = vadd.f32 %v3403, %v3424
      %v3441 = vadd.f32 %v3404, %v3425
      %v3442 = vadd.f32 %v3405, %v3426
      %v3443 = vadd.f32 %v3406, %v3427
      %v3444 = vadd.f32 %v3407, %v3428
      %v3445 = vadd.f32 %v3408, %v3429
      %3446 = vrot.lane.b32.xlu0 %v2572, 125
      %v3447 = vpop.permute.xlu0 %3446
      %s3448 = vtos %v3447
      %v3449 = vstv %s3448
      %v3451 = vmul.f32 %v2277, %v3449
      %v3452 = vmul.f32 %v2280, %v3449
      %v3453 = vmul.f32 %v2285, %v3449
      %v3454 = vmul.f32 %v2288, %v3449
      %v3455 = vmul.f32 %v2293, %v3449
      %v3456 = vmul.f32 %v2296, %v3449
      %v3457 = vmul.f32 %v2301, %v3449
      %v3458 = vmul.f32 %v2304, %v3449
      %v3459 = vmul.f32 %v2309, %v3449
      %v3460 = vmul.f32 %v2312, %v3449
      %v3461 = vmul.f32 %v2317, %v3449
      %v3462 = vmul.f32 %v2320, %v3449
      %v3463 = vmul.f32 %v2325, %v3449
      %v3464 = vmul.f32 %v2328, %v3449
      %v3465 = vmul.f32 %v2333, %v3449
      %v3466 = vmul.f32 %v2336, %v3449
      %v3467 = vadd.f32 %v3430, %v3451
      %v3468 = vadd.f32 %v3431, %v3452
      %v3469 = vadd.f32 %v3432, %v3453
      %v3470 = vadd.f32 %v3433, %v3454
      %v3471 = vadd.f32 %v3434, %v3455
      %v3472 = vadd.f32 %v3435, %v3456
      %v3473 = vadd.f32 %v3436, %v3457
      %v3474 = vadd.f32 %v3437, %v3458
      %v3475 = vadd.f32 %v3438, %v3459
      %v3476 = vadd.f32 %v3439, %v3460
      %v3477 = vadd.f32 %v3440, %v3461
      %v3478 = vadd.f32 %v3441, %v3462
      %v3479 = vadd.f32 %v3442, %v3463
      %v3480 = vadd.f32 %v3443, %v3464
      %v3481 = vadd.f32 %v3444, %v3465
      %v3482 = vadd.f32 %v3445, %v3466
      %3483 = vrot.lane.b32.xlu0 %v2608, 125
      %v3484 = vpop.permute.xlu0 %3483
      %s3485 = vtos %v3484
      %v3486 = vstv %s3485
      %v3488 = vmul.f32 %v2454, %v3486
      %v3489 = vmul.f32 %v2457, %v3486
      %v3490 = vmul.f32 %v2462, %v3486
      %v3491 = vmul.f32 %v2465, %v3486
      %v3492 = vmul.f32 %v2470, %v3486
      %v3493 = vmul.f32 %v2473, %v3486
      %v3494 = vmul.f32 %v2478, %v3486
      %v3495 = vmul.f32 %v2481, %v3486
      %v3496 = vmul.f32 %v2486, %v3486
      %v3497 = vmul.f32 %v2489, %v3486
      %v3498 = vmul.f32 %v2494, %v3486
      %v3499 = vmul.f32 %v2497, %v3486
      %v3500 = vmul.f32 %v2502, %v3486
      %v3501 = vmul.f32 %v2505, %v3486
      %v3502 = vmul.f32 %v2510, %v3486
      %v3503 = vmul.f32 %v2513, %v3486
      %v3504 = vadd.f32 %v3467, %v3488
      %v3505 = vadd.f32 %v3468, %v3489
      %v3506 = vadd.f32 %v3469, %v3490
      %v3507 = vadd.f32 %v3470, %v3491
      %v3508 = vadd.f32 %v3471, %v3492
      %v3509 = vadd.f32 %v3472, %v3493
      %v3510 = vadd.f32 %v3473, %v3494
      %v3511 = vadd.f32 %v3474, %v3495
      %v3512 = vadd.f32 %v3475, %v3496
      %v3513 = vadd.f32 %v3476, %v3497
      %v3514 = vadd.f32 %v3477, %v3498
      %v3515 = vadd.f32 %v3478, %v3499
      %v3516 = vadd.f32 %v3479, %v3500
      %v3517 = vadd.f32 %v3480, %v3501
      %v3518 = vadd.f32 %v3481, %v3502
      %v3519 = vadd.f32 %v3482, %v3503
      %v3520 = vadd.f32 %v3504, %v1822
      %v3521 = vadd.f32 %v3505, %v1822
      %v3522 = vadd.f32 %v3506, %v1822
      %v3523 = vadd.f32 %v3507, %v1822
      %v3524 = vadd.f32 %v3508, %v1822
      %v3525 = vadd.f32 %v3509, %v1822
      %v3526 = vadd.f32 %v3510, %v1822
      %v3527 = vadd.f32 %v3511, %v1822
      %v3528 = vadd.f32 %v3512, %v1822
      %v3529 = vadd.f32 %v3513, %v1822
      %v3530 = vadd.f32 %v3514, %v1822
      %v3531 = vadd.f32 %v3515, %v1822
      %v3532 = vadd.f32 %v3516, %v1822
      %v3533 = vadd.f32 %v3517, %v1822
      %v3534 = vadd.f32 %v3518, %v1822
      %v3535 = vadd.f32 %v3519, %v1822
      %3536 = vmax.xlane.f32.xlu0 %v3520
      %v3537 = vpop.xlane.xlu0 %3536
      %3538 = vmax.xlane.f32.xlu0 %v3521
      %v3539 = vpop.xlane.xlu0 %3538
      %3540 = vmax.xlane.f32.xlu0 %v3522
      %v3541 = vpop.xlane.xlu0 %3540
      %3542 = vmax.xlane.f32.xlu0 %v3523
      %v3543 = vpop.xlane.xlu0 %3542
      %3544 = vmax.xlane.f32.xlu0 %v3524
      %v3545 = vpop.xlane.xlu0 %3544
      %3546 = vmax.xlane.f32.xlu0 %v3525
      %v3547 = vpop.xlane.xlu0 %3546
      %3548 = vmax.xlane.f32.xlu0 %v3526
      %v3549 = vpop.xlane.xlu0 %3548
      %3550 = vmax.xlane.f32.xlu0 %v3527
      %v3551 = vpop.xlane.xlu0 %3550
      %3552 = vmax.xlane.f32.xlu0 %v3528
      %v3553 = vpop.xlane.xlu0 %3552
      %3554 = vmax.xlane.f32.xlu0 %v3529
      %v3555 = vpop.xlane.xlu0 %3554
      %3556 = vmax.xlane.f32.xlu0 %v3530
      %v3557 = vpop.xlane.xlu0 %3556
      %3558 = vmax.xlane.f32.xlu0 %v3531
      %v3559 = vpop.xlane.xlu0 %3558
      %3560 = vmax.xlane.f32.xlu0 %v3532
      %v3561 = vpop.xlane.xlu0 %3560
      %3562 = vmax.xlane.f32.xlu0 %v3533
      %v3563 = vpop.xlane.xlu0 %3562
      %3564 = vmax.xlane.f32.xlu0 %v3534
      %v3565 = vpop.xlane.xlu0 %3564
      %3566 = vmax.xlane.f32.xlu0 %v3535
      %v3567 = vpop.xlane.xlu0 %3566
      %v3568 = vsub.f32 %v3520, %v3537
      %v3569 = vsub.f32 %v3521, %v3539
      %v3570 = vsub.f32 %v3522, %v3541
      %v3571 = vsub.f32 %v3523, %v3543
      %v3572 = vsub.f32 %v3524, %v3545
      %v3573 = vsub.f32 %v3525, %v3547
      %v3574 = vsub.f32 %v3526, %v3549
      %v3575 = vsub.f32 %v3527, %v3551
      %v3576 = vsub.f32 %v3528, %v3553
      %v3577 = vsub.f32 %v3529, %v3555
      %v3578 = vsub.f32 %v3530, %v3557
      %v3579 = vsub.f32 %v3531, %v3559
      %v3580 = vsub.f32 %v3532, %v3561
      %v3581 = vsub.f32 %v3533, %v3563
      %v3582 = vsub.f32 %v3534, %v3565
      %v3583 = vsub.f32 %v3535, %v3567
      %v3584 = vmul.f32 %v3568, 1.442695
      %v3585 = vpow.pop %v3584
      %v3586 = vmul.f32 %v3569, 1.442695
      %v3587 = vpow.pop %v3586
      %v3588 = vmul.f32 %v3570, 1.442695
      %v3589 = vpow.pop %v3588
      %v3590 = vmul.f32 %v3571, 1.442695
      %v3591 = vpow.pop %v3590
      %v3592 = vmul.f32 %v3572, 1.442695
      %v3593 = vpow.pop %v3592
      %v3594 = vmul.f32 %v3573, 1.442695
      %v3595 = vpow.pop %v3594
      %v3596 = vmul.f32 %v3574, 1.442695
      %v3597 = vpow.pop %v3596
      %v3598 = vmul.f32 %v3575, 1.442695
      %v3599 = vpow.pop %v3598
      %v3600 = vmul.f32 %v3576, 1.442695
      %v3601 = vpow.pop %v3600
      %v3602 = vmul.f32 %v3577, 1.442695
      %v3603 = vpow.pop %v3602
      %v3604 = vmul.f32 %v3578, 1.442695
      %v3605 = vpow.pop %v3604
      %v3606 = vmul.f32 %v3579, 1.442695
      %v3607 = vpow.pop %v3606
      %v3608 = vmul.f32 %v3580, 1.442695
      %v3609 = vpow.pop %v3608
      %v3610 = vmul.f32 %v3581, 1.442695
      %v3611 = vpow.pop %v3610
      %v3612 = vmul.f32 %v3582, 1.442695
      %v3613 = vpow.pop %v3612
      %v3614 = vmul.f32 %v3583, 1.442695
      %v3615 = vpow.pop %v3614
      %3616 = vadd.xlane.f32.xlu0 %v3585
      %v3617 = vpop.xlane.xlu0 %3616
      %3618 = vadd.xlane.f32.xlu0 %v3587
      %v3619 = vpop.xlane.xlu0 %3618
      %3620 = vadd.xlane.f32.xlu0 %v3589
      %v3621 = vpop.xlane.xlu0 %3620
      %3622 = vadd.xlane.f32.xlu0 %v3591
      %v3623 = vpop.xlane.xlu0 %3622
      %3624 = vadd.xlane.f32.xlu0 %v3593
      %v3625 = vpop.xlane.xlu0 %3624
      %3626 = vadd.xlane.f32.xlu0 %v3595
      %v3627 = vpop.xlane.xlu0 %3626
      %3628 = vadd.xlane.f32.xlu0 %v3597
      %v3629 = vpop.xlane.xlu0 %3628
      %3630 = vadd.xlane.f32.xlu0 %v3599
      %v3631 = vpop.xlane.xlu0 %3630
      %3632 = vadd.xlane.f32.xlu0 %v3601
      %v3633 = vpop.xlane.xlu0 %3632
      %3634 = vadd.xlane.f32.xlu0 %v3603
      %v3635 = vpop.xlane.xlu0 %3634
      %3636 = vadd.xlane.f32.xlu0 %v3605
      %v3637 = vpop.xlane.xlu0 %3636
      %3638 = vadd.xlane.f32.xlu0 %v3607
      %v3639 = vpop.xlane.xlu0 %3638
      %3640 = vadd.xlane.f32.xlu0 %v3609
      %v3641 = vpop.xlane.xlu0 %3640
      %3642 = vadd.xlane.f32.xlu0 %v3611
      %v3643 = vpop.xlane.xlu0 %3642
      %3644 = vadd.xlane.f32.xlu0 %v3613
      %v3645 = vpop.xlane.xlu0 %3644
      %3646 = vadd.xlane.f32.xlu0 %v3615
      %v3647 = vpop.xlane.xlu0 %3646
      %v3648 = vrcp.pop %v3617
      %v3649 = vrcp.pop %v3619
      %v3650 = vrcp.pop %v3621
      %v3651 = vrcp.pop %v3623
      %v3652 = vrcp.pop %v3625
      %v3653 = vrcp.pop %v3627
      %v3654 = vrcp.pop %v3629
      %v3655 = vrcp.pop %v3631
      %v3656 = vrcp.pop %v3633
      %v3657 = vrcp.pop %v3635
      %v3658 = vrcp.pop %v3637
      %v3659 = vrcp.pop %v3639
      %v3660 = vrcp.pop %v3641
      %v3661 = vrcp.pop %v3643
      %v3662 = vrcp.pop %v3645
      %v3663 = vrcp.pop %v3647
      %v3664 = vmul.f32 %v3585, %v3648
      %v3665 = vmul.f32 %v3587, %v3649
      %v3666 = vmul.f32 %v3589, %v3650
      %v3667 = vmul.f32 %v3591, %v3651
      %v3668 = vmul.f32 %v3593, %v3652
      %v3669 = vmul.f32 %v3595, %v3653
      %v3670 = vmul.f32 %v3597, %v3654
      %v3671 = vmul.f32 %v3599, %v3655
      %v3672 = vmul.f32 %v3601, %v3656
      %v3673 = vmul.f32 %v3603, %v3657
      %v3674 = vmul.f32 %v3605, %v3658
      %v3675 = vmul.f32 %v3607, %v3659
      %v3676 = vmul.f32 %v3609, %v3660
      %v3677 = vmul.f32 %v3611, %v3661
      %v3678 = vmul.f32 %v3613, %v3662
      %v3679 = vmul.f32 %v3615, %v3663
      %v3680 = vrot.slane %v554, 4
      %s3681 = vtos %v3680
      %v3682 = vstv %s3681
      %v3684 = vmul.f32 %v2788, %v3682
      %v3685 = vmul.f32 %v2789, %v3682
      %v3686 = vmul.f32 %v2790, %v3682
      %v3687 = vmul.f32 %v2791, %v3682
      %v3688 = vmul.f32 %v2792, %v3682
      %v3689 = vmul.f32 %v2793, %v3682
      %v3690 = vmul.f32 %v2794, %v3682
      %v3691 = vmul.f32 %v2795, %v3682
      %v3692 = vmul.f32 %v2796, %v3682
      %v3693 = vmul.f32 %v2797, %v3682
      %v3694 = vmul.f32 %v2798, %v3682
      %v3695 = vmul.f32 %v2799, %v3682
      %v3696 = vmul.f32 %v2800, %v3682
      %v3697 = vmul.f32 %v2801, %v3682
      %v3698 = vmul.f32 %v2802, %v3682
      %v3699 = vmul.f32 %v2803, %v3682
      %v3700 = vrot.slane %v554, 5
      %s3701 = vtos %v3700
      %v3702 = vstv %s3701
      %v3704 = vmul.f32 %v3080, %v3702
      %v3705 = vmul.f32 %v3081, %v3702
      %v3706 = vmul.f32 %v3082, %v3702
      %v3707 = vmul.f32 %v3083, %v3702
      %v3708 = vmul.f32 %v3084, %v3702
      %v3709 = vmul.f32 %v3085, %v3702
      %v3710 = vmul.f32 %v3086, %v3702
      %v3711 = vmul.f32 %v3087, %v3702
      %v3712 = vmul.f32 %v3088, %v3702
      %v3713 = vmul.f32 %v3089, %v3702
      %v3714 = vmul.f32 %v3090, %v3702
      %v3715 = vmul.f32 %v3091, %v3702
      %v3716 = vmul.f32 %v3092, %v3702
      %v3717 = vmul.f32 %v3093, %v3702
      %v3718 = vmul.f32 %v3094, %v3702
      %v3719 = vmul.f32 %v3095, %v3702
      %v3720 = vadd.f32 %v3684, %v3704
      %v3721 = vadd.f32 %v3685, %v3705
      %v3722 = vadd.f32 %v3686, %v3706
      %v3723 = vadd.f32 %v3687, %v3707
      %v3724 = vadd.f32 %v3688, %v3708
      %v3725 = vadd.f32 %v3689, %v3709
      %v3726 = vadd.f32 %v3690, %v3710
      %v3727 = vadd.f32 %v3691, %v3711
      %v3728 = vadd.f32 %v3692, %v3712
      %v3729 = vadd.f32 %v3693, %v3713
      %v3730 = vadd.f32 %v3694, %v3714
      %v3731 = vadd.f32 %v3695, %v3715
      %v3732 = vadd.f32 %v3696, %v3716
      %v3733 = vadd.f32 %v3697, %v3717
      %v3734 = vadd.f32 %v3698, %v3718
      %v3735 = vadd.f32 %v3699, %v3719
      %v3736 = vrot.slane %v554, 6
      %s3737 = vtos %v3736
      %v3738 = vstv %s3737
      %v3740 = vmul.f32 %v3372, %v3738
      %v3741 = vmul.f32 %v3373, %v3738
      %v3742 = vmul.f32 %v3374, %v3738
      %v3743 = vmul.f32 %v3375, %v3738
      %v3744 = vmul.f32 %v3376, %v3738
      %v3745 = vmul.f32 %v3377, %v3738
      %v3746 = vmul.f32 %v3378, %v3738
      %v3747 = vmul.f32 %v3379, %v3738
      %v3748 = vmul.f32 %v3380, %v3738
      %v3749 = vmul.f32 %v3381, %v3738
      %v3750 = vmul.f32 %v3382, %v3738
      %v3751 = vmul.f32 %v3383, %v3738
      %v3752 = vmul.f32 %v3384, %v3738
      %v3753 = vmul.f32 %v3385, %v3738
      %v3754 = vmul.f32 %v3386, %v3738
      %v3755 = vmul.f32 %v3387, %v3738
      %v3756 = vadd.f32 %v3720, %v3740
      %v3757 = vadd.f32 %v3721, %v3741
      %v3758 = vadd.f32 %v3722, %v3742
      %v3759 = vadd.f32 %v3723, %v3743
      %v3760 = vadd.f32 %v3724, %v3744
      %v3761 = vadd.f32 %v3725, %v3745
      %v3762 = vadd.f32 %v3726, %v3746
      %v3763 = vadd.f32 %v3727, %v3747
      %v3764 = vadd.f32 %v3728, %v3748
      %v3765 = vadd.f32 %v3729, %v3749
      %v3766 = vadd.f32 %v3730, %v3750
      %v3767 = vadd.f32 %v3731, %v3751
      %v3768 = vadd.f32 %v3732, %v3752
      %v3769 = vadd.f32 %v3733, %v3753
      %v3770 = vadd.f32 %v3734, %v3754
      %v3771 = vadd.f32 %v3735, %v3755
      %v3772 = vrot.slane %v554, 7
      %s3773 = vtos %v3772
      %v3774 = vstv %s3773
      %v3776 = vmul.f32 %v3664, %v3774
      %v3777 = vmul.f32 %v3665, %v3774
      %v3778 = vmul.f32 %v3666, %v3774
      %v3779 = vmul.f32 %v3667, %v3774
      %v3780 = vmul.f32 %v3668, %v3774
      %v3781 = vmul.f32 %v3669, %v3774
      %v3782 = vmul.f32 %v3670, %v3774
      %v3783 = vmul.f32 %v3671, %v3774
      %v3784 = vmul.f32 %v3672, %v3774
      %v3785 = vmul.f32 %v3673, %v3774
      %v3786 = vmul.f32 %v3674, %v3774
      %v3787 = vmul.f32 %v3675, %v3774
      %v3788 = vmul.f32 %v3676, %v3774
      %v3789 = vmul.f32 %v3677, %v3774
      %v3790 = vmul.f32 %v3678, %v3774
      %v3791 = vmul.f32 %v3679, %v3774
      %v3792 = vadd.f32 %v3756, %v3776
      %v3793 = vadd.f32 %v3757, %v3777
      %v3794 = vadd.f32 %v3758, %v3778
      %v3795 = vadd.f32 %v3759, %v3779
      %v3796 = vadd.f32 %v3760, %v3780
      %v3797 = vadd.f32 %v3761, %v3781
      %v3798 = vadd.f32 %v3762, %v3782
      %v3799 = vadd.f32 %v3763, %v3783
      %v3800 = vadd.f32 %v3764, %v3784
      %v3801 = vadd.f32 %v3765, %v3785
      %v3802 = vadd.f32 %v3766, %v3786
      %v3803 = vadd.f32 %v3767, %v3787
      %v3804 = vadd.f32 %v3768, %v3788
      %v3805 = vadd.f32 %v3769, %v3789
      %v3806 = vadd.f32 %v3770, %v3790
      %v3807 = vadd.f32 %v3771, %v3791
      %v3808 = vpack.c.bf16 %v3793, %v3792
      %v3809 = vpack.c.bf16 %v3795, %v3794
      %v3810 = vpack.c.bf16 %v3797, %v3796
      %v3811 = vpack.c.bf16 %v3799, %v3798
      %v3812 = vpack.c.bf16 %v3801, %v3800
      %v3813 = vpack.c.bf16 %v3803, %v3802
      %v3814 = vpack.c.bf16 %v3805, %v3804
      %v3815 = vpack.c.bf16 %v3807, %v3806
      %3816 = vmatprep.subr.bf16.mxu0 0
      %3817 = vmatpush1.bf16.msra.mxu0 %v1803
      %3818 = vmatprep.subr.bf16.mxu0 0
      %3819 = vmatpush1.bf16.msra.mxu0 %v1804
      %3820 = vmatprep.subr.bf16.mxu0 0
      %3821 = vmatpush1.bf16.msra.mxu0 %v1805
      %3822 = vmatprep.subr.bf16.mxu0 0
      %3823 = vmatpush1.bf16.msra.mxu0 %v1806
      %3824 = vmatprep.subr.bf16.mxu0 0
      %3825 = vmatpush1.bf16.msra.mxu0 %v1807
      %3826 = vmatprep.subr.bf16.mxu0 0
      %3827 = vmatpush1.bf16.msra.mxu0 %v1808
      %3828 = vmatprep.subr.bf16.mxu0 0
      %3829 = vmatpush1.bf16.msra.mxu0 %v1809
      %3830 = vmatprep.subr.bf16.mxu0 0
      %3831 = vmatpush1.bf16.msra.mxu0 %v1810
      %3832 = vmatprep.subr.bf16.mxu0 0
      %3833 = vmatpush1.bf16.msra.mxu0 0
      %3834 = vmatprep.subr.bf16.mxu0 0
      %3835 = vmatpush1.bf16.msra.mxu0 0
      %3836 = vmatprep.subr.bf16.mxu0 0
      %3837 = vmatpush1.bf16.msra.mxu0 0
      %3838 = vmatprep.subr.bf16.mxu0 0
      %3839 = vmatpush1.bf16.msra.mxu0 0
      %3840 = vmatprep.subr.bf16.mxu0 0
      %3841 = vmatpush1.bf16.msra.mxu0 0
      %3842 = vmatprep.subr.bf16.mxu0 0
      %3843 = vmatpush1.bf16.msra.mxu0 0
      %3844 = vmatprep.subr.bf16.mxu0 0
      %3845 = vmatpush1.bf16.msra.mxu0 0
      %3846 = vmatprep.subr.bf16.mxu0 0
      %3847 = vmatpush1.bf16.msra.mxu0 0
      %3848 = vmatprep.mubr.bf16.mxu0 0
      %3849 = vmatmul.mubr.bf16.gmra.mrb[0].mxu0 %v3808
      %v3850 = vpop.f32.mrb[0].mxu0
      %v3851 = vadd.f32 0.0, %v3850
      %v3852 = vpop.f32.mrb[0].mxu0
      %v3853 = vpop.f32.mrb[0].mxu0
      %v3854 = vadd.f32 0.0, %v3853
      %v3855 = vpop.f32.mrb[0].mxu0
      %3856 = vmatprep.mubr.bf16.mxu0 0
      %3857 = vmatmul.mubr.bf16.gmra.mrb[0].mxu0 %v3809
      %v3858 = vpop.f32.mrb[0].mxu0
      %v3859 = vadd.f32 0.0, %v3858
      %v3860 = vpop.f32.mrb[0].mxu0
      %v3861 = vpop.f32.mrb[0].mxu0
      %v3862 = vadd.f32 0.0, %v3861
      %v3863 = vpop.f32.mrb[0].mxu0
      %3864 = vmatprep.mubr.bf16.mxu0 0
      %3865 = vmatmul.mubr.bf16.gmra.mrb[0].mxu0 %v3810
      %v3866 = vpop.f32.mrb[0].mxu0
      %v3867 = vadd.f32 0.0, %v3866
      %v3868 = vpop.f32.mrb[0].mxu0
      %v3869 = vpop.f32.mrb[0].mxu0
      %v3870 = vadd.f32 0.0, %v3869
      %v3871 = vpop.f32.mrb[0].mxu0
      %3872 = vmatprep.mubr.bf16.mxu0 0
      %3873 = vmatmul.mubr.bf16.gmra.mrb[0].mxu0 %v3811
      %v3874 = vpop.f32.mrb[0].mxu0
      %v3875 = vadd.f32 0.0, %v3874
      %v3876 = vpop.f32.mrb[0].mxu0
      %v3877 = vpop.f32.mrb[0].mxu0
      %v3878 = vadd.f32 0.0, %v3877
      %v3879 = vpop.f32.mrb[0].mxu0
      %3880 = vmatprep.mubr.bf16.mxu0 0
      %3881 = vmatmul.mubr.bf16.gmra.mrb[0].mxu0 %v3812
      %v3882 = vpop.f32.mrb[0].mxu0
      %v3883 = vadd.f32 0.0, %v3882
      %v3884 = vpop.f32.mrb[0].mxu0
      %v3885 = vpop.f32.mrb[0].mxu0
      %v3886 = vadd.f32 0.0, %v3885
      %v3887 = vpop.f32.mrb[0].mxu0
      %3888 = vmatprep.mubr.bf16.mxu0 0
      %3889 = vmatmul.mubr.bf16.gmra.mrb[0].mxu0 %v3813
      %v3890 = vpop.f32.mrb[0].mxu0
      %v3891 = vadd.f32 0.0, %v3890
      %v3892 = vpop.f32.mrb[0].mxu0
      %v3893 = vpop.f32.mrb[0].mxu0
      %v3894 = vadd.f32 0.0, %v3893
      %v3895 = vpop.f32.mrb[0].mxu0
      %3896 = vmatprep.mubr.bf16.mxu0 0
      %3897 = vmatmul.mubr.bf16.gmra.mrb[0].mxu0 %v3814
      %v3898 = vpop.f32.mrb[0].mxu0
      %v3899 = vadd.f32 0.0, %v3898
      %v3900 = vpop.f32.mrb[0].mxu0
      %v3901 = vpop.f32.mrb[0].mxu0
      %v3902 = vadd.f32 0.0, %v3901
      %v3903 = vpop.f32.mrb[0].mxu0
      %3904 = vmatprep.mubr.bf16.mxu0 0
      %3905 = vmatmul.mubr.bf16.gmra.mrb[0].mxu0 %v3815
      %v3906 = vpop.f32.mrb[0].mxu0
      %v3907 = vadd.f32 0.0, %v3906
      %v3908 = vpop.f32.mrb[0].mxu0
      %v3909 = vpop.f32.mrb[0].mxu0
      %v3910 = vadd.f32 0.0, %v3909
      %v3911 = vpop.f32.mrb[0].mxu0
      %3912 = vdwg.mxu0
      %v3913 = vpack.c.bf16 %v3854, %v3851
      %v3914 = vpack.c.bf16 %v3862, %v3859
      %v3915 = vpack.c.bf16 %v3870, %v3867
      %v3916 = vpack.c.bf16 %v3878, %v3875
      %v3917 = vpack.c.bf16 %v3886, %v3883
      %v3918 = vpack.c.bf16 %v3894, %v3891
      %v3919 = vpack.c.bf16 %v3902, %v3899
      %v3920 = vpack.c.bf16 %v3910, %v3907
      %3921 = vrot.lane.b32.xlu0 %v3680, 127
      %v3922 = vpop.permute.xlu0 %3921
      %s3923 = vtos %v3922
      %v3924 = vstv %s3923
      %v3926 = vmul.f32 %v2788, %v3924
      %v3927 = vmul.f32 %v2789, %v3924
      %v3928 = vmul.f32 %v2790, %v3924
      %v3929 = vmul.f32 %v2791, %v3924
      %v3930 = vmul.f32 %v2792, %v3924
      %v3931 = vmul.f32 %v2793, %v3924
      %v3932 = vmul.f32 %v2794, %v3924
      %v3933 = vmul.f32 %v2795, %v3924
      %v3934 = vmul.f32 %v2796, %v3924
      %v3935 = vmul.f32 %v2797, %v3924
      %v3936 = vmul.f32 %v2798, %v3924
      %v3937 = vmul.f32 %v2799, %v3924
      %v3938 = vmul.f32 %v2800, %v3924
      %v3939 = vmul.f32 %v2801, %v3924
      %v3940 = vmul.f32 %v2802, %v3924
      %v3941 = vmul.f32 %v2803, %v3924
      %3942 = vrot.lane.b32.xlu0 %v3700, 127
      %v3943 = vpop.permute.xlu0 %3942
      %s3944 = vtos %v3943
      %v3945 = vstv %s3944
      %v3947 = vmul.f32 %v3080, %v3945
      %v3948 = vmul.f32 %v3081, %v3945
      %v3949 = vmul.f32 %v3082, %v3945
      %v3950 = vmul.f32 %v3083, %v3945
      %v3951 = vmul.f32 %v3084, %v3945
      %v3952 = vmul.f32 %v3085, %v3945
      %v3953 = vmul.f32 %v3086, %v3945
      %v3954 = vmul.f32 %v3087, %v3945
      %v3955 = vmul.f32 %v3088, %v3945
      %v3956 = vmul.f32 %v3089, %v3945
      %v3957 = vmul.f32 %v3090, %v3945
      %v3958 = vmul.f32 %v3091, %v3945
      %v3959 = vmul.f32 %v3092, %v3945
      %v3960 = vmul.f32 %v3093, %v3945
      %v3961 = vmul.f32 %v3094, %v3945
      %v3962 = vmul.f32 %v3095, %v3945
      %v3963 = vadd.f32 %v3926, %v3947
      %v3964 = vadd.f32 %v3927, %v3948
      %v3965 = vadd.f32 %v3928, %v3949
      %v3966 = vadd.f32 %v3929, %v3950
      %v3967 = vadd.f32 %v3930, %v3951
      %v3968 = vadd.f32 %v3931, %v3952
      %v3969 = vadd.f32 %v3932, %v3953
      %v3970 = vadd.f32 %v3933, %v3954
      %v3971 = vadd.f32 %v3934, %v3955
      %v3972 = vadd.f32 %v3935, %v3956
      %v3973 = vadd.f32 %v3936, %v3957
      %v3974 = vadd.f32 %v3937, %v3958
      %v3975 = vadd.f32 %v3938, %v3959
      %v3976 = vadd.f32 %v3939, %v3960
      %v3977 = vadd.f32 %v3940, %v3961
      %v3978 = vadd.f32 %v3941, %v3962
      %3979 = vrot.lane.b32.xlu0 %v3736, 127
      %v3980 = vpop.permute.xlu0 %3979
      %s3981 = vtos %v3980
      %v3982 = vstv %s3981
      %v3984 = vmul.f32 %v3372, %v3982
      %v3985 = vmul.f32 %v3373, %v3982
      %v3986 = vmul.f32 %v3374, %v3982
      %v3987 = vmul.f32 %v3375, %v3982
      %v3988 = vmul.f32 %v3376, %v3982
      %v3989 = vmul.f32 %v3377, %v3982
      %v3990 = vmul.f32 %v3378, %v3982
      %v3991 = vmul.f32 %v3379, %v3982
      %v3992 = vmul.f32 %v3380, %v3982
      %v3993 = vmul.f32 %v3381, %v3982
      %v3994 = vmul.f32 %v3382, %v3982
      %v3995 = vmul.f32 %v3383, %v3982
      %v3996 = vmul.f32 %v3384, %v3982
      %v3997 = vmul.f32 %v3385, %v3982
      %v3998 = vmul.f32 %v3386, %v3982
      %v3999 = vmul.f32 %v3387, %v3982
      %v4000 = vadd.f32 %v3963, %v3984
      %v4001 = vadd.f32 %v3964, %v3985
      %v4002 = vadd.f32 %v3965, %v3986
      %v4003 = vadd.f32 %v3966, %v3987
      %v4004 = vadd.f32 %v3967, %v3988
      %v4005 = vadd.f32 %v3968, %v3989
      %v4006 = vadd.f32 %v3969, %v3990
      %v4007 = vadd.f32 %v3970, %v3991
      %v4008 = vadd.f32 %v3971, %v3992
      %v4009 = vadd.f32 %v3972, %v3993
      %v4010 = vadd.f32 %v3973, %v3994
      %v4011 = vadd.f32 %v3974, %v3995
      %v4012 = vadd.f32 %v3975, %v3996
      %v4013 = vadd.f32 %v3976, %v3997
      %v4014 = vadd.f32 %v3977, %v3998
      %v4015 = vadd.f32 %v3978, %v3999
      %4016 = vrot.lane.b32.xlu0 %v3772, 127
      %v4017 = vpop.permute.xlu0 %4016
      %s4018 = vtos %v4017
      %v4019 = vstv %s4018
      %v4021 = vmul.f32 %v3664, %v4019
      %v4022 = vmul.f32 %v3665, %v4019
      %v4023 = vmul.f32 %v3666, %v4019
      %v4024 = vmul.f32 %v3667, %v4019
      %v4025 = vmul.f32 %v3668, %v4019
      %v4026 = vmul.f32 %v3669, %v4019
      %v4027 = vmul.f32 %v3670, %v4019
      %v4028 = vmul.f32 %v3671, %v4019
      %v4029 = vmul.f32 %v3672, %v4019
      %v4030 = vmul.f32 %v3673, %v4019
      %v4031 = vmul.f32 %v3674, %v4019
      %v4032 = vmul.f32 %v3675, %v4019
      %v4033 = vmul.f32 %v3676, %v4019
      %v4034 = vmul.f32 %v3677, %v4019
      %v4035 = vmul.f32 %v3678, %v4019
      %v4036 = vmul.f32 %v3679, %v4019
      %v4037 = vadd.f32 %v4000, %v4021
      %v4038 = vadd.f32 %v4001, %v4022
      %v4039 = vadd.f32 %v4002, %v4023
      %v4040 = vadd.f32 %v4003, %v4024
      %v4041 = vadd.f32 %v4004, %v4025
      %v4042 = vadd.f32 %v4005, %v4026
      %v4043 = vadd.f32 %v4006, %v4027
      %v4044 = vadd.f32 %v4007, %v4028
      %v4045 = vadd.f32 %v4008, %v4029
      %v4046 = vadd.f32 %v4009, %v4030
      %v4047 = vadd.f32 %v4010, %v4031
      %v4048 = vadd.f32 %v4011, %v4032
      %v4049 = vadd.f32 %v4012, %v4033
      %v4050 = vadd.f32 %v4013, %v4034
      %v4051 = vadd.f32 %v4014, %v4035
      %v4052 = vadd.f32 %v4015, %v4036
      %v4053 = vpack.c.bf16 %v4038, %v4037
      %v4054 = vpack.c.bf16 %v4040, %v4039
      %v4055 = vpack.c.bf16 %v4042, %v4041
      %v4056 = vpack.c.bf16 %v4044, %v4043
      %v4057 = vpack.c.bf16 %v4046, %v4045
      %v4058 = vpack.c.bf16 %v4048, %v4047
      %v4059 = vpack.c.bf16 %v4050, %v4049
      %v4060 = vpack.c.bf16 %v4052, %v4051
      %4069 = vrot.lane.b32.xlu0 %v1803, 120
      %v4070 = vpop.permute.xlu0 %4069
      %4071 = vrot.lane.b32.xlu0 %v1804, 120
      %v4072 = vpop.permute.xlu0 %4071
      %4073 = vrot.lane.b32.xlu0 %v1805, 120
      %v4074 = vpop.permute.xlu0 %4073
      %4075 = vrot.lane.b32.xlu0 %v1806, 120
      %v4076 = vpop.permute.xlu0 %4075
      %4077 = vrot.lane.b32.xlu0 %v1807, 120
      %v4078 = vpop.permute.xlu0 %4077
      %4079 = vrot.lane.b32.xlu0 %v1808, 120
      %v4080 = vpop.permute.xlu0 %4079
      %4081 = vrot.lane.b32.xlu0 %v1809, 120
      %v4082 = vpop.permute.xlu0 %4081
      %4083 = vrot.lane.b32.xlu0 %v1810, 120
      %v4084 = vpop.permute.xlu0 %4083
      %4093 = vmatprep.subr.bf16.mxu0 0
      %4094 = vmatpush1.bf16.msra.mxu0 %v4070
      %4095 = vmatprep.subr.bf16.mxu0 0
      %4096 = vmatpush1.bf16.msra.mxu0 %v4072
      %4097 = vmatprep.subr.bf16.mxu0 0
      %4098 = vmatpush1.bf16.msra.mxu0 %v4074
      %4099 = vmatprep.subr.bf16.mxu0 0
      %4100 = vmatpush1.bf16.msra.mxu0 %v4076
      %4101 = vmatprep.subr.bf16.mxu0 0
      %4102 = vmatpush1.bf16.msra.mxu0 %v4078
      %4103 = vmatprep.subr.bf16.mxu0 0
      %4104 = vmatpush1.bf16.msra.mxu0 %v4080
      %4105 = vmatprep.subr.bf16.mxu0 0
      %4106 = vmatpush1.bf16.msra.mxu0 %v4082
      %4107 = vmatprep.subr.bf16.mxu0 0
      %4108 = vmatpush1.bf16.msra.mxu0 %v4084
      %4109 = vmatprep.subr.bf16.mxu0 0
      %4110 = vmatpush1.bf16.msra.mxu0 0
      %4111 = vmatprep.subr.bf16.mxu0 0
      %4112 = vmatpush1.bf16.msra.mxu0 0
      %4113 = vmatprep.subr.bf16.mxu0 0
      %4114 = vmatpush1.bf16.msra.mxu0 0
      %4115 = vmatprep.subr.bf16.mxu0 0
      %4116 = vmatpush1.bf16.msra.mxu0 0
      %4117 = vmatprep.subr.bf16.mxu0 0
      %4118 = vmatpush1.bf16.msra.mxu0 0
      %4119 = vmatprep.subr.bf16.mxu0 0
      %4120 = vmatpush1.bf16.msra.mxu0 0
      %4121 = vmatprep.subr.bf16.mxu0 0
      %4122 = vmatpush1.bf16.msra.mxu0 0
      %4123 = vmatprep.subr.bf16.mxu0 0
      %4124 = vmatpush1.bf16.msra.mxu0 0
      %4125 = vmatprep.mubr.bf16.mxu0 0
      %4126 = vmatmul.mubr.bf16.gmra.mrb[0].mxu0 %v4053
      %v4127 = vpop.f32.mrb[0].mxu0
      %v4128 = vadd.f32 0.0, %v4127
      %v4129 = vpop.f32.mrb[0].mxu0
      %v4130 = vpop.f32.mrb[0].mxu0
      %v4131 = vadd.f32 0.0, %v4130
      %v4132 = vpop.f32.mrb[0].mxu0
      %4133 = vmatprep.mubr.bf16.mxu0 0
      %4134 = vmatmul.mubr.bf16.gmra.mrb[0].mxu0 %v4054
      %v4135 = vpop.f32.mrb[0].mxu0
      %v4136 = vadd.f32 0.0, %v4135
      %v4137 = vpop.f32.mrb[0].mxu0
      %v4138 = vpop.f32.mrb[0].mxu0
      %v4139 = vadd.f32 0.0, %v4138
      %v4140 = vpop.f32.mrb[0].mxu0
      %4141 = vmatprep.mubr.bf16.mxu0 0
      %4142 = vmatmul.mubr.bf16.gmra.mrb[0].mxu0 %v4055
      %v4143 = vpop.f32.mrb[0].mxu0
      %v4144 = vadd.f32 0.0, %v4143
      %v4145 = vpop.f32.mrb[0].mxu0
      %v4146 = vpop.f32.mrb[0].mxu0
      %v4147 = vadd.f32 0.0, %v4146
      %v4148 = vpop.f32.mrb[0].mxu0
      %4149 = vmatprep.mubr.bf16.mxu0 0
      %4150 = vmatmul.mubr.bf16.gmra.mrb[0].mxu0 %v4056
      %v4151 = vpop.f32.mrb[0].mxu0
      %v4152 = vadd.f32 0.0, %v4151
      %v4153 = vpop.f32.mrb[0].mxu0
      %v4154 = vpop.f32.mrb[0].mxu0
      %v4155 = vadd.f32 0.0, %v4154
      %v4156 = vpop.f32.mrb[0].mxu0
      %4157 = vmatprep.mubr.bf16.mxu0 0
      %4158 = vmatmul.mubr.bf16.gmra.mrb[0].mxu0 %v4057
      %v4159 = vpop.f32.mrb[0].mxu0
      %v4160 = vadd.f32 0.0, %v4159
      %v4161 = vpop.f32.mrb[0].mxu0
      %v4162 = vpop.f32.mrb[0].mxu0
      %v4163 = vadd.f32 0.0, %v4162
      %v4164 = vpop.f32.mrb[0].mxu0
      %4165 = vmatprep.mubr.bf16.mxu0 0
      %4166 = vmatmul.mubr.bf16.gmra.mrb[0].mxu0 %v4058
      %v4167 = vpop.f32.mrb[0].mxu0
      %v4168 = vadd.f32 0.0, %v4167
      %v4169 = vpop.f32.mrb[0].mxu0
      %v4170 = vpop.f32.mrb[0].mxu0
      %v4171 = vadd.f32 0.0, %v4170
      %v4172 = vpop.f32.mrb[0].mxu0
      %4173 = vmatprep.mubr.bf16.mxu0 0
      %4174 = vmatmul.mubr.bf16.gmra.mrb[0].mxu0 %v4059
      %v4175 = vpop.f32.mrb[0].mxu0
      %v4176 = vadd.f32 0.0, %v4175
      %v4177 = vpop.f32.mrb[0].mxu0
      %v4178 = vpop.f32.mrb[0].mxu0
      %v4179 = vadd.f32 0.0, %v4178
      %v4180 = vpop.f32.mrb[0].mxu0
      %4181 = vmatprep.mubr.bf16.mxu0 0
      %4182 = vmatmul.mubr.bf16.gmra.mrb[0].mxu0 %v4060
      %v4183 = vpop.f32.mrb[0].mxu0
      %v4184 = vadd.f32 0.0, %v4183
      %v4185 = vpop.f32.mrb[0].mxu0
      %v4186 = vpop.f32.mrb[0].mxu0
      %v4187 = vadd.f32 0.0, %v4186
      %v4188 = vpop.f32.mrb[0].mxu0
      %4189 = vdwg.mxu0
      %v4190 = vpack.c.bf16 %v4131, %v4128
      %v4191 = vpack.c.bf16 %v4139, %v4136
      %v4192 = vpack.c.bf16 %v4147, %v4144
      %v4193 = vpack.c.bf16 %v4155, %v4152
      %v4194 = vpack.c.bf16 %v4163, %v4160
      %v4195 = vpack.c.bf16 %v4171, %v4168
      %v4196 = vpack.c.bf16 %v4179, %v4176
      %v4197 = vpack.c.bf16 %v4187, %v4184
      %v4199 = vsel %vm1823, %v4190, 0
      %v4202 = vsel %vm1823, %v4191, 0
      %v4205 = vsel %vm1823, %v4192, 0
      %v4208 = vsel %vm1823, %v4193, 0
      %v4211 = vsel %vm1823, %v4194, 0
      %v4214 = vsel %vm1823, %v4195, 0
      %v4217 = vsel %vm1823, %v4196, 0
      %v4220 = vsel %vm1823, %v4197, 0
      %vm4222 = vcmask 1043456
      %v4224 = vsel %vm4222, %v1141, 0
      %4226 = vmatprep.subr.bf16.mxu0 0
      %4227 = vmatpush1.bf16.msra.mxu0 %v4224
      %4228 = vmatprep.subr.bf16.mxu0 0
      %4229 = vmatpush1.bf16.msra.mxu0 0
      %4230 = vmatprep.subr.bf16.mxu0 0
      %4231 = vmatpush1.bf16.msra.mxu0 0
      %4232 = vmatprep.subr.bf16.mxu0 0
      %4233 = vmatpush1.bf16.msra.mxu0 0
      %4234 = vmatprep.subr.bf16.mxu0 0
      %4235 = vmatpush1.bf16.msra.mxu0 0
      %4236 = vmatprep.subr.bf16.mxu0 0
      %4237 = vmatpush1.bf16.msra.mxu0 0
      %4238 = vmatprep.subr.bf16.mxu0 0
      %4239 = vmatpush1.bf16.msra.mxu0 0
      %4240 = vmatprep.subr.bf16.mxu0 0
      %4241 = vmatpush1.bf16.msra.mxu0 0
      %4242 = vmatprep.subr.bf16.mxu0 0
      %4243 = vmatpush1.bf16.msra.mxu0 0
      %4244 = vmatprep.subr.bf16.mxu0 0
      %4245 = vmatpush1.bf16.msra.mxu0 0
      %4246 = vmatprep.subr.bf16.mxu0 0
      %4247 = vmatpush1.bf16.msra.mxu0 0
      %4248 = vmatprep.subr.bf16.mxu0 0
      %4249 = vmatpush1.bf16.msra.mxu0 0
      %4250 = vmatprep.subr.bf16.mxu0 0
      %4251 = vmatpush1.bf16.msra.mxu0 0
      %4252 = vmatprep.subr.bf16.mxu0 0
      %4253 = vmatpush1.bf16.msra.mxu0 0
      %4254 = vmatprep.subr.bf16.mxu0 0
      %4255 = vmatpush1.bf16.msra.mxu0 0
      %4256 = vmatprep.subr.bf16.mxu0 0
      %4257 = vmatpush1.bf16.msra.mxu0 0
      %4258 = vmatprep.mubr.bf16.mxu0 0
      %4259 = vmatmul.mubr.bf16.gmra.mrb[0].mxu0 %v4199
      %v4260 = vpop.f32.mrb[0].mxu0
      %v4261 = vadd.f32 0.0, %v4260
      %v4262 = vpop.f32.mrb[0].mxu0
      %v4263 = vpop.f32.mrb[0].mxu0
      %v4264 = vadd.f32 0.0, %v4263
      %v4265 = vpop.f32.mrb[0].mxu0
      %4266 = vmatprep.mubr.bf16.mxu0 0
      %4267 = vmatmul.mubr.bf16.gmra.mrb[0].mxu0 %v4202
      %v4268 = vpop.f32.mrb[0].mxu0
      %v4269 = vadd.f32 0.0, %v4268
      %v4270 = vpop.f32.mrb[0].mxu0
      %v4271 = vpop.f32.mrb[0].mxu0
      %v4272 = vadd.f32 0.0, %v4271
      %v4273 = vpop.f32.mrb[0].mxu0
      %4274 = vmatprep.mubr.bf16.mxu0 0
      %4275 = vmatmul.mubr.bf16.gmra.mrb[0].mxu0 %v4205
      %v4276 = vpop.f32.mrb[0].mxu0
      %v4277 = vadd.f32 0.0, %v4276
      %v4278 = vpop.f32.mrb[0].mxu0
      %v4279 = vpop.f32.mrb[0].mxu0
      %v4280 = vadd.f32 0.0, %v4279
      %v4281 = vpop.f32.mrb[0].mxu0
      %4282 = vmatprep.mubr.bf16.mxu0 0
      %4283 = vmatmul.mubr.bf16.gmra.mrb[0].mxu0 %v4208
      %v4284 = vpop.f32.mrb[0].mxu0
      %v4285 = vadd.f32 0.0, %v4284
      %v4286 = vpop.f32.mrb[0].mxu0
      %v4287 = vpop.f32.mrb[0].mxu0
      %v4288 = vadd.f32 0.0, %v4287
      %v4289 = vpop.f32.mrb[0].mxu0
      %4290 = vmatprep.mubr.bf16.mxu0 0
      %4291 = vmatmul.mubr.bf16.gmra.mrb[0].mxu0 %v4211
      %v4292 = vpop.f32.mrb[0].mxu0
      %v4293 = vadd.f32 0.0, %v4292
      %v4294 = vpop.f32.mrb[0].mxu0
      %v4295 = vpop.f32.mrb[0].mxu0
      %v4296 = vadd.f32 0.0, %v4295
      %v4297 = vpop.f32.mrb[0].mxu0
      %4298 = vmatprep.mubr.bf16.mxu0 0
      %4299 = vmatmul.mubr.bf16.gmra.mrb[0].mxu0 %v4214
      %v4300 = vpop.f32.mrb[0].mxu0
      %v4301 = vadd.f32 0.0, %v4300
      %v4302 = vpop.f32.mrb[0].mxu0
      %v4303 = vpop.f32.mrb[0].mxu0
      %v4304 = vadd.f32 0.0, %v4303
      %v4305 = vpop.f32.mrb[0].mxu0
      %4306 = vmatprep.mubr.bf16.mxu0 0
      %4307 = vmatmul.mubr.bf16.gmra.mrb[0].mxu0 %v4217
      %v4308 = vpop.f32.mrb[0].mxu0
      %v4309 = vadd.f32 0.0, %v4308
      %v4310 = vpop.f32.mrb[0].mxu0
      %v4311 = vpop.f32.mrb[0].mxu0
      %v4312 = vadd.f32 0.0, %v4311
      %v4313 = vpop.f32.mrb[0].mxu0
      %4314 = vmatprep.mubr.bf16.mxu0 0
      %4315 = vmatmul.mubr.bf16.gmra.mrb[0].mxu0 %v4220
      %v4316 = vpop.f32.mrb[0].mxu0
      %v4317 = vadd.f32 0.0, %v4316
      %v4318 = vpop.f32.mrb[0].mxu0
      %v4319 = vpop.f32.mrb[0].mxu0
      %v4320 = vadd.f32 0.0, %v4319
      %v4321 = vpop.f32.mrb[0].mxu0
      %4322 = vdwg.mxu0
      %v4324 = vsel %vm1823, %v3913, 0
      %v4327 = vsel %vm1823, %v3914, 0
      %v4330 = vsel %vm1823, %v3915, 0
      %v4333 = vsel %vm1823, %v3916, 0
      %v4336 = vsel %vm1823, %v3917, 0
      %v4339 = vsel %vm1823, %v3918, 0
      %v4342 = vsel %vm1823, %v3919, 0
      %v4345 = vsel %vm1823, %v3920, 0
      %v4348 = vsel %vm4222, %v1140, 0
      %4350 = vmatprep.subr.bf16.mxu0 0
      %4351 = vmatpush1.bf16.msra.mxu0 %v4348
      %4352 = vmatprep.subr.bf16.mxu0 0
      %4353 = vmatpush1.bf16.msra.mxu0 0
      %4354 = vmatprep.subr.bf16.mxu0 0
      %4355 = vmatpush1.bf16.msra.mxu0 0
      %4356 = vmatprep.subr.bf16.mxu0 0
      %4357 = vmatpush1.bf16.msra.mxu0 0
      %4358 = vmatprep.subr.bf16.mxu0 0
      %4359 = vmatpush1.bf16.msra.mxu0 0
      %4360 = vmatprep.subr.bf16.mxu0 0
      %4361 = vmatpush1.bf16.msra.mxu0 0
      %4362 = vmatprep.subr.bf16.mxu0 0
      %4363 = vmatpush1.bf16.msra.mxu0 0
      %4364 = vmatprep.subr.bf16.mxu0 0
      %4365 = vmatpush1.bf16.msra.mxu0 0
      %4366 = vmatprep.subr.bf16.mxu0 0
      %4367 = vmatpush1.bf16.msra.mxu0 0
      %4368 = vmatprep.subr.bf16.mxu0 0
      %4369 = vmatpush1.bf16.msra.mxu0 0
      %4370 = vmatprep.subr.bf16.mxu0 0
      %4371 = vmatpush1.bf16.msra.mxu0 0
      %4372 = vmatprep.subr.bf16.mxu0 0
      %4373 = vmatpush1.bf16.msra.mxu0 0
      %4374 = vmatprep.subr.bf16.mxu0 0
      %4375 = vmatpush1.bf16.msra.mxu0 0
      %4376 = vmatprep.subr.bf16.mxu0 0
      %4377 = vmatpush1.bf16.msra.mxu0 0
      %4378 = vmatprep.subr.bf16.mxu0 0
      %4379 = vmatpush1.bf16.msra.mxu0 0
      %4380 = vmatprep.subr.bf16.mxu0 0
      %4381 = vmatpush1.bf16.msra.mxu0 0
      %4382 = vmatprep.mubr.bf16.mxu0 0
      %4383 = vmatmul.mubr.bf16.gmra.mrb[0].mxu0 %v4324
      %v4384 = vpop.f32.mrb[0].mxu0
      %v4385 = vadd.f32 %v4261, %v4384
      %v4386 = vpop.f32.mrb[0].mxu0
      %v4387 = vpop.f32.mrb[0].mxu0
      %v4388 = vadd.f32 %v4264, %v4387
      %v4389 = vpop.f32.mrb[0].mxu0
      %4390 = vmatprep.mubr.bf16.mxu0 0
      %4391 = vmatmul.mubr.bf16.gmra.mrb[0].mxu0 %v4327
      %v4392 = vpop.f32.mrb[0].mxu0
      %v4393 = vadd.f32 %v4269, %v4392
      %v4394 = vpop.f32.mrb[0].mxu0
      %v4395 = vpop.f32.mrb[0].mxu0
      %v4396 = vadd.f32 %v4272, %v4395
      %v4397 = vpop.f32.mrb[0].mxu0
      %4398 = vmatprep.mubr.bf16.mxu0 0
      %4399 = vmatmul.mubr.bf16.gmra.mrb[0].mxu0 %v4330
      %v4400 = vpop.f32.mrb[0].mxu0
      %v4401 = vadd.f32 %v4277, %v4400
      %v4402 = vpop.f32.mrb[0].mxu0
      %v4403 = vpop.f32.mrb[0].mxu0
      %v4404 = vadd.f32 %v4280, %v4403
      %v4405 = vpop.f32.mrb[0].mxu0
      %4406 = vmatprep.mubr.bf16.mxu0 0
      %4407 = vmatmul.mubr.bf16.gmra.mrb[0].mxu0 %v4333
      %v4408 = vpop.f32.mrb[0].mxu0
      %v4409 = vadd.f32 %v4285, %v4408
      %v4410 = vpop.f32.mrb[0].mxu0
      %v4411 = vpop.f32.mrb[0].mxu0
      %v4412 = vadd.f32 %v4288, %v4411
      %v4413 = vpop.f32.mrb[0].mxu0
      %4414 = vmatprep.mubr.bf16.mxu0 0
      %4415 = vmatmul.mubr.bf16.gmra.mrb[0].mxu0 %v4336
      %v4416 = vpop.f32.mrb[0].mxu0
      %v4417 = vadd.f32 %v4293, %v4416
      %v4418 = vpop.f32.mrb[0].mxu0
      %v4419 = vpop.f32.mrb[0].mxu0
      %v4420 = vadd.f32 %v4296, %v4419
      %v4421 = vpop.f32.mrb[0].mxu0
      %4422 = vmatprep.mubr.bf16.mxu0 0
      %4423 = vmatmul.mubr.bf16.gmra.mrb[0].mxu0 %v4339
      %v4424 = vpop.f32.mrb[0].mxu0
      %v4425 = vadd.f32 %v4301, %v4424
      %v4426 = vpop.f32.mrb[0].mxu0
      %v4427 = vpop.f32.mrb[0].mxu0
      %v4428 = vadd.f32 %v4304, %v4427
      %v4429 = vpop.f32.mrb[0].mxu0
      %4430 = vmatprep.mubr.bf16.mxu0 0
      %4431 = vmatmul.mubr.bf16.gmra.mrb[0].mxu0 %v4342
      %v4432 = vpop.f32.mrb[0].mxu0
      %v4433 = vadd.f32 %v4309, %v4432
      %v4434 = vpop.f32.mrb[0].mxu0
      %v4435 = vpop.f32.mrb[0].mxu0
      %v4436 = vadd.f32 %v4312, %v4435
      %v4437 = vpop.f32.mrb[0].mxu0
      %4438 = vmatprep.mubr.bf16.mxu0 0
      %4439 = vmatmul.mubr.bf16.gmra.mrb[0].mxu0 %v4345
      %v4440 = vpop.f32.mrb[0].mxu0
      %v4441 = vadd.f32 %v4317, %v4440
      %v4442 = vpop.f32.mrb[0].mxu0
      %v4443 = vpop.f32.mrb[0].mxu0
      %v4444 = vadd.f32 %v4320, %v4443
      %v4445 = vpop.f32.mrb[0].mxu0
      %4446 = vdwg.mxu0
      %4447 = vrot.lane.b32.xlu0 %v3680, 126
      %v4448 = vpop.permute.xlu0 %4447
      %s4449 = vtos %v4448
      %v4450 = vstv %s4449
      %v4452 = vmul.f32 %v2788, %v4450
      %v4453 = vmul.f32 %v2789, %v4450
      %v4454 = vmul.f32 %v2790, %v4450
      %v4455 = vmul.f32 %v2791, %v4450
      %v4456 = vmul.f32 %v2792, %v4450
      %v4457 = vmul.f32 %v2793, %v4450
      %v4458 = vmul.f32 %v2794, %v4450
      %v4459 = vmul.f32 %v2795, %v4450
      %v4460 = vmul.f32 %v2796, %v4450
      %v4461 = vmul.f32 %v2797, %v4450
      %v4462 = vmul.f32 %v2798, %v4450
      %v4463 = vmul.f32 %v2799, %v4450
      %v4464 = vmul.f32 %v2800, %v4450
      %v4465 = vmul.f32 %v2801, %v4450
      %v4466 = vmul.f32 %v2802, %v4450
      %v4467 = vmul.f32 %v2803, %v4450
      %4468 = vrot.lane.b32.xlu0 %v3700, 126
      %v4469 = vpop.permute.xlu0 %4468
      %s4470 = vtos %v4469
      %v4471 = vstv %s4470
      %v4473 = vmul.f32 %v3080, %v4471
      %v4474 = vmul.f32 %v3081, %v4471
      %v4475 = vmul.f32 %v3082, %v4471
      %v4476 = vmul.f32 %v3083, %v4471
      %v4477 = vmul.f32 %v3084, %v4471
      %v4478 = vmul.f32 %v3085, %v4471
      %v4479 = vmul.f32 %v3086, %v4471
      %v4480 = vmul.f32 %v3087, %v4471
      %v4481 = vmul.f32 %v3088, %v4471
      %v4482 = vmul.f32 %v3089, %v4471
      %v4483 = vmul.f32 %v3090, %v4471
      %v4484 = vmul.f32 %v3091, %v4471
      %v4485 = vmul.f32 %v3092, %v4471
      %v4486 = vmul.f32 %v3093, %v4471
      %v4487 = vmul.f32 %v3094, %v4471
      %v4488 = vmul.f32 %v3095, %v4471
      %v4489 = vadd.f32 %v4452, %v4473
      %v4490 = vadd.f32 %v4453, %v4474
      %v4491 = vadd.f32 %v4454, %v4475
      %v4492 = vadd.f32 %v4455, %v4476
      %v4493 = vadd.f32 %v4456, %v4477
      %v4494 = vadd.f32 %v4457, %v4478
      %v4495 = vadd.f32 %v4458, %v4479
      %v4496 = vadd.f32 %v4459, %v4480
      %v4497 = vadd.f32 %v4460, %v4481
      %v4498 = vadd.f32 %v4461, %v4482
      %v4499 = vadd.f32 %v4462, %v4483
      %v4500 = vadd.f32 %v4463, %v4484
      %v4501 = vadd.f32 %v4464, %v4485
      %v4502 = vadd.f32 %v4465, %v4486
      %v4503 = vadd.f32 %v4466, %v4487
      %v4504 = vadd.f32 %v4467, %v4488
      %4505 = vrot.lane.b32.xlu0 %v3736, 126
      %v4506 = vpop.permute.xlu0 %4505
      %s4507 = vtos %v4506
      %v4508 = vstv %s4507
      %v4510 = vmul.f32 %v3372, %v4508
      %v4511 = vmul.f32 %v3373, %v4508
      %v4512 = vmul.f32 %v3374, %v4508
      %v4513 = vmul.f32 %v3375, %v4508
      %v4514 = vmul.f32 %v3376, %v4508
      %v4515 = vmul.f32 %v3377, %v4508
      %v4516 = vmul.f32 %v3378, %v4508
      %v4517 = vmul.f32 %v3379, %v4508
      %v4518 = vmul.f32 %v3380, %v4508
      %v4519 = vmul.f32 %v3381, %v4508
      %v4520 = vmul.f32 %v3382, %v4508
      %v4521 = vmul.f32 %v3383, %v4508
      %v4522 = vmul.f32 %v3384, %v4508
      %v4523 = vmul.f32 %v3385, %v4508
      %v4524 = vmul.f32 %v3386, %v4508
      %v4525 = vmul.f32 %v3387, %v4508
      %v4526 = vadd.f32 %v4489, %v4510
      %v4527 = vadd.f32 %v4490, %v4511
      %v4528 = vadd.f32 %v4491, %v4512
      %v4529 = vadd.f32 %v4492, %v4513
      %v4530 = vadd.f32 %v4493, %v4514
      %v4531 = vadd.f32 %v4494, %v4515
      %v4532 = vadd.f32 %v4495, %v4516
      %v4533 = vadd.f32 %v4496, %v4517
      %v4534 = vadd.f32 %v4497, %v4518
      %v4535 = vadd.f32 %v4498, %v4519
      %v4536 = vadd.f32 %v4499, %v4520
      %v4537 = vadd.f32 %v4500, %v4521
      %v4538 = vadd.f32 %v4501, %v4522
      %v4539 = vadd.f32 %v4502, %v4523
      %v4540 = vadd.f32 %v4503, %v4524
      %v4541 = vadd.f32 %v4504, %v4525
      %4542 = vrot.lane.b32.xlu0 %v3772, 126
      %v4543 = vpop.permute.xlu0 %4542
      %s4544 = vtos %v4543
      %v4545 = vstv %s4544
      %v4547 = vmul.f32 %v3664, %v4545
      %v4548 = vmul.f32 %v3665, %v4545
      %v4549 = vmul.f32 %v3666, %v4545
      %v4550 = vmul.f32 %v3667, %v4545
      %v4551 = vmul.f32 %v3668, %v4545
      %v4552 = vmul.f32 %v3669, %v4545
      %v4553 = vmul.f32 %v3670, %v4545
      %v4554 = vmul.f32 %v3671, %v4545
      %v4555 = vmul.f32 %v3672, %v4545
      %v4556 = vmul.f32 %v3673, %v4545
      %v4557 = vmul.f32 %v3674, %v4545
      %v4558 = vmul.f32 %v3675, %v4545
      %v4559 = vmul.f32 %v3676, %v4545
      %v4560 = vmul.f32 %v3677, %v4545
      %v4561 = vmul.f32 %v3678, %v4545
      %v4562 = vmul.f32 %v3679, %v4545
      %v4563 = vadd.f32 %v4526, %v4547
      %v4564 = vadd.f32 %v4527, %v4548
      %v4565 = vadd.f32 %v4528, %v4549
      %v4566 = vadd.f32 %v4529, %v4550
      %v4567 = vadd.f32 %v4530, %v4551
      %v4568 = vadd.f32 %v4531, %v4552
      %v4569 = vadd.f32 %v4532, %v4553
      %v4570 = vadd.f32 %v4533, %v4554
      %v4571 = vadd.f32 %v4534, %v4555
      %v4572 = vadd.f32 %v4535, %v4556
      %v4573 = vadd.f32 %v4536, %v4557
      %v4574 = vadd.f32 %v4537, %v4558
      %v4575 = vadd.f32 %v4538, %v4559
      %v4576 = vadd.f32 %v4539, %v4560
      %v4577 = vadd.f32 %v4540, %v4561
      %v4578 = vadd.f32 %v4541, %v4562
      %v4579 = vpack.c.bf16 %v4564, %v4563
      %v4580 = vpack.c.bf16 %v4566, %v4565
      %v4581 = vpack.c.bf16 %v4568, %v4567
      %v4582 = vpack.c.bf16 %v4570, %v4569
      %v4583 = vpack.c.bf16 %v4572, %v4571
      %v4584 = vpack.c.bf16 %v4574, %v4573
      %v4585 = vpack.c.bf16 %v4576, %v4575
      %v4586 = vpack.c.bf16 %v4578, %v4577
      %4587 = vrot.lane.b32.xlu0 %v1803, 112
      %v4588 = vpop.permute.xlu0 %4587
      %4589 = vrot.lane.b32.xlu0 %v1804, 112
      %v4590 = vpop.permute.xlu0 %4589
      %4591 = vrot.lane.b32.xlu0 %v1805, 112
      %v4592 = vpop.permute.xlu0 %4591
      %4593 = vrot.lane.b32.xlu0 %v1806, 112
      %v4594 = vpop.permute.xlu0 %4593
      %4595 = vrot.lane.b32.xlu0 %v1807, 112
      %v4596 = vpop.permute.xlu0 %4595
      %4597 = vrot.lane.b32.xlu0 %v1808, 112
      %v4598 = vpop.permute.xlu0 %4597
      %4599 = vrot.lane.b32.xlu0 %v1809, 112
      %v4600 = vpop.permute.xlu0 %4599
      %4601 = vrot.lane.b32.xlu0 %v1810, 112
      %v4602 = vpop.permute.xlu0 %4601
      %4611 = vmatprep.subr.bf16.mxu0 0
      %4612 = vmatpush1.bf16.msra.mxu0 %v4588
      %4613 = vmatprep.subr.bf16.mxu0 0
      %4614 = vmatpush1.bf16.msra.mxu0 %v4590
      %4615 = vmatprep.subr.bf16.mxu0 0
      %4616 = vmatpush1.bf16.msra.mxu0 %v4592
      %4617 = vmatprep.subr.bf16.mxu0 0
      %4618 = vmatpush1.bf16.msra.mxu0 %v4594
      %4619 = vmatprep.subr.bf16.mxu0 0
      %4620 = vmatpush1.bf16.msra.mxu0 %v4596
      %4621 = vmatprep.subr.bf16.mxu0 0
      %4622 = vmatpush1.bf16.msra.mxu0 %v4598
      %4623 = vmatprep.subr.bf16.mxu0 0
      %4624 = vmatpush1.bf16.msra.mxu0 %v4600
      %4625 = vmatprep.subr.bf16.mxu0 0
      %4626 = vmatpush1.bf16.msra.mxu0 %v4602
      %4627 = vmatprep.subr.bf16.mxu0 0
      %4628 = vmatpush1.bf16.msra.mxu0 0
      %4629 = vmatprep.subr.bf16.mxu0 0
      %4630 = vmatpush1.bf16.msra.mxu0 0
      %4631 = vmatprep.subr.bf16.mxu0 0
      %4632 = vmatpush1.bf16.msra.mxu0 0
      %4633 = vmatprep.subr.bf16.mxu0 0
      %4634 = vmatpush1.bf16.msra.mxu0 0
      %4635 = vmatprep.subr.bf16.mxu0 0
      %4636 = vmatpush1.bf16.msra.mxu0 0
      %4637 = vmatprep.subr.bf16.mxu0 0
      %4638 = vmatpush1.bf16.msra.mxu0 0
      %4639 = vmatprep.subr.bf16.mxu0 0
      %4640 = vmatpush1.bf16.msra.mxu0 0
      %4641 = vmatprep.subr.bf16.mxu0 0
      %4642 = vmatpush1.bf16.msra.mxu0 0
      %4643 = vmatprep.mubr.bf16.mxu0 0
      %4644 = vmatmul.mubr.bf16.gmra.mrb[0].mxu0 %v4579
      %v4645 = vpop.f32.mrb[0].mxu0
      %v4646 = vadd.f32 0.0, %v4645
      %v4647 = vpop.f32.mrb[0].mxu0
      %v4648 = vpop.f32.mrb[0].mxu0
      %v4649 = vadd.f32 0.0, %v4648
      %v4650 = vpop.f32.mrb[0].mxu0
      %4651 = vmatprep.mubr.bf16.mxu0 0
      %4652 = vmatmul.mubr.bf16.gmra.mrb[0].mxu0 %v4580
      %v4653 = vpop.f32.mrb[0].mxu0
      %v4654 = vadd.f32 0.0, %v4653
      %v4655 = vpop.f32.mrb[0].mxu0
      %v4656 = vpop.f32.mrb[0].mxu0
      %v4657 = vadd.f32 0.0, %v4656
      %v4658 = vpop.f32.mrb[0].mxu0
      %4659 = vmatprep.mubr.bf16.mxu0 0
      %4660 = vmatmul.mubr.bf16.gmra.mrb[0].mxu0 %v4581
      %v4661 = vpop.f32.mrb[0].mxu0
      %v4662 = vadd.f32 0.0, %v4661
      %v4663 = vpop.f32.mrb[0].mxu0
      %v4664 = vpop.f32.mrb[0].mxu0
      %v4665 = vadd.f32 0.0, %v4664
      %v4666 = vpop.f32.mrb[0].mxu0
      %4667 = vmatprep.mubr.bf16.mxu0 0
      %4668 = vmatmul.mubr.bf16.gmra.mrb[0].mxu0 %v4582
      %v4669 = vpop.f32.mrb[0].mxu0
      %v4670 = vadd.f32 0.0, %v4669
      %v4671 = vpop.f32.mrb[0].mxu0
      %v4672 = vpop.f32.mrb[0].mxu0
      %v4673 = vadd.f32 0.0, %v4672
      %v4674 = vpop.f32.mrb[0].mxu0
      %4675 = vmatprep.mubr.bf16.mxu0 0
      %4676 = vmatmul.mubr.bf16.gmra.mrb[0].mxu0 %v4583
      %v4677 = vpop.f32.mrb[0].mxu0
      %v4678 = vadd.f32 0.0, %v4677
      %v4679 = vpop.f32.mrb[0].mxu0
      %v4680 = vpop.f32.mrb[0].mxu0
      %v4681 = vadd.f32 0.0, %v4680
      %v4682 = vpop.f32.mrb[0].mxu0
      %4683 = vmatprep.mubr.bf16.mxu0 0
      %4684 = vmatmul.mubr.bf16.gmra.mrb[0].mxu0 %v4584
      %v4685 = vpop.f32.mrb[0].mxu0
      %v4686 = vadd.f32 0.0, %v4685
      %v4687 = vpop.f32.mrb[0].mxu0
      %v4688 = vpop.f32.mrb[0].mxu0
      %v4689 = vadd.f32 0.0, %v4688
      %v4690 = vpop.f32.mrb[0].mxu0
      %4691 = vmatprep.mubr.bf16.mxu0 0
      %4692 = vmatmul.mubr.bf16.gmra.mrb[0].mxu0 %v4585
      %v4693 = vpop.f32.mrb[0].mxu0
      %v4694 = vadd.f32 0.0, %v4693
      %v4695 = vpop.f32.mrb[0].mxu0
      %v4696 = vpop.f32.mrb[0].mxu0
      %v4697 = vadd.f32 0.0, %v4696
      %v4698 = vpop.f32.mrb[0].mxu0
      %4699 = vmatprep.mubr.bf16.mxu0 0
      %4700 = vmatmul.mubr.bf16.gmra.mrb[0].mxu0 %v4586
      %v4701 = vpop.f32.mrb[0].mxu0
      %v4702 = vadd.f32 0.0, %v4701
      %v4703 = vpop.f32.mrb[0].mxu0
      %v4704 = vpop.f32.mrb[0].mxu0
      %v4705 = vadd.f32 0.0, %v4704
      %v4706 = vpop.f32.mrb[0].mxu0
      %4707 = vdwg.mxu0
      %v4708 = vpack.c.bf16 %v4649, %v4646
      %v4709 = vpack.c.bf16 %v4657, %v4654
      %v4710 = vpack.c.bf16 %v4665, %v4662
      %v4711 = vpack.c.bf16 %v4673, %v4670
      %v4712 = vpack.c.bf16 %v4681, %v4678
      %v4713 = vpack.c.bf16 %v4689, %v4686
      %v4714 = vpack.c.bf16 %v4697, %v4694
      %v4715 = vpack.c.bf16 %v4705, %v4702
      %v4717 = vsel %vm1823, %v4708, 0
      %v4720 = vsel %vm1823, %v4709, 0
      %v4723 = vsel %vm1823, %v4710, 0
      %v4726 = vsel %vm1823, %v4711, 0
      %v4729 = vsel %vm1823, %v4712, 0
      %v4732 = vsel %vm1823, %v4713, 0
      %v4735 = vsel %vm1823, %v4714, 0
      %v4738 = vsel %vm1823, %v4715, 0
      %v4741 = vsel %vm4222, %v1142, 0
      %4743 = vmatprep.subr.bf16.mxu0 0
      %4744 = vmatpush1.bf16.msra.mxu0 %v4741
      %4745 = vmatprep.subr.bf16.mxu0 0
      %4746 = vmatpush1.bf16.msra.mxu0 0
      %4747 = vmatprep.subr.bf16.mxu0 0
      %4748 = vmatpush1.bf16.msra.mxu0 0
      %4749 = vmatprep.subr.bf16.mxu0 0
      %4750 = vmatpush1.bf16.msra.mxu0 0
      %4751 = vmatprep.subr.bf16.mxu0 0
      %4752 = vmatpush1.bf16.msra.mxu0 0
      %4753 = vmatprep.subr.bf16.mxu0 0
      %4754 = vmatpush1.bf16.msra.mxu0 0
      %4755 = vmatprep.subr.bf16.mxu0 0
      %4756 = vmatpush1.bf16.msra.mxu0 0
      %4757 = vmatprep.subr.bf16.mxu0 0
      %4758 = vmatpush1.bf16.msra.mxu0 0
      %4759 = vmatprep.subr.bf16.mxu0 0
      %4760 = vmatpush1.bf16.msra.mxu0 0
      %4761 = vmatprep.subr.bf16.mxu0 0
      %4762 = vmatpush1.bf16.msra.mxu0 0
      %4763 = vmatprep.subr.bf16.mxu0 0
      %4764 = vmatpush1.bf16.msra.mxu0 0
      %4765 = vmatprep.subr.bf16.mxu0 0
      %4766 = vmatpush1.bf16.msra.mxu0 0
      %4767 = vmatprep.subr.bf16.mxu0 0
      %4768 = vmatpush1.bf16.msra.mxu0 0
      %4769 = vmatprep.subr.bf16.mxu0 0
      %4770 = vmatpush1.bf16.msra.mxu0 0
      %4771 = vmatprep.subr.bf16.mxu0 0
      %4772 = vmatpush1.bf16.msra.mxu0 0
      %4773 = vmatprep.subr.bf16.mxu0 0
      %4774 = vmatpush1.bf16.msra.mxu0 0
      %4775 = vmatprep.mubr.bf16.mxu0 0
      %4776 = vmatmul.mubr.bf16.gmra.mrb[0].mxu0 %v4717
      %v4777 = vpop.f32.mrb[0].mxu0
      %v4778 = vadd.f32 0.0, %v4777
      %v4779 = vpop.f32.mrb[0].mxu0
      %v4780 = vpop.f32.mrb[0].mxu0
      %v4781 = vadd.f32 0.0, %v4780
      %v4782 = vpop.f32.mrb[0].mxu0
      %4783 = vmatprep.mubr.bf16.mxu0 0
      %4784 = vmatmul.mubr.bf16.gmra.mrb[0].mxu0 %v4720
      %v4785 = vpop.f32.mrb[0].mxu0
      %v4786 = vadd.f32 0.0, %v4785
      %v4787 = vpop.f32.mrb[0].mxu0
      %v4788 = vpop.f32.mrb[0].mxu0
      %v4789 = vadd.f32 0.0, %v4788
      %v4790 = vpop.f32.mrb[0].mxu0
      %4791 = vmatprep.mubr.bf16.mxu0 0
      %4792 = vmatmul.mubr.bf16.gmra.mrb[0].mxu0 %v4723
      %v4793 = vpop.f32.mrb[0].mxu0
      %v4794 = vadd.f32 0.0, %v4793
      %v4795 = vpop.f32.mrb[0].mxu0
      %v4796 = vpop.f32.mrb[0].mxu0
      %v4797 = vadd.f32 0.0, %v4796
      %v4798 = vpop.f32.mrb[0].mxu0
      %4799 = vmatprep.mubr.bf16.mxu0 0
      %4800 = vmatmul.mubr.bf16.gmra.mrb[0].mxu0 %v4726
      %v4801 = vpop.f32.mrb[0].mxu0
      %v4802 = vadd.f32 0.0, %v4801
      %v4803 = vpop.f32.mrb[0].mxu0
      %v4804 = vpop.f32.mrb[0].mxu0
      %v4805 = vadd.f32 0.0, %v4804
      %v4806 = vpop.f32.mrb[0].mxu0
      %4807 = vmatprep.mubr.bf16.mxu0 0
      %4808 = vmatmul.mubr.bf16.gmra.mrb[0].mxu0 %v4729
      %v4809 = vpop.f32.mrb[0].mxu0
      %v4810 = vadd.f32 0.0, %v4809
      %v4811 = vpop.f32.mrb[0].mxu0
      %v4812 = vpop.f32.mrb[0].mxu0
      %v4813 = vadd.f32 0.0, %v4812
      %v4814 = vpop.f32.mrb[0].mxu0
      %4815 = vmatprep.mubr.bf16.mxu0 0
      %4816 = vmatmul.mubr.bf16.gmra.mrb[0].mxu0 %v4732
      %v4817 = vpop.f32.mrb[0].mxu0
      %v4818 = vadd.f32 0.0, %v4817
      %v4819 = vpop.f32.mrb[0].mxu0
      %v4820 = vpop.f32.mrb[0].mxu0
      %v4821 = vadd.f32 0.0, %v4820
      %v4822 = vpop.f32.mrb[0].mxu0
      %4823 = vmatprep.mubr.bf16.mxu0 0
      %4824 = vmatmul.mubr.bf16.gmra.mrb[0].mxu0 %v4735
      %v4825 = vpop.f32.mrb[0].mxu0
      %v4826 = vadd.f32 0.0, %v4825
      %v4827 = vpop.f32.mrb[0].mxu0
      %v4828 = vpop.f32.mrb[0].mxu0
      %v4829 = vadd.f32 0.0, %v4828
      %v4830 = vpop.f32.mrb[0].mxu0
      %4831 = vmatprep.mubr.bf16.mxu0 0
      %4832 = vmatmul.mubr.bf16.gmra.mrb[0].mxu0 %v4738
      %v4833 = vpop.f32.mrb[0].mxu0
      %v4834 = vadd.f32 0.0, %v4833
      %v4835 = vpop.f32.mrb[0].mxu0
      %v4836 = vpop.f32.mrb[0].mxu0
      %v4837 = vadd.f32 0.0, %v4836
      %v4838 = vpop.f32.mrb[0].mxu0
      %4839 = vdwg.mxu0
      %v4840 = vadd.f32 %v4385, %v4778
      %v4841 = vadd.f32 %v4388, %v4781
      %v4842 = vadd.f32 %v4393, %v4786
      %v4843 = vadd.f32 %v4396, %v4789
      %v4844 = vadd.f32 %v4401, %v4794
      %v4845 = vadd.f32 %v4404, %v4797
      %v4846 = vadd.f32 %v4409, %v4802
      %v4847 = vadd.f32 %v4412, %v4805
      %v4848 = vadd.f32 %v4417, %v4810
      %v4849 = vadd.f32 %v4420, %v4813
      %v4850 = vadd.f32 %v4425, %v4818
      %v4851 = vadd.f32 %v4428, %v4821
      %v4852 = vadd.f32 %v4433, %v4826
      %v4853 = vadd.f32 %v4436, %v4829
      %v4854 = vadd.f32 %v4441, %v4834
      %v4855 = vadd.f32 %v4444, %v4837
      %4856 = vrot.lane.b32.xlu0 %v3680, 125
      %v4857 = vpop.permute.xlu0 %4856
      %s4858 = vtos %v4857
      %v4859 = vstv %s4858
      %v4861 = vmul.f32 %v2788, %v4859
      %v4862 = vmul.f32 %v2789, %v4859
      %v4863 = vmul.f32 %v2790, %v4859
      %v4864 = vmul.f32 %v2791, %v4859
      %v4865 = vmul.f32 %v2792, %v4859
      %v4866 = vmul.f32 %v2793, %v4859
      %v4867 = vmul.f32 %v2794, %v4859
      %v4868 = vmul.f32 %v2795, %v4859
      %v4869 = vmul.f32 %v2796, %v4859
      %v4870 = vmul.f32 %v2797, %v4859
      %v4871 = vmul.f32 %v2798, %v4859
      %v4872 = vmul.f32 %v2799, %v4859
      %v4873 = vmul.f32 %v2800, %v4859
      %v4874 = vmul.f32 %v2801, %v4859
      %v4875 = vmul.f32 %v2802, %v4859
      %v4876 = vmul.f32 %v2803, %v4859
      %4877 = vrot.lane.b32.xlu0 %v3700, 125
      %v4878 = vpop.permute.xlu0 %4877
      %s4879 = vtos %v4878
      %v4880 = vstv %s4879
      %v4882 = vmul.f32 %v3080, %v4880
      %v4883 = vmul.f32 %v3081, %v4880
      %v4884 = vmul.f32 %v3082, %v4880
      %v4885 = vmul.f32 %v3083, %v4880
      %v4886 = vmul.f32 %v3084, %v4880
      %v4887 = vmul.f32 %v3085, %v4880
      %v4888 = vmul.f32 %v3086, %v4880
      %v4889 = vmul.f32 %v3087, %v4880
      %v4890 = vmul.f32 %v3088, %v4880
      %v4891 = vmul.f32 %v3089, %v4880
      %v4892 = vmul.f32 %v3090, %v4880
      %v4893 = vmul.f32 %v3091, %v4880
      %v4894 = vmul.f32 %v3092, %v4880
      %v4895 = vmul.f32 %v3093, %v4880
      %v4896 = vmul.f32 %v3094, %v4880
      %v4897 = vmul.f32 %v3095, %v4880
      %v4898 = vadd.f32 %v4861, %v4882
      %v4899 = vadd.f32 %v4862, %v4883
      %v4900 = vadd.f32 %v4863, %v4884
      %v4901 = vadd.f32 %v4864, %v4885
      %v4902 = vadd.f32 %v4865, %v4886
      %v4903 = vadd.f32 %v4866, %v4887
      %v4904 = vadd.f32 %v4867, %v4888
      %v4905 = vadd.f32 %v4868, %v4889
      %v4906 = vadd.f32 %v4869, %v4890
      %v4907 = vadd.f32 %v4870, %v4891
      %v4908 = vadd.f32 %v4871, %v4892
      %v4909 = vadd.f32 %v4872, %v4893
      %v4910 = vadd.f32 %v4873, %v4894
      %v4911 = vadd.f32 %v4874, %v4895
      %v4912 = vadd.f32 %v4875, %v4896
      %v4913 = vadd.f32 %v4876, %v4897
      %4914 = vrot.lane.b32.xlu0 %v3736, 125
      %v4915 = vpop.permute.xlu0 %4914
      %s4916 = vtos %v4915
      %v4917 = vstv %s4916
      %v4919 = vmul.f32 %v3372, %v4917
      %v4920 = vmul.f32 %v3373, %v4917
      %v4921 = vmul.f32 %v3374, %v4917
      %v4922 = vmul.f32 %v3375, %v4917
      %v4923 = vmul.f32 %v3376, %v4917
      %v4924 = vmul.f32 %v3377, %v4917
      %v4925 = vmul.f32 %v3378, %v4917
      %v4926 = vmul.f32 %v3379, %v4917
      %v4927 = vmul.f32 %v3380, %v4917
      %v4928 = vmul.f32 %v3381, %v4917
      %v4929 = vmul.f32 %v3382, %v4917
      %v4930 = vmul.f32 %v3383, %v4917
      %v4931 = vmul.f32 %v3384, %v4917
      %v4932 = vmul.f32 %v3385, %v4917
      %v4933 = vmul.f32 %v3386, %v4917
      %v4934 = vmul.f32 %v3387, %v4917
      %v4935 = vadd.f32 %v4898, %v4919
      %v4936 = vadd.f32 %v4899, %v4920
      %v4937 = vadd.f32 %v4900, %v4921
      %v4938 = vadd.f32 %v4901, %v4922
      %v4939 = vadd.f32 %v4902, %v4923
      %v4940 = vadd.f32 %v4903, %v4924
      %v4941 = vadd.f32 %v4904, %v4925
      %v4942 = vadd.f32 %v4905, %v4926
      %v4943 = vadd.f32 %v4906, %v4927
      %v4944 = vadd.f32 %v4907, %v4928
      %v4945 = vadd.f32 %v4908, %v4929
      %v4946 = vadd.f32 %v4909, %v4930
      %v4947 = vadd.f32 %v4910, %v4931
      %v4948 = vadd.f32 %v4911, %v4932
      %v4949 = vadd.f32 %v4912, %v4933
      %v4950 = vadd.f32 %v4913, %v4934
      %4951 = vrot.lane.b32.xlu0 %v3772, 125
      %v4952 = vpop.permute.xlu0 %4951
      %s4953 = vtos %v4952
      %v4954 = vstv %s4953
      %v4956 = vmul.f32 %v3664, %v4954
      %v4957 = vmul.f32 %v3665, %v4954
      %v4958 = vmul.f32 %v3666, %v4954
      %v4959 = vmul.f32 %v3667, %v4954
      %v4960 = vmul.f32 %v3668, %v4954
      %v4961 = vmul.f32 %v3669, %v4954
      %v4962 = vmul.f32 %v3670, %v4954
      %v4963 = vmul.f32 %v3671, %v4954
      %v4964 = vmul.f32 %v3672, %v4954
      %v4965 = vmul.f32 %v3673, %v4954
      %v4966 = vmul.f32 %v3674, %v4954
      %v4967 = vmul.f32 %v3675, %v4954
      %v4968 = vmul.f32 %v3676, %v4954
      %v4969 = vmul.f32 %v3677, %v4954
      %v4970 = vmul.f32 %v3678, %v4954
      %v4971 = vmul.f32 %v3679, %v4954
      %v4972 = vadd.f32 %v4935, %v4956
      %v4973 = vadd.f32 %v4936, %v4957
      %v4974 = vadd.f32 %v4937, %v4958
      %v4975 = vadd.f32 %v4938, %v4959
      %v4976 = vadd.f32 %v4939, %v4960
      %v4977 = vadd.f32 %v4940, %v4961
      %v4978 = vadd.f32 %v4941, %v4962
      %v4979 = vadd.f32 %v4942, %v4963
      %v4980 = vadd.f32 %v4943, %v4964
      %v4981 = vadd.f32 %v4944, %v4965
      %v4982 = vadd.f32 %v4945, %v4966
      %v4983 = vadd.f32 %v4946, %v4967
      %v4984 = vadd.f32 %v4947, %v4968
      %v4985 = vadd.f32 %v4948, %v4969
      %v4986 = vadd.f32 %v4949, %v4970
      %v4987 = vadd.f32 %v4950, %v4971
      %v4988 = vpack.c.bf16 %v4973, %v4972
      %v4989 = vpack.c.bf16 %v4975, %v4974
      %v4990 = vpack.c.bf16 %v4977, %v4976
      %v4991 = vpack.c.bf16 %v4979, %v4978
      %v4992 = vpack.c.bf16 %v4981, %v4980
      %v4993 = vpack.c.bf16 %v4983, %v4982
      %v4994 = vpack.c.bf16 %v4985, %v4984
      %v4995 = vpack.c.bf16 %v4987, %v4986
      %4996 = vrot.lane.b32.xlu0 %v1803, 104
      %v4997 = vpop.permute.xlu0 %4996
      %4998 = vrot.lane.b32.xlu0 %v1804, 104
      %v4999 = vpop.permute.xlu0 %4998
      %5000 = vrot.lane.b32.xlu0 %v1805, 104
      %v5001 = vpop.permute.xlu0 %5000
      %5002 = vrot.lane.b32.xlu0 %v1806, 104
      %v5003 = vpop.permute.xlu0 %5002
      %5004 = vrot.lane.b32.xlu0 %v1807, 104
      %v5005 = vpop.permute.xlu0 %5004
      %5006 = vrot.lane.b32.xlu0 %v1808, 104
      %v5007 = vpop.permute.xlu0 %5006
      %5008 = vrot.lane.b32.xlu0 %v1809, 104
      %v5009 = vpop.permute.xlu0 %5008
      %5010 = vrot.lane.b32.xlu0 %v1810, 104
      %v5011 = vpop.permute.xlu0 %5010
      %5020 = vmatprep.subr.bf16.mxu0 0
      %5021 = vmatpush1.bf16.msra.mxu0 %v4997
      %5022 = vmatprep.subr.bf16.mxu0 0
      %5023 = vmatpush1.bf16.msra.mxu0 %v4999
      %5024 = vmatprep.subr.bf16.mxu0 0
      %5025 = vmatpush1.bf16.msra.mxu0 %v5001
      %5026 = vmatprep.subr.bf16.mxu0 0
      %5027 = vmatpush1.bf16.msra.mxu0 %v5003
      %5028 = vmatprep.subr.bf16.mxu0 0
      %5029 = vmatpush1.bf16.msra.mxu0 %v5005
      %5030 = vmatprep.subr.bf16.mxu0 0
      %5031 = vmatpush1.bf16.msra.mxu0 %v5007
      %5032 = vmatprep.subr.bf16.mxu0 0
      %5033 = vmatpush1.bf16.msra.mxu0 %v5009
      %5034 = vmatprep.subr.bf16.mxu0 0
      %5035 = vmatpush1.bf16.msra.mxu0 %v5011
      %5036 = vmatprep.subr.bf16.mxu0 0
      %5037 = vmatpush1.bf16.msra.mxu0 0
      %5038 = vmatprep.subr.bf16.mxu0 0
      %5039 = vmatpush1.bf16.msra.mxu0 0
      %5040 = vmatprep.subr.bf16.mxu0 0
      %5041 = vmatpush1.bf16.msra.mxu0 0
      %5042 = vmatprep.subr.bf16.mxu0 0
      %5043 = vmatpush1.bf16.msra.mxu0 0
      %5044 = vmatprep.subr.bf16.mxu0 0
      %5045 = vmatpush1.bf16.msra.mxu0 0
      %5046 = vmatprep.subr.bf16.mxu0 0
      %5047 = vmatpush1.bf16.msra.mxu0 0
      %5048 = vmatprep.subr.bf16.mxu0 0
      %5049 = vmatpush1.bf16.msra.mxu0 0
      %5050 = vmatprep.subr.bf16.mxu0 0
      %5051 = vmatpush1.bf16.msra.mxu0 0
      %5052 = vmatprep.mubr.bf16.mxu0 0
      %5053 = vmatmul.mubr.bf16.gmra.mrb[0].mxu0 %v4988
      %v5054 = vpop.f32.mrb[0].mxu0
      %v5055 = vadd.f32 0.0, %v5054
      %v5056 = vpop.f32.mrb[0].mxu0
      %v5057 = vpop.f32.mrb[0].mxu0
      %v5058 = vadd.f32 0.0, %v5057
      %v5059 = vpop.f32.mrb[0].mxu0
      %5060 = vmatprep.mubr.bf16.mxu0 0
      %5061 = vmatmul.mubr.bf16.gmra.mrb[0].mxu0 %v4989
      %v5062 = vpop.f32.mrb[0].mxu0
      %v5063 = vadd.f32 0.0, %v5062
      %v5064 = vpop.f32.mrb[0].mxu0
      %v5065 = vpop.f32.mrb[0].mxu0
      %v5066 = vadd.f32 0.0, %v5065
      %v5067 = vpop.f32.mrb[0].mxu0
      %5068 = vmatprep.mubr.bf16.mxu0 0
      %5069 = vmatmul.mubr.bf16.gmra.mrb[0].mxu0 %v4990
      %v5070 = vpop.f32.mrb[0].mxu0
      %v5071 = vadd.f32 0.0, %v5070
      %v5072 = vpop.f32.mrb[0].mxu0
      %v5073 = vpop.f32.mrb[0].mxu0
      %v5074 = vadd.f32 0.0, %v5073
      %v5075 = vpop.f32.mrb[0].mxu0
      %5076 = vmatprep.mubr.bf16.mxu0 0
      %5077 = vmatmul.mubr.bf16.gmra.mrb[0].mxu0 %v4991
      %v5078 = vpop.f32.mrb[0].mxu0
      %v5079 = vadd.f32 0.0, %v5078
      %v5080 = vpop.f32.mrb[0].mxu0
      %v5081 = vpop.f32.mrb[0].mxu0
      %v5082 = vadd.f32 0.0, %v5081
      %v5083 = vpop.f32.mrb[0].mxu0
      %5084 = vmatprep.mubr.bf16.mxu0 0
      %5085 = vmatmul.mubr.bf16.gmra.mrb[0].mxu0 %v4992
      %v5086 = vpop.f32.mrb[0].mxu0
      %v5087 = vadd.f32 0.0, %v5086
      %v5088 = vpop.f32.mrb[0].mxu0
      %v5089 = vpop.f32.mrb[0].mxu0
      %v5090 = vadd.f32 0.0, %v5089
      %v5091 = vpop.f32.mrb[0].mxu0
      %5092 = vmatprep.mubr.bf16.mxu0 0
      %5093 = vmatmul.mubr.bf16.gmra.mrb[0].mxu0 %v4993
      %v5094 = vpop.f32.mrb[0].mxu0
      %v5095 = vadd.f32 0.0, %v5094
      %v5096 = vpop.f32.mrb[0].mxu0
      %v5097 = vpop.f32.mrb[0].mxu0
      %v5098 = vadd.f32 0.0, %v5097
      %v5099 = vpop.f32.mrb[0].mxu0
      %5100 = vmatprep.mubr.bf16.mxu0 0
      %5101 = vmatmul.mubr.bf16.gmra.mrb[0].mxu0 %v4994
      %v5102 = vpop.f32.mrb[0].mxu0
      %v5103 = vadd.f32 0.0, %v5102
      %v5104 = vpop.f32.mrb[0].mxu0
      %v5105 = vpop.f32.mrb[0].mxu0
      %v5106 = vadd.f32 0.0, %v5105
      %v5107 = vpop.f32.mrb[0].mxu0
      %5108 = vmatprep.mubr.bf16.mxu0 0
      %5109 = vmatmul.mubr.bf16.gmra.mrb[0].mxu0 %v4995
      %v5110 = vpop.f32.mrb[0].mxu0
      %v5111 = vadd.f32 0.0, %v5110
      %v5112 = vpop.f32.mrb[0].mxu0
      %v5113 = vpop.f32.mrb[0].mxu0
      %v5114 = vadd.f32 0.0, %v5113
      %v5115 = vpop.f32.mrb[0].mxu0
      %5116 = vdwg.mxu0
      %v5117 = vpack.c.bf16 %v5058, %v5055
      %v5118 = vpack.c.bf16 %v5066, %v5063
      %v5119 = vpack.c.bf16 %v5074, %v5071
      %v5120 = vpack.c.bf16 %v5082, %v5079
      %v5121 = vpack.c.bf16 %v5090, %v5087
      %v5122 = vpack.c.bf16 %v5098, %v5095
      %v5123 = vpack.c.bf16 %v5106, %v5103
      %v5124 = vpack.c.bf16 %v5114, %v5111
      %v5126 = vsel %vm1823, %v5117, 0
      %v5129 = vsel %vm1823, %v5118, 0
      %v5132 = vsel %vm1823, %v5119, 0
      %v5135 = vsel %vm1823, %v5120, 0
      %v5138 = vsel %vm1823, %v5121, 0
      %v5141 = vsel %vm1823, %v5122, 0
      %v5144 = vsel %vm1823, %v5123, 0
      %v5147 = vsel %vm1823, %v5124, 0
      %v5150 = vsel %vm4222, %v1143, 0
      %5152 = vmatprep.subr.bf16.mxu0 0
      %5153 = vmatpush1.bf16.msra.mxu0 %v5150
      %5154 = vmatprep.subr.bf16.mxu0 0
      %5155 = vmatpush1.bf16.msra.mxu0 0
      %5156 = vmatprep.subr.bf16.mxu0 0
      %5157 = vmatpush1.bf16.msra.mxu0 0
      %5158 = vmatprep.subr.bf16.mxu0 0
      %5159 = vmatpush1.bf16.msra.mxu0 0
      %5160 = vmatprep.subr.bf16.mxu0 0
      %5161 = vmatpush1.bf16.msra.mxu0 0
      %5162 = vmatprep.subr.bf16.mxu0 0
      %5163 = vmatpush1.bf16.msra.mxu0 0
      %5164 = vmatprep.subr.bf16.mxu0 0
      %5165 = vmatpush1.bf16.msra.mxu0 0
      %5166 = vmatprep.subr.bf16.mxu0 0
      %5167 = vmatpush1.bf16.msra.mxu0 0
      %5168 = vmatprep.subr.bf16.mxu0 0
      %5169 = vmatpush1.bf16.msra.mxu0 0
      %5170 = vmatprep.subr.bf16.mxu0 0
      %5171 = vmatpush1.bf16.msra.mxu0 0
      %5172 = vmatprep.subr.bf16.mxu0 0
      %5173 = vmatpush1.bf16.msra.mxu0 0
      %5174 = vmatprep.subr.bf16.mxu0 0
      %5175 = vmatpush1.bf16.msra.mxu0 0
      %5176 = vmatprep.subr.bf16.mxu0 0
      %5177 = vmatpush1.bf16.msra.mxu0 0
      %5178 = vmatprep.subr.bf16.mxu0 0
      %5179 = vmatpush1.bf16.msra.mxu0 0
      %5180 = vmatprep.subr.bf16.mxu0 0
      %5181 = vmatpush1.bf16.msra.mxu0 0
      %5182 = vmatprep.subr.bf16.mxu0 0
      %5183 = vmatpush1.bf16.msra.mxu0 0
      %5184 = vmatprep.mubr.bf16.mxu0 0
      %5185 = vmatmul.mubr.bf16.gmra.mrb[0].mxu0 %v5126
      %v5186 = vpop.f32.mrb[0].mxu0
      %v5187 = vadd.f32 0.0, %v5186
      %v5188 = vpop.f32.mrb[0].mxu0
      %v5189 = vpop.f32.mrb[0].mxu0
      %v5190 = vadd.f32 0.0, %v5189
      %v5191 = vpop.f32.mrb[0].mxu0
      %5192 = vmatprep.mubr.bf16.mxu0 0
      %5193 = vmatmul.mubr.bf16.gmra.mrb[0].mxu0 %v5129
      %v5194 = vpop.f32.mrb[0].mxu0
      %v5195 = vadd.f32 0.0, %v5194
      %v5196 = vpop.f32.mrb[0].mxu0
      %v5197 = vpop.f32.mrb[0].mxu0
      %v5198 = vadd.f32 0.0, %v5197
      %v5199 = vpop.f32.mrb[0].mxu0
      %5200 = vmatprep.mubr.bf16.mxu0 0
      %5201 = vmatmul.mubr.bf16.gmra.mrb[0].mxu0 %v5132
      %v5202 = vpop.f32.mrb[0].mxu0
      %v5203 = vadd.f32 0.0, %v5202
      %v5204 = vpop.f32.mrb[0].mxu0
      %v5205 = vpop.f32.mrb[0].mxu0
      %v5206 = vadd.f32 0.0, %v5205
      %v5207 = vpop.f32.mrb[0].mxu0
      %5208 = vmatprep.mubr.bf16.mxu0 0
      %5209 = vmatmul.mubr.bf16.gmra.mrb[0].mxu0 %v5135
      %v5210 = vpop.f32.mrb[0].mxu0
      %v5211 = vadd.f32 0.0, %v5210
      %v5212 = vpop.f32.mrb[0].mxu0
      %v5213 = vpop.f32.mrb[0].mxu0
      %v5214 = vadd.f32 0.0, %v5213
      %v5215 = vpop.f32.mrb[0].mxu0
      %5216 = vmatprep.mubr.bf16.mxu0 0
      %5217 = vmatmul.mubr.bf16.gmra.mrb[0].mxu0 %v5138
      %v5218 = vpop.f32.mrb[0].mxu0
      %v5219 = vadd.f32 0.0, %v5218
      %v5220 = vpop.f32.mrb[0].mxu0
      %v5221 = vpop.f32.mrb[0].mxu0
      %v5222 = vadd.f32 0.0, %v5221
      %v5223 = vpop.f32.mrb[0].mxu0
      %5224 = vmatprep.mubr.bf16.mxu0 0
      %5225 = vmatmul.mubr.bf16.gmra.mrb[0].mxu0 %v5141
      %v5226 = vpop.f32.mrb[0].mxu0
      %v5227 = vadd.f32 0.0, %v5226
      %v5228 = vpop.f32.mrb[0].mxu0
      %v5229 = vpop.f32.mrb[0].mxu0
      %v5230 = vadd.f32 0.0, %v5229
      %v5231 = vpop.f32.mrb[0].mxu0
      %5232 = vmatprep.mubr.bf16.mxu0 0
      %5233 = vmatmul.mubr.bf16.gmra.mrb[0].mxu0 %v5144
      %v5234 = vpop.f32.mrb[0].mxu0
      %v5235 = vadd.f32 0.0, %v5234
      %v5236 = vpop.f32.mrb[0].mxu0
      %v5237 = vpop.f32.mrb[0].mxu0
      %v5238 = vadd.f32 0.0, %v5237
      %v5239 = vpop.f32.mrb[0].mxu0
      %5240 = vmatprep.mubr.bf16.mxu0 0
      %5241 = vmatmul.mubr.bf16.gmra.mrb[0].mxu0 %v5147
      %v5242 = vpop.f32.mrb[0].mxu0
      %v5243 = vadd.f32 0.0, %v5242
      %v5244 = vpop.f32.mrb[0].mxu0
      %v5245 = vpop.f32.mrb[0].mxu0
      %v5246 = vadd.f32 0.0, %v5245
      %v5247 = vpop.f32.mrb[0].mxu0
      %5248 = vdwg.mxu0
      %v5249 = vadd.f32 %v4840, %v5187
      %v5250 = vadd.f32 %v4841, %v5190
      %v5251 = vadd.f32 %v4842, %v5195
      %v5252 = vadd.f32 %v4843, %v5198
      %v5253 = vadd.f32 %v4844, %v5203
      %v5254 = vadd.f32 %v4845, %v5206
      %v5255 = vadd.f32 %v4846, %v5211
      %v5256 = vadd.f32 %v4847, %v5214
      %v5257 = vadd.f32 %v4848, %v5219
      %v5258 = vadd.f32 %v4849, %v5222
      %v5259 = vadd.f32 %v4850, %v5227
      %v5260 = vadd.f32 %v4851, %v5230
      %v5261 = vadd.f32 %v4852, %v5235
      %v5262 = vadd.f32 %v4853, %v5238
      %v5263 = vadd.f32 %v4854, %v5243
      %v5264 = vadd.f32 %v4855, %v5246
      %v5266 = vsel %vm1823, %v1361, 0
      %v5269 = vsel %vm1823, %v1362, 0
      %v5272 = vsel %vm1823, %v1363, 0
      %v5275 = vsel %vm1823, %v1364, 0
      %v5278 = vsel %vm1823, %v1365, 0
      %v5281 = vsel %vm1823, %v1366, 0
      %v5284 = vsel %vm1823, %v1367, 0
      %v5287 = vsel %vm1823, %v1368, 0
      %v5290 = vsel %vm1823, %v1586, 0
      %v5293 = vsel %vm1823, %v1587, 0
      %v5296 = vsel %vm1823, %v1588, 0
      %v5299 = vsel %vm1823, %v1589, 0
      %v5302 = vsel %vm1823, %v1590, 0
      %v5305 = vsel %vm1823, %v1591, 0
      %v5308 = vsel %vm1823, %v1592, 0
      %v5311 = vsel %vm1823, %v1593, 0
      %5313 = vmatprep.subr.bf16.mxu0 0
      %5314 = vmatpush1.bf16.xpose.msra.mxu0 %v5290
      %5315 = vmatprep.subr.bf16.mxu0 0
      %5316 = vmatpush1.bf16.xpose.msra.mxu0 %v5293
      %5317 = vmatprep.subr.bf16.mxu0 0
      %5318 = vmatpush1.bf16.xpose.msra.mxu0 %v5296
      %5319 = vmatprep.subr.bf16.mxu0 0
      %5320 = vmatpush1.bf16.xpose.msra.mxu0 %v5299
      %5321 = vmatprep.subr.bf16.mxu0 0
      %5322 = vmatpush1.bf16.xpose.msra.mxu0 %v5302
      %5323 = vmatprep.subr.bf16.mxu0 0
      %5324 = vmatpush1.bf16.xpose.msra.mxu0 %v5305
      %5325 = vmatprep.subr.bf16.mxu0 0
      %5326 = vmatpush1.bf16.xpose.msra.mxu0 %v5308
      %5327 = vmatprep.subr.bf16.mxu0 0
      %5328 = vmatpush1.bf16.xpose.msra.mxu0 %v5311
      %5329 = vmatprep.subr.bf16.mxu0 0
      %5330 = vmatpush1.bf16.xpose.msra.mxu0 0
      %5331 = vmatprep.subr.bf16.mxu0 0
      %5332 = vmatpush1.bf16.xpose.msra.mxu0 0
      %5333 = vmatprep.subr.bf16.mxu0 0
      %5334 = vmatpush1.bf16.xpose.msra.mxu0 0
      %5335 = vmatprep.subr.bf16.mxu0 0
      %5336 = vmatpush1.bf16.xpose.msra.mxu0 0
      %5337 = vmatprep.subr.bf16.mxu0 0
      %5338 = vmatpush1.bf16.xpose.msra.mxu0 0
      %5339 = vmatprep.subr.bf16.mxu0 0
      %5340 = vmatpush1.bf16.xpose.msra.mxu0 0
      %5341 = vmatprep.subr.bf16.mxu0 0
      %5342 = vmatpush1.bf16.xpose.msra.mxu0 0
      %5343 = vmatprep.subr.bf16.mxu0 0
      %5344 = vmatpush1.bf16.xpose.msra.mxu0 0
      %5345 = vmatprep.mubr.bf16.mxu0 0
      %5346 = vmatmul.mubr.bf16.gmra.mrb[0].mxu0 %v5266
      %v5347 = vpop.f32.mrb[0].mxu0
      %v5348 = vadd.f32 0.0, %v5347
      %v5349 = vpop.f32.mrb[0].mxu0
      %v5350 = vpop.f32.mrb[0].mxu0
      %v5351 = vadd.f32 0.0, %v5350
      %v5352 = vpop.f32.mrb[0].mxu0
      %5353 = vmatprep.mubr.bf16.mxu0 0
      %5354 = vmatmul.mubr.bf16.gmra.mrb[0].mxu0 %v5269
      %v5355 = vpop.f32.mrb[0].mxu0
      %v5356 = vadd.f32 0.0, %v5355
      %v5357 = vpop.f32.mrb[0].mxu0
      %v5358 = vpop.f32.mrb[0].mxu0
      %v5359 = vadd.f32 0.0, %v5358
      %v5360 = vpop.f32.mrb[0].mxu0
      %5361 = vmatprep.mubr.bf16.mxu0 0
      %5362 = vmatmul.mubr.bf16.gmra.mrb[0].mxu0 %v5272
      %v5363 = vpop.f32.mrb[0].mxu0
      %v5364 = vadd.f32 0.0, %v5363
      %v5365 = vpop.f32.mrb[0].mxu0
      %v5366 = vpop.f32.mrb[0].mxu0
      %v5367 = vadd.f32 0.0, %v5366
      %v5368 = vpop.f32.mrb[0].mxu0
      %5369 = vmatprep.mubr.bf16.mxu0 0
      %5370 = vmatmul.mubr.bf16.gmra.mrb[0].mxu0 %v5275
      %v5371 = vpop.f32.mrb[0].mxu0
      %v5372 = vadd.f32 0.0, %v5371
      %v5373 = vpop.f32.mrb[0].mxu0
      %v5374 = vpop.f32.mrb[0].mxu0
      %v5375 = vadd.f32 0.0, %v5374
      %v5376 = vpop.f32.mrb[0].mxu0
      %5377 = vmatprep.mubr.bf16.mxu0 0
      %5378 = vmatmul.mubr.bf16.gmra.mrb[0].mxu0 %v5278
      %v5379 = vpop.f32.mrb[0].mxu0
      %v5380 = vadd.f32 0.0, %v5379
      %v5381 = vpop.f32.mrb[0].mxu0
      %v5382 = vpop.f32.mrb[0].mxu0
      %v5383 = vadd.f32 0.0, %v5382
      %v5384 = vpop.f32.mrb[0].mxu0
      %5385 = vmatprep.mubr.bf16.mxu0 0
      %5386 = vmatmul.mubr.bf16.gmra.mrb[0].mxu0 %v5281
      %v5387 = vpop.f32.mrb[0].mxu0
      %v5388 = vadd.f32 0.0, %v5387
      %v5389 = vpop.f32.mrb[0].mxu0
      %v5390 = vpop.f32.mrb[0].mxu0
      %v5391 = vadd.f32 0.0, %v5390
      %v5392 = vpop.f32.mrb[0].mxu0
      %5393 = vmatprep.mubr.bf16.mxu0 0
      %5394 = vmatmul.mubr.bf16.gmra.mrb[0].mxu0 %v5284
      %v5395 = vpop.f32.mrb[0].mxu0
      %v5396 = vadd.f32 0.0, %v5395
      %v5397 = vpop.f32.mrb[0].mxu0
      %v5398 = vpop.f32.mrb[0].mxu0
      %v5399 = vadd.f32 0.0, %v5398
      %v5400 = vpop.f32.mrb[0].mxu0
      %5401 = vmatprep.mubr.bf16.mxu0 0
      %5402 = vmatmul.mubr.bf16.gmra.mrb[0].mxu0 %v5287
      %v5403 = vpop.f32.mrb[0].mxu0
      %v5404 = vadd.f32 0.0, %v5403
      %v5405 = vpop.f32.mrb[0].mxu0
      %v5406 = vpop.f32.mrb[0].mxu0
      %v5407 = vadd.f32 0.0, %v5406
      %v5408 = vpop.f32.mrb[0].mxu0
      %5409 = vdwg.mxu0
      %5418 = vrot.lane.b32.xlu0 %v1361, 120
      %v5419 = vpop.permute.xlu0 %5418
      %5420 = vrot.lane.b32.xlu0 %v1362, 120
      %v5421 = vpop.permute.xlu0 %5420
      %5422 = vrot.lane.b32.xlu0 %v1363, 120
      %v5423 = vpop.permute.xlu0 %5422
      %5424 = vrot.lane.b32.xlu0 %v1364, 120
      %v5425 = vpop.permute.xlu0 %5424
      %5426 = vrot.lane.b32.xlu0 %v1365, 120
      %v5427 = vpop.permute.xlu0 %5426
      %5428 = vrot.lane.b32.xlu0 %v1366, 120
      %v5429 = vpop.permute.xlu0 %5428
      %5430 = vrot.lane.b32.xlu0 %v1367, 120
      %v5431 = vpop.permute.xlu0 %5430
      %5432 = vrot.lane.b32.xlu0 %v1368, 120
      %v5433 = vpop.permute.xlu0 %5432
      %5442 = vrot.lane.b32.xlu0 %v1586, 120
      %v5443 = vpop.permute.xlu0 %5442
      %5444 = vrot.lane.b32.xlu0 %v1587, 120
      %v5445 = vpop.permute.xlu0 %5444
      %5446 = vrot.lane.b32.xlu0 %v1588, 120
      %v5447 = vpop.permute.xlu0 %5446
      %5448 = vrot.lane.b32.xlu0 %v1589, 120
      %v5449 = vpop.permute.xlu0 %5448
      %5450 = vrot.lane.b32.xlu0 %v1590, 120
      %v5451 = vpop.permute.xlu0 %5450
      %5452 = vrot.lane.b32.xlu0 %v1591, 120
      %v5453 = vpop.permute.xlu0 %5452
      %5454 = vrot.lane.b32.xlu0 %v1592, 120
      %v5455 = vpop.permute.xlu0 %5454
      %5456 = vrot.lane.b32.xlu0 %v1593, 120
      %v5457 = vpop.permute.xlu0 %5456
      %v5459 = vsel %vm1823, %v5419, 0
      %v5462 = vsel %vm1823, %v5421, 0
      %v5465 = vsel %vm1823, %v5423, 0
      %v5468 = vsel %vm1823, %v5425, 0
      %v5471 = vsel %vm1823, %v5427, 0
      %v5474 = vsel %vm1823, %v5429, 0
      %v5477 = vsel %vm1823, %v5431, 0
      %v5480 = vsel %vm1823, %v5433, 0
      %v5483 = vsel %vm1823, %v5443, 0
      %v5486 = vsel %vm1823, %v5445, 0
      %v5489 = vsel %vm1823, %v5447, 0
      %v5492 = vsel %vm1823, %v5449, 0
      %v5495 = vsel %vm1823, %v5451, 0
      %v5498 = vsel %vm1823, %v5453, 0
      %v5501 = vsel %vm1823, %v5455, 0
      %v5504 = vsel %vm1823, %v5457, 0
      %5506 = vmatprep.subr.bf16.mxu0 0
      %5507 = vmatpush1.bf16.xpose.msra.mxu0 %v5483
      %5508 = vmatprep.subr.bf16.mxu0 0
      %5509 = vmatpush1.bf16.xpose.msra.mxu0 %v5486
      %5510 = vmatprep.subr.bf16.mxu0 0
      %5511 = vmatpush1.bf16.xpose.msra.mxu0 %v5489
      %5512 = vmatprep.subr.bf16.mxu0 0
      %5513 = vmatpush1.bf16.xpose.msra.mxu0 %v5492
      %5514 = vmatprep.subr.bf16.mxu0 0
      %5515 = vmatpush1.bf16.xpose.msra.mxu0 %v5495
      %5516 = vmatprep.subr.bf16.mxu0 0
      %5517 = vmatpush1.bf16.xpose.msra.mxu0 %v5498
      %5518 = vmatprep.subr.bf16.mxu0 0
      %5519 = vmatpush1.bf16.xpose.msra.mxu0 %v5501
      %5520 = vmatprep.subr.bf16.mxu0 0
      %5521 = vmatpush1.bf16.xpose.msra.mxu0 %v5504
      %5522 = vmatprep.subr.bf16.mxu0 0
      %5523 = vmatpush1.bf16.xpose.msra.mxu0 0
      %5524 = vmatprep.subr.bf16.mxu0 0
      %5525 = vmatpush1.bf16.xpose.msra.mxu0 0
      %5526 = vmatprep.subr.bf16.mxu0 0
      %5527 = vmatpush1.bf16.xpose.msra.mxu0 0
      %5528 = vmatprep.subr.bf16.mxu0 0
      %5529 = vmatpush1.bf16.xpose.msra.mxu0 0
      %5530 = vmatprep.subr.bf16.mxu0 0
      %5531 = vmatpush1.bf16.xpose.msra.mxu0 0
      %5532 = vmatprep.subr.bf16.mxu0 0
      %5533 = vmatpush1.bf16.xpose.msra.mxu0 0
      %5534 = vmatprep.subr.bf16.mxu0 0
      %5535 = vmatpush1.bf16.xpose.msra.mxu0 0
      %5536 = vmatprep.subr.bf16.mxu0 0
      %5537 = vmatpush1.bf16.xpose.msra.mxu0 0
      %5538 = vmatprep.mubr.bf16.mxu0 0
      %5539 = vmatmul.mubr.bf16.gmra.mrb[0].mxu0 %v5459
      %v5540 = vpop.f32.mrb[0].mxu0
      %v5541 = vadd.f32 0.0, %v5540
      %v5542 = vpop.f32.mrb[0].mxu0
      %v5543 = vpop.f32.mrb[0].mxu0
      %v5544 = vadd.f32 0.0, %v5543
      %v5545 = vpop.f32.mrb[0].mxu0
      %5546 = vmatprep.mubr.bf16.mxu0 0
      %5547 = vmatmul.mubr.bf16.gmra.mrb[0].mxu0 %v5462
      %v5548 = vpop.f32.mrb[0].mxu0
      %v5549 = vadd.f32 0.0, %v5548
      %v5550 = vpop.f32.mrb[0].mxu0
      %v5551 = vpop.f32.mrb[0].mxu0
      %v5552 = vadd.f32 0.0, %v5551
      %v5553 = vpop.f32.mrb[0].mxu0
      %5554 = vmatprep.mubr.bf16.mxu0 0
      %5555 = vmatmul.mubr.bf16.gmra.mrb[0].mxu0 %v5465
      %v5556 = vpop.f32.mrb[0].mxu0
      %v5557 = vadd.f32 0.0, %v5556
      %v5558 = vpop.f32.mrb[0].mxu0
      %v5559 = vpop.f32.mrb[0].mxu0
      %v5560 = vadd.f32 0.0, %v5559
      %v5561 = vpop.f32.mrb[0].mxu0
      %5562 = vmatprep.mubr.bf16.mxu0 0
      %5563 = vmatmul.mubr.bf16.gmra.mrb[0].mxu0 %v5468
      %v5564 = vpop.f32.mrb[0].mxu0
      %v5565 = vadd.f32 0.0, %v5564
      %v5566 = vpop.f32.mrb[0].mxu0
      %v5567 = vpop.f32.mrb[0].mxu0
      %v5568 = vadd.f32 0.0, %v5567
      %v5569 = vpop.f32.mrb[0].mxu0
      %5570 = vmatprep.mubr.bf16.mxu0 0
      %5571 = vmatmul.mubr.bf16.gmra.mrb[0].mxu0 %v5471
      %v5572 = vpop.f32.mrb[0].mxu0
      %v5573 = vadd.f32 0.0, %v5572
      %v5574 = vpop.f32.mrb[0].mxu0
      %v5575 = vpop.f32.mrb[0].mxu0
      %v5576 = vadd.f32 0.0, %v5575
      %v5577 = vpop.f32.mrb[0].mxu0
      %5578 = vmatprep.mubr.bf16.mxu0 0
      %5579 = vmatmul.mubr.bf16.gmra.mrb[0].mxu0 %v5474
      %v5580 = vpop.f32.mrb[0].mxu0
      %v5581 = vadd.f32 0.0, %v5580
      %v5582 = vpop.f32.mrb[0].mxu0
      %v5583 = vpop.f32.mrb[0].mxu0
      %v5584 = vadd.f32 0.0, %v5583
      %v5585 = vpop.f32.mrb[0].mxu0
      %5586 = vmatprep.mubr.bf16.mxu0 0
      %5587 = vmatmul.mubr.bf16.gmra.mrb[0].mxu0 %v5477
      %v5588 = vpop.f32.mrb[0].mxu0
      %v5589 = vadd.f32 0.0, %v5588
      %v5590 = vpop.f32.mrb[0].mxu0
      %v5591 = vpop.f32.mrb[0].mxu0
      %v5592 = vadd.f32 0.0, %v5591
      %v5593 = vpop.f32.mrb[0].mxu0
      %5594 = vmatprep.mubr.bf16.mxu0 0
      %5595 = vmatmul.mubr.bf16.gmra.mrb[0].mxu0 %v5480
      %v5596 = vpop.f32.mrb[0].mxu0
      %v5597 = vadd.f32 0.0, %v5596
      %v5598 = vpop.f32.mrb[0].mxu0
      %v5599 = vpop.f32.mrb[0].mxu0
      %v5600 = vadd.f32 0.0, %v5599
      %v5601 = vpop.f32.mrb[0].mxu0
      %5602 = vdwg.mxu0
      %5603 = vrot.lane.b32.xlu0 %v1361, 112
      %v5604 = vpop.permute.xlu0 %5603
      %5605 = vrot.lane.b32.xlu0 %v1362, 112
      %v5606 = vpop.permute.xlu0 %5605
      %5607 = vrot.lane.b32.xlu0 %v1363, 112
      %v5608 = vpop.permute.xlu0 %5607
      %5609 = vrot.lane.b32.xlu0 %v1364, 112
      %v5610 = vpop.permute.xlu0 %5609
      %5611 = vrot.lane.b32.xlu0 %v1365, 112
      %v5612 = vpop.permute.xlu0 %5611
      %5613 = vrot.lane.b32.xlu0 %v1366, 112
      %v5614 = vpop.permute.xlu0 %5613
      %5615 = vrot.lane.b32.xlu0 %v1367, 112
      %v5616 = vpop.permute.xlu0 %5615
      %5617 = vrot.lane.b32.xlu0 %v1368, 112
      %v5618 = vpop.permute.xlu0 %5617
      %5619 = vrot.lane.b32.xlu0 %v1586, 112
      %v5620 = vpop.permute.xlu0 %5619
      %5621 = vrot.lane.b32.xlu0 %v1587, 112
      %v5622 = vpop.permute.xlu0 %5621
      %5623 = vrot.lane.b32.xlu0 %v1588, 112
      %v5624 = vpop.permute.xlu0 %5623
      %5625 = vrot.lane.b32.xlu0 %v1589, 112
      %v5626 = vpop.permute.xlu0 %5625
      %5627 = vrot.lane.b32.xlu0 %v1590, 112
      %v5628 = vpop.permute.xlu0 %5627
      %5629 = vrot.lane.b32.xlu0 %v1591, 112
      %v5630 = vpop.permute.xlu0 %5629
      %5631 = vrot.lane.b32.xlu0 %v1592, 112
      %v5632 = vpop.permute.xlu0 %5631
      %5633 = vrot.lane.b32.xlu0 %v1593, 112
      %v5634 = vpop.permute.xlu0 %5633
      %v5636 = vsel %vm1823, %v5604, 0
      %v5639 = vsel %vm1823, %v5606, 0
      %v5642 = vsel %vm1823, %v5608, 0
      %v5645 = vsel %vm1823, %v5610, 0
      %v5648 = vsel %vm1823, %v5612, 0
      %v5651 = vsel %vm1823, %v5614, 0
      %v5654 = vsel %vm1823, %v5616, 0
      %v5657 = vsel %vm1823, %v5618, 0
      %v5660 = vsel %vm1823, %v5620, 0
      %v5663 = vsel %vm1823, %v5622, 0
      %v5666 = vsel %vm1823, %v5624, 0
      %v5669 = vsel %vm1823, %v5626, 0
      %v5672 = vsel %vm1823, %v5628, 0
      %v5675 = vsel %vm1823, %v5630, 0
      %v5678 = vsel %vm1823, %v5632, 0
      %v5681 = vsel %vm1823, %v5634, 0
      %5683 = vmatprep.subr.bf16.mxu0 0
      %5684 = vmatpush1.bf16.xpose.msra.mxu0 %v5660
      %5685 = vmatprep.subr.bf16.mxu0 0
      %5686 = vmatpush1.bf16.xpose.msra.mxu0 %v5663
      %5687 = vmatprep.subr.bf16.mxu0 0
      %5688 = vmatpush1.bf16.xpose.msra.mxu0 %v5666
      %5689 = vmatprep.subr.bf16.mxu0 0
      %5690 = vmatpush1.bf16.xpose.msra.mxu0 %v5669
      %5691 = vmatprep.subr.bf16.mxu0 0
      %5692 = vmatpush1.bf16.xpose.msra.mxu0 %v5672
      %5693 = vmatprep.subr.bf16.mxu0 0
      %5694 = vmatpush1.bf16.xpose.msra.mxu0 %v5675
      %5695 = vmatprep.subr.bf16.mxu0 0
      %5696 = vmatpush1.bf16.xpose.msra.mxu0 %v5678
      %5697 = vmatprep.subr.bf16.mxu0 0
      %5698 = vmatpush1.bf16.xpose.msra.mxu0 %v5681
      %5699 = vmatprep.subr.bf16.mxu0 0
      %5700 = vmatpush1.bf16.xpose.msra.mxu0 0
      %5701 = vmatprep.subr.bf16.mxu0 0
      %5702 = vmatpush1.bf16.xpose.msra.mxu0 0
      %5703 = vmatprep.subr.bf16.mxu0 0
      %5704 = vmatpush1.bf16.xpose.msra.mxu0 0
      %5705 = vmatprep.subr.bf16.mxu0 0
      %5706 = vmatpush1.bf16.xpose.msra.mxu0 0
      %5707 = vmatprep.subr.bf16.mxu0 0
      %5708 = vmatpush1.bf16.xpose.msra.mxu0 0
      %5709 = vmatprep.subr.bf16.mxu0 0
      %5710 = vmatpush1.bf16.xpose.msra.mxu0 0
      %5711 = vmatprep.subr.bf16.mxu0 0
      %5712 = vmatpush1.bf16.xpose.msra.mxu0 0
      %5713 = vmatprep.subr.bf16.mxu0 0
      %5714 = vmatpush1.bf16.xpose.msra.mxu0 0
      %5715 = vmatprep.mubr.bf16.mxu0 0
      %5716 = vmatmul.mubr.bf16.gmra.mrb[0].mxu0 %v5636
      %v5717 = vpop.f32.mrb[0].mxu0
      %v5718 = vadd.f32 0.0, %v5717
      %v5719 = vpop.f32.mrb[0].mxu0
      %v5720 = vpop.f32.mrb[0].mxu0
      %v5721 = vadd.f32 0.0, %v5720
      %v5722 = vpop.f32.mrb[0].mxu0
      %5723 = vmatprep.mubr.bf16.mxu0 0
      %5724 = vmatmul.mubr.bf16.gmra.mrb[0].mxu0 %v5639
      %v5725 = vpop.f32.mrb[0].mxu0
      %v5726 = vadd.f32 0.0, %v5725
      %v5727 = vpop.f32.mrb[0].mxu0
      %v5728 = vpop.f32.mrb[0].mxu0
      %v5729 = vadd.f32 0.0, %v5728
      %v5730 = vpop.f32.mrb[0].mxu0
      %5731 = vmatprep.mubr.bf16.mxu0 0
      %5732 = vmatmul.mubr.bf16.gmra.mrb[0].mxu0 %v5642
      %v5733 = vpop.f32.mrb[0].mxu0
      %v5734 = vadd.f32 0.0, %v5733
      %v5735 = vpop.f32.mrb[0].mxu0
      %v5736 = vpop.f32.mrb[0].mxu0
      %v5737 = vadd.f32 0.0, %v5736
      %v5738 = vpop.f32.mrb[0].mxu0
      %5739 = vmatprep.mubr.bf16.mxu0 0
      %5740 = vmatmul.mubr.bf16.gmra.mrb[0].mxu0 %v5645
      %v5741 = vpop.f32.mrb[0].mxu0
      %v5742 = vadd.f32 0.0, %v5741
      %v5743 = vpop.f32.mrb[0].mxu0
      %v5744 = vpop.f32.mrb[0].mxu0
      %v5745 = vadd.f32 0.0, %v5744
      %v5746 = vpop.f32.mrb[0].mxu0
      %5747 = vmatprep.mubr.bf16.mxu0 0
      %5748 = vmatmul.mubr.bf16.gmra.mrb[0].mxu0 %v5648
      %v5749 = vpop.f32.mrb[0].mxu0
      %v5750 = vadd.f32 0.0, %v5749
      %v5751 = vpop.f32.mrb[0].mxu0
      %v5752 = vpop.f32.mrb[0].mxu0
      %v5753 = vadd.f32 0.0, %v5752
      %v5754 = vpop.f32.mrb[0].mxu0
      %5755 = vmatprep.mubr.bf16.mxu0 0
      %5756 = vmatmul.mubr.bf16.gmra.mrb[0].mxu0 %v5651
      %v5757 = vpop.f32.mrb[0].mxu0
      %v5758 = vadd.f32 0.0, %v5757
      %v5759 = vpop.f32.mrb[0].mxu0
      %v5760 = vpop.f32.mrb[0].mxu0
      %v5761 = vadd.f32 0.0, %v5760
      %v5762 = vpop.f32.mrb[0].mxu0
      %5763 = vmatprep.mubr.bf16.mxu0 0
      %5764 = vmatmul.mubr.bf16.gmra.mrb[0].mxu0 %v5654
      %v5765 = vpop.f32.mrb[0].mxu0
      %v5766 = vadd.f32 0.0, %v5765
      %v5767 = vpop.f32.mrb[0].mxu0
      %v5768 = vpop.f32.mrb[0].mxu0
      %v5769 = vadd.f32 0.0, %v5768
      %v5770 = vpop.f32.mrb[0].mxu0
      %5771 = vmatprep.mubr.bf16.mxu0 0
      %5772 = vmatmul.mubr.bf16.gmra.mrb[0].mxu0 %v5657
      %v5773 = vpop.f32.mrb[0].mxu0
      %v5774 = vadd.f32 0.0, %v5773
      %v5775 = vpop.f32.mrb[0].mxu0
      %v5776 = vpop.f32.mrb[0].mxu0
      %v5777 = vadd.f32 0.0, %v5776
      %v5778 = vpop.f32.mrb[0].mxu0
      %5779 = vdwg.mxu0
      %5780 = vrot.lane.b32.xlu0 %v1361, 104
      %v5781 = vpop.permute.xlu0 %5780
      %5782 = vrot.lane.b32.xlu0 %v1362, 104
      %v5783 = vpop.permute.xlu0 %5782
      %5784 = vrot.lane.b32.xlu0 %v1363, 104
      %v5785 = vpop.permute.xlu0 %5784
      %5786 = vrot.lane.b32.xlu0 %v1364, 104
      %v5787 = vpop.permute.xlu0 %5786
      %5788 = vrot.lane.b32.xlu0 %v1365, 104
      %v5789 = vpop.permute.xlu0 %5788
      %5790 = vrot.lane.b32.xlu0 %v1366, 104
      %v5791 = vpop.permute.xlu0 %5790
      %5792 = vrot.lane.b32.xlu0 %v1367, 104
      %v5793 = vpop.permute.xlu0 %5792
      %5794 = vrot.lane.b32.xlu0 %v1368, 104
      %v5795 = vpop.permute.xlu0 %5794
      %5796 = vrot.lane.b32.xlu0 %v1586, 104
      %v5797 = vpop.permute.xlu0 %5796
      %5798 = vrot.lane.b32.xlu0 %v1587, 104
      %v5799 = vpop.permute.xlu0 %5798
      %5800 = vrot.lane.b32.xlu0 %v1588, 104
      %v5801 = vpop.permute.xlu0 %5800
      %5802 = vrot.lane.b32.xlu0 %v1589, 104
      %v5803 = vpop.permute.xlu0 %5802
      %5804 = vrot.lane.b32.xlu0 %v1590, 104
      %v5805 = vpop.permute.xlu0 %5804
      %5806 = vrot.lane.b32.xlu0 %v1591, 104
      %v5807 = vpop.permute.xlu0 %5806
      %5808 = vrot.lane.b32.xlu0 %v1592, 104
      %v5809 = vpop.permute.xlu0 %5808
      %5810 = vrot.lane.b32.xlu0 %v1593, 104
      %v5811 = vpop.permute.xlu0 %5810
      %v5813 = vsel %vm1823, %v5781, 0
      %v5816 = vsel %vm1823, %v5783, 0
      %v5819 = vsel %vm1823, %v5785, 0
      %v5822 = vsel %vm1823, %v5787, 0
      %v5825 = vsel %vm1823, %v5789, 0
      %v5828 = vsel %vm1823, %v5791, 0
      %v5831 = vsel %vm1823, %v5793, 0
      %v5834 = vsel %vm1823, %v5795, 0
      %v5837 = vsel %vm1823, %v5797, 0
      %v5840 = vsel %vm1823, %v5799, 0
      %v5843 = vsel %vm1823, %v5801, 0
      %v5846 = vsel %vm1823, %v5803, 0
      %v5849 = vsel %vm1823, %v5805, 0
      %v5852 = vsel %vm1823, %v5807, 0
      %v5855 = vsel %vm1823, %v5809, 0
      %v5858 = vsel %vm1823, %v5811, 0
      %5860 = vmatprep.subr.bf16.mxu0 0
      %5861 = vmatpush1.bf16.xpose.msra.mxu0 %v5837
      %5862 = vmatprep.subr.bf16.mxu0 0
      %5863 = vmatpush1.bf16.xpose.msra.mxu0 %v5840
      %5864 = vmatprep.subr.bf16.mxu0 0
      %5865 = vmatpush1.bf16.xpose.msra.mxu0 %v5843
      %5866 = vmatprep.subr.bf16.mxu0 0
      %5867 = vmatpush1.bf16.xpose.msra.mxu0 %v5846
      %5868 = vmatprep.subr.bf16.mxu0 0
      %5869 = vmatpush1.bf16.xpose.msra.mxu0 %v5849
      %5870 = vmatprep.subr.bf16.mxu0 0
      %5871 = vmatpush1.bf16.xpose.msra.mxu0 %v5852
      %5872 = vmatprep.subr.bf16.mxu0 0
      %5873 = vmatpush1.bf16.xpose.msra.mxu0 %v5855
      %5874 = vmatprep.subr.bf16.mxu0 0
      %5875 = vmatpush1.bf16.xpose.msra.mxu0 %v5858
      %5876 = vmatprep.subr.bf16.mxu0 0
      %5877 = vmatpush1.bf16.xpose.msra.mxu0 0
      %5878 = vmatprep.subr.bf16.mxu0 0
      %5879 = vmatpush1.bf16.xpose.msra.mxu0 0
      %5880 = vmatprep.subr.bf16.mxu0 0
      %5881 = vmatpush1.bf16.xpose.msra.mxu0 0
      %5882 = vmatprep.subr.bf16.mxu0 0
      %5883 = vmatpush1.bf16.xpose.msra.mxu0 0
      %5884 = vmatprep.subr.bf16.mxu0 0
      %5885 = vmatpush1.bf16.xpose.msra.mxu0 0
      %5886 = vmatprep.subr.bf16.mxu0 0
      %5887 = vmatpush1.bf16.xpose.msra.mxu0 0
      %5888 = vmatprep.subr.bf16.mxu0 0
      %5889 = vmatpush1.bf16.xpose.msra.mxu0 0
      %5890 = vmatprep.subr.bf16.mxu0 0
      %5891 = vmatpush1.bf16.xpose.msra.mxu0 0
      %5892 = vmatprep.mubr.bf16.mxu0 0
      %5893 = vmatmul.mubr.bf16.gmra.mrb[0].mxu0 %v5813
      %v5894 = vpop.f32.mrb[0].mxu0
      %v5895 = vadd.f32 0.0, %v5894
      %v5896 = vpop.f32.mrb[0].mxu0
      %v5897 = vpop.f32.mrb[0].mxu0
      %v5898 = vadd.f32 0.0, %v5897
      %v5899 = vpop.f32.mrb[0].mxu0
      %5900 = vmatprep.mubr.bf16.mxu0 0
      %5901 = vmatmul.mubr.bf16.gmra.mrb[0].mxu0 %v5816
      %v5902 = vpop.f32.mrb[0].mxu0
      %v5903 = vadd.f32 0.0, %v5902
      %v5904 = vpop.f32.mrb[0].mxu0
      %v5905 = vpop.f32.mrb[0].mxu0
      %v5906 = vadd.f32 0.0, %v5905
      %v5907 = vpop.f32.mrb[0].mxu0
      %5908 = vmatprep.mubr.bf16.mxu0 0
      %5909 = vmatmul.mubr.bf16.gmra.mrb[0].mxu0 %v5819
      %v5910 = vpop.f32.mrb[0].mxu0
      %v5911 = vadd.f32 0.0, %v5910
      %v5912 = vpop.f32.mrb[0].mxu0
      %v5913 = vpop.f32.mrb[0].mxu0
      %v5914 = vadd.f32 0.0, %v5913
      %v5915 = vpop.f32.mrb[0].mxu0
      %5916 = vmatprep.mubr.bf16.mxu0 0
      %5917 = vmatmul.mubr.bf16.gmra.mrb[0].mxu0 %v5822
      %v5918 = vpop.f32.mrb[0].mxu0
      %v5919 = vadd.f32 0.0, %v5918
      %v5920 = vpop.f32.mrb[0].mxu0
      %v5921 = vpop.f32.mrb[0].mxu0
      %v5922 = vadd.f32 0.0, %v5921
      %v5923 = vpop.f32.mrb[0].mxu0
      %5924 = vmatprep.mubr.bf16.mxu0 0
      %5925 = vmatmul.mubr.bf16.gmra.mrb[0].mxu0 %v5825
      %v5926 = vpop.f32.mrb[0].mxu0
      %v5927 = vadd.f32 0.0, %v5926
      %v5928 = vpop.f32.mrb[0].mxu0
      %v5929 = vpop.f32.mrb[0].mxu0
      %v5930 = vadd.f32 0.0, %v5929
      %v5931 = vpop.f32.mrb[0].mxu0
      %5932 = vmatprep.mubr.bf16.mxu0 0
      %5933 = vmatmul.mubr.bf16.gmra.mrb[0].mxu0 %v5828
      %v5934 = vpop.f32.mrb[0].mxu0
      %v5935 = vadd.f32 0.0, %v5934
      %v5936 = vpop.f32.mrb[0].mxu0
      %v5937 = vpop.f32.mrb[0].mxu0
      %v5938 = vadd.f32 0.0, %v5937
      %v5939 = vpop.f32.mrb[0].mxu0
      %5940 = vmatprep.mubr.bf16.mxu0 0
      %5941 = vmatmul.mubr.bf16.gmra.mrb[0].mxu0 %v5831
      %v5942 = vpop.f32.mrb[0].mxu0
      %v5943 = vadd.f32 0.0, %v5942
      %v5944 = vpop.f32.mrb[0].mxu0
      %v5945 = vpop.f32.mrb[0].mxu0
      %v5946 = vadd.f32 0.0, %v5945
      %v5947 = vpop.f32.mrb[0].mxu0
      %5948 = vmatprep.mubr.bf16.mxu0 0
      %5949 = vmatmul.mubr.bf16.gmra.mrb[0].mxu0 %v5834
      %v5950 = vpop.f32.mrb[0].mxu0
      %v5951 = vadd.f32 0.0, %v5950
      %v5952 = vpop.f32.mrb[0].mxu0
      %v5953 = vpop.f32.mrb[0].mxu0
      %v5954 = vadd.f32 0.0, %v5953
      %v5955 = vpop.f32.mrb[0].mxu0
      %5956 = vdwg.mxu0
      %v5957 = vmul.f32 %v5348, %v2518
      %v5958 = vmul.f32 %v5351, %v2518
      %v5959 = vmul.f32 %v5356, %v2518
      %v5960 = vmul.f32 %v5359, %v2518
      %v5961 = vmul.f32 %v5364, %v2518
      %v5962 = vmul.f32 %v5367, %v2518
      %v5963 = vmul.f32 %v5372, %v2518
      %v5964 = vmul.f32 %v5375, %v2518
      %v5965 = vmul.f32 %v5380, %v2518
      %v5966 = vmul.f32 %v5383, %v2518
      %v5967 = vmul.f32 %v5388, %v2518
      %v5968 = vmul.f32 %v5391, %v2518
      %v5969 = vmul.f32 %v5396, %v2518
      %v5970 = vmul.f32 %v5399, %v2518
      %v5971 = vmul.f32 %v5404, %v2518
      %v5972 = vmul.f32 %v5407, %v2518
      %v5973 = vmul.f32 %v5541, %v2538
      %v5974 = vmul.f32 %v5544, %v2538
      %v5975 = vmul.f32 %v5549, %v2538
      %v5976 = vmul.f32 %v5552, %v2538
      %v5977 = vmul.f32 %v5557, %v2538
      %v5978 = vmul.f32 %v5560, %v2538
      %v5979 = vmul.f32 %v5565, %v2538
      %v5980 = vmul.f32 %v5568, %v2538
      %v5981 = vmul.f32 %v5573, %v2538
      %v5982 = vmul.f32 %v5576, %v2538
      %v5983 = vmul.f32 %v5581, %v2538
      %v5984 = vmul.f32 %v5584, %v2538
      %v5985 = vmul.f32 %v5589, %v2538
      %v5986 = vmul.f32 %v5592, %v2538
      %v5987 = vmul.f32 %v5597, %v2538
      %v5988 = vmul.f32 %v5600, %v2538
      %v5989 = vadd.f32 %v5957, %v5973
      %v5990 = vadd.f32 %v5958, %v5974
      %v5991 = vadd.f32 %v5959, %v5975
      %v5992 = vadd.f32 %v5960, %v5976
      %v5993 = vadd.f32 %v5961, %v5977
      %v5994 = vadd.f32 %v5962, %v5978
      %v5995 = vadd.f32 %v5963, %v5979
      %v5996 = vadd.f32 %v5964, %v5980
      %v5997 = vadd.f32 %v5965, %v5981
      %v5998 = vadd.f32 %v5966, %v5982
      %v5999 = vadd.f32 %v5967, %v5983
      %v6000 = vadd.f32 %v5968, %v5984
      %v6001 = vadd.f32 %v5969, %v5985
      %v6002 = vadd.f32 %v5970, %v5986
      %v6003 = vadd.f32 %v5971, %v5987
      %v6004 = vadd.f32 %v5972, %v5988
      %v6005 = vmul.f32 %v5718, %v2574
      %v6006 = vmul.f32 %v5721, %v2574
      %v6007 = vmul.f32 %v5726, %v2574
      %v6008 = vmul.f32 %v5729, %v2574
      %v6009 = vmul.f32 %v5734, %v2574
      %v6010 = vmul.f32 %v5737, %v2574
      %v6011 = vmul.f32 %v5742, %v2574
      %v6012 = vmul.f32 %v5745, %v2574
      %v6013 = vmul.f32 %v5750, %v2574
      %v6014 = vmul.f32 %v5753, %v2574
      %v6015 = vmul.f32 %v5758, %v2574
      %v6016 = vmul.f32 %v5761, %v2574
      %v6017 = vmul.f32 %v5766, %v2574
      %v6018 = vmul.f32 %v5769, %v2574
      %v6019 = vmul.f32 %v5774, %v2574
      %v6020 = vmul.f32 %v5777, %v2574
      %v6021 = vadd.f32 %v5989, %v6005
      %v6022 = vadd.f32 %v5990, %v6006
      %v6023 = vadd.f32 %v5991, %v6007
      %v6024 = vadd.f32 %v5992, %v6008
      %v6025 = vadd.f32 %v5993, %v6009
      %v6026 = vadd.f32 %v5994, %v6010
      %v6027 = vadd.f32 %v5995, %v6011
      %v6028 = vadd.f32 %v5996, %v6012
      %v6029 = vadd.f32 %v5997, %v6013
      %v6030 = vadd.f32 %v5998, %v6014
      %v6031 = vadd.f32 %v5999, %v6015
      %v6032 = vadd.f32 %v6000, %v6016
      %v6033 = vadd.f32 %v6001, %v6017
      %v6034 = vadd.f32 %v6002, %v6018
      %v6035 = vadd.f32 %v6003, %v6019
      %v6036 = vadd.f32 %v6004, %v6020
      %v6037 = vmul.f32 %v5895, %v2610
      %v6038 = vmul.f32 %v5898, %v2610
      %v6039 = vmul.f32 %v5903, %v2610
      %v6040 = vmul.f32 %v5906, %v2610
      %v6041 = vmul.f32 %v5911, %v2610
      %v6042 = vmul.f32 %v5914, %v2610
      %v6043 = vmul.f32 %v5919, %v2610
      %v6044 = vmul.f32 %v5922, %v2610
      %v6045 = vmul.f32 %v5927, %v2610
      %v6046 = vmul.f32 %v5930, %v2610
      %v6047 = vmul.f32 %v5935, %v2610
      %v6048 = vmul.f32 %v5938, %v2610
      %v6049 = vmul.f32 %v5943, %v2610
      %v6050 = vmul.f32 %v5946, %v2610
      %v6051 = vmul.f32 %v5951, %v2610
      %v6052 = vmul.f32 %v5954, %v2610
      %v6053 = vadd.f32 %v6021, %v6037
      %v6054 = vadd.f32 %v6022, %v6038
      %v6055 = vadd.f32 %v6023, %v6039
      %v6056 = vadd.f32 %v6024, %v6040
      %v6057 = vadd.f32 %v6025, %v6041
      %v6058 = vadd.f32 %v6026, %v6042
      %v6059 = vadd.f32 %v6027, %v6043
      %v6060 = vadd.f32 %v6028, %v6044
      %v6061 = vadd.f32 %v6029, %v6045
      %v6062 = vadd.f32 %v6030, %v6046
      %v6063 = vadd.f32 %v6031, %v6047
      %v6064 = vadd.f32 %v6032, %v6048
      %v6065 = vadd.f32 %v6033, %v6049
      %v6066 = vadd.f32 %v6034, %v6050
      %v6067 = vadd.f32 %v6035, %v6051
      %v6068 = vadd.f32 %v6036, %v6052
      %v6069 = vadd.f32 %v6053, %v1822
      %v6070 = vadd.f32 %v6054, %v1822
      %v6071 = vadd.f32 %v6055, %v1822
      %v6072 = vadd.f32 %v6056, %v1822
      %v6073 = vadd.f32 %v6057, %v1822
      %v6074 = vadd.f32 %v6058, %v1822
      %v6075 = vadd.f32 %v6059, %v1822
      %v6076 = vadd.f32 %v6060, %v1822
      %v6077 = vadd.f32 %v6061, %v1822
      %v6078 = vadd.f32 %v6062, %v1822
      %v6079 = vadd.f32 %v6063, %v1822
      %v6080 = vadd.f32 %v6064, %v1822
      %v6081 = vadd.f32 %v6065, %v1822
      %v6082 = vadd.f32 %v6066, %v1822
      %v6083 = vadd.f32 %v6067, %v1822
      %v6084 = vadd.f32 %v6068, %v1822
      %6085 = vmax.xlane.f32.xlu0 %v6069
      %v6086 = vpop.xlane.xlu0 %6085
      %6087 = vmax.xlane.f32.xlu0 %v6070
      %v6088 = vpop.xlane.xlu0 %6087
      %6089 = vmax.xlane.f32.xlu0 %v6071
      %v6090 = vpop.xlane.xlu0 %6089
      %6091 = vmax.xlane.f32.xlu0 %v6072
      %v6092 = vpop.xlane.xlu0 %6091
      %6093 = vmax.xlane.f32.xlu0 %v6073
      %v6094 = vpop.xlane.xlu0 %6093
      %6095 = vmax.xlane.f32.xlu0 %v6074
      %v6096 = vpop.xlane.xlu0 %6095
      %6097 = vmax.xlane.f32.xlu0 %v6075
      %v6098 = vpop.xlane.xlu0 %6097
      %6099 = vmax.xlane.f32.xlu0 %v6076
      %v6100 = vpop.xlane.xlu0 %6099
      %6101 = vmax.xlane.f32.xlu0 %v6077
      %v6102 = vpop.xlane.xlu0 %6101
      %6103 = vmax.xlane.f32.xlu0 %v6078
      %v6104 = vpop.xlane.xlu0 %6103
      %6105 = vmax.xlane.f32.xlu0 %v6079
      %v6106 = vpop.xlane.xlu0 %6105
      %6107 = vmax.xlane.f32.xlu0 %v6080
      %v6108 = vpop.xlane.xlu0 %6107
      %6109 = vmax.xlane.f32.xlu0 %v6081
      %v6110 = vpop.xlane.xlu0 %6109
      %6111 = vmax.xlane.f32.xlu0 %v6082
      %v6112 = vpop.xlane.xlu0 %6111
      %6113 = vmax.xlane.f32.xlu0 %v6083
      %v6114 = vpop.xlane.xlu0 %6113
      %6115 = vmax.xlane.f32.xlu0 %v6084
      %v6116 = vpop.xlane.xlu0 %6115
      %v6117 = vsub.f32 %v6069, %v6086
      %v6118 = vsub.f32 %v6070, %v6088
      %v6119 = vsub.f32 %v6071, %v6090
      %v6120 = vsub.f32 %v6072, %v6092
      %v6121 = vsub.f32 %v6073, %v6094
      %v6122 = vsub.f32 %v6074, %v6096
      %v6123 = vsub.f32 %v6075, %v6098
      %v6124 = vsub.f32 %v6076, %v6100
      %v6125 = vsub.f32 %v6077, %v6102
      %v6126 = vsub.f32 %v6078, %v6104
      %v6127 = vsub.f32 %v6079, %v6106
      %v6128 = vsub.f32 %v6080, %v6108
      %v6129 = vsub.f32 %v6081, %v6110
      %v6130 = vsub.f32 %v6082, %v6112
      %v6131 = vsub.f32 %v6083, %v6114
      %v6132 = vsub.f32 %v6084, %v6116
      %v6133 = vmul.f32 %v6117, 1.442695
      %v6134 = vpow.pop %v6133
      %v6135 = vmul.f32 %v6118, 1.442695
      %v6136 = vpow.pop %v6135
      %v6137 = vmul.f32 %v6119, 1.442695
      %v6138 = vpow.pop %v6137
      %v6139 = vmul.f32 %v6120, 1.442695
      %v6140 = vpow.pop %v6139
      %v6141 = vmul.f32 %v6121, 1.442695
      %v6142 = vpow.pop %v6141
      %v6143 = vmul.f32 %v6122, 1.442695
      %v6144 = vpow.pop %v6143
      %v6145 = vmul.f32 %v6123, 1.442695
      %v6146 = vpow.pop %v6145
      %v6147 = vmul.f32 %v6124, 1.442695
      %v6148 = vpow.pop %v6147
      %v6149 = vmul.f32 %v6125, 1.442695
      %v6150 = vpow.pop %v6149
      %v6151 = vmul.f32 %v6126, 1.442695
      %v6152 = vpow.pop %v6151
      %v6153 = vmul.f32 %v6127, 1.442695
      %v6154 = vpow.pop %v6153
      %v6155 = vmul.f32 %v6128, 1.442695
      %v6156 = vpow.pop %v6155
      %v6157 = vmul.f32 %v6129, 1.442695
      %v6158 = vpow.pop %v6157
      %v6159 = vmul.f32 %v6130, 1.442695
      %v6160 = vpow.pop %v6159
      %v6161 = vmul.f32 %v6131, 1.442695
      %v6162 = vpow.pop %v6161
      %v6163 = vmul.f32 %v6132, 1.442695
      %v6164 = vpow.pop %v6163
      %6165 = vadd.xlane.f32.xlu0 %v6134
      %v6166 = vpop.xlane.xlu0 %6165
      %6167 = vadd.xlane.f32.xlu0 %v6136
      %v6168 = vpop.xlane.xlu0 %6167
      %6169 = vadd.xlane.f32.xlu0 %v6138
      %v6170 = vpop.xlane.xlu0 %6169
      %6171 = vadd.xlane.f32.xlu0 %v6140
      %v6172 = vpop.xlane.xlu0 %6171
      %6173 = vadd.xlane.f32.xlu0 %v6142
      %v6174 = vpop.xlane.xlu0 %6173
      %6175 = vadd.xlane.f32.xlu0 %v6144
      %v6176 = vpop.xlane.xlu0 %6175
      %6177 = vadd.xlane.f32.xlu0 %v6146
      %v6178 = vpop.xlane.xlu0 %6177
      %6179 = vadd.xlane.f32.xlu0 %v6148
      %v6180 = vpop.xlane.xlu0 %6179
      %6181 = vadd.xlane.f32.xlu0 %v6150
      %v6182 = vpop.xlane.xlu0 %6181
      %6183 = vadd.xlane.f32.xlu0 %v6152
      %v6184 = vpop.xlane.xlu0 %6183
      %6185 = vadd.xlane.f32.xlu0 %v6154
      %v6186 = vpop.xlane.xlu0 %6185
      %6187 = vadd.xlane.f32.xlu0 %v6156
      %v6188 = vpop.xlane.xlu0 %6187
      %6189 = vadd.xlane.f32.xlu0 %v6158
      %v6190 = vpop.xlane.xlu0 %6189
      %6191 = vadd.xlane.f32.xlu0 %v6160
      %v6192 = vpop.xlane.xlu0 %6191
      %6193 = vadd.xlane.f32.xlu0 %v6162
      %v6194 = vpop.xlane.xlu0 %6193
      %6195 = vadd.xlane.f32.xlu0 %v6164
      %v6196 = vpop.xlane.xlu0 %6195
      %v6197 = vrcp.pop %v6166
      %v6198 = vrcp.pop %v6168
      %v6199 = vrcp.pop %v6170
      %v6200 = vrcp.pop %v6172
      %v6201 = vrcp.pop %v6174
      %v6202 = vrcp.pop %v6176
      %v6203 = vrcp.pop %v6178
      %v6204 = vrcp.pop %v6180
      %v6205 = vrcp.pop %v6182
      %v6206 = vrcp.pop %v6184
      %v6207 = vrcp.pop %v6186
      %v6208 = vrcp.pop %v6188
      %v6209 = vrcp.pop %v6190
      %v6210 = vrcp.pop %v6192
      %v6211 = vrcp.pop %v6194
      %v6212 = vrcp.pop %v6196
      %v6213 = vmul.f32 %v6134, %v6197
      %v6214 = vmul.f32 %v6136, %v6198
      %v6215 = vmul.f32 %v6138, %v6199
      %v6216 = vmul.f32 %v6140, %v6200
      %v6217 = vmul.f32 %v6142, %v6201
      %v6218 = vmul.f32 %v6144, %v6202
      %v6219 = vmul.f32 %v6146, %v6203
      %v6220 = vmul.f32 %v6148, %v6204
      %v6221 = vmul.f32 %v6150, %v6205
      %v6222 = vmul.f32 %v6152, %v6206
      %v6223 = vmul.f32 %v6154, %v6207
      %v6224 = vmul.f32 %v6156, %v6208
      %v6225 = vmul.f32 %v6158, %v6209
      %v6226 = vmul.f32 %v6160, %v6210
      %v6227 = vmul.f32 %v6162, %v6211
      %v6228 = vmul.f32 %v6164, %v6212
      %v6229 = vmul.f32 %v5348, %v2807
      %v6230 = vmul.f32 %v5351, %v2807
      %v6231 = vmul.f32 %v5356, %v2807
      %v6232 = vmul.f32 %v5359, %v2807
      %v6233 = vmul.f32 %v5364, %v2807
      %v6234 = vmul.f32 %v5367, %v2807
      %v6235 = vmul.f32 %v5372, %v2807
      %v6236 = vmul.f32 %v5375, %v2807
      %v6237 = vmul.f32 %v5380, %v2807
      %v6238 = vmul.f32 %v5383, %v2807
      %v6239 = vmul.f32 %v5388, %v2807
      %v6240 = vmul.f32 %v5391, %v2807
      %v6241 = vmul.f32 %v5396, %v2807
      %v6242 = vmul.f32 %v5399, %v2807
      %v6243 = vmul.f32 %v5404, %v2807
      %v6244 = vmul.f32 %v5407, %v2807
      %v6245 = vmul.f32 %v5541, %v2828
      %v6246 = vmul.f32 %v5544, %v2828
      %v6247 = vmul.f32 %v5549, %v2828
      %v6248 = vmul.f32 %v5552, %v2828
      %v6249 = vmul.f32 %v5557, %v2828
      %v6250 = vmul.f32 %v5560, %v2828
      %v6251 = vmul.f32 %v5565, %v2828
      %v6252 = vmul.f32 %v5568, %v2828
      %v6253 = vmul.f32 %v5573, %v2828
      %v6254 = vmul.f32 %v5576, %v2828
      %v6255 = vmul.f32 %v5581, %v2828
      %v6256 = vmul.f32 %v5584, %v2828
      %v6257 = vmul.f32 %v5589, %v2828
      %v6258 = vmul.f32 %v5592, %v2828
      %v6259 = vmul.f32 %v5597, %v2828
      %v6260 = vmul.f32 %v5600, %v2828
      %v6261 = vadd.f32 %v6229, %v6245
      %v6262 = vadd.f32 %v6230, %v6246
      %v6263 = vadd.f32 %v6231, %v6247
      %v6264 = vadd.f32 %v6232, %v6248
      %v6265 = vadd.f32 %v6233, %v6249
      %v6266 = vadd.f32 %v6234, %v6250
      %v6267 = vadd.f32 %v6235, %v6251
      %v6268 = vadd.f32 %v6236, %v6252
      %v6269 = vadd.f32 %v6237, %v6253
      %v6270 = vadd.f32 %v6238, %v6254
      %v6271 = vadd.f32 %v6239, %v6255
      %v6272 = vadd.f32 %v6240, %v6256
      %v6273 = vadd.f32 %v6241, %v6257
      %v6274 = vadd.f32 %v6242, %v6258
      %v6275 = vadd.f32 %v6243, %v6259
      %v6276 = vadd.f32 %v6244, %v6260
      %v6277 = vmul.f32 %v5718, %v2865
      %v6278 = vmul.f32 %v5721, %v2865
      %v6279 = vmul.f32 %v5726, %v2865
      %v6280 = vmul.f32 %v5729, %v2865
      %v6281 = vmul.f32 %v5734, %v2865
      %v6282 = vmul.f32 %v5737, %v2865
      %v6283 = vmul.f32 %v5742, %v2865
      %v6284 = vmul.f32 %v5745, %v2865
      %v6285 = vmul.f32 %v5750, %v2865
      %v6286 = vmul.f32 %v5753, %v2865
      %v6287 = vmul.f32 %v5758, %v2865
      %v6288 = vmul.f32 %v5761, %v2865
      %v6289 = vmul.f32 %v5766, %v2865
      %v6290 = vmul.f32 %v5769, %v2865
      %v6291 = vmul.f32 %v5774, %v2865
      %v6292 = vmul.f32 %v5777, %v2865
      %v6293 = vadd.f32 %v6261, %v6277
      %v6294 = vadd.f32 %v6262, %v6278
      %v6295 = vadd.f32 %v6263, %v6279
      %v6296 = vadd.f32 %v6264, %v6280
      %v6297 = vadd.f32 %v6265, %v6281
      %v6298 = vadd.f32 %v6266, %v6282
      %v6299 = vadd.f32 %v6267, %v6283
      %v6300 = vadd.f32 %v6268, %v6284
      %v6301 = vadd.f32 %v6269, %v6285
      %v6302 = vadd.f32 %v6270, %v6286
      %v6303 = vadd.f32 %v6271, %v6287
      %v6304 = vadd.f32 %v6272, %v6288
      %v6305 = vadd.f32 %v6273, %v6289
      %v6306 = vadd.f32 %v6274, %v6290
      %v6307 = vadd.f32 %v6275, %v6291
      %v6308 = vadd.f32 %v6276, %v6292
      %v6309 = vmul.f32 %v5895, %v2902
      %v6310 = vmul.f32 %v5898, %v2902
      %v6311 = vmul.f32 %v5903, %v2902
      %v6312 = vmul.f32 %v5906, %v2902
      %v6313 = vmul.f32 %v5911, %v2902
      %v6314 = vmul.f32 %v5914, %v2902
      %v6315 = vmul.f32 %v5919, %v2902
      %v6316 = vmul.f32 %v5922, %v2902
      %v6317 = vmul.f32 %v5927, %v2902
      %v6318 = vmul.f32 %v5930, %v2902
      %v6319 = vmul.f32 %v5935, %v2902
      %v6320 = vmul.f32 %v5938, %v2902
      %v6321 = vmul.f32 %v5943, %v2902
      %v6322 = vmul.f32 %v5946, %v2902
      %v6323 = vmul.f32 %v5951, %v2902
      %v6324 = vmul.f32 %v5954, %v2902
      %v6325 = vadd.f32 %v6293, %v6309
      %v6326 = vadd.f32 %v6294, %v6310
      %v6327 = vadd.f32 %v6295, %v6311
      %v6328 = vadd.f32 %v6296, %v6312
      %v6329 = vadd.f32 %v6297, %v6313
      %v6330 = vadd.f32 %v6298, %v6314
      %v6331 = vadd.f32 %v6299, %v6315
      %v6332 = vadd.f32 %v6300, %v6316
      %v6333 = vadd.f32 %v6301, %v6317
      %v6334 = vadd.f32 %v6302, %v6318
      %v6335 = vadd.f32 %v6303, %v6319
      %v6336 = vadd.f32 %v6304, %v6320
      %v6337 = vadd.f32 %v6305, %v6321
      %v6338 = vadd.f32 %v6306, %v6322
      %v6339 = vadd.f32 %v6307, %v6323
      %v6340 = vadd.f32 %v6308, %v6324
      %v6341 = vadd.f32 %v6325, %v1822
      %v6342 = vadd.f32 %v6326, %v1822
      %v6343 = vadd.f32 %v6327, %v1822
      %v6344 = vadd.f32 %v6328, %v1822
      %v6345 = vadd.f32 %v6329, %v1822
      %v6346 = vadd.f32 %v6330, %v1822
      %v6347 = vadd.f32 %v6331, %v1822
      %v6348 = vadd.f32 %v6332, %v1822
      %v6349 = vadd.f32 %v6333, %v1822
      %v6350 = vadd.f32 %v6334, %v1822
      %v6351 = vadd.f32 %v6335, %v1822
      %v6352 = vadd.f32 %v6336, %v1822
      %v6353 = vadd.f32 %v6337, %v1822
      %v6354 = vadd.f32 %v6338, %v1822
      %v6355 = vadd.f32 %v6339, %v1822
      %v6356 = vadd.f32 %v6340, %v1822
      %6357 = vmax.xlane.f32.xlu0 %v6341
      %v6358 = vpop.xlane.xlu0 %6357
      %6359 = vmax.xlane.f32.xlu0 %v6342
      %v6360 = vpop.xlane.xlu0 %6359
      %6361 = vmax.xlane.f32.xlu0 %v6343
      %v6362 = vpop.xlane.xlu0 %6361
      %6363 = vmax.xlane.f32.xlu0 %v6344
      %v6364 = vpop.xlane.xlu0 %6363
      %6365 = vmax.xlane.f32.xlu0 %v6345
      %v6366 = vpop.xlane.xlu0 %6365
      %6367 = vmax.xlane.f32.xlu0 %v6346
      %v6368 = vpop.xlane.xlu0 %6367
      %6369 = vmax.xlane.f32.xlu0 %v6347
      %v6370 = vpop.xlane.xlu0 %6369
      %6371 = vmax.xlane.f32.xlu0 %v6348
      %v6372 = vpop.xlane.xlu0 %6371
      %6373 = vmax.xlane.f32.xlu0 %v6349
      %v6374 = vpop.xlane.xlu0 %6373
      %6375 = vmax.xlane.f32.xlu0 %v6350
      %v6376 = vpop.xlane.xlu0 %6375
      %6377 = vmax.xlane.f32.xlu0 %v6351
      %v6378 = vpop.xlane.xlu0 %6377
      %6379 = vmax.xlane.f32.xlu0 %v6352
      %v6380 = vpop.xlane.xlu0 %6379
      %6381 = vmax.xlane.f32.xlu0 %v6353
      %v6382 = vpop.xlane.xlu0 %6381
      %6383 = vmax.xlane.f32.xlu0 %v6354
      %v6384 = vpop.xlane.xlu0 %6383
      %6385 = vmax.xlane.f32.xlu0 %v6355
      %v6386 = vpop.xlane.xlu0 %6385
      %6387 = vmax.xlane.f32.xlu0 %v6356
      %v6388 = vpop.xlane.xlu0 %6387
      %v6389 = vsub.f32 %v6341, %v6358
      %v6390 = vsub.f32 %v6342, %v6360
      %v6391 = vsub.f32 %v6343, %v6362
      %v6392 = vsub.f32 %v6344, %v6364
      %v6393 = vsub.f32 %v6345, %v6366
      %v6394 = vsub.f32 %v6346, %v6368
      %v6395 = vsub.f32 %v6347, %v6370
      %v6396 = vsub.f32 %v6348, %v6372
      %v6397 = vsub.f32 %v6349, %v6374
      %v6398 = vsub.f32 %v6350, %v6376
      %v6399 = vsub.f32 %v6351, %v6378
      %v6400 = vsub.f32 %v6352, %v6380
      %v6401 = vsub.f32 %v6353, %v6382
      %v6402 = vsub.f32 %v6354, %v6384
      %v6403 = vsub.f32 %v6355, %v6386
      %v6404 = vsub.f32 %v6356, %v6388
      %v6405 = vmul.f32 %v6389, 1.442695
      %v6406 = vpow.pop %v6405
      %v6407 = vmul.f32 %v6390, 1.442695
      %v6408 = vpow.pop %v6407
      %v6409 = vmul.f32 %v6391, 1.442695
      %v6410 = vpow.pop %v6409
      %v6411 = vmul.f32 %v6392, 1.442695
      %v6412 = vpow.pop %v6411
      %v6413 = vmul.f32 %v6393, 1.442695
      %v6414 = vpow.pop %v6413
      %v6415 = vmul.f32 %v6394, 1.442695
      %v6416 = vpow.pop %v6415
      %v6417 = vmul.f32 %v6395, 1.442695
      %v6418 = vpow.pop %v6417
      %v6419 = vmul.f32 %v6396, 1.442695
      %v6420 = vpow.pop %v6419
      %v6421 = vmul.f32 %v6397, 1.442695
      %v6422 = vpow.pop %v6421
      %v6423 = vmul.f32 %v6398, 1.442695
      %v6424 = vpow.pop %v6423
      %v6425 = vmul.f32 %v6399, 1.442695
      %v6426 = vpow.pop %v6425
      %v6427 = vmul.f32 %v6400, 1.442695
      %v6428 = vpow.pop %v6427
      %v6429 = vmul.f32 %v6401, 1.442695
      %v6430 = vpow.pop %v6429
      %v6431 = vmul.f32 %v6402, 1.442695
      %v6432 = vpow.pop %v6431
      %v6433 = vmul.f32 %v6403, 1.442695
      %v6434 = vpow.pop %v6433
      %v6435 = vmul.f32 %v6404, 1.442695
      %v6436 = vpow.pop %v6435
      %6437 = vadd.xlane.f32.xlu0 %v6406
      %v6438 = vpop.xlane.xlu0 %6437
      %6439 = vadd.xlane.f32.xlu0 %v6408
      %v6440 = vpop.xlane.xlu0 %6439
      %6441 = vadd.xlane.f32.xlu0 %v6410
      %v6442 = vpop.xlane.xlu0 %6441
      %6443 = vadd.xlane.f32.xlu0 %v6412
      %v6444 = vpop.xlane.xlu0 %6443
      %6445 = vadd.xlane.f32.xlu0 %v6414
      %v6446 = vpop.xlane.xlu0 %6445
      %6447 = vadd.xlane.f32.xlu0 %v6416
      %v6448 = vpop.xlane.xlu0 %6447
      %6449 = vadd.xlane.f32.xlu0 %v6418
      %v6450 = vpop.xlane.xlu0 %6449
      %6451 = vadd.xlane.f32.xlu0 %v6420
      %v6452 = vpop.xlane.xlu0 %6451
      %6453 = vadd.xlane.f32.xlu0 %v6422
      %v6454 = vpop.xlane.xlu0 %6453
      %6455 = vadd.xlane.f32.xlu0 %v6424
      %v6456 = vpop.xlane.xlu0 %6455
      %6457 = vadd.xlane.f32.xlu0 %v6426
      %v6458 = vpop.xlane.xlu0 %6457
      %6459 = vadd.xlane.f32.xlu0 %v6428
      %v6460 = vpop.xlane.xlu0 %6459
      %6461 = vadd.xlane.f32.xlu0 %v6430
      %v6462 = vpop.xlane.xlu0 %6461
      %6463 = vadd.xlane.f32.xlu0 %v6432
      %v6464 = vpop.xlane.xlu0 %6463
      %6465 = vadd.xlane.f32.xlu0 %v6434
      %v6466 = vpop.xlane.xlu0 %6465
      %6467 = vadd.xlane.f32.xlu0 %v6436
      %v6468 = vpop.xlane.xlu0 %6467
      %v6469 = vrcp.pop %v6438
      %v6470 = vrcp.pop %v6440
      %v6471 = vrcp.pop %v6442
      %v6472 = vrcp.pop %v6444
      %v6473 = vrcp.pop %v6446
      %v6474 = vrcp.pop %v6448
      %v6475 = vrcp.pop %v6450
      %v6476 = vrcp.pop %v6452
      %v6477 = vrcp.pop %v6454
      %v6478 = vrcp.pop %v6456
      %v6479 = vrcp.pop %v6458
      %v6480 = vrcp.pop %v6460
      %v6481 = vrcp.pop %v6462
      %v6482 = vrcp.pop %v6464
      %v6483 = vrcp.pop %v6466
      %v6484 = vrcp.pop %v6468
      %v6485 = vmul.f32 %v6406, %v6469
      %v6486 = vmul.f32 %v6408, %v6470
      %v6487 = vmul.f32 %v6410, %v6471
      %v6488 = vmul.f32 %v6412, %v6472
      %v6489 = vmul.f32 %v6414, %v6473
      %v6490 = vmul.f32 %v6416, %v6474
      %v6491 = vmul.f32 %v6418, %v6475
      %v6492 = vmul.f32 %v6420, %v6476
      %v6493 = vmul.f32 %v6422, %v6477
      %v6494 = vmul.f32 %v6424, %v6478
      %v6495 = vmul.f32 %v6426, %v6479
      %v6496 = vmul.f32 %v6428, %v6480
      %v6497 = vmul.f32 %v6430, %v6481
      %v6498 = vmul.f32 %v6432, %v6482
      %v6499 = vmul.f32 %v6434, %v6483
      %v6500 = vmul.f32 %v6436, %v6484
      %v6501 = vmul.f32 %v5348, %v3099
      %v6502 = vmul.f32 %v5351, %v3099
      %v6503 = vmul.f32 %v5356, %v3099
      %v6504 = vmul.f32 %v5359, %v3099
      %v6505 = vmul.f32 %v5364, %v3099
      %v6506 = vmul.f32 %v5367, %v3099
      %v6507 = vmul.f32 %v5372, %v3099
      %v6508 = vmul.f32 %v5375, %v3099
      %v6509 = vmul.f32 %v5380, %v3099
      %v6510 = vmul.f32 %v5383, %v3099
      %v6511 = vmul.f32 %v5388, %v3099
      %v6512 = vmul.f32 %v5391, %v3099
      %v6513 = vmul.f32 %v5396, %v3099
      %v6514 = vmul.f32 %v5399, %v3099
      %v6515 = vmul.f32 %v5404, %v3099
      %v6516 = vmul.f32 %v5407, %v3099
      %v6517 = vmul.f32 %v5541, %v3120
      %v6518 = vmul.f32 %v5544, %v3120
      %v6519 = vmul.f32 %v5549, %v3120
      %v6520 = vmul.f32 %v5552, %v3120
      %v6521 = vmul.f32 %v5557, %v3120
      %v6522 = vmul.f32 %v5560, %v3120
      %v6523 = vmul.f32 %v5565, %v3120
      %v6524 = vmul.f32 %v5568, %v3120
      %v6525 = vmul.f32 %v5573, %v3120
      %v6526 = vmul.f32 %v5576, %v3120
      %v6527 = vmul.f32 %v5581, %v3120
      %v6528 = vmul.f32 %v5584, %v3120
      %v6529 = vmul.f32 %v5589, %v3120
      %v6530 = vmul.f32 %v5592, %v3120
      %v6531 = vmul.f32 %v5597, %v3120
      %v6532 = vmul.f32 %v5600, %v3120
      %v6533 = vadd.f32 %v6501, %v6517
      %v6534 = vadd.f32 %v6502, %v6518
      %v6535 = vadd.f32 %v6503, %v6519
      %v6536 = vadd.f32 %v6504, %v6520
      %v6537 = vadd.f32 %v6505, %v6521
      %v6538 = vadd.f32 %v6506, %v6522
      %v6539 = vadd.f32 %v6507, %v6523
      %v6540 = vadd.f32 %v6508, %v6524
      %v6541 = vadd.f32 %v6509, %v6525
      %v6542 = vadd.f32 %v6510, %v6526
      %v6543 = vadd.f32 %v6511, %v6527
      %v6544 = vadd.f32 %v6512, %v6528
      %v6545 = vadd.f32 %v6513, %v6529
      %v6546 = vadd.f32 %v6514, %v6530
      %v6547 = vadd.f32 %v6515, %v6531
      %v6548 = vadd.f32 %v6516, %v6532
      %v6549 = vmul.f32 %v5718, %v3157
      %v6550 = vmul.f32 %v5721, %v3157
      %v6551 = vmul.f32 %v5726, %v3157
      %v6552 = vmul.f32 %v5729, %v3157
      %v6553 = vmul.f32 %v5734, %v3157
      %v6554 = vmul.f32 %v5737, %v3157
      %v6555 = vmul.f32 %v5742, %v3157
      %v6556 = vmul.f32 %v5745, %v3157
      %v6557 = vmul.f32 %v5750, %v3157
      %v6558 = vmul.f32 %v5753, %v3157
      %v6559 = vmul.f32 %v5758, %v3157
      %v6560 = vmul.f32 %v5761, %v3157
      %v6561 = vmul.f32 %v5766, %v3157
      %v6562 = vmul.f32 %v5769, %v3157
      %v6563 = vmul.f32 %v5774, %v3157
      %v6564 = vmul.f32 %v5777, %v3157
      %v6565 = vadd.f32 %v6533, %v6549
      %v6566 = vadd.f32 %v6534, %v6550
      %v6567 = vadd.f32 %v6535, %v6551
      %v6568 = vadd.f32 %v6536, %v6552
      %v6569 = vadd.f32 %v6537, %v6553
      %v6570 = vadd.f32 %v6538, %v6554
      %v6571 = vadd.f32 %v6539, %v6555
      %v6572 = vadd.f32 %v6540, %v6556
      %v6573 = vadd.f32 %v6541, %v6557
      %v6574 = vadd.f32 %v6542, %v6558
      %v6575 = vadd.f32 %v6543, %v6559
      %v6576 = vadd.f32 %v6544, %v6560
      %v6577 = vadd.f32 %v6545, %v6561
      %v6578 = vadd.f32 %v6546, %v6562
      %v6579 = vadd.f32 %v6547, %v6563
      %v6580 = vadd.f32 %v6548, %v6564
      %v6581 = vmul.f32 %v5895, %v3194
      %v6582 = vmul.f32 %v5898, %v3194
      %v6583 = vmul.f32 %v5903, %v3194
      %v6584 = vmul.f32 %v5906, %v3194
      %v6585 = vmul.f32 %v5911, %v3194
      %v6586 = vmul.f32 %v5914, %v3194
      %v6587 = vmul.f32 %v5919, %v3194
      %v6588 = vmul.f32 %v5922, %v3194
      %v6589 = vmul.f32 %v5927, %v3194
      %v6590 = vmul.f32 %v5930, %v3194
      %v6591 = vmul.f32 %v5935, %v3194
      %v6592 = vmul.f32 %v5938, %v3194
      %v6593 = vmul.f32 %v5943, %v3194
      %v6594 = vmul.f32 %v5946, %v3194
      %v6595 = vmul.f32 %v5951, %v3194
      %v6596 = vmul.f32 %v5954, %v3194
      %v6597 = vadd.f32 %v6565, %v6581
      %v6598 = vadd.f32 %v6566, %v6582
      %v6599 = vadd.f32 %v6567, %v6583
      %v6600 = vadd.f32 %v6568, %v6584
      %v6601 = vadd.f32 %v6569, %v6585
      %v6602 = vadd.f32 %v6570, %v6586
      %v6603 = vadd.f32 %v6571, %v6587
      %v6604 = vadd.f32 %v6572, %v6588
      %v6605 = vadd.f32 %v6573, %v6589
      %v6606 = vadd.f32 %v6574, %v6590
      %v6607 = vadd.f32 %v6575, %v6591
      %v6608 = vadd.f32 %v6576, %v6592
      %v6609 = vadd.f32 %v6577, %v6593
      %v6610 = vadd.f32 %v6578, %v6594
      %v6611 = vadd.f32 %v6579, %v6595
      %v6612 = vadd.f32 %v6580, %v6596
      %v6613 = vadd.f32 %v6597, %v1822
      %v6614 = vadd.f32 %v6598, %v1822
      %v6615 = vadd.f32 %v6599, %v1822
      %v6616 = vadd.f32 %v6600, %v1822
      %v6617 = vadd.f32 %v6601, %v1822
      %v6618 = vadd.f32 %v6602, %v1822
      %v6619 = vadd.f32 %v6603, %v1822
      %v6620 = vadd.f32 %v6604, %v1822
      %v6621 = vadd.f32 %v6605, %v1822
      %v6622 = vadd.f32 %v6606, %v1822
      %v6623 = vadd.f32 %v6607, %v1822
      %v6624 = vadd.f32 %v6608, %v1822
      %v6625 = vadd.f32 %v6609, %v1822
      %v6626 = vadd.f32 %v6610, %v1822
      %v6627 = vadd.f32 %v6611, %v1822
      %v6628 = vadd.f32 %v6612, %v1822
      %6629 = vmax.xlane.f32.xlu0 %v6613
      %v6630 = vpop.xlane.xlu0 %6629
      %6631 = vmax.xlane.f32.xlu0 %v6614
      %v6632 = vpop.xlane.xlu0 %6631
      %6633 = vmax.xlane.f32.xlu0 %v6615
      %v6634 = vpop.xlane.xlu0 %6633
      %6635 = vmax.xlane.f32.xlu0 %v6616
      %v6636 = vpop.xlane.xlu0 %6635
      %6637 = vmax.xlane.f32.xlu0 %v6617
      %v6638 = vpop.xlane.xlu0 %6637
      %6639 = vmax.xlane.f32.xlu0 %v6618
      %v6640 = vpop.xlane.xlu0 %6639
      %6641 = vmax.xlane.f32.xlu0 %v6619
      %v6642 = vpop.xlane.xlu0 %6641
      %6643 = vmax.xlane.f32.xlu0 %v6620
      %v6644 = vpop.xlane.xlu0 %6643
      %6645 = vmax.xlane.f32.xlu0 %v6621
      %v6646 = vpop.xlane.xlu0 %6645
      %6647 = vmax.xlane.f32.xlu0 %v6622
      %v6648 = vpop.xlane.xlu0 %6647
      %6649 = vmax.xlane.f32.xlu0 %v6623
      %v6650 = vpop.xlane.xlu0 %6649
      %6651 = vmax.xlane.f32.xlu0 %v6624
      %v6652 = vpop.xlane.xlu0 %6651
      %6653 = vmax.xlane.f32.xlu0 %v6625
      %v6654 = vpop.xlane.xlu0 %6653
      %6655 = vmax.xlane.f32.xlu0 %v6626
      %v6656 = vpop.xlane.xlu0 %6655
      %6657 = vmax.xlane.f32.xlu0 %v6627
      %v6658 = vpop.xlane.xlu0 %6657
      %6659 = vmax.xlane.f32.xlu0 %v6628
      %v6660 = vpop.xlane.xlu0 %6659
      %v6661 = vsub.f32 %v6613, %v6630
      %v6662 = vsub.f32 %v6614, %v6632
      %v6663 = vsub.f32 %v6615, %v6634
      %v6664 = vsub.f32 %v6616, %v6636
      %v6665 = vsub.f32 %v6617, %v6638
      %v6666 = vsub.f32 %v6618, %v6640
      %v6667 = vsub.f32 %v6619, %v6642
      %v6668 = vsub.f32 %v6620, %v6644
      %v6669 = vsub.f32 %v6621, %v6646
      %v6670 = vsub.f32 %v6622, %v6648
      %v6671 = vsub.f32 %v6623, %v6650
      %v6672 = vsub.f32 %v6624, %v6652
      %v6673 = vsub.f32 %v6625, %v6654
      %v6674 = vsub.f32 %v6626, %v6656
      %v6675 = vsub.f32 %v6627, %v6658
      %v6676 = vsub.f32 %v6628, %v6660
      %v6677 = vmul.f32 %v6661, 1.442695
      %v6678 = vpow.pop %v6677
      %v6679 = vmul.f32 %v6662, 1.442695
      %v6680 = vpow.pop %v6679
      %v6681 = vmul.f32 %v6663, 1.442695
      %v6682 = vpow.pop %v6681
      %v6683 = vmul.f32 %v6664, 1.442695
      %v6684 = vpow.pop %v6683
      %v6685 = vmul.f32 %v6665, 1.442695
      %v6686 = vpow.pop %v6685
      %v6687 = vmul.f32 %v6666, 1.442695
      %v6688 = vpow.pop %v6687
      %v6689 = vmul.f32 %v6667, 1.442695
      %v6690 = vpow.pop %v6689
      %v6691 = vmul.f32 %v6668, 1.442695
      %v6692 = vpow.pop %v6691
      %v6693 = vmul.f32 %v6669, 1.442695
      %v6694 = vpow.pop %v6693
      %v6695 = vmul.f32 %v6670, 1.442695
      %v6696 = vpow.pop %v6695
      %v6697 = vmul.f32 %v6671, 1.442695
      %v6698 = vpow.pop %v6697
      %v6699 = vmul.f32 %v6672, 1.442695
      %v6700 = vpow.pop %v6699
      %v6701 = vmul.f32 %v6673, 1.442695
      %v6702 = vpow.pop %v6701
      %v6703 = vmul.f32 %v6674, 1.442695
      %v6704 = vpow.pop %v6703
      %v6705 = vmul.f32 %v6675, 1.442695
      %v6706 = vpow.pop %v6705
      %v6707 = vmul.f32 %v6676, 1.442695
      %v6708 = vpow.pop %v6707
      %6709 = vadd.xlane.f32.xlu0 %v6678
      %v6710 = vpop.xlane.xlu0 %6709
      %6711 = vadd.xlane.f32.xlu0 %v6680
      %v6712 = vpop.xlane.xlu0 %6711
      %6713 = vadd.xlane.f32.xlu0 %v6682
      %v6714 = vpop.xlane.xlu0 %6713
      %6715 = vadd.xlane.f32.xlu0 %v6684
      %v6716 = vpop.xlane.xlu0 %6715
      %6717 = vadd.xlane.f32.xlu0 %v6686
      %v6718 = vpop.xlane.xlu0 %6717
      %6719 = vadd.xlane.f32.xlu0 %v6688
      %v6720 = vpop.xlane.xlu0 %6719
      %6721 = vadd.xlane.f32.xlu0 %v6690
      %v6722 = vpop.xlane.xlu0 %6721
      %6723 = vadd.xlane.f32.xlu0 %v6692
      %v6724 = vpop.xlane.xlu0 %6723
      %6725 = vadd.xlane.f32.xlu0 %v6694
      %v6726 = vpop.xlane.xlu0 %6725
      %6727 = vadd.xlane.f32.xlu0 %v6696
      %v6728 = vpop.xlane.xlu0 %6727
      %6729 = vadd.xlane.f32.xlu0 %v6698
      %v6730 = vpop.xlane.xlu0 %6729
      %6731 = vadd.xlane.f32.xlu0 %v6700
      %v6732 = vpop.xlane.xlu0 %6731
      %6733 = vadd.xlane.f32.xlu0 %v6702
      %v6734 = vpop.xlane.xlu0 %6733
      %6735 = vadd.xlane.f32.xlu0 %v6704
      %v6736 = vpop.xlane.xlu0 %6735
      %6737 = vadd.xlane.f32.xlu0 %v6706
      %v6738 = vpop.xlane.xlu0 %6737
      %6739 = vadd.xlane.f32.xlu0 %v6708
      %v6740 = vpop.xlane.xlu0 %6739
      %v6741 = vrcp.pop %v6710
      %v6742 = vrcp.pop %v6712
      %v6743 = vrcp.pop %v6714
      %v6744 = vrcp.pop %v6716
      %v6745 = vrcp.pop %v6718
      %v6746 = vrcp.pop %v6720
      %v6747 = vrcp.pop %v6722
      %v6748 = vrcp.pop %v6724
      %v6749 = vrcp.pop %v6726
      %v6750 = vrcp.pop %v6728
      %v6751 = vrcp.pop %v6730
      %v6752 = vrcp.pop %v6732
      %v6753 = vrcp.pop %v6734
      %v6754 = vrcp.pop %v6736
      %v6755 = vrcp.pop %v6738
      %v6756 = vrcp.pop %v6740
      %v6757 = vmul.f32 %v6678, %v6741
      %v6758 = vmul.f32 %v6680, %v6742
      %v6759 = vmul.f32 %v6682, %v6743
      %v6760 = vmul.f32 %v6684, %v6744
      %v6761 = vmul.f32 %v6686, %v6745
      %v6762 = vmul.f32 %v6688, %v6746
      %v6763 = vmul.f32 %v6690, %v6747
      %v6764 = vmul.f32 %v6692, %v6748
      %v6765 = vmul.f32 %v6694, %v6749
      %v6766 = vmul.f32 %v6696, %v6750
      %v6767 = vmul.f32 %v6698, %v6751
      %v6768 = vmul.f32 %v6700, %v6752
      %v6769 = vmul.f32 %v6702, %v6753
      %v6770 = vmul.f32 %v6704, %v6754
      %v6771 = vmul.f32 %v6706, %v6755
      %v6772 = vmul.f32 %v6708, %v6756
      %v6773 = vmul.f32 %v5348, %v3391
      %v6774 = vmul.f32 %v5351, %v3391
      %v6775 = vmul.f32 %v5356, %v3391
      %v6776 = vmul.f32 %v5359, %v3391
      %v6777 = vmul.f32 %v5364, %v3391
      %v6778 = vmul.f32 %v5367, %v3391
      %v6779 = vmul.f32 %v5372, %v3391
      %v6780 = vmul.f32 %v5375, %v3391
      %v6781 = vmul.f32 %v5380, %v3391
      %v6782 = vmul.f32 %v5383, %v3391
      %v6783 = vmul.f32 %v5388, %v3391
      %v6784 = vmul.f32 %v5391, %v3391
      %v6785 = vmul.f32 %v5396, %v3391
      %v6786 = vmul.f32 %v5399, %v3391
      %v6787 = vmul.f32 %v5404, %v3391
      %v6788 = vmul.f32 %v5407, %v3391
      %v6789 = vmul.f32 %v5541, %v3412
      %v6790 = vmul.f32 %v5544, %v3412
      %v6791 = vmul.f32 %v5549, %v3412
      %v6792 = vmul.f32 %v5552, %v3412
      %v6793 = vmul.f32 %v5557, %v3412
      %v6794 = vmul.f32 %v5560, %v3412
      %v6795 = vmul.f32 %v5565, %v3412
      %v6796 = vmul.f32 %v5568, %v3412
      %v6797 = vmul.f32 %v5573, %v3412
      %v6798 = vmul.f32 %v5576, %v3412
      %v6799 = vmul.f32 %v5581, %v3412
      %v6800 = vmul.f32 %v5584, %v3412
      %v6801 = vmul.f32 %v5589, %v3412
      %v6802 = vmul.f32 %v5592, %v3412
      %v6803 = vmul.f32 %v5597, %v3412
      %v6804 = vmul.f32 %v5600, %v3412
      %v6805 = vadd.f32 %v6773, %v6789
      %v6806 = vadd.f32 %v6774, %v6790
      %v6807 = vadd.f32 %v6775, %v6791
      %v6808 = vadd.f32 %v6776, %v6792
      %v6809 = vadd.f32 %v6777, %v6793
      %v6810 = vadd.f32 %v6778, %v6794
      %v6811 = vadd.f32 %v6779, %v6795
      %v6812 = vadd.f32 %v6780, %v6796
      %v6813 = vadd.f32 %v6781, %v6797
      %v6814 = vadd.f32 %v6782, %v6798
      %v6815 = vadd.f32 %v6783, %v6799
      %v6816 = vadd.f32 %v6784, %v6800
      %v6817 = vadd.f32 %v6785, %v6801
      %v6818 = vadd.f32 %v6786, %v6802
      %v6819 = vadd.f32 %v6787, %v6803
      %v6820 = vadd.f32 %v6788, %v6804
      %v6821 = vmul.f32 %v5718, %v3449
      %v6822 = vmul.f32 %v5721, %v3449
      %v6823 = vmul.f32 %v5726, %v3449
      %v6824 = vmul.f32 %v5729, %v3449
      %v6825 = vmul.f32 %v5734, %v3449
      %v6826 = vmul.f32 %v5737, %v3449
      %v6827 = vmul.f32 %v5742, %v3449
      %v6828 = vmul.f32 %v5745, %v3449
      %v6829 = vmul.f32 %v5750, %v3449
      %v6830 = vmul.f32 %v5753, %v3449
      %v6831 = vmul.f32 %v5758, %v3449
      %v6832 = vmul.f32 %v5761, %v3449
      %v6833 = vmul.f32 %v5766, %v3449
      %v6834 = vmul.f32 %v5769, %v3449
      %v6835 = vmul.f32 %v5774, %v3449
      %v6836 = vmul.f32 %v5777, %v3449
      %v6837 = vadd.f32 %v6805, %v6821
      %v6838 = vadd.f32 %v6806, %v6822
      %v6839 = vadd.f32 %v6807, %v6823
      %v6840 = vadd.f32 %v6808, %v6824
      %v6841 = vadd.f32 %v6809, %v6825
      %v6842 = vadd.f32 %v6810, %v6826
      %v6843 = vadd.f32 %v6811, %v6827
      %v6844 = vadd.f32 %v6812, %v6828
      %v6845 = vadd.f32 %v6813, %v6829
      %v6846 = vadd.f32 %v6814, %v6830
      %v6847 = vadd.f32 %v6815, %v6831
      %v6848 = vadd.f32 %v6816, %v6832
      %v6849 = vadd.f32 %v6817, %v6833
      %v6850 = vadd.f32 %v6818, %v6834
      %v6851 = vadd.f32 %v6819, %v6835
      %v6852 = vadd.f32 %v6820, %v6836
      %v6853 = vmul.f32 %v5895, %v3486
      %v6854 = vmul.f32 %v5898, %v3486
      %v6855 = vmul.f32 %v5903, %v3486
      %v6856 = vmul.f32 %v5906, %v3486
      %v6857 = vmul.f32 %v5911, %v3486
      %v6858 = vmul.f32 %v5914, %v3486
      %v6859 = vmul.f32 %v5919, %v3486
      %v6860 = vmul.f32 %v5922, %v3486
      %v6861 = vmul.f32 %v5927, %v3486
      %v6862 = vmul.f32 %v5930, %v3486
      %v6863 = vmul.f32 %v5935, %v3486
      %v6864 = vmul.f32 %v5938, %v3486
      %v6865 = vmul.f32 %v5943, %v3486
      %v6866 = vmul.f32 %v5946, %v3486
      %v6867 = vmul.f32 %v5951, %v3486
      %v6868 = vmul.f32 %v5954, %v3486
      %v6869 = vadd.f32 %v6837, %v6853
      %v6870 = vadd.f32 %v6838, %v6854
      %v6871 = vadd.f32 %v6839, %v6855
      %v6872 = vadd.f32 %v6840, %v6856
      %v6873 = vadd.f32 %v6841, %v6857
      %v6874 = vadd.f32 %v6842, %v6858
      %v6875 = vadd.f32 %v6843, %v6859
      %v6876 = vadd.f32 %v6844, %v6860
      %v6877 = vadd.f32 %v6845, %v6861
      %v6878 = vadd.f32 %v6846, %v6862
      %v6879 = vadd.f32 %v6847, %v6863
      %v6880 = vadd.f32 %v6848, %v6864
      %v6881 = vadd.f32 %v6849, %v6865
      %v6882 = vadd.f32 %v6850, %v6866
      %v6883 = vadd.f32 %v6851, %v6867
      %v6884 = vadd.f32 %v6852, %v6868
      %v6885 = vadd.f32 %v6869, %v1822
      %v6886 = vadd.f32 %v6870, %v1822
      %v6887 = vadd.f32 %v6871, %v1822
      %v6888 = vadd.f32 %v6872, %v1822
      %v6889 = vadd.f32 %v6873, %v1822
      %v6890 = vadd.f32 %v6874, %v1822
      %v6891 = vadd.f32 %v6875, %v1822
      %v6892 = vadd.f32 %v6876, %v1822
      %v6893 = vadd.f32 %v6877, %v1822
      %v6894 = vadd.f32 %v6878, %v1822
      %v6895 = vadd.f32 %v6879, %v1822
      %v6896 = vadd.f32 %v6880, %v1822
      %v6897 = vadd.f32 %v6881, %v1822
      %v6898 = vadd.f32 %v6882, %v1822
      %v6899 = vadd.f32 %v6883, %v1822
      %v6900 = vadd.f32 %v6884, %v1822
      %6901 = vmax.xlane.f32.xlu0 %v6885
      %v6902 = vpop.xlane.xlu0 %6901
      %6903 = vmax.xlane.f32.xlu0 %v6886
      %v6904 = vpop.xlane.xlu0 %6903
      %6905 = vmax.xlane.f32.xlu0 %v6887
      %v6906 = vpop.xlane.xlu0 %6905
      %6907 = vmax.xlane.f32.xlu0 %v6888
      %v6908 = vpop.xlane.xlu0 %6907
      %6909 = vmax.xlane.f32.xlu0 %v6889
      %v6910 = vpop.xlane.xlu0 %6909
      %6911 = vmax.xlane.f32.xlu0 %v6890
      %v6912 = vpop.xlane.xlu0 %6911
      %6913 = vmax.xlane.f32.xlu0 %v6891
      %v6914 = vpop.xlane.xlu0 %6913
      %6915 = vmax.xlane.f32.xlu0 %v6892
      %v6916 = vpop.xlane.xlu0 %6915
      %6917 = vmax.xlane.f32.xlu0 %v6893
      %v6918 = vpop.xlane.xlu0 %6917
      %6919 = vmax.xlane.f32.xlu0 %v6894
      %v6920 = vpop.xlane.xlu0 %6919
      %6921 = vmax.xlane.f32.xlu0 %v6895
      %v6922 = vpop.xlane.xlu0 %6921
      %6923 = vmax.xlane.f32.xlu0 %v6896
      %v6924 = vpop.xlane.xlu0 %6923
      %6925 = vmax.xlane.f32.xlu0 %v6897
      %v6926 = vpop.xlane.xlu0 %6925
      %6927 = vmax.xlane.f32.xlu0 %v6898
      %v6928 = vpop.xlane.xlu0 %6927
      %6929 = vmax.xlane.f32.xlu0 %v6899
      %v6930 = vpop.xlane.xlu0 %6929
      %6931 = vmax.xlane.f32.xlu0 %v6900
      %v6932 = vpop.xlane.xlu0 %6931
      %v6933 = vsub.f32 %v6885, %v6902
      %v6934 = vsub.f32 %v6886, %v6904
      %v6935 = vsub.f32 %v6887, %v6906
      %v6936 = vsub.f32 %v6888, %v6908
      %v6937 = vsub.f32 %v6889, %v6910
      %v6938 = vsub.f32 %v6890, %v6912
      %v6939 = vsub.f32 %v6891, %v6914
      %v6940 = vsub.f32 %v6892, %v6916
      %v6941 = vsub.f32 %v6893, %v6918
      %v6942 = vsub.f32 %v6894, %v6920
      %v6943 = vsub.f32 %v6895, %v6922
      %v6944 = vsub.f32 %v6896, %v6924
      %v6945 = vsub.f32 %v6897, %v6926
      %v6946 = vsub.f32 %v6898, %v6928
      %v6947 = vsub.f32 %v6899, %v6930
      %v6948 = vsub.f32 %v6900, %v6932
      %v6949 = vmul.f32 %v6933, 1.442695
      %v6950 = vpow.pop %v6949
      %v6951 = vmul.f32 %v6934, 1.442695
      %v6952 = vpow.pop %v6951
      %v6953 = vmul.f32 %v6935, 1.442695
      %v6954 = vpow.pop %v6953
      %v6955 = vmul.f32 %v6936, 1.442695
      %v6956 = vpow.pop %v6955
      %v6957 = vmul.f32 %v6937, 1.442695
      %v6958 = vpow.pop %v6957
      %v6959 = vmul.f32 %v6938, 1.442695
      %v6960 = vpow.pop %v6959
      %v6961 = vmul.f32 %v6939, 1.442695
      %v6962 = vpow.pop %v6961
      %v6963 = vmul.f32 %v6940, 1.442695
      %v6964 = vpow.pop %v6963
      %v6965 = vmul.f32 %v6941, 1.442695
      %v6966 = vpow.pop %v6965
      %v6967 = vmul.f32 %v6942, 1.442695
      %v6968 = vpow.pop %v6967
      %v6969 = vmul.f32 %v6943, 1.442695
      %v6970 = vpow.pop %v6969
      %v6971 = vmul.f32 %v6944, 1.442695
      %v6972 = vpow.pop %v6971
      %v6973 = vmul.f32 %v6945, 1.442695
      %v6974 = vpow.pop %v6973
      %v6975 = vmul.f32 %v6946, 1.442695
      %v6976 = vpow.pop %v6975
      %v6977 = vmul.f32 %v6947, 1.442695
      %v6978 = vpow.pop %v6977
      %v6979 = vmul.f32 %v6948, 1.442695
      %v6980 = vpow.pop %v6979
      %6981 = vadd.xlane.f32.xlu0 %v6950
      %v6982 = vpop.xlane.xlu0 %6981
      %6983 = vadd.xlane.f32.xlu0 %v6952
      %v6984 = vpop.xlane.xlu0 %6983
      %6985 = vadd.xlane.f32.xlu0 %v6954
      %v6986 = vpop.xlane.xlu0 %6985
      %6987 = vadd.xlane.f32.xlu0 %v6956
      %v6988 = vpop.xlane.xlu0 %6987
      %6989 = vadd.xlane.f32.xlu0 %v6958
      %v6990 = vpop.xlane.xlu0 %6989
      %6991 = vadd.xlane.f32.xlu0 %v6960
      %v6992 = vpop.xlane.xlu0 %6991
      %6993 = vadd.xlane.f32.xlu0 %v6962
      %v6994 = vpop.xlane.xlu0 %6993
      %6995 = vadd.xlane.f32.xlu0 %v6964
      %v6996 = vpop.xlane.xlu0 %6995
      %6997 = vadd.xlane.f32.xlu0 %v6966
      %v6998 = vpop.xlane.xlu0 %6997
      %6999 = vadd.xlane.f32.xlu0 %v6968
      %v7000 = vpop.xlane.xlu0 %6999
      %7001 = vadd.xlane.f32.xlu0 %v6970
      %v7002 = vpop.xlane.xlu0 %7001
      %7003 = vadd.xlane.f32.xlu0 %v6972
      %v7004 = vpop.xlane.xlu0 %7003
      %7005 = vadd.xlane.f32.xlu0 %v6974
      %v7006 = vpop.xlane.xlu0 %7005
      %7007 = vadd.xlane.f32.xlu0 %v6976
      %v7008 = vpop.xlane.xlu0 %7007
      %7009 = vadd.xlane.f32.xlu0 %v6978
      %v7010 = vpop.xlane.xlu0 %7009
      %7011 = vadd.xlane.f32.xlu0 %v6980
      %v7012 = vpop.xlane.xlu0 %7011
      %v7013 = vrcp.pop %v6982
      %v7014 = vrcp.pop %v6984
      %v7015 = vrcp.pop %v6986
      %v7016 = vrcp.pop %v6988
      %v7017 = vrcp.pop %v6990
      %v7018 = vrcp.pop %v6992
      %v7019 = vrcp.pop %v6994
      %v7020 = vrcp.pop %v6996
      %v7021 = vrcp.pop %v6998
      %v7022 = vrcp.pop %v7000
      %v7023 = vrcp.pop %v7002
      %v7024 = vrcp.pop %v7004
      %v7025 = vrcp.pop %v7006
      %v7026 = vrcp.pop %v7008
      %v7027 = vrcp.pop %v7010
      %v7028 = vrcp.pop %v7012
      %v7029 = vmul.f32 %v6950, %v7013
      %v7030 = vmul.f32 %v6952, %v7014
      %v7031 = vmul.f32 %v6954, %v7015
      %v7032 = vmul.f32 %v6956, %v7016
      %v7033 = vmul.f32 %v6958, %v7017
      %v7034 = vmul.f32 %v6960, %v7018
      %v7035 = vmul.f32 %v6962, %v7019
      %v7036 = vmul.f32 %v6964, %v7020
      %v7037 = vmul.f32 %v6966, %v7021
      %v7038 = vmul.f32 %v6968, %v7022
      %v7039 = vmul.f32 %v6970, %v7023
      %v7040 = vmul.f32 %v6972, %v7024
      %v7041 = vmul.f32 %v6974, %v7025
      %v7042 = vmul.f32 %v6976, %v7026
      %v7043 = vmul.f32 %v6978, %v7027
      %v7044 = vmul.f32 %v6980, %v7028
      %v7045 = vmul.f32 %v6213, %v3682
      %v7046 = vmul.f32 %v6214, %v3682
      %v7047 = vmul.f32 %v6215, %v3682
      %v7048 = vmul.f32 %v6216, %v3682
      %v7049 = vmul.f32 %v6217, %v3682
      %v7050 = vmul.f32 %v6218, %v3682
      %v7051 = vmul.f32 %v6219, %v3682
      %v7052 = vmul.f32 %v6220, %v3682
      %v7053 = vmul.f32 %v6221, %v3682
      %v7054 = vmul.f32 %v6222, %v3682
      %v7055 = vmul.f32 %v6223, %v3682
      %v7056 = vmul.f32 %v6224, %v3682
      %v7057 = vmul.f32 %v6225, %v3682
      %v7058 = vmul.f32 %v6226, %v3682
      %v7059 = vmul.f32 %v6227, %v3682
      %v7060 = vmul.f32 %v6228, %v3682
      %v7061 = vmul.f32 %v6485, %v3702
      %v7062 = vmul.f32 %v6486, %v3702
      %v7063 = vmul.f32 %v6487, %v3702
      %v7064 = vmul.f32 %v6488, %v3702
      %v7065 = vmul.f32 %v6489, %v3702
      %v7066 = vmul.f32 %v6490, %v3702
      %v7067 = vmul.f32 %v6491, %v3702
      %v7068 = vmul.f32 %v6492, %v3702
      %v7069 = vmul.f32 %v6493, %v3702
      %v7070 = vmul.f32 %v6494, %v3702
      %v7071 = vmul.f32 %v6495, %v3702
      %v7072 = vmul.f32 %v6496, %v3702
      %v7073 = vmul.f32 %v6497, %v3702
      %v7074 = vmul.f32 %v6498, %v3702
      %v7075 = vmul.f32 %v6499, %v3702
      %v7076 = vmul.f32 %v6500, %v3702
      %v7077 = vadd.f32 %v7045, %v7061
      %v7078 = vadd.f32 %v7046, %v7062
      %v7079 = vadd.f32 %v7047, %v7063
      %v7080 = vadd.f32 %v7048, %v7064
      %v7081 = vadd.f32 %v7049, %v7065
      %v7082 = vadd.f32 %v7050, %v7066
      %v7083 = vadd.f32 %v7051, %v7067
      %v7084 = vadd.f32 %v7052, %v7068
      %v7085 = vadd.f32 %v7053, %v7069
      %v7086 = vadd.f32 %v7054, %v7070
      %v7087 = vadd.f32 %v7055, %v7071
      %v7088 = vadd.f32 %v7056, %v7072
      %v7089 = vadd.f32 %v7057, %v7073
      %v7090 = vadd.f32 %v7058, %v7074
      %v7091 = vadd.f32 %v7059, %v7075
      %v7092 = vadd.f32 %v7060, %v7076
      %v7093 = vmul.f32 %v6757, %v3738
      %v7094 = vmul.f32 %v6758, %v3738
      %v7095 = vmul.f32 %v6759, %v3738
      %v7096 = vmul.f32 %v6760, %v3738
      %v7097 = vmul.f32 %v6761, %v3738
      %v7098 = vmul.f32 %v6762, %v3738
      %v7099 = vmul.f32 %v6763, %v3738
      %v7100 = vmul.f32 %v6764, %v3738
      %v7101 = vmul.f32 %v6765, %v3738
      %v7102 = vmul.f32 %v6766, %v3738
      %v7103 = vmul.f32 %v6767, %v3738
      %v7104 = vmul.f32 %v6768, %v3738
      %v7105 = vmul.f32 %v6769, %v3738
      %v7106 = vmul.f32 %v6770, %v3738
      %v7107 = vmul.f32 %v6771, %v3738
      %v7108 = vmul.f32 %v6772, %v3738
      %v7109 = vadd.f32 %v7077, %v7093
      %v7110 = vadd.f32 %v7078, %v7094
      %v7111 = vadd.f32 %v7079, %v7095
      %v7112 = vadd.f32 %v7080, %v7096
      %v7113 = vadd.f32 %v7081, %v7097
      %v7114 = vadd.f32 %v7082, %v7098
      %v7115 = vadd.f32 %v7083, %v7099
      %v7116 = vadd.f32 %v7084, %v7100
      %v7117 = vadd.f32 %v7085, %v7101
      %v7118 = vadd.f32 %v7086, %v7102
      %v7119 = vadd.f32 %v7087, %v7103
      %v7120 = vadd.f32 %v7088, %v7104
      %v7121 = vadd.f32 %v7089, %v7105
      %v7122 = vadd.f32 %v7090, %v7106
      %v7123 = vadd.f32 %v7091, %v7107
      %v7124 = vadd.f32 %v7092, %v7108
      %v7125 = vmul.f32 %v7029, %v3774
      %v7126 = vmul.f32 %v7030, %v3774
      %v7127 = vmul.f32 %v7031, %v3774
      %v7128 = vmul.f32 %v7032, %v3774
      %v7129 = vmul.f32 %v7033, %v3774
      %v7130 = vmul.f32 %v7034, %v3774
      %v7131 = vmul.f32 %v7035, %v3774
      %v7132 = vmul.f32 %v7036, %v3774
      %v7133 = vmul.f32 %v7037, %v3774
      %v7134 = vmul.f32 %v7038, %v3774
      %v7135 = vmul.f32 %v7039, %v3774
      %v7136 = vmul.f32 %v7040, %v3774
      %v7137 = vmul.f32 %v7041, %v3774
      %v7138 = vmul.f32 %v7042, %v3774
      %v7139 = vmul.f32 %v7043, %v3774
      %v7140 = vmul.f32 %v7044, %v3774
      %v7141 = vadd.f32 %v7109, %v7125
      %v7142 = vadd.f32 %v7110, %v7126
      %v7143 = vadd.f32 %v7111, %v7127
      %v7144 = vadd.f32 %v7112, %v7128
      %v7145 = vadd.f32 %v7113, %v7129
      %v7146 = vadd.f32 %v7114, %v7130
      %v7147 = vadd.f32 %v7115, %v7131
      %v7148 = vadd.f32 %v7116, %v7132
      %v7149 = vadd.f32 %v7117, %v7133
      %v7150 = vadd.f32 %v7118, %v7134
      %v7151 = vadd.f32 %v7119, %v7135
      %v7152 = vadd.f32 %v7120, %v7136
      %v7153 = vadd.f32 %v7121, %v7137
      %v7154 = vadd.f32 %v7122, %v7138
      %v7155 = vadd.f32 %v7123, %v7139
      %v7156 = vadd.f32 %v7124, %v7140
      %v7157 = vpack.c.bf16 %v7142, %v7141
      %v7158 = vpack.c.bf16 %v7144, %v7143
      %v7159 = vpack.c.bf16 %v7146, %v7145
      %v7160 = vpack.c.bf16 %v7148, %v7147
      %v7161 = vpack.c.bf16 %v7150, %v7149
      %v7162 = vpack.c.bf16 %v7152, %v7151
      %v7163 = vpack.c.bf16 %v7154, %v7153
      %v7164 = vpack.c.bf16 %v7156, %v7155
      %7165 = vmatprep.subr.bf16.mxu0 0
      %7166 = vmatpush1.bf16.msra.mxu0 %v1811
      %7167 = vmatprep.subr.bf16.mxu0 0
      %7168 = vmatpush1.bf16.msra.mxu0 %v1812
      %7169 = vmatprep.subr.bf16.mxu0 0
      %7170 = vmatpush1.bf16.msra.mxu0 %v1813
      %7171 = vmatprep.subr.bf16.mxu0 0
      %7172 = vmatpush1.bf16.msra.mxu0 %v1814
      %7173 = vmatprep.subr.bf16.mxu0 0
      %7174 = vmatpush1.bf16.msra.mxu0 %v1815
      %7175 = vmatprep.subr.bf16.mxu0 0
      %7176 = vmatpush1.bf16.msra.mxu0 %v1816
      %7177 = vmatprep.subr.bf16.mxu0 0
      %7178 = vmatpush1.bf16.msra.mxu0 %v1817
      %7179 = vmatprep.subr.bf16.mxu0 0
      %7180 = vmatpush1.bf16.msra.mxu0 %v1818
      %7181 = vmatprep.subr.bf16.mxu0 0
      %7182 = vmatpush1.bf16.msra.mxu0 0
      %7183 = vmatprep.subr.bf16.mxu0 0
      %7184 = vmatpush1.bf16.msra.mxu0 0
      %7185 = vmatprep.subr.bf16.mxu0 0
      %7186 = vmatpush1.bf16.msra.mxu0 0
      %7187 = vmatprep.subr.bf16.mxu0 0
      %7188 = vmatpush1.bf16.msra.mxu0 0
      %7189 = vmatprep.subr.bf16.mxu0 0
      %7190 = vmatpush1.bf16.msra.mxu0 0
      %7191 = vmatprep.subr.bf16.mxu0 0
      %7192 = vmatpush1.bf16.msra.mxu0 0
      %7193 = vmatprep.subr.bf16.mxu0 0
      %7194 = vmatpush1.bf16.msra.mxu0 0
      %7195 = vmatprep.subr.bf16.mxu0 0
      %7196 = vmatpush1.bf16.msra.mxu0 0
      %7197 = vmatprep.mubr.bf16.mxu0 0
      %7198 = vmatmul.mubr.bf16.gmra.mrb[0].mxu0 %v7157
      %v7199 = vpop.f32.mrb[0].mxu0
      %v7200 = vadd.f32 0.0, %v7199
      %v7201 = vpop.f32.mrb[0].mxu0
      %v7202 = vpop.f32.mrb[0].mxu0
      %v7203 = vadd.f32 0.0, %v7202
      %v7204 = vpop.f32.mrb[0].mxu0
      %7205 = vmatprep.mubr.bf16.mxu0 0
      %7206 = vmatmul.mubr.bf16.gmra.mrb[0].mxu0 %v7158
      %v7207 = vpop.f32.mrb[0].mxu0
      %v7208 = vadd.f32 0.0, %v7207
      %v7209 = vpop.f32.mrb[0].mxu0
      %v7210 = vpop.f32.mrb[0].mxu0
      %v7211 = vadd.f32 0.0, %v7210
      %v7212 = vpop.f32.mrb[0].mxu0
      %7213 = vmatprep.mubr.bf16.mxu0 0
      %7214 = vmatmul.mubr.bf16.gmra.mrb[0].mxu0 %v7159
      %v7215 = vpop.f32.mrb[0].mxu0
      %v7216 = vadd.f32 0.0, %v7215
      %v7217 = vpop.f32.mrb[0].mxu0
      %v7218 = vpop.f32.mrb[0].mxu0
      %v7219 = vadd.f32 0.0, %v7218
      %v7220 = vpop.f32.mrb[0].mxu0
      %7221 = vmatprep.mubr.bf16.mxu0 0
      %7222 = vmatmul.mubr.bf16.gmra.mrb[0].mxu0 %v7160
      %v7223 = vpop.f32.mrb[0].mxu0
      %v7224 = vadd.f32 0.0, %v7223
      %v7225 = vpop.f32.mrb[0].mxu0
      %v7226 = vpop.f32.mrb[0].mxu0
      %v7227 = vadd.f32 0.0, %v7226
      %v7228 = vpop.f32.mrb[0].mxu0
      %7229 = vmatprep.mubr.bf16.mxu0 0
      %7230 = vmatmul.mubr.bf16.gmra.mrb[0].mxu0 %v7161
      %v7231 = vpop.f32.mrb[0].mxu0
      %v7232 = vadd.f32 0.0, %v7231
      %v7233 = vpop.f32.mrb[0].mxu0
      %v7234 = vpop.f32.mrb[0].mxu0
      %v7235 = vadd.f32 0.0, %v7234
      %v7236 = vpop.f32.mrb[0].mxu0
      %7237 = vmatprep.mubr.bf16.mxu0 0
      %7238 = vmatmul.mubr.bf16.gmra.mrb[0].mxu0 %v7162
      %v7239 = vpop.f32.mrb[0].mxu0
      %v7240 = vadd.f32 0.0, %v7239
      %v7241 = vpop.f32.mrb[0].mxu0
      %v7242 = vpop.f32.mrb[0].mxu0
      %v7243 = vadd.f32 0.0, %v7242
      %v7244 = vpop.f32.mrb[0].mxu0
      %7245 = vmatprep.mubr.bf16.mxu0 0
      %7246 = vmatmul.mubr.bf16.gmra.mrb[0].mxu0 %v7163
      %v7247 = vpop.f32.mrb[0].mxu0
      %v7248 = vadd.f32 0.0, %v7247
      %v7249 = vpop.f32.mrb[0].mxu0
      %v7250 = vpop.f32.mrb[0].mxu0
      %v7251 = vadd.f32 0.0, %v7250
      %v7252 = vpop.f32.mrb[0].mxu0
      %7253 = vmatprep.mubr.bf16.mxu0 0
      %7254 = vmatmul.mubr.bf16.gmra.mrb[0].mxu0 %v7164
      %v7255 = vpop.f32.mrb[0].mxu0
      %v7256 = vadd.f32 0.0, %v7255
      %v7257 = vpop.f32.mrb[0].mxu0
      %v7258 = vpop.f32.mrb[0].mxu0
      %v7259 = vadd.f32 0.0, %v7258
      %v7260 = vpop.f32.mrb[0].mxu0
      %7261 = vdwg.mxu0
      %v7262 = vpack.c.bf16 %v7203, %v7200
      %v7263 = vpack.c.bf16 %v7211, %v7208
      %v7264 = vpack.c.bf16 %v7219, %v7216
      %v7265 = vpack.c.bf16 %v7227, %v7224
      %v7266 = vpack.c.bf16 %v7235, %v7232
      %v7267 = vpack.c.bf16 %v7243, %v7240
      %v7268 = vpack.c.bf16 %v7251, %v7248
      %v7269 = vpack.c.bf16 %v7259, %v7256
      %v7270 = vmul.f32 %v6213, %v3924
      %v7271 = vmul.f32 %v6214, %v3924
      %v7272 = vmul.f32 %v6215, %v3924
      %v7273 = vmul.f32 %v6216, %v3924
      %v7274 = vmul.f32 %v6217, %v3924
      %v7275 = vmul.f32 %v6218, %v3924
      %v7276 = vmul.f32 %v6219, %v3924
      %v7277 = vmul.f32 %v6220, %v3924
      %v7278 = vmul.f32 %v6221, %v3924
      %v7279 = vmul.f32 %v6222, %v3924
      %v7280 = vmul.f32 %v6223, %v3924
      %v7281 = vmul.f32 %v6224, %v3924
      %v7282 = vmul.f32 %v6225, %v3924
      %v7283 = vmul.f32 %v6226, %v3924
      %v7284 = vmul.f32 %v6227, %v3924
      %v7285 = vmul.f32 %v6228, %v3924
      %v7286 = vmul.f32 %v6485, %v3945
      %v7287 = vmul.f32 %v6486, %v3945
      %v7288 = vmul.f32 %v6487, %v3945
      %v7289 = vmul.f32 %v6488, %v3945
      %v7290 = vmul.f32 %v6489, %v3945
      %v7291 = vmul.f32 %v6490, %v3945
      %v7292 = vmul.f32 %v6491, %v3945
      %v7293 = vmul.f32 %v6492, %v3945
      %v7294 = vmul.f32 %v6493, %v3945
      %v7295 = vmul.f32 %v6494, %v3945
      %v7296 = vmul.f32 %v6495, %v3945
      %v7297 = vmul.f32 %v6496, %v3945
      %v7298 = vmul.f32 %v6497, %v3945
      %v7299 = vmul.f32 %v6498, %v3945
      %v7300 = vmul.f32 %v6499, %v3945
      %v7301 = vmul.f32 %v6500, %v3945
      %v7302 = vadd.f32 %v7270, %v7286
      %v7303 = vadd.f32 %v7271, %v7287
      %v7304 = vadd.f32 %v7272, %v7288
      %v7305 = vadd.f32 %v7273, %v7289
      %v7306 = vadd.f32 %v7274, %v7290
      %v7307 = vadd.f32 %v7275, %v7291
      %v7308 = vadd.f32 %v7276, %v7292
      %v7309 = vadd.f32 %v7277, %v7293
      %v7310 = vadd.f32 %v7278, %v7294
      %v7311 = vadd.f32 %v7279, %v7295
      %v7312 = vadd.f32 %v7280, %v7296
      %v7313 = vadd.f32 %v7281, %v7297
      %v7314 = vadd.f32 %v7282, %v7298
      %v7315 = vadd.f32 %v7283, %v7299
      %v7316 = vadd.f32 %v7284, %v7300
      %v7317 = vadd.f32 %v7285, %v7301
      %v7318 = vmul.f32 %v6757, %v3982
      %v7319 = vmul.f32 %v6758, %v3982
      %v7320 = vmul.f32 %v6759, %v3982
      %v7321 = vmul.f32 %v6760, %v3982
      %v7322 = vmul.f32 %v6761, %v3982
      %v7323 = vmul.f32 %v6762, %v3982
      %v7324 = vmul.f32 %v6763, %v3982
      %v7325 = vmul.f32 %v6764, %v3982
      %v7326 = vmul.f32 %v6765, %v3982
      %v7327 = vmul.f32 %v6766, %v3982
      %v7328 = vmul.f32 %v6767, %v3982
      %v7329 = vmul.f32 %v6768, %v3982
      %v7330 = vmul.f32 %v6769, %v3982
      %v7331 = vmul.f32 %v6770, %v3982
      %v7332 = vmul.f32 %v6771, %v3982
      %v7333 = vmul.f32 %v6772, %v3982
      %v7334 = vadd.f32 %v7302, %v7318
      %v7335 = vadd.f32 %v7303, %v7319
      %v7336 = vadd.f32 %v7304, %v7320
      %v7337 = vadd.f32 %v7305, %v7321
      %v7338 = vadd.f32 %v7306, %v7322
      %v7339 = vadd.f32 %v7307, %v7323
      %v7340 = vadd.f32 %v7308, %v7324
      %v7341 = vadd.f32 %v7309, %v7325
      %v7342 = vadd.f32 %v7310, %v7326
      %v7343 = vadd.f32 %v7311, %v7327
      %v7344 = vadd.f32 %v7312, %v7328
      %v7345 = vadd.f32 %v7313, %v7329
      %v7346 = vadd.f32 %v7314, %v7330
      %v7347 = vadd.f32 %v7315, %v7331
      %v7348 = vadd.f32 %v7316, %v7332
      %v7349 = vadd.f32 %v7317, %v7333
      %v7350 = vmul.f32 %v7029, %v4019
      %v7351 = vmul.f32 %v7030, %v4019
      %v7352 = vmul.f32 %v7031, %v4019
      %v7353 = vmul.f32 %v7032, %v4019
      %v7354 = vmul.f32 %v7033, %v4019
      %v7355 = vmul.f32 %v7034, %v4019
      %v7356 = vmul.f32 %v7035, %v4019
      %v7357 = vmul.f32 %v7036, %v4019
      %v7358 = vmul.f32 %v7037, %v4019
      %v7359 = vmul.f32 %v7038, %v4019
      %v7360 = vmul.f32 %v7039, %v4019
      %v7361 = vmul.f32 %v7040, %v4019
      %v7362 = vmul.f32 %v7041, %v4019
      %v7363 = vmul.f32 %v7042, %v4019
      %v7364 = vmul.f32 %v7043, %v4019
      %v7365 = vmul.f32 %v7044, %v4019
      %v7366 = vadd.f32 %v7334, %v7350
      %v7367 = vadd.f32 %v7335, %v7351
      %v7368 = vadd.f32 %v7336, %v7352
      %v7369 = vadd.f32 %v7337, %v7353
      %v7370 = vadd.f32 %v7338, %v7354
      %v7371 = vadd.f32 %v7339, %v7355
      %v7372 = vadd.f32 %v7340, %v7356
      %v7373 = vadd.f32 %v7341, %v7357
      %v7374 = vadd.f32 %v7342, %v7358
      %v7375 = vadd.f32 %v7343, %v7359
      %v7376 = vadd.f32 %v7344, %v7360
      %v7377 = vadd.f32 %v7345, %v7361
      %v7378 = vadd.f32 %v7346, %v7362
      %v7379 = vadd.f32 %v7347, %v7363
      %v7380 = vadd.f32 %v7348, %v7364
      %v7381 = vadd.f32 %v7349, %v7365
      %v7382 = vpack.c.bf16 %v7367, %v7366
      %v7383 = vpack.c.bf16 %v7369, %v7368
      %v7384 = vpack.c.bf16 %v7371, %v7370
      %v7385 = vpack.c.bf16 %v7373, %v7372
      %v7386 = vpack.c.bf16 %v7375, %v7374
      %v7387 = vpack.c.bf16 %v7377, %v7376
      %v7388 = vpack.c.bf16 %v7379, %v7378
      %v7389 = vpack.c.bf16 %v7381, %v7380
      %7398 = vrot.lane.b32.xlu0 %v1811, 120
      %v7399 = vpop.permute.xlu0 %7398
      %7400 = vrot.lane.b32.xlu0 %v1812, 120
      %v7401 = vpop.permute.xlu0 %7400
      %7402 = vrot.lane.b32.xlu0 %v1813, 120
      %v7403 = vpop.permute.xlu0 %7402
      %7404 = vrot.lane.b32.xlu0 %v1814, 120
      %v7405 = vpop.permute.xlu0 %7404
      %7406 = vrot.lane.b32.xlu0 %v1815, 120
      %v7407 = vpop.permute.xlu0 %7406
      %7408 = vrot.lane.b32.xlu0 %v1816, 120
      %v7409 = vpop.permute.xlu0 %7408
      %7410 = vrot.lane.b32.xlu0 %v1817, 120
      %v7411 = vpop.permute.xlu0 %7410
      %7412 = vrot.lane.b32.xlu0 %v1818, 120
      %v7413 = vpop.permute.xlu0 %7412
      %7422 = vmatprep.subr.bf16.mxu0 0
      %7423 = vmatpush1.bf16.msra.mxu0 %v7399
      %7424 = vmatprep.subr.bf16.mxu0 0
      %7425 = vmatpush1.bf16.msra.mxu0 %v7401
      %7426 = vmatprep.subr.bf16.mxu0 0
      %7427 = vmatpush1.bf16.msra.mxu0 %v7403
      %7428 = vmatprep.subr.bf16.mxu0 0
      %7429 = vmatpush1.bf16.msra.mxu0 %v7405
      %7430 = vmatprep.subr.bf16.mxu0 0
      %7431 = vmatpush1.bf16.msra.mxu0 %v7407
      %7432 = vmatprep.subr.bf16.mxu0 0
      %7433 = vmatpush1.bf16.msra.mxu0 %v7409
      %7434 = vmatprep.subr.bf16.mxu0 0
      %7435 = vmatpush1.bf16.msra.mxu0 %v7411
      %7436 = vmatprep.subr.bf16.mxu0 0
      %7437 = vmatpush1.bf16.msra.mxu0 %v7413
      %7438 = vmatprep.subr.bf16.mxu0 0
      %7439 = vmatpush1.bf16.msra.mxu0 0
      %7440 = vmatprep.subr.bf16.mxu0 0
      %7441 = vmatpush1.bf16.msra.mxu0 0
      %7442 = vmatprep.subr.bf16.mxu0 0
      %7443 = vmatpush1.bf16.msra.mxu0 0
      %7444 = vmatprep.subr.bf16.mxu0 0
      %7445 = vmatpush1.bf16.msra.mxu0 0
      %7446 = vmatprep.subr.bf16.mxu0 0
      %7447 = vmatpush1.bf16.msra.mxu0 0
      %7448 = vmatprep.subr.bf16.mxu0 0
      %7449 = vmatpush1.bf16.msra.mxu0 0
      %7450 = vmatprep.subr.bf16.mxu0 0
      %7451 = vmatpush1.bf16.msra.mxu0 0
      %7452 = vmatprep.subr.bf16.mxu0 0
      %7453 = vmatpush1.bf16.msra.mxu0 0
      %7454 = vmatprep.mubr.bf16.mxu0 0
      %7455 = vmatmul.mubr.bf16.gmra.mrb[0].mxu0 %v7382
      %v7456 = vpop.f32.mrb[0].mxu0
      %v7457 = vadd.f32 0.0, %v7456
      %v7458 = vpop.f32.mrb[0].mxu0
      %v7459 = vpop.f32.mrb[0].mxu0
      %v7460 = vadd.f32 0.0, %v7459
      %v7461 = vpop.f32.mrb[0].mxu0
      %7462 = vmatprep.mubr.bf16.mxu0 0
      %7463 = vmatmul.mubr.bf16.gmra.mrb[0].mxu0 %v7383
      %v7464 = vpop.f32.mrb[0].mxu0
      %v7465 = vadd.f32 0.0, %v7464
      %v7466 = vpop.f32.mrb[0].mxu0
      %v7467 = vpop.f32.mrb[0].mxu0
      %v7468 = vadd.f32 0.0, %v7467
      %v7469 = vpop.f32.mrb[0].mxu0
      %7470 = vmatprep.mubr.bf16.mxu0 0
      %7471 = vmatmul.mubr.bf16.gmra.mrb[0].mxu0 %v7384
      %v7472 = vpop.f32.mrb[0].mxu0
      %v7473 = vadd.f32 0.0, %v7472
      %v7474 = vpop.f32.mrb[0].mxu0
      %v7475 = vpop.f32.mrb[0].mxu0
      %v7476 = vadd.f32 0.0, %v7475
      %v7477 = vpop.f32.mrb[0].mxu0
      %7478 = vmatprep.mubr.bf16.mxu0 0
      %7479 = vmatmul.mubr.bf16.gmra.mrb[0].mxu0 %v7385
      %v7480 = vpop.f32.mrb[0].mxu0
      %v7481 = vadd.f32 0.0, %v7480
      %v7482 = vpop.f32.mrb[0].mxu0
      %v7483 = vpop.f32.mrb[0].mxu0
      %v7484 = vadd.f32 0.0, %v7483
      %v7485 = vpop.f32.mrb[0].mxu0
      %7486 = vmatprep.mubr.bf16.mxu0 0
      %7487 = vmatmul.mubr.bf16.gmra.mrb[0].mxu0 %v7386
      %v7488 = vpop.f32.mrb[0].mxu0
      %v7489 = vadd.f32 0.0, %v7488
      %v7490 = vpop.f32.mrb[0].mxu0
      %v7491 = vpop.f32.mrb[0].mxu0
      %v7492 = vadd.f32 0.0, %v7491
      %v7493 = vpop.f32.mrb[0].mxu0
      %7494 = vmatprep.mubr.bf16.mxu0 0
      %7495 = vmatmul.mubr.bf16.gmra.mrb[0].mxu0 %v7387
      %v7496 = vpop.f32.mrb[0].mxu0
      %v7497 = vadd.f32 0.0, %v7496
      %v7498 = vpop.f32.mrb[0].mxu0
      %v7499 = vpop.f32.mrb[0].mxu0
      %v7500 = vadd.f32 0.0, %v7499
      %v7501 = vpop.f32.mrb[0].mxu0
      %7502 = vmatprep.mubr.bf16.mxu0 0
      %7503 = vmatmul.mubr.bf16.gmra.mrb[0].mxu0 %v7388
      %v7504 = vpop.f32.mrb[0].mxu0
      %v7505 = vadd.f32 0.0, %v7504
      %v7506 = vpop.f32.mrb[0].mxu0
      %v7507 = vpop.f32.mrb[0].mxu0
      %v7508 = vadd.f32 0.0, %v7507
      %v7509 = vpop.f32.mrb[0].mxu0
      %7510 = vmatprep.mubr.bf16.mxu0 0
      %7511 = vmatmul.mubr.bf16.gmra.mrb[0].mxu0 %v7389
      %v7512 = vpop.f32.mrb[0].mxu0
      %v7513 = vadd.f32 0.0, %v7512
      %v7514 = vpop.f32.mrb[0].mxu0
      %v7515 = vpop.f32.mrb[0].mxu0
      %v7516 = vadd.f32 0.0, %v7515
      %v7517 = vpop.f32.mrb[0].mxu0
      %7518 = vdwg.mxu0
      %v7519 = vpack.c.bf16 %v7460, %v7457
      %v7520 = vpack.c.bf16 %v7468, %v7465
      %v7521 = vpack.c.bf16 %v7476, %v7473
      %v7522 = vpack.c.bf16 %v7484, %v7481
      %v7523 = vpack.c.bf16 %v7492, %v7489
      %v7524 = vpack.c.bf16 %v7500, %v7497
      %v7525 = vpack.c.bf16 %v7508, %v7505
      %v7526 = vpack.c.bf16 %v7516, %v7513
      %v7528 = vsel %vm1823, %v7519, 0
      %v7531 = vsel %vm1823, %v7520, 0
      %v7534 = vsel %vm1823, %v7521, 0
      %v7537 = vsel %vm1823, %v7522, 0
      %v7540 = vsel %vm1823, %v7523, 0
      %v7543 = vsel %vm1823, %v7524, 0
      %v7546 = vsel %vm1823, %v7525, 0
      %v7549 = vsel %vm1823, %v7526, 0
      %7551 = vmatprep.subr.bf16.mxu0 0
      %7552 = vmatpush1.bf16.msra.mxu0 %v4224
      %7553 = vmatprep.subr.bf16.mxu0 0
      %7554 = vmatpush1.bf16.msra.mxu0 0
      %7555 = vmatprep.subr.bf16.mxu0 0
      %7556 = vmatpush1.bf16.msra.mxu0 0
      %7557 = vmatprep.subr.bf16.mxu0 0
      %7558 = vmatpush1.bf16.msra.mxu0 0
      %7559 = vmatprep.subr.bf16.mxu0 0
      %7560 = vmatpush1.bf16.msra.mxu0 0
      %7561 = vmatprep.subr.bf16.mxu0 0
      %7562 = vmatpush1.bf16.msra.mxu0 0
      %7563 = vmatprep.subr.bf16.mxu0 0
      %7564 = vmatpush1.bf16.msra.mxu0 0
      %7565 = vmatprep.subr.bf16.mxu0 0
      %7566 = vmatpush1.bf16.msra.mxu0 0
      %7567 = vmatprep.subr.bf16.mxu0 0
      %7568 = vmatpush1.bf16.msra.mxu0 0
      %7569 = vmatprep.subr.bf16.mxu0 0
      %7570 = vmatpush1.bf16.msra.mxu0 0
      %7571 = vmatprep.subr.bf16.mxu0 0
      %7572 = vmatpush1.bf16.msra.mxu0 0
      %7573 = vmatprep.subr.bf16.mxu0 0
      %7574 = vmatpush1.bf16.msra.mxu0 0
      %7575 = vmatprep.subr.bf16.mxu0 0
      %7576 = vmatpush1.bf16.msra.mxu0 0
      %7577 = vmatprep.subr.bf16.mxu0 0
      %7578 = vmatpush1.bf16.msra.mxu0 0
      %7579 = vmatprep.subr.bf16.mxu0 0
      %7580 = vmatpush1.bf16.msra.mxu0 0
      %7581 = vmatprep.subr.bf16.mxu0 0
      %7582 = vmatpush1.bf16.msra.mxu0 0
      %7583 = vmatprep.mubr.bf16.mxu0 0
      %7584 = vmatmul.mubr.bf16.gmra.mrb[0].mxu0 %v7528
      %v7585 = vpop.f32.mrb[0].mxu0
      %v7586 = vadd.f32 0.0, %v7585
      %v7587 = vpop.f32.mrb[0].mxu0
      %v7588 = vpop.f32.mrb[0].mxu0
      %v7589 = vadd.f32 0.0, %v7588
      %v7590 = vpop.f32.mrb[0].mxu0
      %7591 = vmatprep.mubr.bf16.mxu0 0
      %7592 = vmatmul.mubr.bf16.gmra.mrb[0].mxu0 %v7531
      %v7593 = vpop.f32.mrb[0].mxu0
      %v7594 = vadd.f32 0.0, %v7593
      %v7595 = vpop.f32.mrb[0].mxu0
      %v7596 = vpop.f32.mrb[0].mxu0
      %v7597 = vadd.f32 0.0, %v7596
      %v7598 = vpop.f32.mrb[0].mxu0
      %7599 = vmatprep.mubr.bf16.mxu0 0
      %7600 = vmatmul.mubr.bf16.gmra.mrb[0].mxu0 %v7534
      %v7601 = vpop.f32.mrb[0].mxu0
      %v7602 = vadd.f32 0.0, %v7601
      %v7603 = vpop.f32.mrb[0].mxu0
      %v7604 = vpop.f32.mrb[0].mxu0
      %v7605 = vadd.f32 0.0, %v7604
      %v7606 = vpop.f32.mrb[0].mxu0
      %7607 = vmatprep.mubr.bf16.mxu0 0
      %7608 = vmatmul.mubr.bf16.gmra.mrb[0].mxu0 %v7537
      %v7609 = vpop.f32.mrb[0].mxu0
      %v7610 = vadd.f32 0.0, %v7609
      %v7611 = vpop.f32.mrb[0].mxu0
      %v7612 = vpop.f32.mrb[0].mxu0
      %v7613 = vadd.f32 0.0, %v7612
      %v7614 = vpop.f32.mrb[0].mxu0
      %7615 = vmatprep.mubr.bf16.mxu0 0
      %7616 = vmatmul.mubr.bf16.gmra.mrb[0].mxu0 %v7540
      %v7617 = vpop.f32.mrb[0].mxu0
      %v7618 = vadd.f32 0.0, %v7617
      %v7619 = vpop.f32.mrb[0].mxu0
      %v7620 = vpop.f32.mrb[0].mxu0
      %v7621 = vadd.f32 0.0, %v7620
      %v7622 = vpop.f32.mrb[0].mxu0
      %7623 = vmatprep.mubr.bf16.mxu0 0
      %7624 = vmatmul.mubr.bf16.gmra.mrb[0].mxu0 %v7543
      %v7625 = vpop.f32.mrb[0].mxu0
      %v7626 = vadd.f32 0.0, %v7625
      %v7627 = vpop.f32.mrb[0].mxu0
      %v7628 = vpop.f32.mrb[0].mxu0
      %v7629 = vadd.f32 0.0, %v7628
      %v7630 = vpop.f32.mrb[0].mxu0
      %7631 = vmatprep.mubr.bf16.mxu0 0
      %7632 = vmatmul.mubr.bf16.gmra.mrb[0].mxu0 %v7546
      %v7633 = vpop.f32.mrb[0].mxu0
      %v7634 = vadd.f32 0.0, %v7633
      %v7635 = vpop.f32.mrb[0].mxu0
      %v7636 = vpop.f32.mrb[0].mxu0
      %v7637 = vadd.f32 0.0, %v7636
      %v7638 = vpop.f32.mrb[0].mxu0
      %7639 = vmatprep.mubr.bf16.mxu0 0
      %7640 = vmatmul.mubr.bf16.gmra.mrb[0].mxu0 %v7549
      %v7641 = vpop.f32.mrb[0].mxu0
      %v7642 = vadd.f32 0.0, %v7641
      %v7643 = vpop.f32.mrb[0].mxu0
      %v7644 = vpop.f32.mrb[0].mxu0
      %v7645 = vadd.f32 0.0, %v7644
      %v7646 = vpop.f32.mrb[0].mxu0
      %7647 = vdwg.mxu0
      %v7649 = vsel %vm1823, %v7262, 0
      %v7652 = vsel %vm1823, %v7263, 0
      %v7655 = vsel %vm1823, %v7264, 0
      %v7658 = vsel %vm1823, %v7265, 0
      %v7661 = vsel %vm1823, %v7266, 0
      %v7664 = vsel %vm1823, %v7267, 0
      %v7667 = vsel %vm1823, %v7268, 0
      %v7670 = vsel %vm1823, %v7269, 0
      %7672 = vmatprep.subr.bf16.mxu0 0
      %7673 = vmatpush1.bf16.msra.mxu0 %v4348
      %7674 = vmatprep.subr.bf16.mxu0 0
      %7675 = vmatpush1.bf16.msra.mxu0 0
      %7676 = vmatprep.subr.bf16.mxu0 0
      %7677 = vmatpush1.bf16.msra.mxu0 0
      %7678 = vmatprep.subr.bf16.mxu0 0
      %7679 = vmatpush1.bf16.msra.mxu0 0
      %7680 = vmatprep.subr.bf16.mxu0 0
      %7681 = vmatpush1.bf16.msra.mxu0 0
      %7682 = vmatprep.subr.bf16.mxu0 0
      %7683 = vmatpush1.bf16.msra.mxu0 0
      %7684 = vmatprep.subr.bf16.mxu0 0
      %7685 = vmatpush1.bf16.msra.mxu0 0
      %7686 = vmatprep.subr.bf16.mxu0 0
      %7687 = vmatpush1.bf16.msra.mxu0 0
      %7688 = vmatprep.subr.bf16.mxu0 0
      %7689 = vmatpush1.bf16.msra.mxu0 0
      %7690 = vmatprep.subr.bf16.mxu0 0
      %7691 = vmatpush1.bf16.msra.mxu0 0
      %7692 = vmatprep.subr.bf16.mxu0 0
      %7693 = vmatpush1.bf16.msra.mxu0 0
      %7694 = vmatprep.subr.bf16.mxu0 0
      %7695 = vmatpush1.bf16.msra.mxu0 0
      %7696 = vmatprep.subr.bf16.mxu0 0
      %7697 = vmatpush1.bf16.msra.mxu0 0
      %7698 = vmatprep.subr.bf16.mxu0 0
      %7699 = vmatpush1.bf16.msra.mxu0 0
      %7700 = vmatprep.subr.bf16.mxu0 0
      %7701 = vmatpush1.bf16.msra.mxu0 0
      %7702 = vmatprep.subr.bf16.mxu0 0
      %7703 = vmatpush1.bf16.msra.mxu0 0
      %7704 = vmatprep.mubr.bf16.mxu0 0
      %7705 = vmatmul.mubr.bf16.gmra.mrb[0].mxu0 %v7649
      %v7706 = vpop.f32.mrb[0].mxu0
      %v7707 = vadd.f32 %v7586, %v7706
      %v7708 = vpop.f32.mrb[0].mxu0
      %v7709 = vpop.f32.mrb[0].mxu0
      %v7710 = vadd.f32 %v7589, %v7709
      %v7711 = vpop.f32.mrb[0].mxu0
      %7712 = vmatprep.mubr.bf16.mxu0 0
      %7713 = vmatmul.mubr.bf16.gmra.mrb[0].mxu0 %v7652
      %v7714 = vpop.f32.mrb[0].mxu0
      %v7715 = vadd.f32 %v7594, %v7714
      %v7716 = vpop.f32.mrb[0].mxu0
      %v7717 = vpop.f32.mrb[0].mxu0
      %v7718 = vadd.f32 %v7597, %v7717
      %v7719 = vpop.f32.mrb[0].mxu0
      %7720 = vmatprep.mubr.bf16.mxu0 0
      %7721 = vmatmul.mubr.bf16.gmra.mrb[0].mxu0 %v7655
      %v7722 = vpop.f32.mrb[0].mxu0
      %v7723 = vadd.f32 %v7602, %v7722
      %v7724 = vpop.f32.mrb[0].mxu0
      %v7725 = vpop.f32.mrb[0].mxu0
      %v7726 = vadd.f32 %v7605, %v7725
      %v7727 = vpop.f32.mrb[0].mxu0
      %7728 = vmatprep.mubr.bf16.mxu0 0
      %7729 = vmatmul.mubr.bf16.gmra.mrb[0].mxu0 %v7658
      %v7730 = vpop.f32.mrb[0].mxu0
      %v7731 = vadd.f32 %v7610, %v7730
      %v7732 = vpop.f32.mrb[0].mxu0
      %v7733 = vpop.f32.mrb[0].mxu0
      %v7734 = vadd.f32 %v7613, %v7733
      %v7735 = vpop.f32.mrb[0].mxu0
      %7736 = vmatprep.mubr.bf16.mxu0 0
      %7737 = vmatmul.mubr.bf16.gmra.mrb[0].mxu0 %v7661
      %v7738 = vpop.f32.mrb[0].mxu0
      %v7739 = vadd.f32 %v7618, %v7738
      %v7740 = vpop.f32.mrb[0].mxu0
      %v7741 = vpop.f32.mrb[0].mxu0
      %v7742 = vadd.f32 %v7621, %v7741
      %v7743 = vpop.f32.mrb[0].mxu0
      %7744 = vmatprep.mubr.bf16.mxu0 0
      %7745 = vmatmul.mubr.bf16.gmra.mrb[0].mxu0 %v7664
      %v7746 = vpop.f32.mrb[0].mxu0
      %v7747 = vadd.f32 %v7626, %v7746
      %v7748 = vpop.f32.mrb[0].mxu0
      %v7749 = vpop.f32.mrb[0].mxu0
      %v7750 = vadd.f32 %v7629, %v7749
      %v7751 = vpop.f32.mrb[0].mxu0
      %7752 = vmatprep.mubr.bf16.mxu0 0
      %7753 = vmatmul.mubr.bf16.gmra.mrb[0].mxu0 %v7667
      %v7754 = vpop.f32.mrb[0].mxu0
      %v7755 = vadd.f32 %v7634, %v7754
      %v7756 = vpop.f32.mrb[0].mxu0
      %v7757 = vpop.f32.mrb[0].mxu0
      %v7758 = vadd.f32 %v7637, %v7757
      %v7759 = vpop.f32.mrb[0].mxu0
      %7760 = vmatprep.mubr.bf16.mxu0 0
      %7761 = vmatmul.mubr.bf16.gmra.mrb[0].mxu0 %v7670
      %v7762 = vpop.f32.mrb[0].mxu0
      %v7763 = vadd.f32 %v7642, %v7762
      %v7764 = vpop.f32.mrb[0].mxu0
      %v7765 = vpop.f32.mrb[0].mxu0
      %v7766 = vadd.f32 %v7645, %v7765
      %v7767 = vpop.f32.mrb[0].mxu0
      %7768 = vdwg.mxu0
      %v7769 = vmul.f32 %v6213, %v4450
      %v7770 = vmul.f32 %v6214, %v4450
      %v7771 = vmul.f32 %v6215, %v4450
      %v7772 = vmul.f32 %v6216, %v4450
      %v7773 = vmul.f32 %v6217, %v4450
      %v7774 = vmul.f32 %v6218, %v4450
      %v7775 = vmul.f32 %v6219, %v4450
      %v7776 = vmul.f32 %v6220, %v4450
      %v7777 = vmul.f32 %v6221, %v4450
      %v7778 = vmul.f32 %v6222, %v4450
      %v7779 = vmul.f32 %v6223, %v4450
      %v7780 = vmul.f32 %v6224, %v4450
      %v7781 = vmul.f32 %v6225, %v4450
      %v7782 = vmul.f32 %v6226, %v4450
      %v7783 = vmul.f32 %v6227, %v4450
      %v7784 = vmul.f32 %v6228, %v4450
      %v7785 = vmul.f32 %v6485, %v4471
      %v7786 = vmul.f32 %v6486, %v4471
      %v7787 = vmul.f32 %v6487, %v4471
      %v7788 = vmul.f32 %v6488, %v4471
      %v7789 = vmul.f32 %v6489, %v4471
      %v7790 = vmul.f32 %v6490, %v4471
      %v7791 = vmul.f32 %v6491, %v4471
      %v7792 = vmul.f32 %v6492, %v4471
      %v7793 = vmul.f32 %v6493, %v4471
      %v7794 = vmul.f32 %v6494, %v4471
      %v7795 = vmul.f32 %v6495, %v4471
      %v7796 = vmul.f32 %v6496, %v4471
      %v7797 = vmul.f32 %v6497, %v4471
      %v7798 = vmul.f32 %v6498, %v4471
      %v7799 = vmul.f32 %v6499, %v4471
      %v7800 = vmul.f32 %v6500, %v4471
      %v7801 = vadd.f32 %v7769, %v7785
      %v7802 = vadd.f32 %v7770, %v7786
      %v7803 = vadd.f32 %v7771, %v7787
      %v7804 = vadd.f32 %v7772, %v7788
      %v7805 = vadd.f32 %v7773, %v7789
      %v7806 = vadd.f32 %v7774, %v7790
      %v7807 = vadd.f32 %v7775, %v7791
      %v7808 = vadd.f32 %v7776, %v7792
      %v7809 = vadd.f32 %v7777, %v7793
      %v7810 = vadd.f32 %v7778, %v7794
      %v7811 = vadd.f32 %v7779, %v7795
      %v7812 = vadd.f32 %v7780, %v7796
      %v7813 = vadd.f32 %v7781, %v7797
      %v7814 = vadd.f32 %v7782, %v7798
      %v7815 = vadd.f32 %v7783, %v7799
      %v7816 = vadd.f32 %v7784, %v7800
      %v7817 = vmul.f32 %v6757, %v4508
      %v7818 = vmul.f32 %v6758, %v4508
      %v7819 = vmul.f32 %v6759, %v4508
      %v7820 = vmul.f32 %v6760, %v4508
      %v7821 = vmul.f32 %v6761, %v4508
      %v7822 = vmul.f32 %v6762, %v4508
      %v7823 = vmul.f32 %v6763, %v4508
      %v7824 = vmul.f32 %v6764, %v4508
      %v7825 = vmul.f32 %v6765, %v4508
      %v7826 = vmul.f32 %v6766, %v4508
      %v7827 = vmul.f32 %v6767, %v4508
      %v7828 = vmul.f32 %v6768, %v4508
      %v7829 = vmul.f32 %v6769, %v4508
      %v7830 = vmul.f32 %v6770, %v4508
      %v7831 = vmul.f32 %v6771, %v4508
      %v7832 = vmul.f32 %v6772, %v4508
      %v7833 = vadd.f32 %v7801, %v7817
      %v7834 = vadd.f32 %v7802, %v7818
      %v7835 = vadd.f32 %v7803, %v7819
      %v7836 = vadd.f32 %v7804, %v7820
      %v7837 = vadd.f32 %v7805, %v7821
      %v7838 = vadd.f32 %v7806, %v7822
      %v7839 = vadd.f32 %v7807, %v7823
      %v7840 = vadd.f32 %v7808, %v7824
      %v7841 = vadd.f32 %v7809, %v7825
      %v7842 = vadd.f32 %v7810, %v7826
      %v7843 = vadd.f32 %v7811, %v7827
      %v7844 = vadd.f32 %v7812, %v7828
      %v7845 = vadd.f32 %v7813, %v7829
      %v7846 = vadd.f32 %v7814, %v7830
      %v7847 = vadd.f32 %v7815, %v7831
      %v7848 = vadd.f32 %v7816, %v7832
      %v7849 = vmul.f32 %v7029, %v4545
      %v7850 = vmul.f32 %v7030, %v4545
      %v7851 = vmul.f32 %v7031, %v4545
      %v7852 = vmul.f32 %v7032, %v4545
      %v7853 = vmul.f32 %v7033, %v4545
      %v7854 = vmul.f32 %v7034, %v4545
      %v7855 = vmul.f32 %v7035, %v4545
      %v7856 = vmul.f32 %v7036, %v4545
      %v7857 = vmul.f32 %v7037, %v4545
      %v7858 = vmul.f32 %v7038, %v4545
      %v7859 = vmul.f32 %v7039, %v4545
      %v7860 = vmul.f32 %v7040, %v4545
      %v7861 = vmul.f32 %v7041, %v4545
      %v7862 = vmul.f32 %v7042, %v4545
      %v7863 = vmul.f32 %v7043, %v4545
      %v7864 = vmul.f32 %v7044, %v4545
      %v7865 = vadd.f32 %v7833, %v7849
      %v7866 = vadd.f32 %v7834, %v7850
      %v7867 = vadd.f32 %v7835, %v7851
      %v7868 = vadd.f32 %v7836, %v7852
      %v7869 = vadd.f32 %v7837, %v7853
      %v7870 = vadd.f32 %v7838, %v7854
      %v7871 = vadd.f32 %v7839, %v7855
      %v7872 = vadd.f32 %v7840, %v7856
      %v7873 = vadd.f32 %v7841, %v7857
      %v7874 = vadd.f32 %v7842, %v7858
      %v7875 = vadd.f32 %v7843, %v7859
      %v7876 = vadd.f32 %v7844, %v7860
      %v7877 = vadd.f32 %v7845, %v7861
      %v7878 = vadd.f32 %v7846, %v7862
      %v7879 = vadd.f32 %v7847, %v7863
      %v7880 = vadd.f32 %v7848, %v7864
      %v7881 = vpack.c.bf16 %v7866, %v7865
      %v7882 = vpack.c.bf16 %v7868, %v7867
      %v7883 = vpack.c.bf16 %v7870, %v7869
      %v7884 = vpack.c.bf16 %v7872, %v7871
      %v7885 = vpack.c.bf16 %v7874, %v7873
      %v7886 = vpack.c.bf16 %v7876, %v7875
      %v7887 = vpack.c.bf16 %v7878, %v7877
      %v7888 = vpack.c.bf16 %v7880, %v7879
      %7889 = vrot.lane.b32.xlu0 %v1811, 112
      %v7890 = vpop.permute.xlu0 %7889
      %7891 = vrot.lane.b32.xlu0 %v1812, 112
      %v7892 = vpop.permute.xlu0 %7891
      %7893 = vrot.lane.b32.xlu0 %v1813, 112
      %v7894 = vpop.permute.xlu0 %7893
      %7895 = vrot.lane.b32.xlu0 %v1814, 112
      %v7896 = vpop.permute.xlu0 %7895
      %7897 = vrot.lane.b32.xlu0 %v1815, 112
      %v7898 = vpop.permute.xlu0 %7897
      %7899 = vrot.lane.b32.xlu0 %v1816, 112
      %v7900 = vpop.permute.xlu0 %7899
      %7901 = vrot.lane.b32.xlu0 %v1817, 112
      %v7902 = vpop.permute.xlu0 %7901
      %7903 = vrot.lane.b32.xlu0 %v1818, 112
      %v7904 = vpop.permute.xlu0 %7903
      %7913 = vmatprep.subr.bf16.mxu0 0
      %7914 = vmatpush1.bf16.msra.mxu0 %v7890
      %7915 = vmatprep.subr.bf16.mxu0 0
      %7916 = vmatpush1.bf16.msra.mxu0 %v7892
      %7917 = vmatprep.subr.bf16.mxu0 0
      %7918 = vmatpush1.bf16.msra.mxu0 %v7894
      %7919 = vmatprep.subr.bf16.mxu0 0
      %7920 = vmatpush1.bf16.msra.mxu0 %v7896
      %7921 = vmatprep.subr.bf16.mxu0 0
      %7922 = vmatpush1.bf16.msra.mxu0 %v7898
      %7923 = vmatprep.subr.bf16.mxu0 0
      %7924 = vmatpush1.bf16.msra.mxu0 %v7900
      %7925 = vmatprep.subr.bf16.mxu0 0
      %7926 = vmatpush1.bf16.msra.mxu0 %v7902
      %7927 = vmatprep.subr.bf16.mxu0 0
      %7928 = vmatpush1.bf16.msra.mxu0 %v7904
      %7929 = vmatprep.subr.bf16.mxu0 0
      %7930 = vmatpush1.bf16.msra.mxu0 0
      %7931 = vmatprep.subr.bf16.mxu0 0
      %7932 = vmatpush1.bf16.msra.mxu0 0
      %7933 = vmatprep.subr.bf16.mxu0 0
      %7934 = vmatpush1.bf16.msra.mxu0 0
      %7935 = vmatprep.subr.bf16.mxu0 0
      %7936 = vmatpush1.bf16.msra.mxu0 0
      %7937 = vmatprep.subr.bf16.mxu0 0
      %7938 = vmatpush1.bf16.msra.mxu0 0
      %7939 = vmatprep.subr.bf16.mxu0 0
      %7940 = vmatpush1.bf16.msra.mxu0 0
      %7941 = vmatprep.subr.bf16.mxu0 0
      %7942 = vmatpush1.bf16.msra.mxu0 0
      %7943 = vmatprep.subr.bf16.mxu0 0
      %7944 = vmatpush1.bf16.msra.mxu0 0
      %7945 = vmatprep.mubr.bf16.mxu0 0
      %7946 = vmatmul.mubr.bf16.gmra.mrb[0].mxu0 %v7881
      %v7947 = vpop.f32.mrb[0].mxu0
      %v7948 = vadd.f32 0.0, %v7947
      %v7949 = vpop.f32.mrb[0].mxu0
      %v7950 = vpop.f32.mrb[0].mxu0
      %v7951 = vadd.f32 0.0, %v7950
      %v7952 = vpop.f32.mrb[0].mxu0
      %7953 = vmatprep.mubr.bf16.mxu0 0
      %7954 = vmatmul.mubr.bf16.gmra.mrb[0].mxu0 %v7882
      %v7955 = vpop.f32.mrb[0].mxu0
      %v7956 = vadd.f32 0.0, %v7955
      %v7957 = vpop.f32.mrb[0].mxu0
      %v7958 = vpop.f32.mrb[0].mxu0
      %v7959 = vadd.f32 0.0, %v7958
      %v7960 = vpop.f32.mrb[0].mxu0
      %7961 = vmatprep.mubr.bf16.mxu0 0
      %7962 = vmatmul.mubr.bf16.gmra.mrb[0].mxu0 %v7883
      %v7963 = vpop.f32.mrb[0].mxu0
      %v7964 = vadd.f32 0.0, %v7963
      %v7965 = vpop.f32.mrb[0].mxu0
      %v7966 = vpop.f32.mrb[0].mxu0
      %v7967 = vadd.f32 0.0, %v7966
      %v7968 = vpop.f32.mrb[0].mxu0
      %7969 = vmatprep.mubr.bf16.mxu0 0
      %7970 = vmatmul.mubr.bf16.gmra.mrb[0].mxu0 %v7884
      %v7971 = vpop.f32.mrb[0].mxu0
      %v7972 = vadd.f32 0.0, %v7971
      %v7973 = vpop.f32.mrb[0].mxu0
      %v7974 = vpop.f32.mrb[0].mxu0
      %v7975 = vadd.f32 0.0, %v7974
      %v7976 = vpop.f32.mrb[0].mxu0
      %7977 = vmatprep.mubr.bf16.mxu0 0
      %7978 = vmatmul.mubr.bf16.gmra.mrb[0].mxu0 %v7885
      %v7979 = vpop.f32.mrb[0].mxu0
      %v7980 = vadd.f32 0.0, %v7979
      %v7981 = vpop.f32.mrb[0].mxu0
      %v7982 = vpop.f32.mrb[0].mxu0
      %v7983 = vadd.f32 0.0, %v7982
      %v7984 = vpop.f32.mrb[0].mxu0
      %7985 = vmatprep.mubr.bf16.mxu0 0
      %7986 = vmatmul.mubr.bf16.gmra.mrb[0].mxu0 %v7886
      %v7987 = vpop.f32.mrb[0].mxu0
      %v7988 = vadd.f32 0.0, %v7987
      %v7989 = vpop.f32.mrb[0].mxu0
      %v7990 = vpop.f32.mrb[0].mxu0
      %v7991 = vadd.f32 0.0, %v7990
      %v7992 = vpop.f32.mrb[0].mxu0
      %7993 = vmatprep.mubr.bf16.mxu0 0
      %7994 = vmatmul.mubr.bf16.gmra.mrb[0].mxu0 %v7887
      %v7995 = vpop.f32.mrb[0].mxu0
      %v7996 = vadd.f32 0.0, %v7995
      %v7997 = vpop.f32.mrb[0].mxu0
      %v7998 = vpop.f32.mrb[0].mxu0
      %v7999 = vadd.f32 0.0, %v7998
      %v8000 = vpop.f32.mrb[0].mxu0
      %8001 = vmatprep.mubr.bf16.mxu0 0
      %8002 = vmatmul.mubr.bf16.gmra.mrb[0].mxu0 %v7888
      %v8003 = vpop.f32.mrb[0].mxu0
      %v8004 = vadd.f32 0.0, %v8003
      %v8005 = vpop.f32.mrb[0].mxu0
      %v8006 = vpop.f32.mrb[0].mxu0
      %v8007 = vadd.f32 0.0, %v8006
      %v8008 = vpop.f32.mrb[0].mxu0
      %8009 = vdwg.mxu0
      %v8010 = vpack.c.bf16 %v7951, %v7948
      %v8011 = vpack.c.bf16 %v7959, %v7956
      %v8012 = vpack.c.bf16 %v7967, %v7964
      %v8013 = vpack.c.bf16 %v7975, %v7972
      %v8014 = vpack.c.bf16 %v7983, %v7980
      %v8015 = vpack.c.bf16 %v7991, %v7988
      %v8016 = vpack.c.bf16 %v7999, %v7996
      %v8017 = vpack.c.bf16 %v8007, %v8004
      %v8019 = vsel %vm1823, %v8010, 0
      %v8022 = vsel %vm1823, %v8011, 0
      %v8025 = vsel %vm1823, %v8012, 0
      %v8028 = vsel %vm1823, %v8013, 0
      %v8031 = vsel %vm1823, %v8014, 0
      %v8034 = vsel %vm1823, %v8015, 0
      %v8037 = vsel %vm1823, %v8016, 0
      %v8040 = vsel %vm1823, %v8017, 0
      %8042 = vmatprep.subr.bf16.mxu0 0
      %8043 = vmatpush1.bf16.msra.mxu0 %v4741
      %8044 = vmatprep.subr.bf16.mxu0 0
      %8045 = vmatpush1.bf16.msra.mxu0 0
      %8046 = vmatprep.subr.bf16.mxu0 0
      %8047 = vmatpush1.bf16.msra.mxu0 0
      %8048 = vmatprep.subr.bf16.mxu0 0
      %8049 = vmatpush1.bf16.msra.mxu0 0
      %8050 = vmatprep.subr.bf16.mxu0 0
      %8051 = vmatpush1.bf16.msra.mxu0 0
      %8052 = vmatprep.subr.bf16.mxu0 0
      %8053 = vmatpush1.bf16.msra.mxu0 0
      %8054 = vmatprep.subr.bf16.mxu0 0
      %8055 = vmatpush1.bf16.msra.mxu0 0
      %8056 = vmatprep.subr.bf16.mxu0 0
      %8057 = vmatpush1.bf16.msra.mxu0 0
      %8058 = vmatprep.subr.bf16.mxu0 0
      %8059 = vmatpush1.bf16.msra.mxu0 0
      %8060 = vmatprep.subr.bf16.mxu0 0
      %8061 = vmatpush1.bf16.msra.mxu0 0
      %8062 = vmatprep.subr.bf16.mxu0 0
      %8063 = vmatpush1.bf16.msra.mxu0 0
      %8064 = vmatprep.subr.bf16.mxu0 0
      %8065 = vmatpush1.bf16.msra.mxu0 0
      %8066 = vmatprep.subr.bf16.mxu0 0
      %8067 = vmatpush1.bf16.msra.mxu0 0
      %8068 = vmatprep.subr.bf16.mxu0 0
      %8069 = vmatpush1.bf16.msra.mxu0 0
      %8070 = vmatprep.subr.bf16.mxu0 0
      %8071 = vmatpush1.bf16.msra.mxu0 0
      %8072 = vmatprep.subr.bf16.mxu0 0
      %8073 = vmatpush1.bf16.msra.mxu0 0
      %8074 = vmatprep.mubr.bf16.mxu0 0
      %8075 = vmatmul.mubr.bf16.gmra.mrb[0].mxu0 %v8019
      %v8076 = vpop.f32.mrb[0].mxu0
      %v8077 = vadd.f32 0.0, %v8076
      %v8078 = vpop.f32.mrb[0].mxu0
      %v8079 = vpop.f32.mrb[0].mxu0
      %v8080 = vadd.f32 0.0, %v8079
      %v8081 = vpop.f32.mrb[0].mxu0
      %8082 = vmatprep.mubr.bf16.mxu0 0
      %8083 = vmatmul.mubr.bf16.gmra.mrb[0].mxu0 %v8022
      %v8084 = vpop.f32.mrb[0].mxu0
      %v8085 = vadd.f32 0.0, %v8084
      %v8086 = vpop.f32.mrb[0].mxu0
      %v8087 = vpop.f32.mrb[0].mxu0
      %v8088 = vadd.f32 0.0, %v8087
      %v8089 = vpop.f32.mrb[0].mxu0
      %8090 = vmatprep.mubr.bf16.mxu0 0
      %8091 = vmatmul.mubr.bf16.gmra.mrb[0].mxu0 %v8025
      %v8092 = vpop.f32.mrb[0].mxu0
      %v8093 = vadd.f32 0.0, %v8092
      %v8094 = vpop.f32.mrb[0].mxu0
      %v8095 = vpop.f32.mrb[0].mxu0
      %v8096 = vadd.f32 0.0, %v8095
      %v8097 = vpop.f32.mrb[0].mxu0
      %8098 = vmatprep.mubr.bf16.mxu0 0
      %8099 = vmatmul.mubr.bf16.gmra.mrb[0].mxu0 %v8028
      %v8100 = vpop.f32.mrb[0].mxu0
      %v8101 = vadd.f32 0.0, %v8100
      %v8102 = vpop.f32.mrb[0].mxu0
      %v8103 = vpop.f32.mrb[0].mxu0
      %v8104 = vadd.f32 0.0, %v8103
      %v8105 = vpop.f32.mrb[0].mxu0
      %8106 = vmatprep.mubr.bf16.mxu0 0
      %8107 = vmatmul.mubr.bf16.gmra.mrb[0].mxu0 %v8031
      %v8108 = vpop.f32.mrb[0].mxu0
      %v8109 = vadd.f32 0.0, %v8108
      %v8110 = vpop.f32.mrb[0].mxu0
      %v8111 = vpop.f32.mrb[0].mxu0
      %v8112 = vadd.f32 0.0, %v8111
      %v8113 = vpop.f32.mrb[0].mxu0
      %8114 = vmatprep.mubr.bf16.mxu0 0
      %8115 = vmatmul.mubr.bf16.gmra.mrb[0].mxu0 %v8034
      %v8116 = vpop.f32.mrb[0].mxu0
      %v8117 = vadd.f32 0.0, %v8116
      %v8118 = vpop.f32.mrb[0].mxu0
      %v8119 = vpop.f32.mrb[0].mxu0
      %v8120 = vadd.f32 0.0, %v8119
      %v8121 = vpop.f32.mrb[0].mxu0
      %8122 = vmatprep.mubr.bf16.mxu0 0
      %8123 = vmatmul.mubr.bf16.gmra.mrb[0].mxu0 %v8037
      %v8124 = vpop.f32.mrb[0].mxu0
      %v8125 = vadd.f32 0.0, %v8124
      %v8126 = vpop.f32.mrb[0].mxu0
      %v8127 = vpop.f32.mrb[0].mxu0
      %v8128 = vadd.f32 0.0, %v8127
      %v8129 = vpop.f32.mrb[0].mxu0
      %8130 = vmatprep.mubr.bf16.mxu0 0
      %8131 = vmatmul.mubr.bf16.gmra.mrb[0].mxu0 %v8040
      %v8132 = vpop.f32.mrb[0].mxu0
      %v8133 = vadd.f32 0.0, %v8132
      %v8134 = vpop.f32.mrb[0].mxu0
      %v8135 = vpop.f32.mrb[0].mxu0
      %v8136 = vadd.f32 0.0, %v8135
      %v8137 = vpop.f32.mrb[0].mxu0
      %8138 = vdwg.mxu0
      %v8139 = vadd.f32 %v7707, %v8077
      %v8140 = vadd.f32 %v7710, %v8080
      %v8141 = vadd.f32 %v7715, %v8085
      %v8142 = vadd.f32 %v7718, %v8088
      %v8143 = vadd.f32 %v7723, %v8093
      %v8144 = vadd.f32 %v7726, %v8096
      %v8145 = vadd.f32 %v7731, %v8101
      %v8146 = vadd.f32 %v7734, %v8104
      %v8147 = vadd.f32 %v7739, %v8109
      %v8148 = vadd.f32 %v7742, %v8112
      %v8149 = vadd.f32 %v7747, %v8117
      %v8150 = vadd.f32 %v7750, %v8120
      %v8151 = vadd.f32 %v7755, %v8125
      %v8152 = vadd.f32 %v7758, %v8128
      %v8153 = vadd.f32 %v7763, %v8133
      %v8154 = vadd.f32 %v7766, %v8136
      %v8155 = vmul.f32 %v6213, %v4859
      %v8156 = vmul.f32 %v6214, %v4859
      %v8157 = vmul.f32 %v6215, %v4859
      %v8158 = vmul.f32 %v6216, %v4859
      %v8159 = vmul.f32 %v6217, %v4859
      %v8160 = vmul.f32 %v6218, %v4859
      %v8161 = vmul.f32 %v6219, %v4859
      %v8162 = vmul.f32 %v6220, %v4859
      %v8163 = vmul.f32 %v6221, %v4859
      %v8164 = vmul.f32 %v6222, %v4859
      %v8165 = vmul.f32 %v6223, %v4859
      %v8166 = vmul.f32 %v6224, %v4859
      %v8167 = vmul.f32 %v6225, %v4859
      %v8168 = vmul.f32 %v6226, %v4859
      %v8169 = vmul.f32 %v6227, %v4859
      %v8170 = vmul.f32 %v6228, %v4859
      %v8171 = vmul.f32 %v6485, %v4880
      %v8172 = vmul.f32 %v6486, %v4880
      %v8173 = vmul.f32 %v6487, %v4880
      %v8174 = vmul.f32 %v6488, %v4880
      %v8175 = vmul.f32 %v6489, %v4880
      %v8176 = vmul.f32 %v6490, %v4880
      %v8177 = vmul.f32 %v6491, %v4880
      %v8178 = vmul.f32 %v6492, %v4880
      %v8179 = vmul.f32 %v6493, %v4880
      %v8180 = vmul.f32 %v6494, %v4880
      %v8181 = vmul.f32 %v6495, %v4880
      %v8182 = vmul.f32 %v6496, %v4880
      %v8183 = vmul.f32 %v6497, %v4880
      %v8184 = vmul.f32 %v6498, %v4880
      %v8185 = vmul.f32 %v6499, %v4880
      %v8186 = vmul.f32 %v6500, %v4880
      %v8187 = vadd.f32 %v8155, %v8171
      %v8188 = vadd.f32 %v8156, %v8172
      %v8189 = vadd.f32 %v8157, %v8173
      %v8190 = vadd.f32 %v8158, %v8174
      %v8191 = vadd.f32 %v8159, %v8175
      %v8192 = vadd.f32 %v8160, %v8176
      %v8193 = vadd.f32 %v8161, %v8177
      %v8194 = vadd.f32 %v8162, %v8178
      %v8195 = vadd.f32 %v8163, %v8179
      %v8196 = vadd.f32 %v8164, %v8180
      %v8197 = vadd.f32 %v8165, %v8181
      %v8198 = vadd.f32 %v8166, %v8182
      %v8199 = vadd.f32 %v8167, %v8183
      %v8200 = vadd.f32 %v8168, %v8184
      %v8201 = vadd.f32 %v8169, %v8185
      %v8202 = vadd.f32 %v8170, %v8186
      %v8203 = vmul.f32 %v6757, %v4917
      %v8204 = vmul.f32 %v6758, %v4917
      %v8205 = vmul.f32 %v6759, %v4917
      %v8206 = vmul.f32 %v6760, %v4917
      %v8207 = vmul.f32 %v6761, %v4917
      %v8208 = vmul.f32 %v6762, %v4917
      %v8209 = vmul.f32 %v6763, %v4917
      %v8210 = vmul.f32 %v6764, %v4917
      %v8211 = vmul.f32 %v6765, %v4917
      %v8212 = vmul.f32 %v6766, %v4917
      %v8213 = vmul.f32 %v6767, %v4917
      %v8214 = vmul.f32 %v6768, %v4917
      %v8215 = vmul.f32 %v6769, %v4917
      %v8216 = vmul.f32 %v6770, %v4917
      %v8217 = vmul.f32 %v6771, %v4917
      %v8218 = vmul.f32 %v6772, %v4917
      %v8219 = vadd.f32 %v8187, %v8203
      %v8220 = vadd.f32 %v8188, %v8204
      %v8221 = vadd.f32 %v8189, %v8205
      %v8222 = vadd.f32 %v8190, %v8206
      %v8223 = vadd.f32 %v8191, %v8207
      %v8224 = vadd.f32 %v8192, %v8208
      %v8225 = vadd.f32 %v8193, %v8209
      %v8226 = vadd.f32 %v8194, %v8210
      %v8227 = vadd.f32 %v8195, %v8211
      %v8228 = vadd.f32 %v8196, %v8212
      %v8229 = vadd.f32 %v8197, %v8213
      %v8230 = vadd.f32 %v8198, %v8214
      %v8231 = vadd.f32 %v8199, %v8215
      %v8232 = vadd.f32 %v8200, %v8216
      %v8233 = vadd.f32 %v8201, %v8217
      %v8234 = vadd.f32 %v8202, %v8218
      %v8235 = vmul.f32 %v7029, %v4954
      %v8236 = vmul.f32 %v7030, %v4954
      %v8237 = vmul.f32 %v7031, %v4954
      %v8238 = vmul.f32 %v7032, %v4954
      %v8239 = vmul.f32 %v7033, %v4954
      %v8240 = vmul.f32 %v7034, %v4954
      %v8241 = vmul.f32 %v7035, %v4954
      %v8242 = vmul.f32 %v7036, %v4954
      %v8243 = vmul.f32 %v7037, %v4954
      %v8244 = vmul.f32 %v7038, %v4954
      %v8245 = vmul.f32 %v7039, %v4954
      %v8246 = vmul.f32 %v7040, %v4954
      %v8247 = vmul.f32 %v7041, %v4954
      %v8248 = vmul.f32 %v7042, %v4954
      %v8249 = vmul.f32 %v7043, %v4954
      %v8250 = vmul.f32 %v7044, %v4954
      %v8251 = vadd.f32 %v8219, %v8235
      %v8252 = vadd.f32 %v8220, %v8236
      %v8253 = vadd.f32 %v8221, %v8237
      %v8254 = vadd.f32 %v8222, %v8238
      %v8255 = vadd.f32 %v8223, %v8239
      %v8256 = vadd.f32 %v8224, %v8240
      %v8257 = vadd.f32 %v8225, %v8241
      %v8258 = vadd.f32 %v8226, %v8242
      %v8259 = vadd.f32 %v8227, %v8243
      %v8260 = vadd.f32 %v8228, %v8244
      %v8261 = vadd.f32 %v8229, %v8245
      %v8262 = vadd.f32 %v8230, %v8246
      %v8263 = vadd.f32 %v8231, %v8247
      %v8264 = vadd.f32 %v8232, %v8248
      %v8265 = vadd.f32 %v8233, %v8249
      %v8266 = vadd.f32 %v8234, %v8250
      %v8267 = vpack.c.bf16 %v8252, %v8251
      %v8268 = vpack.c.bf16 %v8254, %v8253
      %v8269 = vpack.c.bf16 %v8256, %v8255
      %v8270 = vpack.c.bf16 %v8258, %v8257
      %v8271 = vpack.c.bf16 %v8260, %v8259
      %v8272 = vpack.c.bf16 %v8262, %v8261
      %v8273 = vpack.c.bf16 %v8264, %v8263
      %v8274 = vpack.c.bf16 %v8266, %v8265
      %8275 = vrot.lane.b32.xlu0 %v1811, 104
      %v8276 = vpop.permute.xlu0 %8275
      %8277 = vrot.lane.b32.xlu0 %v1812, 104
      %v8278 = vpop.permute.xlu0 %8277
      %8279 = vrot.lane.b32.xlu0 %v1813, 104
      %v8280 = vpop.permute.xlu0 %8279
      %8281 = vrot.lane.b32.xlu0 %v1814, 104
      %v8282 = vpop.permute.xlu0 %8281
      %8283 = vrot.lane.b32.xlu0 %v1815, 104
      %v8284 = vpop.permute.xlu0 %8283
      %8285 = vrot.lane.b32.xlu0 %v1816, 104
      %v8286 = vpop.permute.xlu0 %8285
      %8287 = vrot.lane.b32.xlu0 %v1817, 104
      %v8288 = vpop.permute.xlu0 %8287
      %8289 = vrot.lane.b32.xlu0 %v1818, 104
      %v8290 = vpop.permute.xlu0 %8289
      %8299 = vmatprep.subr.bf16.mxu0 0
      %8300 = vmatpush1.bf16.msra.mxu0 %v8276
      %8301 = vmatprep.subr.bf16.mxu0 0
      %8302 = vmatpush1.bf16.msra.mxu0 %v8278
      %8303 = vmatprep.subr.bf16.mxu0 0
      %8304 = vmatpush1.bf16.msra.mxu0 %v8280
      %8305 = vmatprep.subr.bf16.mxu0 0
      %8306 = vmatpush1.bf16.msra.mxu0 %v8282
      %8307 = vmatprep.subr.bf16.mxu0 0
      %8308 = vmatpush1.bf16.msra.mxu0 %v8284
      %8309 = vmatprep.subr.bf16.mxu0 0
      %8310 = vmatpush1.bf16.msra.mxu0 %v8286
      %8311 = vmatprep.subr.bf16.mxu0 0
      %8312 = vmatpush1.bf16.msra.mxu0 %v8288
      %8313 = vmatprep.subr.bf16.mxu0 0
      %8314 = vmatpush1.bf16.msra.mxu0 %v8290
      %8315 = vmatprep.subr.bf16.mxu0 0
      %8316 = vmatpush1.bf16.msra.mxu0 0
      %8317 = vmatprep.subr.bf16.mxu0 0
      %8318 = vmatpush1.bf16.msra.mxu0 0
      %8319 = vmatprep.subr.bf16.mxu0 0
      %8320 = vmatpush1.bf16.msra.mxu0 0
      %8321 = vmatprep.subr.bf16.mxu0 0
      %8322 = vmatpush1.bf16.msra.mxu0 0
      %8323 = vmatprep.subr.bf16.mxu0 0
      %8324 = vmatpush1.bf16.msra.mxu0 0
      %8325 = vmatprep.subr.bf16.mxu0 0
      %8326 = vmatpush1.bf16.msra.mxu0 0
      %8327 = vmatprep.subr.bf16.mxu0 0
      %8328 = vmatpush1.bf16.msra.mxu0 0
      %8329 = vmatprep.subr.bf16.mxu0 0
      %8330 = vmatpush1.bf16.msra.mxu0 0
      %8331 = vmatprep.mubr.bf16.mxu0 0
      %8332 = vmatmul.mubr.bf16.gmra.mrb[0].mxu0 %v8267
      %v8333 = vpop.f32.mrb[0].mxu0
      %v8334 = vadd.f32 0.0, %v8333
      %v8335 = vpop.f32.mrb[0].mxu0
      %v8336 = vpop.f32.mrb[0].mxu0
      %v8337 = vadd.f32 0.0, %v8336
      %v8338 = vpop.f32.mrb[0].mxu0
      %8339 = vmatprep.mubr.bf16.mxu0 0
      %8340 = vmatmul.mubr.bf16.gmra.mrb[0].mxu0 %v8268
      %v8341 = vpop.f32.mrb[0].mxu0
      %v8342 = vadd.f32 0.0, %v8341
      %v8343 = vpop.f32.mrb[0].mxu0
      %v8344 = vpop.f32.mrb[0].mxu0
      %v8345 = vadd.f32 0.0, %v8344
      %v8346 = vpop.f32.mrb[0].mxu0
      %8347 = vmatprep.mubr.bf16.mxu0 0
      %8348 = vmatmul.mubr.bf16.gmra.mrb[0].mxu0 %v8269
      %v8349 = vpop.f32.mrb[0].mxu0
      %v8350 = vadd.f32 0.0, %v8349
      %v8351 = vpop.f32.mrb[0].mxu0
      %v8352 = vpop.f32.mrb[0].mxu0
      %v8353 = vadd.f32 0.0, %v8352
      %v8354 = vpop.f32.mrb[0].mxu0
      %8355 = vmatprep.mubr.bf16.mxu0 0
      %8356 = vmatmul.mubr.bf16.gmra.mrb[0].mxu0 %v8270
      %v8357 = vpop.f32.mrb[0].mxu0
      %v8358 = vadd.f32 0.0, %v8357
      %v8359 = vpop.f32.mrb[0].mxu0
      %v8360 = vpop.f32.mrb[0].mxu0
      %v8361 = vadd.f32 0.0, %v8360
      %v8362 = vpop.f32.mrb[0].mxu0
      %8363 = vmatprep.mubr.bf16.mxu0 0
      %8364 = vmatmul.mubr.bf16.gmra.mrb[0].mxu0 %v8271
      %v8365 = vpop.f32.mrb[0].mxu0
      %v8366 = vadd.f32 0.0, %v8365
      %v8367 = vpop.f32.mrb[0].mxu0
      %v8368 = vpop.f32.mrb[0].mxu0
      %v8369 = vadd.f32 0.0, %v8368
      %v8370 = vpop.f32.mrb[0].mxu0
      %8371 = vmatprep.mubr.bf16.mxu0 0
      %8372 = vmatmul.mubr.bf16.gmra.mrb[0].mxu0 %v8272
      %v8373 = vpop.f32.mrb[0].mxu0
      %v8374 = vadd.f32 0.0, %v8373
      %v8375 = vpop.f32.mrb[0].mxu0
      %v8376 = vpop.f32.mrb[0].mxu0
      %v8377 = vadd.f32 0.0, %v8376
      %v8378 = vpop.f32.mrb[0].mxu0
      %8379 = vmatprep.mubr.bf16.mxu0 0
      %8380 = vmatmul.mubr.bf16.gmra.mrb[0].mxu0 %v8273
      %v8381 = vpop.f32.mrb[0].mxu0
      %v8382 = vadd.f32 0.0, %v8381
      %v8383 = vpop.f32.mrb[0].mxu0
      %v8384 = vpop.f32.mrb[0].mxu0
      %v8385 = vadd.f32 0.0, %v8384
      %v8386 = vpop.f32.mrb[0].mxu0
      %8387 = vmatprep.mubr.bf16.mxu0 0
      %8388 = vmatmul.mubr.bf16.gmra.mrb[0].mxu0 %v8274
      %v8389 = vpop.f32.mrb[0].mxu0
      %v8390 = vadd.f32 0.0, %v8389
      %v8391 = vpop.f32.mrb[0].mxu0
      %v8392 = vpop.f32.mrb[0].mxu0
      %v8393 = vadd.f32 0.0, %v8392
      %v8394 = vpop.f32.mrb[0].mxu0
      %8395 = vdwg.mxu0
      %v8396 = vpack.c.bf16 %v8337, %v8334
      %v8397 = vpack.c.bf16 %v8345, %v8342
      %v8398 = vpack.c.bf16 %v8353, %v8350
      %v8399 = vpack.c.bf16 %v8361, %v8358
      %v8400 = vpack.c.bf16 %v8369, %v8366
      %v8401 = vpack.c.bf16 %v8377, %v8374
      %v8402 = vpack.c.bf16 %v8385, %v8382
      %v8403 = vpack.c.bf16 %v8393, %v8390
      %v8405 = vsel %vm1823, %v8396, 0
      %v8408 = vsel %vm1823, %v8397, 0
      %v8411 = vsel %vm1823, %v8398, 0
      %v8414 = vsel %vm1823, %v8399, 0
      %v8417 = vsel %vm1823, %v8400, 0
      %v8420 = vsel %vm1823, %v8401, 0
      %v8423 = vsel %vm1823, %v8402, 0
      %v8426 = vsel %vm1823, %v8403, 0
      %8428 = vmatprep.subr.bf16.mxu0 0
      %8429 = vmatpush1.bf16.msra.mxu0 %v5150
      %8430 = vmatprep.subr.bf16.mxu0 0
      %8431 = vmatpush1.bf16.msra.mxu0 0
      %8432 = vmatprep.subr.bf16.mxu0 0
      %8433 = vmatpush1.bf16.msra.mxu0 0
      %8434 = vmatprep.subr.bf16.mxu0 0
      %8435 = vmatpush1.bf16.msra.mxu0 0
      %8436 = vmatprep.subr.bf16.mxu0 0
      %8437 = vmatpush1.bf16.msra.mxu0 0
      %8438 = vmatprep.subr.bf16.mxu0 0
      %8439 = vmatpush1.bf16.msra.mxu0 0
      %8440 = vmatprep.subr.bf16.mxu0 0
      %8441 = vmatpush1.bf16.msra.mxu0 0
      %8442 = vmatprep.subr.bf16.mxu0 0
      %8443 = vmatpush1.bf16.msra.mxu0 0
      %8444 = vmatprep.subr.bf16.mxu0 0
      %8445 = vmatpush1.bf16.msra.mxu0 0
      %8446 = vmatprep.subr.bf16.mxu0 0
      %8447 = vmatpush1.bf16.msra.mxu0 0
      %8448 = vmatprep.subr.bf16.mxu0 0
      %8449 = vmatpush1.bf16.msra.mxu0 0
      %8450 = vmatprep.subr.bf16.mxu0 0
      %8451 = vmatpush1.bf16.msra.mxu0 0
      %8452 = vmatprep.subr.bf16.mxu0 0
      %8453 = vmatpush1.bf16.msra.mxu0 0
      %8454 = vmatprep.subr.bf16.mxu0 0
      %8455 = vmatpush1.bf16.msra.mxu0 0
      %8456 = vmatprep.subr.bf16.mxu0 0
      %8457 = vmatpush1.bf16.msra.mxu0 0
      %8458 = vmatprep.subr.bf16.mxu0 0
      %8459 = vmatpush1.bf16.msra.mxu0 0
      %8460 = vmatprep.mubr.bf16.mxu0 0
      %8461 = vmatmul.mubr.bf16.gmra.mrb[0].mxu0 %v8405
      %v8462 = vpop.f32.mrb[0].mxu0
      %v8463 = vadd.f32 0.0, %v8462
      %v8464 = vpop.f32.mrb[0].mxu0
      %v8465 = vpop.f32.mrb[0].mxu0
      %v8466 = vadd.f32 0.0, %v8465
      %v8467 = vpop.f32.mrb[0].mxu0
      %8468 = vmatprep.mubr.bf16.mxu0 0
      %8469 = vmatmul.mubr.bf16.gmra.mrb[0].mxu0 %v8408
      %v8470 = vpop.f32.mrb[0].mxu0
      %v8471 = vadd.f32 0.0, %v8470
      %v8472 = vpop.f32.mrb[0].mxu0
      %v8473 = vpop.f32.mrb[0].mxu0
      %v8474 = vadd.f32 0.0, %v8473
      %v8475 = vpop.f32.mrb[0].mxu0
      %8476 = vmatprep.mubr.bf16.mxu0 0
      %8477 = vmatmul.mubr.bf16.gmra.mrb[0].mxu0 %v8411
      %v8478 = vpop.f32.mrb[0].mxu0
      %v8479 = vadd.f32 0.0, %v8478
      %v8480 = vpop.f32.mrb[0].mxu0
      %v8481 = vpop.f32.mrb[0].mxu0
      %v8482 = vadd.f32 0.0, %v8481
      %v8483 = vpop.f32.mrb[0].mxu0
      %8484 = vmatprep.mubr.bf16.mxu0 0
      %8485 = vmatmul.mubr.bf16.gmra.mrb[0].mxu0 %v8414
      %v8486 = vpop.f32.mrb[0].mxu0
      %v8487 = vadd.f32 0.0, %v8486
      %v8488 = vpop.f32.mrb[0].mxu0
      %v8489 = vpop.f32.mrb[0].mxu0
      %v8490 = vadd.f32 0.0, %v8489
      %v8491 = vpop.f32.mrb[0].mxu0
      %8492 = vmatprep.mubr.bf16.mxu0 0
      %8493 = vmatmul.mubr.bf16.gmra.mrb[0].mxu0 %v8417
      %v8494 = vpop.f32.mrb[0].mxu0
      %v8495 = vadd.f32 0.0, %v8494
      %v8496 = vpop.f32.mrb[0].mxu0
      %v8497 = vpop.f32.mrb[0].mxu0
      %v8498 = vadd.f32 0.0, %v8497
      %v8499 = vpop.f32.mrb[0].mxu0
      %8500 = vmatprep.mubr.bf16.mxu0 0
      %8501 = vmatmul.mubr.bf16.gmra.mrb[0].mxu0 %v8420
      %v8502 = vpop.f32.mrb[0].mxu0
      %v8503 = vadd.f32 0.0, %v8502
      %v8504 = vpop.f32.mrb[0].mxu0
      %v8505 = vpop.f32.mrb[0].mxu0
      %v8506 = vadd.f32 0.0, %v8505
      %v8507 = vpop.f32.mrb[0].mxu0
      %8508 = vmatprep.mubr.bf16.mxu0 0
      %8509 = vmatmul.mubr.bf16.gmra.mrb[0].mxu0 %v8423
      %v8510 = vpop.f32.mrb[0].mxu0
      %v8511 = vadd.f32 0.0, %v8510
      %v8512 = vpop.f32.mrb[0].mxu0
      %v8513 = vpop.f32.mrb[0].mxu0
      %v8514 = vadd.f32 0.0, %v8513
      %v8515 = vpop.f32.mrb[0].mxu0
      %8516 = vmatprep.mubr.bf16.mxu0 0
      %8517 = vmatmul.mubr.bf16.gmra.mrb[0].mxu0 %v8426
      %v8518 = vpop.f32.mrb[0].mxu0
      %v8519 = vadd.f32 0.0, %v8518
      %v8520 = vpop.f32.mrb[0].mxu0
      %v8521 = vpop.f32.mrb[0].mxu0
      %v8522 = vadd.f32 0.0, %v8521
      %v8523 = vpop.f32.mrb[0].mxu0
      %8524 = vdwg.mxu0
      %v8525 = vadd.f32 %v8139, %v8463
      %v8526 = vadd.f32 %v8140, %v8466
      %v8527 = vadd.f32 %v8141, %v8471
      %v8528 = vadd.f32 %v8142, %v8474
      %v8529 = vadd.f32 %v8143, %v8479
      %v8530 = vadd.f32 %v8144, %v8482
      %v8531 = vadd.f32 %v8145, %v8487
      %v8532 = vadd.f32 %v8146, %v8490
      %v8533 = vadd.f32 %v8147, %v8495
      %v8534 = vadd.f32 %v8148, %v8498
      %v8535 = vadd.f32 %v8149, %v8503
      %v8536 = vadd.f32 %v8150, %v8506
      %v8537 = vadd.f32 %v8151, %v8511
      %v8538 = vadd.f32 %v8152, %v8514
      %v8539 = vadd.f32 %v8153, %v8519
      %v8540 = vadd.f32 %v8154, %v8522
      %v8541 = vlaneseq
      %v8542 = vshrl.u32 %v8541, 7
      %v8543 = vsub.s32 2, %v8542
      %v8544 = vrot.slane %v553, %v8543
      %v8545 = vadd.f32 %v5249, %v8544
      %v8546 = vadd.f32 %v5250, %v8544
      %v8547 = vadd.f32 %v5251, %v8544
      %v8548 = vadd.f32 %v5252, %v8544
      %v8549 = vadd.f32 %v5253, %v8544
      %v8550 = vadd.f32 %v5254, %v8544
      %v8551 = vadd.f32 %v5255, %v8544
      %v8552 = vadd.f32 %v5256, %v8544
      %v8553 = vadd.f32 %v5257, %v8544
      %v8554 = vadd.f32 %v5258, %v8544
      %v8555 = vadd.f32 %v5259, %v8544
      %v8556 = vadd.f32 %v5260, %v8544
      %v8557 = vadd.f32 %v5261, %v8544
      %v8558 = vadd.f32 %v5262, %v8544
      %v8559 = vadd.f32 %v5263, %v8544
      %v8560 = vadd.f32 %v5264, %v8544
      %v8561 = vadd.f32 %v8525, %v8544
      %v8562 = vadd.f32 %v8526, %v8544
      %v8563 = vadd.f32 %v8527, %v8544
      %v8564 = vadd.f32 %v8528, %v8544
      %v8565 = vadd.f32 %v8529, %v8544
      %v8566 = vadd.f32 %v8530, %v8544
      %v8567 = vadd.f32 %v8531, %v8544
      %v8568 = vadd.f32 %v8532, %v8544
      %v8569 = vadd.f32 %v8533, %v8544
      %v8570 = vadd.f32 %v8534, %v8544
      %v8571 = vadd.f32 %v8535, %v8544
      %v8572 = vadd.f32 %v8536, %v8544
      %v8573 = vadd.f32 %v8537, %v8544
      %v8574 = vadd.f32 %v8538, %v8544
      %v8575 = vadd.f32 %v8539, %v8544
      %v8576 = vadd.f32 %v8540, %v8544
      %v8577 = vlaneseq
      %v8578 = vshrl.u32 %v8577, 7
      %v8579 = vsub.s32 3, %v8578
      %v8580 = vrot.slane %v553, %v8579
      %v8581 = vmul.f32 %v8545, %v8580
      %v8582 = vmul.f32 %v8546, %v8580
      %v8583 = vmul.f32 %v8547, %v8580
      %v8584 = vmul.f32 %v8548, %v8580
      %v8585 = vmul.f32 %v8549, %v8580
      %v8586 = vmul.f32 %v8550, %v8580
      %v8587 = vmul.f32 %v8551, %v8580
      %v8588 = vmul.f32 %v8552, %v8580
      %v8589 = vmul.f32 %v8553, %v8580
      %v8590 = vmul.f32 %v8554, %v8580
      %v8591 = vmul.f32 %v8555, %v8580
      %v8592 = vmul.f32 %v8556, %v8580
      %v8593 = vmul.f32 %v8557, %v8580
      %v8594 = vmul.f32 %v8558, %v8580
      %v8595 = vmul.f32 %v8559, %v8580
      %v8596 = vmul.f32 %v8560, %v8580
      %v8597 = vmul.f32 %v8561, %v8580
      %v8598 = vmul.f32 %v8562, %v8580
      %v8599 = vmul.f32 %v8563, %v8580
      %v8600 = vmul.f32 %v8564, %v8580
      %v8601 = vmul.f32 %v8565, %v8580
      %v8602 = vmul.f32 %v8566, %v8580
      %v8603 = vmul.f32 %v8567, %v8580
      %v8604 = vmul.f32 %v8568, %v8580
      %v8605 = vmul.f32 %v8569, %v8580
      %v8606 = vmul.f32 %v8570, %v8580
      %v8607 = vmul.f32 %v8571, %v8580
      %v8608 = vmul.f32 %v8572, %v8580
      %v8609 = vmul.f32 %v8573, %v8580
      %v8610 = vmul.f32 %v8574, %v8580
      %v8611 = vmul.f32 %v8575, %v8580
      %v8612 = vmul.f32 %v8576, %v8580
      %v8613 = vadd.f32 %v521, %v8581
      %v8614 = vadd.f32 %v522, %v8582
      %v8615 = vadd.f32 %v523, %v8583
      %v8616 = vadd.f32 %v524, %v8584
      %v8617 = vadd.f32 %v525, %v8585
      %v8618 = vadd.f32 %v526, %v8586
      %v8619 = vadd.f32 %v527, %v8587
      %v8620 = vadd.f32 %v528, %v8588
      %v8621 = vadd.f32 %v529, %v8589
      %v8622 = vadd.f32 %v530, %v8590
      %v8623 = vadd.f32 %v531, %v8591
      %v8624 = vadd.f32 %v532, %v8592
      %v8625 = vadd.f32 %v533, %v8593
      %v8626 = vadd.f32 %v534, %v8594
      %v8627 = vadd.f32 %v535, %v8595
      %v8628 = vadd.f32 %v536, %v8596
      %v8629 = vadd.f32 %v537, %v8597
      %v8630 = vadd.f32 %v538, %v8598
      %v8631 = vadd.f32 %v539, %v8599
      %v8632 = vadd.f32 %v540, %v8600
      %v8633 = vadd.f32 %v541, %v8601
      %v8634 = vadd.f32 %v542, %v8602
      %v8635 = vadd.f32 %v543, %v8603
      %v8636 = vadd.f32 %v544, %v8604
      %v8637 = vadd.f32 %v545, %v8605
      %v8638 = vadd.f32 %v546, %v8606
      %v8639 = vadd.f32 %v547, %v8607
      %v8640 = vadd.f32 %v548, %v8608
      %v8641 = vadd.f32 %v549, %v8609
      %v8642 = vadd.f32 %v550, %v8610
      %v8643 = vadd.f32 %v551, %v8611
      %v8644 = vadd.f32 %v552, %v8612
      %8645 = vadd.xlane.f32.xlu0 %v8613
      %v8646 = vpop.xlane.xlu0 %8645
      %8647 = vadd.xlane.f32.xlu0 %v8614
      %v8648 = vpop.xlane.xlu0 %8647
      %8649 = vadd.xlane.f32.xlu0 %v8615
      %v8650 = vpop.xlane.xlu0 %8649
      %8651 = vadd.xlane.f32.xlu0 %v8616
      %v8652 = vpop.xlane.xlu0 %8651
      %8653 = vadd.xlane.f32.xlu0 %v8617
      %v8654 = vpop.xlane.xlu0 %8653
      %8655 = vadd.xlane.f32.xlu0 %v8618
      %v8656 = vpop.xlane.xlu0 %8655
      %8657 = vadd.xlane.f32.xlu0 %v8619
      %v8658 = vpop.xlane.xlu0 %8657
      %8659 = vadd.xlane.f32.xlu0 %v8620
      %v8660 = vpop.xlane.xlu0 %8659
      %8661 = vadd.xlane.f32.xlu0 %v8621
      %v8662 = vpop.xlane.xlu0 %8661
      %8663 = vadd.xlane.f32.xlu0 %v8622
      %v8664 = vpop.xlane.xlu0 %8663
      %8665 = vadd.xlane.f32.xlu0 %v8623
      %v8666 = vpop.xlane.xlu0 %8665
      %8667 = vadd.xlane.f32.xlu0 %v8624
      %v8668 = vpop.xlane.xlu0 %8667
      %8669 = vadd.xlane.f32.xlu0 %v8625
      %v8670 = vpop.xlane.xlu0 %8669
      %8671 = vadd.xlane.f32.xlu0 %v8626
      %v8672 = vpop.xlane.xlu0 %8671
      %8673 = vadd.xlane.f32.xlu0 %v8627
      %v8674 = vpop.xlane.xlu0 %8673
      %8675 = vadd.xlane.f32.xlu0 %v8628
      %v8676 = vpop.xlane.xlu0 %8675
      %8677 = vadd.xlane.f32.xlu0 %v8629
      %v8678 = vpop.xlane.xlu0 %8677
      %8679 = vadd.xlane.f32.xlu0 %v8630
      %v8680 = vpop.xlane.xlu0 %8679
      %8681 = vadd.xlane.f32.xlu0 %v8631
      %v8682 = vpop.xlane.xlu0 %8681
      %8683 = vadd.xlane.f32.xlu0 %v8632
      %v8684 = vpop.xlane.xlu0 %8683
      %8685 = vadd.xlane.f32.xlu0 %v8633
      %v8686 = vpop.xlane.xlu0 %8685
      %8687 = vadd.xlane.f32.xlu0 %v8634
      %v8688 = vpop.xlane.xlu0 %8687
      %8689 = vadd.xlane.f32.xlu0 %v8635
      %v8690 = vpop.xlane.xlu0 %8689
      %8691 = vadd.xlane.f32.xlu0 %v8636
      %v8692 = vpop.xlane.xlu0 %8691
      %8693 = vadd.xlane.f32.xlu0 %v8637
      %v8694 = vpop.xlane.xlu0 %8693
      %8695 = vadd.xlane.f32.xlu0 %v8638
      %v8696 = vpop.xlane.xlu0 %8695
      %8697 = vadd.xlane.f32.xlu0 %v8639
      %v8698 = vpop.xlane.xlu0 %8697
      %8699 = vadd.xlane.f32.xlu0 %v8640
      %v8700 = vpop.xlane.xlu0 %8699
      %8701 = vadd.xlane.f32.xlu0 %v8641
      %v8702 = vpop.xlane.xlu0 %8701
      %8703 = vadd.xlane.f32.xlu0 %v8642
      %v8704 = vpop.xlane.xlu0 %8703
      %8705 = vadd.xlane.f32.xlu0 %v8643
      %v8706 = vpop.xlane.xlu0 %8705
      %8707 = vadd.xlane.f32.xlu0 %v8644
      %v8708 = vpop.xlane.xlu0 %8707
      %v8709 = vmul.f32 %v8613, %v8613
      %v8710 = vmul.f32 %v8614, %v8614
      %v8711 = vmul.f32 %v8615, %v8615
      %v8712 = vmul.f32 %v8616, %v8616
      %v8713 = vmul.f32 %v8617, %v8617
      %v8714 = vmul.f32 %v8618, %v8618
      %v8715 = vmul.f32 %v8619, %v8619
      %v8716 = vmul.f32 %v8620, %v8620
      %v8717 = vmul.f32 %v8621, %v8621
      %v8718 = vmul.f32 %v8622, %v8622
      %v8719 = vmul.f32 %v8623, %v8623
      %v8720 = vmul.f32 %v8624, %v8624
      %v8721 = vmul.f32 %v8625, %v8625
      %v8722 = vmul.f32 %v8626, %v8626
      %v8723 = vmul.f32 %v8627, %v8627
      %v8724 = vmul.f32 %v8628, %v8628
      %v8725 = vmul.f32 %v8629, %v8629
      %v8726 = vmul.f32 %v8630, %v8630
      %v8727 = vmul.f32 %v8631, %v8631
      %v8728 = vmul.f32 %v8632, %v8632
      %v8729 = vmul.f32 %v8633, %v8633
      %v8730 = vmul.f32 %v8634, %v8634
      %v8731 = vmul.f32 %v8635, %v8635
      %v8732 = vmul.f32 %v8636, %v8636
      %v8733 = vmul.f32 %v8637, %v8637
      %v8734 = vmul.f32 %v8638, %v8638
      %v8735 = vmul.f32 %v8639, %v8639
      %v8736 = vmul.f32 %v8640, %v8640
      %v8737 = vmul.f32 %v8641, %v8641
      %v8738 = vmul.f32 %v8642, %v8642
      %v8739 = vmul.f32 %v8643, %v8643
      %v8740 = vmul.f32 %v8644, %v8644
      %8741 = vadd.xlane.f32.xlu0 %v8709
      %v8742 = vpop.xlane.xlu0 %8741
      %8743 = vadd.xlane.f32.xlu0 %v8710
      %v8744 = vpop.xlane.xlu0 %8743
      %8745 = vadd.xlane.f32.xlu0 %v8711
      %v8746 = vpop.xlane.xlu0 %8745
      %8747 = vadd.xlane.f32.xlu0 %v8712
      %v8748 = vpop.xlane.xlu0 %8747
      %8749 = vadd.xlane.f32.xlu0 %v8713
      %v8750 = vpop.xlane.xlu0 %8749
      %8751 = vadd.xlane.f32.xlu0 %v8714
      %v8752 = vpop.xlane.xlu0 %8751
      %8753 = vadd.xlane.f32.xlu0 %v8715
      %v8754 = vpop.xlane.xlu0 %8753
      %8755 = vadd.xlane.f32.xlu0 %v8716
      %v8756 = vpop.xlane.xlu0 %8755
      %8757 = vadd.xlane.f32.xlu0 %v8717
      %v8758 = vpop.xlane.xlu0 %8757
      %8759 = vadd.xlane.f32.xlu0 %v8718
      %v8760 = vpop.xlane.xlu0 %8759
      %8761 = vadd.xlane.f32.xlu0 %v8719
      %v8762 = vpop.xlane.xlu0 %8761
      %8763 = vadd.xlane.f32.xlu0 %v8720
      %v8764 = vpop.xlane.xlu0 %8763
      %8765 = vadd.xlane.f32.xlu0 %v8721
      %v8766 = vpop.xlane.xlu0 %8765
      %8767 = vadd.xlane.f32.xlu0 %v8722
      %v8768 = vpop.xlane.xlu0 %8767
      %8769 = vadd.xlane.f32.xlu0 %v8723
      %v8770 = vpop.xlane.xlu0 %8769
      %8771 = vadd.xlane.f32.xlu0 %v8724
      %v8772 = vpop.xlane.xlu0 %8771
      %8773 = vadd.xlane.f32.xlu0 %v8725
      %v8774 = vpop.xlane.xlu0 %8773
      %8775 = vadd.xlane.f32.xlu0 %v8726
      %v8776 = vpop.xlane.xlu0 %8775
      %8777 = vadd.xlane.f32.xlu0 %v8727
      %v8778 = vpop.xlane.xlu0 %8777
      %8779 = vadd.xlane.f32.xlu0 %v8728
      %v8780 = vpop.xlane.xlu0 %8779
      %8781 = vadd.xlane.f32.xlu0 %v8729
      %v8782 = vpop.xlane.xlu0 %8781
      %8783 = vadd.xlane.f32.xlu0 %v8730
      %v8784 = vpop.xlane.xlu0 %8783
      %8785 = vadd.xlane.f32.xlu0 %v8731
      %v8786 = vpop.xlane.xlu0 %8785
      %8787 = vadd.xlane.f32.xlu0 %v8732
      %v8788 = vpop.xlane.xlu0 %8787
      %8789 = vadd.xlane.f32.xlu0 %v8733
      %v8790 = vpop.xlane.xlu0 %8789
      %8791 = vadd.xlane.f32.xlu0 %v8734
      %v8792 = vpop.xlane.xlu0 %8791
      %8793 = vadd.xlane.f32.xlu0 %v8735
      %v8794 = vpop.xlane.xlu0 %8793
      %8795 = vadd.xlane.f32.xlu0 %v8736
      %v8796 = vpop.xlane.xlu0 %8795
      %8797 = vadd.xlane.f32.xlu0 %v8737
      %v8798 = vpop.xlane.xlu0 %8797
      %8799 = vadd.xlane.f32.xlu0 %v8738
      %v8800 = vpop.xlane.xlu0 %8799
      %8801 = vadd.xlane.f32.xlu0 %v8739
      %v8802 = vpop.xlane.xlu0 %8801
      %8803 = vadd.xlane.f32.xlu0 %v8740
      %v8804 = vpop.xlane.xlu0 %8803
      %v8805 = vmul.f32 %v8646, %v715
      %v8806 = vmul.f32 %v8648, %v715
      %v8807 = vmul.f32 %v8650, %v715
      %v8808 = vmul.f32 %v8652, %v715
      %v8809 = vmul.f32 %v8654, %v715
      %v8810 = vmul.f32 %v8656, %v715
      %v8811 = vmul.f32 %v8658, %v715
      %v8812 = vmul.f32 %v8660, %v715
      %v8813 = vmul.f32 %v8662, %v715
      %v8814 = vmul.f32 %v8664, %v715
      %v8815 = vmul.f32 %v8666, %v715
      %v8816 = vmul.f32 %v8668, %v715
      %v8817 = vmul.f32 %v8670, %v715
      %v8818 = vmul.f32 %v8672, %v715
      %v8819 = vmul.f32 %v8674, %v715
      %v8820 = vmul.f32 %v8676, %v715
      %v8821 = vmul.f32 %v8678, %v715
      %v8822 = vmul.f32 %v8680, %v715
      %v8823 = vmul.f32 %v8682, %v715
      %v8824 = vmul.f32 %v8684, %v715
      %v8825 = vmul.f32 %v8686, %v715
      %v8826 = vmul.f32 %v8688, %v715
      %v8827 = vmul.f32 %v8690, %v715
      %v8828 = vmul.f32 %v8692, %v715
      %v8829 = vmul.f32 %v8694, %v715
      %v8830 = vmul.f32 %v8696, %v715
      %v8831 = vmul.f32 %v8698, %v715
      %v8832 = vmul.f32 %v8700, %v715
      %v8833 = vmul.f32 %v8702, %v715
      %v8834 = vmul.f32 %v8704, %v715
      %v8835 = vmul.f32 %v8706, %v715
      %v8836 = vmul.f32 %v8708, %v715
      %v8837 = vmul.f32 %v8742, %v715
      %v8838 = vmul.f32 %v8744, %v715
      %v8839 = vmul.f32 %v8746, %v715
      %v8840 = vmul.f32 %v8748, %v715
      %v8841 = vmul.f32 %v8750, %v715
      %v8842 = vmul.f32 %v8752, %v715
      %v8843 = vmul.f32 %v8754, %v715
      %v8844 = vmul.f32 %v8756, %v715
      %v8845 = vmul.f32 %v8758, %v715
      %v8846 = vmul.f32 %v8760, %v715
      %v8847 = vmul.f32 %v8762, %v715
      %v8848 = vmul.f32 %v8764, %v715
      %v8849 = vmul.f32 %v8766, %v715
      %v8850 = vmul.f32 %v8768, %v715
      %v8851 = vmul.f32 %v8770, %v715
      %v8852 = vmul.f32 %v8772, %v715
      %v8853 = vmul.f32 %v8774, %v715
      %v8854 = vmul.f32 %v8776, %v715
      %v8855 = vmul.f32 %v8778, %v715
      %v8856 = vmul.f32 %v8780, %v715
      %v8857 = vmul.f32 %v8782, %v715
      %v8858 = vmul.f32 %v8784, %v715
      %v8859 = vmul.f32 %v8786, %v715
      %v8860 = vmul.f32 %v8788, %v715
      %v8861 = vmul.f32 %v8790, %v715
      %v8862 = vmul.f32 %v8792, %v715
      %v8863 = vmul.f32 %v8794, %v715
      %v8864 = vmul.f32 %v8796, %v715
      %v8865 = vmul.f32 %v8798, %v715
      %v8866 = vmul.f32 %v8800, %v715
      %v8867 = vmul.f32 %v8802, %v715
      %v8868 = vmul.f32 %v8804, %v715
      %v8869 = vmul.f32 %v8805, %v8805
      %v8870 = vmul.f32 %v8806, %v8806
      %v8871 = vmul.f32 %v8807, %v8807
      %v8872 = vmul.f32 %v8808, %v8808
      %v8873 = vmul.f32 %v8809, %v8809
      %v8874 = vmul.f32 %v8810, %v8810
      %v8875 = vmul.f32 %v8811, %v8811
      %v8876 = vmul.f32 %v8812, %v8812
      %v8877 = vmul.f32 %v8813, %v8813
      %v8878 = vmul.f32 %v8814, %v8814
      %v8879 = vmul.f32 %v8815, %v8815
      %v8880 = vmul.f32 %v8816, %v8816
      %v8881 = vmul.f32 %v8817, %v8817
      %v8882 = vmul.f32 %v8818, %v8818
      %v8883 = vmul.f32 %v8819, %v8819
      %v8884 = vmul.f32 %v8820, %v8820
      %v8885 = vmul.f32 %v8821, %v8821
      %v8886 = vmul.f32 %v8822, %v8822
      %v8887 = vmul.f32 %v8823, %v8823
      %v8888 = vmul.f32 %v8824, %v8824
      %v8889 = vmul.f32 %v8825, %v8825
      %v8890 = vmul.f32 %v8826, %v8826
      %v8891 = vmul.f32 %v8827, %v8827
      %v8892 = vmul.f32 %v8828, %v8828
      %v8893 = vmul.f32 %v8829, %v8829
      %v8894 = vmul.f32 %v8830, %v8830
      %v8895 = vmul.f32 %v8831, %v8831
      %v8896 = vmul.f32 %v8832, %v8832
      %v8897 = vmul.f32 %v8833, %v8833
      %v8898 = vmul.f32 %v8834, %v8834
      %v8899 = vmul.f32 %v8835, %v8835
      %v8900 = vmul.f32 %v8836, %v8836
      %v8901 = vsub.f32 %v8837, %v8869
      %v8902 = vsub.f32 %v8838, %v8870
      %v8903 = vsub.f32 %v8839, %v8871
      %v8904 = vsub.f32 %v8840, %v8872
      %v8905 = vsub.f32 %v8841, %v8873
      %v8906 = vsub.f32 %v8842, %v8874
      %v8907 = vsub.f32 %v8843, %v8875
      %v8908 = vsub.f32 %v8844, %v8876
      %v8909 = vsub.f32 %v8845, %v8877
      %v8910 = vsub.f32 %v8846, %v8878
      %v8911 = vsub.f32 %v8847, %v8879
      %v8912 = vsub.f32 %v8848, %v8880
      %v8913 = vsub.f32 %v8849, %v8881
      %v8914 = vsub.f32 %v8850, %v8882
      %v8915 = vsub.f32 %v8851, %v8883
      %v8916 = vsub.f32 %v8852, %v8884
      %v8917 = vsub.f32 %v8853, %v8885
      %v8918 = vsub.f32 %v8854, %v8886
      %v8919 = vsub.f32 %v8855, %v8887
      %v8920 = vsub.f32 %v8856, %v8888
      %v8921 = vsub.f32 %v8857, %v8889
      %v8922 = vsub.f32 %v8858, %v8890
      %v8923 = vsub.f32 %v8859, %v8891
      %v8924 = vsub.f32 %v8860, %v8892
      %v8925 = vsub.f32 %v8861, %v8893
      %v8926 = vsub.f32 %v8862, %v8894
      %v8927 = vsub.f32 %v8863, %v8895
      %v8928 = vsub.f32 %v8864, %v8896
      %v8929 = vsub.f32 %v8865, %v8897
      %v8930 = vsub.f32 %v8866, %v8898
      %v8931 = vsub.f32 %v8867, %v8899
      %v8932 = vsub.f32 %v8868, %v8900
      %v8933 = vmax.f32 %v8901, 0.0
      %v8934 = vmax.f32 %v8902, 0.0
      %v8935 = vmax.f32 %v8903, 0.0
      %v8936 = vmax.f32 %v8904, 0.0
      %v8937 = vmax.f32 %v8905, 0.0
      %v8938 = vmax.f32 %v8906, 0.0
      %v8939 = vmax.f32 %v8907, 0.0
      %v8940 = vmax.f32 %v8908, 0.0
      %v8941 = vmax.f32 %v8909, 0.0
      %v8942 = vmax.f32 %v8910, 0.0
      %v8943 = vmax.f32 %v8911, 0.0
      %v8944 = vmax.f32 %v8912, 0.0
      %v8945 = vmax.f32 %v8913, 0.0
      %v8946 = vmax.f32 %v8914, 0.0
      %v8947 = vmax.f32 %v8915, 0.0
      %v8948 = vmax.f32 %v8916, 0.0
      %v8949 = vmax.f32 %v8917, 0.0
      %v8950 = vmax.f32 %v8918, 0.0
      %v8951 = vmax.f32 %v8919, 0.0
      %v8952 = vmax.f32 %v8920, 0.0
      %v8953 = vmax.f32 %v8921, 0.0
      %v8954 = vmax.f32 %v8922, 0.0
      %v8955 = vmax.f32 %v8923, 0.0
      %v8956 = vmax.f32 %v8924, 0.0
      %v8957 = vmax.f32 %v8925, 0.0
      %v8958 = vmax.f32 %v8926, 0.0
      %v8959 = vmax.f32 %v8927, 0.0
      %v8960 = vmax.f32 %v8928, 0.0
      %v8961 = vmax.f32 %v8929, 0.0
      %v8962 = vmax.f32 %v8930, 0.0
      %v8963 = vmax.f32 %v8931, 0.0
      %v8964 = vmax.f32 %v8932, 0.0
      %v8965 = vadd.f32 %v8933, 1e-05
      %v8966 = vadd.f32 %v8934, 1e-05
      %v8967 = vadd.f32 %v8935, 1e-05
      %v8968 = vadd.f32 %v8936, 1e-05
      %v8969 = vadd.f32 %v8937, 1e-05
      %v8970 = vadd.f32 %v8938, 1e-05
      %v8971 = vadd.f32 %v8939, 1e-05
      %v8972 = vadd.f32 %v8940, 1e-05
      %v8973 = vadd.f32 %v8941, 1e-05
      %v8974 = vadd.f32 %v8942, 1e-05
      %v8975 = vadd.f32 %v8943, 1e-05
      %v8976 = vadd.f32 %v8944, 1e-05
      %v8977 = vadd.f32 %v8945, 1e-05
      %v8978 = vadd.f32 %v8946, 1e-05
      %v8979 = vadd.f32 %v8947, 1e-05
      %v8980 = vadd.f32 %v8948, 1e-05
      %v8981 = vadd.f32 %v8949, 1e-05
      %v8982 = vadd.f32 %v8950, 1e-05
      %v8983 = vadd.f32 %v8951, 1e-05
      %v8984 = vadd.f32 %v8952, 1e-05
      %v8985 = vadd.f32 %v8953, 1e-05
      %v8986 = vadd.f32 %v8954, 1e-05
      %v8987 = vadd.f32 %v8955, 1e-05
      %v8988 = vadd.f32 %v8956, 1e-05
      %v8989 = vadd.f32 %v8957, 1e-05
      %v8990 = vadd.f32 %v8958, 1e-05
      %v8991 = vadd.f32 %v8959, 1e-05
      %v8992 = vadd.f32 %v8960, 1e-05
      %v8993 = vadd.f32 %v8961, 1e-05
      %v8994 = vadd.f32 %v8962, 1e-05
      %v8995 = vadd.f32 %v8963, 1e-05
      %v8996 = vadd.f32 %v8964, 1e-05
      %v8997 = vrsqrt.pop %v8965
      %v8998 = vrsqrt.pop %v8966
      %v8999 = vrsqrt.pop %v8967
      %v9000 = vrsqrt.pop %v8968
      %v9001 = vrsqrt.pop %v8969
      %v9002 = vrsqrt.pop %v8970
      %v9003 = vrsqrt.pop %v8971
      %v9004 = vrsqrt.pop %v8972
      %v9005 = vrsqrt.pop %v8973
      %v9006 = vrsqrt.pop %v8974
      %v9007 = vrsqrt.pop %v8975
      %v9008 = vrsqrt.pop %v8976
      %v9009 = vrsqrt.pop %v8977
      %v9010 = vrsqrt.pop %v8978
      %v9011 = vrsqrt.pop %v8979
      %v9012 = vrsqrt.pop %v8980
      %v9013 = vrsqrt.pop %v8981
      %v9014 = vrsqrt.pop %v8982
      %v9015 = vrsqrt.pop %v8983
      %v9016 = vrsqrt.pop %v8984
      %v9017 = vrsqrt.pop %v8985
      %v9018 = vrsqrt.pop %v8986
      %v9019 = vrsqrt.pop %v8987
      %v9020 = vrsqrt.pop %v8988
      %v9021 = vrsqrt.pop %v8989
      %v9022 = vrsqrt.pop %v8990
      %v9023 = vrsqrt.pop %v8991
      %v9024 = vrsqrt.pop %v8992
      %v9025 = vrsqrt.pop %v8993
      %v9026 = vrsqrt.pop %v8994
      %v9027 = vrsqrt.pop %v8995
      %v9028 = vrsqrt.pop %v8996
      %v9029 = vsub.f32 %v8613, %v8805
      %v9030 = vsub.f32 %v8614, %v8806
      %v9031 = vsub.f32 %v8615, %v8807
      %v9032 = vsub.f32 %v8616, %v8808
      %v9033 = vsub.f32 %v8617, %v8809
      %v9034 = vsub.f32 %v8618, %v8810
      %v9035 = vsub.f32 %v8619, %v8811
      %v9036 = vsub.f32 %v8620, %v8812
      %v9037 = vsub.f32 %v8621, %v8813
      %v9038 = vsub.f32 %v8622, %v8814
      %v9039 = vsub.f32 %v8623, %v8815
      %v9040 = vsub.f32 %v8624, %v8816
      %v9041 = vsub.f32 %v8625, %v8817
      %v9042 = vsub.f32 %v8626, %v8818
      %v9043 = vsub.f32 %v8627, %v8819
      %v9044 = vsub.f32 %v8628, %v8820
      %v9045 = vsub.f32 %v8629, %v8821
      %v9046 = vsub.f32 %v8630, %v8822
      %v9047 = vsub.f32 %v8631, %v8823
      %v9048 = vsub.f32 %v8632, %v8824
      %v9049 = vsub.f32 %v8633, %v8825
      %v9050 = vsub.f32 %v8634, %v8826
      %v9051 = vsub.f32 %v8635, %v8827
      %v9052 = vsub.f32 %v8636, %v8828
      %v9053 = vsub.f32 %v8637, %v8829
      %v9054 = vsub.f32 %v8638, %v8830
      %v9055 = vsub.f32 %v8639, %v8831
      %v9056 = vsub.f32 %v8640, %v8832
      %v9057 = vsub.f32 %v8641, %v8833
      %v9058 = vsub.f32 %v8642, %v8834
      %v9059 = vsub.f32 %v8643, %v8835
      %v9060 = vsub.f32 %v8644, %v8836
      %v9061 = vmul.f32 %v9029, %v8997
      %v9062 = vmul.f32 %v9030, %v8998
      %v9063 = vmul.f32 %v9031, %v8999
      %v9064 = vmul.f32 %v9032, %v9000
      %v9065 = vmul.f32 %v9033, %v9001
      %v9066 = vmul.f32 %v9034, %v9002
      %v9067 = vmul.f32 %v9035, %v9003
      %v9068 = vmul.f32 %v9036, %v9004
      %v9069 = vmul.f32 %v9037, %v9005
      %v9070 = vmul.f32 %v9038, %v9006
      %v9071 = vmul.f32 %v9039, %v9007
      %v9072 = vmul.f32 %v9040, %v9008
      %v9073 = vmul.f32 %v9041, %v9009
      %v9074 = vmul.f32 %v9042, %v9010
      %v9075 = vmul.f32 %v9043, %v9011
      %v9076 = vmul.f32 %v9044, %v9012
      %v9077 = vmul.f32 %v9045, %v9013
      %v9078 = vmul.f32 %v9046, %v9014
      %v9079 = vmul.f32 %v9047, %v9015
      %v9080 = vmul.f32 %v9048, %v9016
      %v9081 = vmul.f32 %v9049, %v9017
      %v9082 = vmul.f32 %v9050, %v9018
      %v9083 = vmul.f32 %v9051, %v9019
      %v9084 = vmul.f32 %v9052, %v9020
      %v9085 = vmul.f32 %v9053, %v9021
      %v9086 = vmul.f32 %v9054, %v9022
      %v9087 = vmul.f32 %v9055, %v9023
      %v9088 = vmul.f32 %v9056, %v9024
      %v9089 = vmul.f32 %v9057, %v9025
      %v9090 = vmul.f32 %v9058, %v9026
      %v9091 = vmul.f32 %v9059, %v9027
      %v9092 = vmul.f32 %v9060, %v9028
      %v9093 = vlaneseq
      %v9094 = vshrl.u32 %v9093, 7
      %v9095 = vsub.s32 4, %v9094
      %v9096 = vrot.slane %v553, %v9095
      %v9097 = vmul.f32 %v9061, %v9096
      %v9098 = vmul.f32 %v9062, %v9096
      %v9099 = vmul.f32 %v9063, %v9096
      %v9100 = vmul.f32 %v9064, %v9096
      %v9101 = vmul.f32 %v9065, %v9096
      %v9102 = vmul.f32 %v9066, %v9096
      %v9103 = vmul.f32 %v9067, %v9096
      %v9104 = vmul.f32 %v9068, %v9096
      %v9105 = vmul.f32 %v9069, %v9096
      %v9106 = vmul.f32 %v9070, %v9096
      %v9107 = vmul.f32 %v9071, %v9096
      %v9108 = vmul.f32 %v9072, %v9096
      %v9109 = vmul.f32 %v9073, %v9096
      %v9110 = vmul.f32 %v9074, %v9096
      %v9111 = vmul.f32 %v9075, %v9096
      %v9112 = vmul.f32 %v9076, %v9096
      %v9113 = vmul.f32 %v9077, %v9096
      %v9114 = vmul.f32 %v9078, %v9096
      %v9115 = vmul.f32 %v9079, %v9096
      %v9116 = vmul.f32 %v9080, %v9096
      %v9117 = vmul.f32 %v9081, %v9096
      %v9118 = vmul.f32 %v9082, %v9096
      %v9119 = vmul.f32 %v9083, %v9096
      %v9120 = vmul.f32 %v9084, %v9096
      %v9121 = vmul.f32 %v9085, %v9096
      %v9122 = vmul.f32 %v9086, %v9096
      %v9123 = vmul.f32 %v9087, %v9096
      %v9124 = vmul.f32 %v9088, %v9096
      %v9125 = vmul.f32 %v9089, %v9096
      %v9126 = vmul.f32 %v9090, %v9096
      %v9127 = vmul.f32 %v9091, %v9096
      %v9128 = vmul.f32 %v9092, %v9096
      %v9129 = vlaneseq
      %v9130 = vshrl.u32 %v9129, 7
      %v9131 = vsub.s32 5, %v9130
      %v9132 = vrot.slane %v553, %v9131
      %v9133 = vadd.f32 %v9097, %v9132
      %v9134 = vadd.f32 %v9098, %v9132
      %v9135 = vadd.f32 %v9099, %v9132
      %v9136 = vadd.f32 %v9100, %v9132
      %v9137 = vadd.f32 %v9101, %v9132
      %v9138 = vadd.f32 %v9102, %v9132
      %v9139 = vadd.f32 %v9103, %v9132
      %v9140 = vadd.f32 %v9104, %v9132
      %v9141 = vadd.f32 %v9105, %v9132
      %v9142 = vadd.f32 %v9106, %v9132
      %v9143 = vadd.f32 %v9107, %v9132
      %v9144 = vadd.f32 %v9108, %v9132
      %v9145 = vadd.f32 %v9109, %v9132
      %v9146 = vadd.f32 %v9110, %v9132
      %v9147 = vadd.f32 %v9111, %v9132
      %v9148 = vadd.f32 %v9112, %v9132
      %v9149 = vadd.f32 %v9113, %v9132
      %v9150 = vadd.f32 %v9114, %v9132
      %v9151 = vadd.f32 %v9115, %v9132
      %v9152 = vadd.f32 %v9116, %v9132
      %v9153 = vadd.f32 %v9117, %v9132
      %v9154 = vadd.f32 %v9118, %v9132
      %v9155 = vadd.f32 %v9119, %v9132
      %v9156 = vadd.f32 %v9120, %v9132
      %v9157 = vadd.f32 %v9121, %v9132
      %v9158 = vadd.f32 %v9122, %v9132
      %v9159 = vadd.f32 %v9123, %v9132
      %v9160 = vadd.f32 %v9124, %v9132
      %v9161 = vadd.f32 %v9125, %v9132
      %v9162 = vadd.f32 %v9126, %v9132
      %v9163 = vadd.f32 %v9127, %v9132
      %v9164 = vadd.f32 %v9128, %v9132
      %v9165 = vpack.c.bf16 %v9134, %v9133
      %v9166 = vpack.c.bf16 %v9136, %v9135
      %v9167 = vpack.c.bf16 %v9138, %v9137
      %v9168 = vpack.c.bf16 %v9140, %v9139
      %v9169 = vpack.c.bf16 %v9142, %v9141
      %v9170 = vpack.c.bf16 %v9144, %v9143
      %v9171 = vpack.c.bf16 %v9146, %v9145
      %v9172 = vpack.c.bf16 %v9148, %v9147
      %v9173 = vpack.c.bf16 %v9150, %v9149
      %v9174 = vpack.c.bf16 %v9152, %v9151
      %v9175 = vpack.c.bf16 %v9154, %v9153
      %v9176 = vpack.c.bf16 %v9156, %v9155
      %v9177 = vpack.c.bf16 %v9158, %v9157
      %v9178 = vpack.c.bf16 %v9160, %v9159
      %v9179 = vpack.c.bf16 %v9162, %v9161
      %v9180 = vpack.c.bf16 %v9164, %v9163
      %v9181 = vld [vmem:[%s438] sm:$0xf]
      %v9182 = vld [vmem:[%s438 + $0x4] sm:$0xf]
      %v9183 = vld [vmem:[%s438 + $0x8] sm:$0xf]
      %v9184 = vld [vmem:[%s438 + $0xc] sm:$0xf]
      %v9185 = vld [vmem:[%s438 + $0x10] sm:$0xf]
      %v9186 = vld [vmem:[%s438 + $0x14] sm:$0xf]
      %v9187 = vld [vmem:[%s438 + $0x18] sm:$0xf]
      %v9188 = vld [vmem:[%s438 + $0x1c] sm:$0xf]
      %v9189 = vld [vmem:[%s438 + $0x20] sm:$0xf]
      %v9190 = vld [vmem:[%s438 + $0x24] sm:$0xf]
      %v9191 = vld [vmem:[%s438 + $0x28] sm:$0xf]
      %v9192 = vld [vmem:[%s438 + $0x2c] sm:$0xf]
      %v9193 = vld [vmem:[%s438 + $0x30] sm:$0xf]
      %v9194 = vld [vmem:[%s438 + $0x34] sm:$0xf]
      %v9195 = vld [vmem:[%s438 + $0x38] sm:$0xf]
      %v9196 = vld [vmem:[%s438 + $0x3c] sm:$0xf]
      %v9197 = vld [vmem:[%s451] sm:$0x1]
      %v9199 = vlaneseq
      %v9200 = vshrl.u32 %v9199, 7
      %v9201 = vsub.s32 0, %v9200
      %v9202 = vrot.slane %v9197, %v9201
      %v9220 = vunpack.c.l.b16 %v9181
      %v9221 = vunpack.c.l.b16 %v9182
      %v9222 = vunpack.c.l.b16 %v9183
      %v9223 = vunpack.c.l.b16 %v9184
      %v9224 = vunpack.c.l.b16 %v9185
      %v9225 = vunpack.c.l.b16 %v9186
      %v9226 = vunpack.c.l.b16 %v9187
      %v9227 = vunpack.c.l.b16 %v9188
      %v9228 = vunpack.c.l.b16 %v9189
      %v9229 = vunpack.c.l.b16 %v9190
      %v9230 = vunpack.c.l.b16 %v9191
      %v9231 = vunpack.c.l.b16 %v9192
      %v9232 = vunpack.c.l.b16 %v9193
      %v9233 = vunpack.c.l.b16 %v9194
      %v9234 = vunpack.c.l.b16 %v9195
      %v9235 = vunpack.c.l.b16 %v9196
      %v9236 = vpack.c.b16 %v9221, %v9220
      %v9237 = vpack.c.b16 %v9223, %v9222
      %v9238 = vpack.c.b16 %v9225, %v9224
      %v9239 = vpack.c.b16 %v9227, %v9226
      %v9240 = vpack.c.b16 %v9229, %v9228
      %v9241 = vpack.c.b16 %v9231, %v9230
      %v9242 = vpack.c.b16 %v9233, %v9232
      %v9243 = vpack.c.b16 %v9235, %v9234
      %9252 = vmatprep.subr.bf16.mxu0 0
      %9253 = vmatpush1.bf16.msra.mxu0 %v9236
      %9254 = vmatprep.subr.bf16.mxu0 0
      %9255 = vmatpush1.bf16.msra.mxu0 %v9237
      %9256 = vmatprep.subr.bf16.mxu0 0
      %9257 = vmatpush1.bf16.msra.mxu0 %v9238
      %9258 = vmatprep.subr.bf16.mxu0 0
      %9259 = vmatpush1.bf16.msra.mxu0 %v9239
      %9260 = vmatprep.subr.bf16.mxu0 0
      %9261 = vmatpush1.bf16.msra.mxu0 %v9240
      %9262 = vmatprep.subr.bf16.mxu0 0
      %9263 = vmatpush1.bf16.msra.mxu0 %v9241
      %9264 = vmatprep.subr.bf16.mxu0 0
      %9265 = vmatpush1.bf16.msra.mxu0 %v9242
      %9266 = vmatprep.subr.bf16.mxu0 0
      %9267 = vmatpush1.bf16.msra.mxu0 %v9243
      %9268 = vmatprep.subr.bf16.mxu0 0
      %9269 = vmatpush1.bf16.msra.mxu0 0
      %9270 = vmatprep.subr.bf16.mxu0 0
      %9271 = vmatpush1.bf16.msra.mxu0 0
      %9272 = vmatprep.subr.bf16.mxu0 0
      %9273 = vmatpush1.bf16.msra.mxu0 0
      %9274 = vmatprep.subr.bf16.mxu0 0
      %9275 = vmatpush1.bf16.msra.mxu0 0
      %9276 = vmatprep.subr.bf16.mxu0 0
      %9277 = vmatpush1.bf16.msra.mxu0 0
      %9278 = vmatprep.subr.bf16.mxu0 0
      %9279 = vmatpush1.bf16.msra.mxu0 0
      %9280 = vmatprep.subr.bf16.mxu0 0
      %9281 = vmatpush1.bf16.msra.mxu0 0
      %9282 = vmatprep.subr.bf16.mxu0 0
      %9283 = vmatpush1.bf16.msra.mxu0 0
      %9284 = vmatprep.mubr.bf16.mxu0 0
      %9285 = vmatmul.mubr.bf16.gmra.mrb[0].mxu0 %v9165
      %v9286 = vpop.f32.mrb[0].mxu0
      %v9287 = vadd.f32 %v9202, %v9286
      %v9288 = vpop.f32.mrb[0].mxu0
      %v9289 = vpop.f32.mrb[0].mxu0
      %v9290 = vadd.f32 %v9202, %v9289
      %v9291 = vpop.f32.mrb[0].mxu0
      %9292 = vmatprep.mubr.bf16.mxu0 0
      %9293 = vmatmul.mubr.bf16.gmra.mrb[0].mxu0 %v9166
      %v9294 = vpop.f32.mrb[0].mxu0
      %v9295 = vadd.f32 %v9202, %v9294
      %v9296 = vpop.f32.mrb[0].mxu0
      %v9297 = vpop.f32.mrb[0].mxu0
      %v9298 = vadd.f32 %v9202, %v9297
      %v9299 = vpop.f32.mrb[0].mxu0
      %9300 = vmatprep.mubr.bf16.mxu0 0
      %9301 = vmatmul.mubr.bf16.gmra.mrb[0].mxu0 %v9167
      %v9302 = vpop.f32.mrb[0].mxu0
      %v9303 = vadd.f32 %v9202, %v9302
      %v9304 = vpop.f32.mrb[0].mxu0
      %v9305 = vpop.f32.mrb[0].mxu0
      %v9306 = vadd.f32 %v9202, %v9305
      %v9307 = vpop.f32.mrb[0].mxu0
      %9308 = vmatprep.mubr.bf16.mxu0 0
      %9309 = vmatmul.mubr.bf16.gmra.mrb[0].mxu0 %v9168
      %v9310 = vpop.f32.mrb[0].mxu0
      %v9311 = vadd.f32 %v9202, %v9310
      %v9312 = vpop.f32.mrb[0].mxu0
      %v9313 = vpop.f32.mrb[0].mxu0
      %v9314 = vadd.f32 %v9202, %v9313
      %v9315 = vpop.f32.mrb[0].mxu0
      %9316 = vmatprep.mubr.bf16.mxu0 0
      %9317 = vmatmul.mubr.bf16.gmra.mrb[0].mxu0 %v9169
      %v9318 = vpop.f32.mrb[0].mxu0
      %v9319 = vadd.f32 %v9202, %v9318
      %v9320 = vpop.f32.mrb[0].mxu0
      %v9321 = vpop.f32.mrb[0].mxu0
      %v9322 = vadd.f32 %v9202, %v9321
      %v9323 = vpop.f32.mrb[0].mxu0
      %9324 = vmatprep.mubr.bf16.mxu0 0
      %9325 = vmatmul.mubr.bf16.gmra.mrb[0].mxu0 %v9170
      %v9326 = vpop.f32.mrb[0].mxu0
      %v9327 = vadd.f32 %v9202, %v9326
      %v9328 = vpop.f32.mrb[0].mxu0
      %v9329 = vpop.f32.mrb[0].mxu0
      %v9330 = vadd.f32 %v9202, %v9329
      %v9331 = vpop.f32.mrb[0].mxu0
      %9332 = vmatprep.mubr.bf16.mxu0 0
      %9333 = vmatmul.mubr.bf16.gmra.mrb[0].mxu0 %v9171
      %v9334 = vpop.f32.mrb[0].mxu0
      %v9335 = vadd.f32 %v9202, %v9334
      %v9336 = vpop.f32.mrb[0].mxu0
      %v9337 = vpop.f32.mrb[0].mxu0
      %v9338 = vadd.f32 %v9202, %v9337
      %v9339 = vpop.f32.mrb[0].mxu0
      %9340 = vmatprep.mubr.bf16.mxu0 0
      %9341 = vmatmul.mubr.bf16.gmra.mrb[0].mxu0 %v9172
      %v9342 = vpop.f32.mrb[0].mxu0
      %v9343 = vadd.f32 %v9202, %v9342
      %v9344 = vpop.f32.mrb[0].mxu0
      %v9345 = vpop.f32.mrb[0].mxu0
      %v9346 = vadd.f32 %v9202, %v9345
      %v9347 = vpop.f32.mrb[0].mxu0
      %9348 = vmatprep.mubr.bf16.mxu0 0
      %9349 = vmatmul.mubr.bf16.gmra.mrb[0].mxu0 %v9173
      %v9350 = vpop.f32.mrb[0].mxu0
      %v9351 = vadd.f32 %v9202, %v9350
      %v9352 = vpop.f32.mrb[0].mxu0
      %v9353 = vpop.f32.mrb[0].mxu0
      %v9354 = vadd.f32 %v9202, %v9353
      %v9355 = vpop.f32.mrb[0].mxu0
      %9356 = vmatprep.mubr.bf16.mxu0 0
      %9357 = vmatmul.mubr.bf16.gmra.mrb[0].mxu0 %v9174
      %v9358 = vpop.f32.mrb[0].mxu0
      %v9359 = vadd.f32 %v9202, %v9358
      %v9360 = vpop.f32.mrb[0].mxu0
      %v9361 = vpop.f32.mrb[0].mxu0
      %v9362 = vadd.f32 %v9202, %v9361
      %v9363 = vpop.f32.mrb[0].mxu0
      %9364 = vmatprep.mubr.bf16.mxu0 0
      %9365 = vmatmul.mubr.bf16.gmra.mrb[0].mxu0 %v9175
      %v9366 = vpop.f32.mrb[0].mxu0
      %v9367 = vadd.f32 %v9202, %v9366
      %v9368 = vpop.f32.mrb[0].mxu0
      %v9369 = vpop.f32.mrb[0].mxu0
      %v9370 = vadd.f32 %v9202, %v9369
      %v9371 = vpop.f32.mrb[0].mxu0
      %9372 = vmatprep.mubr.bf16.mxu0 0
      %9373 = vmatmul.mubr.bf16.gmra.mrb[0].mxu0 %v9176
      %v9374 = vpop.f32.mrb[0].mxu0
      %v9375 = vadd.f32 %v9202, %v9374
      %v9376 = vpop.f32.mrb[0].mxu0
      %v9377 = vpop.f32.mrb[0].mxu0
      %v9378 = vadd.f32 %v9202, %v9377
      %v9379 = vpop.f32.mrb[0].mxu0
      %9380 = vmatprep.mubr.bf16.mxu0 0
      %9381 = vmatmul.mubr.bf16.gmra.mrb[0].mxu0 %v9177
      %v9382 = vpop.f32.mrb[0].mxu0
      %v9383 = vadd.f32 %v9202, %v9382
      %v9384 = vpop.f32.mrb[0].mxu0
      %v9385 = vpop.f32.mrb[0].mxu0
      %v9386 = vadd.f32 %v9202, %v9385
      %v9387 = vpop.f32.mrb[0].mxu0
      %9388 = vmatprep.mubr.bf16.mxu0 0
      %9389 = vmatmul.mubr.bf16.gmra.mrb[0].mxu0 %v9178
      %v9390 = vpop.f32.mrb[0].mxu0
      %v9391 = vadd.f32 %v9202, %v9390
      %v9392 = vpop.f32.mrb[0].mxu0
      %v9393 = vpop.f32.mrb[0].mxu0
      %v9394 = vadd.f32 %v9202, %v9393
      %v9395 = vpop.f32.mrb[0].mxu0
      %9396 = vmatprep.mubr.bf16.mxu0 0
      %9397 = vmatmul.mubr.bf16.gmra.mrb[0].mxu0 %v9179
      %v9398 = vpop.f32.mrb[0].mxu0
      %v9399 = vadd.f32 %v9202, %v9398
      %v9400 = vpop.f32.mrb[0].mxu0
      %v9401 = vpop.f32.mrb[0].mxu0
      %v9402 = vadd.f32 %v9202, %v9401
      %v9403 = vpop.f32.mrb[0].mxu0
      %9404 = vmatprep.mubr.bf16.mxu0 0
      %9405 = vmatmul.mubr.bf16.gmra.mrb[0].mxu0 %v9180
      %v9406 = vpop.f32.mrb[0].mxu0
      %v9407 = vadd.f32 %v9202, %v9406
      %v9408 = vpop.f32.mrb[0].mxu0
      %v9409 = vpop.f32.mrb[0].mxu0
      %v9410 = vadd.f32 %v9202, %v9409
      %v9411 = vpop.f32.mrb[0].mxu0
      %9412 = vdwg.mxu0
      %v9413 = vmul.f32 %v9287, 0.5
      %v9414 = vmul.f32 %v9290, 0.5
      %v9415 = vmul.f32 %v9295, 0.5
      %v9416 = vmul.f32 %v9298, 0.5
      %v9417 = vmul.f32 %v9303, 0.5
      %v9418 = vmul.f32 %v9306, 0.5
      %v9419 = vmul.f32 %v9311, 0.5
      %v9420 = vmul.f32 %v9314, 0.5
      %v9421 = vmul.f32 %v9319, 0.5
      %v9422 = vmul.f32 %v9322, 0.5
      %v9423 = vmul.f32 %v9327, 0.5
      %v9424 = vmul.f32 %v9330, 0.5
      %v9425 = vmul.f32 %v9335, 0.5
      %v9426 = vmul.f32 %v9338, 0.5
      %v9427 = vmul.f32 %v9343, 0.5
      %v9428 = vmul.f32 %v9346, 0.5
      %v9429 = vmul.f32 %v9351, 0.5
      %v9430 = vmul.f32 %v9354, 0.5
      %v9431 = vmul.f32 %v9359, 0.5
      %v9432 = vmul.f32 %v9362, 0.5
      %v9433 = vmul.f32 %v9367, 0.5
      %v9434 = vmul.f32 %v9370, 0.5
      %v9435 = vmul.f32 %v9375, 0.5
      %v9436 = vmul.f32 %v9378, 0.5
      %v9437 = vmul.f32 %v9383, 0.5
      %v9438 = vmul.f32 %v9386, 0.5
      %v9439 = vmul.f32 %v9391, 0.5
      %v9440 = vmul.f32 %v9394, 0.5
      %v9441 = vmul.f32 %v9399, 0.5
      %v9442 = vmul.f32 %v9402, 0.5
      %v9443 = vmul.f32 %v9407, 0.5
      %v9444 = vmul.f32 %v9410, 0.5
      %v9445 = vmul.f32 %v9287, 0.70710677
      %v9446 = vmul.f32 %v9290, 0.70710677
      %v9447 = vmul.f32 %v9295, 0.70710677
      %v9448 = vmul.f32 %v9298, 0.70710677
      %v9449 = vmul.f32 %v9303, 0.70710677
      %v9450 = vmul.f32 %v9306, 0.70710677
      %v9451 = vmul.f32 %v9311, 0.70710677
      %v9452 = vmul.f32 %v9314, 0.70710677
      %v9453 = vmul.f32 %v9319, 0.70710677
      %v9454 = vmul.f32 %v9322, 0.70710677
      %v9455 = vmul.f32 %v9327, 0.70710677
      %v9456 = vmul.f32 %v9330, 0.70710677
      %v9457 = vmul.f32 %v9335, 0.70710677
      %v9458 = vmul.f32 %v9338, 0.70710677
      %v9459 = vmul.f32 %v9343, 0.70710677
      %v9460 = vmul.f32 %v9346, 0.70710677
      %v9461 = vmul.f32 %v9351, 0.70710677
      %v9462 = vmul.f32 %v9354, 0.70710677
      %v9463 = vmul.f32 %v9359, 0.70710677
      %v9464 = vmul.f32 %v9362, 0.70710677
      %v9465 = vmul.f32 %v9367, 0.70710677
      %v9466 = vmul.f32 %v9370, 0.70710677
      %v9467 = vmul.f32 %v9375, 0.70710677
      %v9468 = vmul.f32 %v9378, 0.70710677
      %v9469 = vmul.f32 %v9383, 0.70710677
      %v9470 = vmul.f32 %v9386, 0.70710677
      %v9471 = vmul.f32 %v9391, 0.70710677
      %v9472 = vmul.f32 %v9394, 0.70710677
      %v9473 = vmul.f32 %v9399, 0.70710677
      %v9474 = vmul.f32 %v9402, 0.70710677
      %v9475 = vmul.f32 %v9407, 0.70710677
      %v9476 = vmul.f32 %v9410, 0.70710677
      %v9477 = vand.u32 2147483647, %v9445
      %v9478 = vand.u32 2147483647, %v9446
      %v9479 = vand.u32 2147483647, %v9447
      %v9480 = vand.u32 2147483647, %v9448
      %v9481 = vand.u32 2147483647, %v9449
      %v9482 = vand.u32 2147483647, %v9450
      %v9483 = vand.u32 2147483647, %v9451
      %v9484 = vand.u32 2147483647, %v9452
      %v9485 = vand.u32 2147483647, %v9453
      %v9486 = vand.u32 2147483647, %v9454
      %v9487 = vand.u32 2147483647, %v9455
      %v9488 = vand.u32 2147483647, %v9456
      %v9489 = vand.u32 2147483647, %v9457
      %v9490 = vand.u32 2147483647, %v9458
      %v9491 = vand.u32 2147483647, %v9459
      %v9492 = vand.u32 2147483647, %v9460
      %v9493 = vand.u32 2147483647, %v9461
      %v9494 = vand.u32 2147483647, %v9462
      %v9495 = vand.u32 2147483647, %v9463
      %v9496 = vand.u32 2147483647, %v9464
      %v9497 = vand.u32 2147483647, %v9465
      %v9498 = vand.u32 2147483647, %v9466
      %v9499 = vand.u32 2147483647, %v9467
      %v9500 = vand.u32 2147483647, %v9468
      %v9501 = vand.u32 2147483647, %v9469
      %v9502 = vand.u32 2147483647, %v9470
      %v9503 = vand.u32 2147483647, %v9471
      %v9504 = vand.u32 2147483647, %v9472
      %v9505 = vand.u32 2147483647, %v9473
      %v9506 = vand.u32 2147483647, %v9474
      %v9507 = vand.u32 2147483647, %v9475
      %v9508 = vand.u32 2147483647, %v9476
      %v9509 = vmul.f32 %v9477, 0.3275911
      %v9510 = vmul.f32 %v9478, 0.3275911
      %v9511 = vmul.f32 %v9479, 0.3275911
      %v9512 = vmul.f32 %v9480, 0.3275911
      %v9513 = vmul.f32 %v9481, 0.3275911
      %v9514 = vmul.f32 %v9482, 0.3275911
      %v9515 = vmul.f32 %v9483, 0.3275911
      %v9516 = vmul.f32 %v9484, 0.3275911
      %v9517 = vmul.f32 %v9485, 0.3275911
      %v9518 = vmul.f32 %v9486, 0.3275911
      %v9519 = vmul.f32 %v9487, 0.3275911
      %v9520 = vmul.f32 %v9488, 0.3275911
      %v9521 = vmul.f32 %v9489, 0.3275911
      %v9522 = vmul.f32 %v9490, 0.3275911
      %v9523 = vmul.f32 %v9491, 0.3275911
      %v9524 = vmul.f32 %v9492, 0.3275911
      %v9525 = vmul.f32 %v9493, 0.3275911
      %v9526 = vmul.f32 %v9494, 0.3275911
      %v9527 = vmul.f32 %v9495, 0.3275911
      %v9528 = vmul.f32 %v9496, 0.3275911
      %v9529 = vmul.f32 %v9497, 0.3275911
      %v9530 = vmul.f32 %v9498, 0.3275911
      %v9531 = vmul.f32 %v9499, 0.3275911
      %v9532 = vmul.f32 %v9500, 0.3275911
      %v9533 = vmul.f32 %v9501, 0.3275911
      %v9534 = vmul.f32 %v9502, 0.3275911
      %v9535 = vmul.f32 %v9503, 0.3275911
      %v9536 = vmul.f32 %v9504, 0.3275911
      %v9537 = vmul.f32 %v9505, 0.3275911
      %v9538 = vmul.f32 %v9506, 0.3275911
      %v9539 = vmul.f32 %v9507, 0.3275911
      %v9540 = vmul.f32 %v9508, 0.3275911
      %v9541 = vadd.f32 %v9509, 1.0
      %v9542 = vadd.f32 %v9510, 1.0
      %v9543 = vadd.f32 %v9511, 1.0
      %v9544 = vadd.f32 %v9512, 1.0
      %v9545 = vadd.f32 %v9513, 1.0
      %v9546 = vadd.f32 %v9514, 1.0
      %v9547 = vadd.f32 %v9515, 1.0
      %v9548 = vadd.f32 %v9516, 1.0
      %v9549 = vadd.f32 %v9517, 1.0
      %v9550 = vadd.f32 %v9518, 1.0
      %v9551 = vadd.f32 %v9519, 1.0
      %v9552 = vadd.f32 %v9520, 1.0
      %v9553 = vadd.f32 %v9521, 1.0
      %v9554 = vadd.f32 %v9522, 1.0
      %v9555 = vadd.f32 %v9523, 1.0
      %v9556 = vadd.f32 %v9524, 1.0
      %v9557 = vadd.f32 %v9525, 1.0
      %v9558 = vadd.f32 %v9526, 1.0
      %v9559 = vadd.f32 %v9527, 1.0
      %v9560 = vadd.f32 %v9528, 1.0
      %v9561 = vadd.f32 %v9529, 1.0
      %v9562 = vadd.f32 %v9530, 1.0
      %v9563 = vadd.f32 %v9531, 1.0
      %v9564 = vadd.f32 %v9532, 1.0
      %v9565 = vadd.f32 %v9533, 1.0
      %v9566 = vadd.f32 %v9534, 1.0
      %v9567 = vadd.f32 %v9535, 1.0
      %v9568 = vadd.f32 %v9536, 1.0
      %v9569 = vadd.f32 %v9537, 1.0
      %v9570 = vadd.f32 %v9538, 1.0
      %v9571 = vadd.f32 %v9539, 1.0
      %v9572 = vadd.f32 %v9540, 1.0
      %v9573 = vrcp.pop %v9541
      %v9574 = vmul.f32 1.0, %v9573
      %v9575 = vrcp.pop %v9542
      %v9576 = vmul.f32 1.0, %v9575
      %v9577 = vrcp.pop %v9543
      %v9578 = vmul.f32 1.0, %v9577
      %v9579 = vrcp.pop %v9544
      %v9580 = vmul.f32 1.0, %v9579
      %v9581 = vrcp.pop %v9545
      %v9582 = vmul.f32 1.0, %v9581
      %v9583 = vrcp.pop %v9546
      %v9584 = vmul.f32 1.0, %v9583
      %v9585 = vrcp.pop %v9547
      %v9586 = vmul.f32 1.0, %v9585
      %v9587 = vrcp.pop %v9548
      %v9588 = vmul.f32 1.0, %v9587
      %v9589 = vrcp.pop %v9549
      %v9590 = vmul.f32 1.0, %v9589
      %v9591 = vrcp.pop %v9550
      %v9592 = vmul.f32 1.0, %v9591
      %v9593 = vrcp.pop %v9551
      %v9594 = vmul.f32 1.0, %v9593
      %v9595 = vrcp.pop %v9552
      %v9596 = vmul.f32 1.0, %v9595
      %v9597 = vrcp.pop %v9553
      %v9598 = vmul.f32 1.0, %v9597
      %v9599 = vrcp.pop %v9554
      %v9600 = vmul.f32 1.0, %v9599
      %v9601 = vrcp.pop %v9555
      %v9602 = vmul.f32 1.0, %v9601
      %v9603 = vrcp.pop %v9556
      %v9604 = vmul.f32 1.0, %v9603
      %v9605 = vrcp.pop %v9557
      %v9606 = vmul.f32 1.0, %v9605
      %v9607 = vrcp.pop %v9558
      %v9608 = vmul.f32 1.0, %v9607
      %v9609 = vrcp.pop %v9559
      %v9610 = vmul.f32 1.0, %v9609
      %v9611 = vrcp.pop %v9560
      %v9612 = vmul.f32 1.0, %v9611
      %v9613 = vrcp.pop %v9561
      %v9614 = vmul.f32 1.0, %v9613
      %v9615 = vrcp.pop %v9562
      %v9616 = vmul.f32 1.0, %v9615
      %v9617 = vrcp.pop %v9563
      %v9618 = vmul.f32 1.0, %v9617
      %v9619 = vrcp.pop %v9564
      %v9620 = vmul.f32 1.0, %v9619
      %v9621 = vrcp.pop %v9565
      %v9622 = vmul.f32 1.0, %v9621
      %v9623 = vrcp.pop %v9566
      %v9624 = vmul.f32 1.0, %v9623
      %v9625 = vrcp.pop %v9567
      %v9626 = vmul.f32 1.0, %v9625
      %v9627 = vrcp.pop %v9568
      %v9628 = vmul.f32 1.0, %v9627
      %v9629 = vrcp.pop %v9569
      %v9630 = vmul.f32 1.0, %v9629
      %v9631 = vrcp.pop %v9570
      %v9632 = vmul.f32 1.0, %v9631
      %v9633 = vrcp.pop %v9571
      %v9634 = vmul.f32 1.0, %v9633
      %v9635 = vrcp.pop %v9572
      %v9636 = vmul.f32 1.0, %v9635
      %v9637 = vmul.f32 %v9574, 1.0614054
      %v9638 = vmul.f32 %v9576, 1.0614054
      %v9639 = vmul.f32 %v9578, 1.0614054
      %v9640 = vmul.f32 %v9580, 1.0614054
      %v9641 = vmul.f32 %v9582, 1.0614054
      %v9642 = vmul.f32 %v9584, 1.0614054
      %v9643 = vmul.f32 %v9586, 1.0614054
      %v9644 = vmul.f32 %v9588, 1.0614054
      %v9645 = vmul.f32 %v9590, 1.0614054
      %v9646 = vmul.f32 %v9592, 1.0614054
      %v9647 = vmul.f32 %v9594, 1.0614054
      %v9648 = vmul.f32 %v9596, 1.0614054
      %v9649 = vmul.f32 %v9598, 1.0614054
      %v9650 = vmul.f32 %v9600, 1.0614054
      %v9651 = vmul.f32 %v9602, 1.0614054
      %v9652 = vmul.f32 %v9604, 1.0614054
      %v9653 = vmul.f32 %v9606, 1.0614054
      %v9654 = vmul.f32 %v9608, 1.0614054
      %v9655 = vmul.f32 %v9610, 1.0614054
      %v9656 = vmul.f32 %v9612, 1.0614054
      %v9657 = vmul.f32 %v9614, 1.0614054
      %v9658 = vmul.f32 %v9616, 1.0614054
      %v9659 = vmul.f32 %v9618, 1.0614054
      %v9660 = vmul.f32 %v9620, 1.0614054
      %v9661 = vmul.f32 %v9622, 1.0614054
      %v9662 = vmul.f32 %v9624, 1.0614054
      %v9663 = vmul.f32 %v9626, 1.0614054
      %v9664 = vmul.f32 %v9628, 1.0614054
      %v9665 = vmul.f32 %v9630, 1.0614054
      %v9666 = vmul.f32 %v9632, 1.0614054
      %v9667 = vmul.f32 %v9634, 1.0614054
      %v9668 = vmul.f32 %v9636, 1.0614054
      %v9669 = vadd.f32 %v9637, -1.4531521
      %v9670 = vadd.f32 %v9638, -1.4531521
      %v9671 = vadd.f32 %v9639, -1.4531521
      %v9672 = vadd.f32 %v9640, -1.4531521
      %v9673 = vadd.f32 %v9641, -1.4531521
      %v9674 = vadd.f32 %v9642, -1.4531521
      %v9675 = vadd.f32 %v9643, -1.4531521
      %v9676 = vadd.f32 %v9644, -1.4531521
      %v9677 = vadd.f32 %v9645, -1.4531521
      %v9678 = vadd.f32 %v9646, -1.4531521
      %v9679 = vadd.f32 %v9647, -1.4531521
      %v9680 = vadd.f32 %v9648, -1.4531521
      %v9681 = vadd.f32 %v9649, -1.4531521
      %v9682 = vadd.f32 %v9650, -1.4531521
      %v9683 = vadd.f32 %v9651, -1.4531521
      %v9684 = vadd.f32 %v9652, -1.4531521
      %v9685 = vadd.f32 %v9653, -1.4531521
      %v9686 = vadd.f32 %v9654, -1.4531521
      %v9687 = vadd.f32 %v9655, -1.4531521
      %v9688 = vadd.f32 %v9656, -1.4531521
      %v9689 = vadd.f32 %v9657, -1.4531521
      %v9690 = vadd.f32 %v9658, -1.4531521
      %v9691 = vadd.f32 %v9659, -1.4531521
      %v9692 = vadd.f32 %v9660, -1.4531521
      %v9693 = vadd.f32 %v9661, -1.4531521
      %v9694 = vadd.f32 %v9662, -1.4531521
      %v9695 = vadd.f32 %v9663, -1.4531521
      %v9696 = vadd.f32 %v9664, -1.4531521
      %v9697 = vadd.f32 %v9665, -1.4531521
      %v9698 = vadd.f32 %v9666, -1.4531521
      %v9699 = vadd.f32 %v9667, -1.4531521
      %v9700 = vadd.f32 %v9668, -1.4531521
      %v9701 = vmul.f32 %v9669, %v9574
      %v9702 = vmul.f32 %v9670, %v9576
      %v9703 = vmul.f32 %v9671, %v9578
      %v9704 = vmul.f32 %v9672, %v9580
      %v9705 = vmul.f32 %v9673, %v9582
      %v9706 = vmul.f32 %v9674, %v9584
      %v9707 = vmul.f32 %v9675, %v9586
      %v9708 = vmul.f32 %v9676, %v9588
      %v9709 = vmul.f32 %v9677, %v9590
      %v9710 = vmul.f32 %v9678, %v9592
      %v9711 = vmul.f32 %v9679, %v9594
      %v9712 = vmul.f32 %v9680, %v9596
      %v9713 = vmul.f32 %v9681, %v9598
      %v9714 = vmul.f32 %v9682, %v9600
      %v9715 = vmul.f32 %v9683, %v9602
      %v9716 = vmul.f32 %v9684, %v9604
      %v9717 = vmul.f32 %v9685, %v9606
      %v9718 = vmul.f32 %v9686, %v9608
      %v9719 = vmul.f32 %v9687, %v9610
      %v9720 = vmul.f32 %v9688, %v9612
      %v9721 = vmul.f32 %v9689, %v9614
      %v9722 = vmul.f32 %v9690, %v9616
      %v9723 = vmul.f32 %v9691, %v9618
      %v9724 = vmul.f32 %v9692, %v9620
      %v9725 = vmul.f32 %v9693, %v9622
      %v9726 = vmul.f32 %v9694, %v9624
      %v9727 = vmul.f32 %v9695, %v9626
      %v9728 = vmul.f32 %v9696, %v9628
      %v9729 = vmul.f32 %v9697, %v9630
      %v9730 = vmul.f32 %v9698, %v9632
      %v9731 = vmul.f32 %v9699, %v9634
      %v9732 = vmul.f32 %v9700, %v9636
      %v9733 = vadd.f32 %v9701, 1.4214138
      %v9734 = vadd.f32 %v9702, 1.4214138
      %v9735 = vadd.f32 %v9703, 1.4214138
      %v9736 = vadd.f32 %v9704, 1.4214138
      %v9737 = vadd.f32 %v9705, 1.4214138
      %v9738 = vadd.f32 %v9706, 1.4214138
      %v9739 = vadd.f32 %v9707, 1.4214138
      %v9740 = vadd.f32 %v9708, 1.4214138
      %v9741 = vadd.f32 %v9709, 1.4214138
      %v9742 = vadd.f32 %v9710, 1.4214138
      %v9743 = vadd.f32 %v9711, 1.4214138
      %v9744 = vadd.f32 %v9712, 1.4214138
      %v9745 = vadd.f32 %v9713, 1.4214138
      %v9746 = vadd.f32 %v9714, 1.4214138
      %v9747 = vadd.f32 %v9715, 1.4214138
      %v9748 = vadd.f32 %v9716, 1.4214138
      %v9749 = vadd.f32 %v9717, 1.4214138
      %v9750 = vadd.f32 %v9718, 1.4214138
      %v9751 = vadd.f32 %v9719, 1.4214138
      %v9752 = vadd.f32 %v9720, 1.4214138
      %v9753 = vadd.f32 %v9721, 1.4214138
      %v9754 = vadd.f32 %v9722, 1.4214138
      %v9755 = vadd.f32 %v9723, 1.4214138
      %v9756 = vadd.f32 %v9724, 1.4214138
      %v9757 = vadd.f32 %v9725, 1.4214138
      %v9758 = vadd.f32 %v9726, 1.4214138
      %v9759 = vadd.f32 %v9727, 1.4214138
      %v9760 = vadd.f32 %v9728, 1.4214138
      %v9761 = vadd.f32 %v9729, 1.4214138
      %v9762 = vadd.f32 %v9730, 1.4214138
      %v9763 = vadd.f32 %v9731, 1.4214138
      %v9764 = vadd.f32 %v9732, 1.4214138
      %v9765 = vmul.f32 %v9733, %v9574
      %v9766 = vmul.f32 %v9734, %v9576
      %v9767 = vmul.f32 %v9735, %v9578
      %v9768 = vmul.f32 %v9736, %v9580
      %v9769 = vmul.f32 %v9737, %v9582
      %v9770 = vmul.f32 %v9738, %v9584
      %v9771 = vmul.f32 %v9739, %v9586
      %v9772 = vmul.f32 %v9740, %v9588
      %v9773 = vmul.f32 %v9741, %v9590
      %v9774 = vmul.f32 %v9742, %v9592
      %v9775 = vmul.f32 %v9743, %v9594
      %v9776 = vmul.f32 %v9744, %v9596
      %v9777 = vmul.f32 %v9745, %v9598
      %v9778 = vmul.f32 %v9746, %v9600
      %v9779 = vmul.f32 %v9747, %v9602
      %v9780 = vmul.f32 %v9748, %v9604
      %v9781 = vmul.f32 %v9749, %v9606
      %v9782 = vmul.f32 %v9750, %v9608
      %v9783 = vmul.f32 %v9751, %v9610
      %v9784 = vmul.f32 %v9752, %v9612
      %v9785 = vmul.f32 %v9753, %v9614
      %v9786 = vmul.f32 %v9754, %v9616
      %v9787 = vmul.f32 %v9755, %v9618
      %v9788 = vmul.f32 %v9756, %v9620
      %v9789 = vmul.f32 %v9757, %v9622
      %v9790 = vmul.f32 %v9758, %v9624
      %v9791 = vmul.f32 %v9759, %v9626
      %v9792 = vmul.f32 %v9760, %v9628
      %v9793 = vmul.f32 %v9761, %v9630
      %v9794 = vmul.f32 %v9762, %v9632
      %v9795 = vmul.f32 %v9763, %v9634
      %v9796 = vmul.f32 %v9764, %v9636
      %v9797 = vadd.f32 %v9765, -0.28449672
      %v9798 = vadd.f32 %v9766, -0.28449672
      %v9799 = vadd.f32 %v9767, -0.28449672
      %v9800 = vadd.f32 %v9768, -0.28449672
      %v9801 = vadd.f32 %v9769, -0.28449672
      %v9802 = vadd.f32 %v9770, -0.28449672
      %v9803 = vadd.f32 %v9771, -0.28449672
      %v9804 = vadd.f32 %v9772, -0.28449672
      %v9805 = vadd.f32 %v9773, -0.28449672
      %v9806 = vadd.f32 %v9774, -0.28449672
      %v9807 = vadd.f32 %v9775, -0.28449672
      %v9808 = vadd.f32 %v9776, -0.28449672
      %v9809 = vadd.f32 %v9777, -0.28449672
      %v9810 = vadd.f32 %v9778, -0.28449672
      %v9811 = vadd.f32 %v9779, -0.28449672
      %v9812 = vadd.f32 %v9780, -0.28449672
      %v9813 = vadd.f32 %v9781, -0.28449672
      %v9814 = vadd.f32 %v9782, -0.28449672
      %v9815 = vadd.f32 %v9783, -0.28449672
      %v9816 = vadd.f32 %v9784, -0.28449672
      %v9817 = vadd.f32 %v9785, -0.28449672
      %v9818 = vadd.f32 %v9786, -0.28449672
      %v9819 = vadd.f32 %v9787, -0.28449672
      %v9820 = vadd.f32 %v9788, -0.28449672
      %v9821 = vadd.f32 %v9789, -0.28449672
      %v9822 = vadd.f32 %v9790, -0.28449672
      %v9823 = vadd.f32 %v9791, -0.28449672
      %v9824 = vadd.f32 %v9792, -0.28449672
      %v9825 = vadd.f32 %v9793, -0.28449672
      %v9826 = vadd.f32 %v9794, -0.28449672
      %v9827 = vadd.f32 %v9795, -0.28449672
      %v9828 = vadd.f32 %v9796, -0.28449672
      %v9829 = vmul.f32 %v9797, %v9574
      %v9830 = vmul.f32 %v9798, %v9576
      %v9831 = vmul.f32 %v9799, %v9578
      %v9832 = vmul.f32 %v9800, %v9580
      %v9833 = vmul.f32 %v9801, %v9582
      %v9834 = vmul.f32 %v9802, %v9584
      %v9835 = vmul.f32 %v9803, %v9586
      %v9836 = vmul.f32 %v9804, %v9588
      %v9837 = vmul.f32 %v9805, %v9590
      %v9838 = vmul.f32 %v9806, %v9592
      %v9839 = vmul.f32 %v9807, %v9594
      %v9840 = vmul.f32 %v9808, %v9596
      %v9841 = vmul.f32 %v9809, %v9598
      %v9842 = vmul.f32 %v9810, %v9600
      %v9843 = vmul.f32 %v9811, %v9602
      %v9844 = vmul.f32 %v9812, %v9604
      %v9845 = vmul.f32 %v9813, %v9606
      %v9846 = vmul.f32 %v9814, %v9608
      %v9847 = vmul.f32 %v9815, %v9610
      %v9848 = vmul.f32 %v9816, %v9612
      %v9849 = vmul.f32 %v9817, %v9614
      %v9850 = vmul.f32 %v9818, %v9616
      %v9851 = vmul.f32 %v9819, %v9618
      %v9852 = vmul.f32 %v9820, %v9620
      %v9853 = vmul.f32 %v9821, %v9622
      %v9854 = vmul.f32 %v9822, %v9624
      %v9855 = vmul.f32 %v9823, %v9626
      %v9856 = vmul.f32 %v9824, %v9628
      %v9857 = vmul.f32 %v9825, %v9630
      %v9858 = vmul.f32 %v9826, %v9632
      %v9859 = vmul.f32 %v9827, %v9634
      %v9860 = vmul.f32 %v9828, %v9636
      %v9861 = vadd.f32 %v9829, 0.2548296
      %v9862 = vadd.f32 %v9830, 0.2548296
      %v9863 = vadd.f32 %v9831, 0.2548296
      %v9864 = vadd.f32 %v9832, 0.2548296
      %v9865 = vadd.f32 %v9833, 0.2548296
      %v9866 = vadd.f32 %v9834, 0.2548296
      %v9867 = vadd.f32 %v9835, 0.2548296
      %v9868 = vadd.f32 %v9836, 0.2548296
      %v9869 = vadd.f32 %v9837, 0.2548296
      %v9870 = vadd.f32 %v9838, 0.2548296
      %v9871 = vadd.f32 %v9839, 0.2548296
      %v9872 = vadd.f32 %v9840, 0.2548296
      %v9873 = vadd.f32 %v9841, 0.2548296
      %v9874 = vadd.f32 %v9842, 0.2548296
      %v9875 = vadd.f32 %v9843, 0.2548296
      %v9876 = vadd.f32 %v9844, 0.2548296
      %v9877 = vadd.f32 %v9845, 0.2548296
      %v9878 = vadd.f32 %v9846, 0.2548296
      %v9879 = vadd.f32 %v9847, 0.2548296
      %v9880 = vadd.f32 %v9848, 0.2548296
      %v9881 = vadd.f32 %v9849, 0.2548296
      %v9882 = vadd.f32 %v9850, 0.2548296
      %v9883 = vadd.f32 %v9851, 0.2548296
      %v9884 = vadd.f32 %v9852, 0.2548296
      %v9885 = vadd.f32 %v9853, 0.2548296
      %v9886 = vadd.f32 %v9854, 0.2548296
      %v9887 = vadd.f32 %v9855, 0.2548296
      %v9888 = vadd.f32 %v9856, 0.2548296
      %v9889 = vadd.f32 %v9857, 0.2548296
      %v9890 = vadd.f32 %v9858, 0.2548296
      %v9891 = vadd.f32 %v9859, 0.2548296
      %v9892 = vadd.f32 %v9860, 0.2548296
      %v9893 = vmul.f32 %v9861, %v9574
      %v9894 = vmul.f32 %v9862, %v9576
      %v9895 = vmul.f32 %v9863, %v9578
      %v9896 = vmul.f32 %v9864, %v9580
      %v9897 = vmul.f32 %v9865, %v9582
      %v9898 = vmul.f32 %v9866, %v9584
      %v9899 = vmul.f32 %v9867, %v9586
      %v9900 = vmul.f32 %v9868, %v9588
      %v9901 = vmul.f32 %v9869, %v9590
      %v9902 = vmul.f32 %v9870, %v9592
      %v9903 = vmul.f32 %v9871, %v9594
      %v9904 = vmul.f32 %v9872, %v9596
      %v9905 = vmul.f32 %v9873, %v9598
      %v9906 = vmul.f32 %v9874, %v9600
      %v9907 = vmul.f32 %v9875, %v9602
      %v9908 = vmul.f32 %v9876, %v9604
      %v9909 = vmul.f32 %v9877, %v9606
      %v9910 = vmul.f32 %v9878, %v9608
      %v9911 = vmul.f32 %v9879, %v9610
      %v9912 = vmul.f32 %v9880, %v9612
      %v9913 = vmul.f32 %v9881, %v9614
      %v9914 = vmul.f32 %v9882, %v9616
      %v9915 = vmul.f32 %v9883, %v9618
      %v9916 = vmul.f32 %v9884, %v9620
      %v9917 = vmul.f32 %v9885, %v9622
      %v9918 = vmul.f32 %v9886, %v9624
      %v9919 = vmul.f32 %v9887, %v9626
      %v9920 = vmul.f32 %v9888, %v9628
      %v9921 = vmul.f32 %v9889, %v9630
      %v9922 = vmul.f32 %v9890, %v9632
      %v9923 = vmul.f32 %v9891, %v9634
      %v9924 = vmul.f32 %v9892, %v9636
      %v9925 = vsub.f32 0.0, %v9477
      %v9926 = vsub.f32 0.0, %v9478
      %v9927 = vsub.f32 0.0, %v9479
      %v9928 = vsub.f32 0.0, %v9480
      %v9929 = vsub.f32 0.0, %v9481
      %v9930 = vsub.f32 0.0, %v9482
      %v9931 = vsub.f32 0.0, %v9483
      %v9932 = vsub.f32 0.0, %v9484
      %v9933 = vsub.f32 0.0, %v9485
      %v9934 = vsub.f32 0.0, %v9486
      %v9935 = vsub.f32 0.0, %v9487
      %v9936 = vsub.f32 0.0, %v9488
      %v9937 = vsub.f32 0.0, %v9489
      %v9938 = vsub.f32 0.0, %v9490
      %v9939 = vsub.f32 0.0, %v9491
      %v9940 = vsub.f32 0.0, %v9492
      %v9941 = vsub.f32 0.0, %v9493
      %v9942 = vsub.f32 0.0, %v9494
      %v9943 = vsub.f32 0.0, %v9495
      %v9944 = vsub.f32 0.0, %v9496
      %v9945 = vsub.f32 0.0, %v9497
      %v9946 = vsub.f32 0.0, %v9498
      %v9947 = vsub.f32 0.0, %v9499
      %v9948 = vsub.f32 0.0, %v9500
      %v9949 = vsub.f32 0.0, %v9501
      %v9950 = vsub.f32 0.0, %v9502
      %v9951 = vsub.f32 0.0, %v9503
      %v9952 = vsub.f32 0.0, %v9504
      %v9953 = vsub.f32 0.0, %v9505
      %v9954 = vsub.f32 0.0, %v9506
      %v9955 = vsub.f32 0.0, %v9507
      %v9956 = vsub.f32 0.0, %v9508
      %v9957 = vmul.f32 %v9925, %v9477
      %v9958 = vmul.f32 %v9926, %v9478
      %v9959 = vmul.f32 %v9927, %v9479
      %v9960 = vmul.f32 %v9928, %v9480
      %v9961 = vmul.f32 %v9929, %v9481
      %v9962 = vmul.f32 %v9930, %v9482
      %v9963 = vmul.f32 %v9931, %v9483
      %v9964 = vmul.f32 %v9932, %v9484
      %v9965 = vmul.f32 %v9933, %v9485
      %v9966 = vmul.f32 %v9934, %v9486
      %v9967 = vmul.f32 %v9935, %v9487
      %v9968 = vmul.f32 %v9936, %v9488
      %v9969 = vmul.f32 %v9937, %v9489
      %v9970 = vmul.f32 %v9938, %v9490
      %v9971 = vmul.f32 %v9939, %v9491
      %v9972 = vmul.f32 %v9940, %v9492
      %v9973 = vmul.f32 %v9941, %v9493
      %v9974 = vmul.f32 %v9942, %v9494
      %v9975 = vmul.f32 %v9943, %v9495
      %v9976 = vmul.f32 %v9944, %v9496
      %v9977 = vmul.f32 %v9945, %v9497
      %v9978 = vmul.f32 %v9946, %v9498
      %v9979 = vmul.f32 %v9947, %v9499
      %v9980 = vmul.f32 %v9948, %v9500
      %v9981 = vmul.f32 %v9949, %v9501
      %v9982 = vmul.f32 %v9950, %v9502
      %v9983 = vmul.f32 %v9951, %v9503
      %v9984 = vmul.f32 %v9952, %v9504
      %v9985 = vmul.f32 %v9953, %v9505
      %v9986 = vmul.f32 %v9954, %v9506
      %v9987 = vmul.f32 %v9955, %v9507
      %v9988 = vmul.f32 %v9956, %v9508
      %v9989 = vmul.f32 %v9957, 1.442695
      %v9990 = vpow.pop %v9989
      %v9991 = vmul.f32 %v9958, 1.442695
      %v9992 = vpow.pop %v9991
      %v9993 = vmul.f32 %v9959, 1.442695
      %v9994 = vpow.pop %v9993
      %v9995 = vmul.f32 %v9960, 1.442695
      %v9996 = vpow.pop %v9995
      %v9997 = vmul.f32 %v9961, 1.442695
      %v9998 = vpow.pop %v9997
      %v9999 = vmul.f32 %v9962, 1.442695
      %v10000 = vpow.pop %v9999
      %v10001 = vmul.f32 %v9963, 1.442695
      %v10002 = vpow.pop %v10001
      %v10003 = vmul.f32 %v9964, 1.442695
      %v10004 = vpow.pop %v10003
      %v10005 = vmul.f32 %v9965, 1.442695
      %v10006 = vpow.pop %v10005
      %v10007 = vmul.f32 %v9966, 1.442695
      %v10008 = vpow.pop %v10007
      %v10009 = vmul.f32 %v9967, 1.442695
      %v10010 = vpow.pop %v10009
      %v10011 = vmul.f32 %v9968, 1.442695
      %v10012 = vpow.pop %v10011
      %v10013 = vmul.f32 %v9969, 1.442695
      %v10014 = vpow.pop %v10013
      %v10015 = vmul.f32 %v9970, 1.442695
      %v10016 = vpow.pop %v10015
      %v10017 = vmul.f32 %v9971, 1.442695
      %v10018 = vpow.pop %v10017
      %v10019 = vmul.f32 %v9972, 1.442695
      %v10020 = vpow.pop %v10019
      %v10021 = vmul.f32 %v9973, 1.442695
      %v10022 = vpow.pop %v10021
      %v10023 = vmul.f32 %v9974, 1.442695
      %v10024 = vpow.pop %v10023
      %v10025 = vmul.f32 %v9975, 1.442695
      %v10026 = vpow.pop %v10025
      %v10027 = vmul.f32 %v9976, 1.442695
      %v10028 = vpow.pop %v10027
      %v10029 = vmul.f32 %v9977, 1.442695
      %v10030 = vpow.pop %v10029
      %v10031 = vmul.f32 %v9978, 1.442695
      %v10032 = vpow.pop %v10031
      %v10033 = vmul.f32 %v9979, 1.442695
      %v10034 = vpow.pop %v10033
      %v10035 = vmul.f32 %v9980, 1.442695
      %v10036 = vpow.pop %v10035
      %v10037 = vmul.f32 %v9981, 1.442695
      %v10038 = vpow.pop %v10037
      %v10039 = vmul.f32 %v9982, 1.442695
      %v10040 = vpow.pop %v10039
      %v10041 = vmul.f32 %v9983, 1.442695
      %v10042 = vpow.pop %v10041
      %v10043 = vmul.f32 %v9984, 1.442695
      %v10044 = vpow.pop %v10043
      %v10045 = vmul.f32 %v9985, 1.442695
      %v10046 = vpow.pop %v10045
      %v10047 = vmul.f32 %v9986, 1.442695
      %v10048 = vpow.pop %v10047
      %v10049 = vmul.f32 %v9987, 1.442695
      %v10050 = vpow.pop %v10049
      %v10051 = vmul.f32 %v9988, 1.442695
      %v10052 = vpow.pop %v10051
      %v10053 = vmul.f32 %v9893, %v9990
      %v10054 = vmul.f32 %v9894, %v9992
      %v10055 = vmul.f32 %v9895, %v9994
      %v10056 = vmul.f32 %v9896, %v9996
      %v10057 = vmul.f32 %v9897, %v9998
      %v10058 = vmul.f32 %v9898, %v10000
      %v10059 = vmul.f32 %v9899, %v10002
      %v10060 = vmul.f32 %v9900, %v10004
      %v10061 = vmul.f32 %v9901, %v10006
      %v10062 = vmul.f32 %v9902, %v10008
      %v10063 = vmul.f32 %v9903, %v10010
      %v10064 = vmul.f32 %v9904, %v10012
      %v10065 = vmul.f32 %v9905, %v10014
      %v10066 = vmul.f32 %v9906, %v10016
      %v10067 = vmul.f32 %v9907, %v10018
      %v10068 = vmul.f32 %v9908, %v10020
      %v10069 = vmul.f32 %v9909, %v10022
      %v10070 = vmul.f32 %v9910, %v10024
      %v10071 = vmul.f32 %v9911, %v10026
      %v10072 = vmul.f32 %v9912, %v10028
      %v10073 = vmul.f32 %v9913, %v10030
      %v10074 = vmul.f32 %v9914, %v10032
      %v10075 = vmul.f32 %v9915, %v10034
      %v10076 = vmul.f32 %v9916, %v10036
      %v10077 = vmul.f32 %v9917, %v10038
      %v10078 = vmul.f32 %v9918, %v10040
      %v10079 = vmul.f32 %v9919, %v10042
      %v10080 = vmul.f32 %v9920, %v10044
      %v10081 = vmul.f32 %v9921, %v10046
      %v10082 = vmul.f32 %v9922, %v10048
      %v10083 = vmul.f32 %v9923, %v10050
      %v10084 = vmul.f32 %v9924, %v10052
      %v10085 = vsub.f32 1.0, %v10053
      %v10086 = vsub.f32 1.0, %v10054
      %v10087 = vsub.f32 1.0, %v10055
      %v10088 = vsub.f32 1.0, %v10056
      %v10089 = vsub.f32 1.0, %v10057
      %v10090 = vsub.f32 1.0, %v10058
      %v10091 = vsub.f32 1.0, %v10059
      %v10092 = vsub.f32 1.0, %v10060
      %v10093 = vsub.f32 1.0, %v10061
      %v10094 = vsub.f32 1.0, %v10062
      %v10095 = vsub.f32 1.0, %v10063
      %v10096 = vsub.f32 1.0, %v10064
      %v10097 = vsub.f32 1.0, %v10065
      %v10098 = vsub.f32 1.0, %v10066
      %v10099 = vsub.f32 1.0, %v10067
      %v10100 = vsub.f32 1.0, %v10068
      %v10101 = vsub.f32 1.0, %v10069
      %v10102 = vsub.f32 1.0, %v10070
      %v10103 = vsub.f32 1.0, %v10071
      %v10104 = vsub.f32 1.0, %v10072
      %v10105 = vsub.f32 1.0, %v10073
      %v10106 = vsub.f32 1.0, %v10074
      %v10107 = vsub.f32 1.0, %v10075
      %v10108 = vsub.f32 1.0, %v10076
      %v10109 = vsub.f32 1.0, %v10077
      %v10110 = vsub.f32 1.0, %v10078
      %v10111 = vsub.f32 1.0, %v10079
      %v10112 = vsub.f32 1.0, %v10080
      %v10113 = vsub.f32 1.0, %v10081
      %v10114 = vsub.f32 1.0, %v10082
      %v10115 = vsub.f32 1.0, %v10083
      %v10116 = vsub.f32 1.0, %v10084
      %vm10117 = vcmp.ge.f32.partialorder %v9445, 0.0
      %vm10118 = vcmp.ge.f32.partialorder %v9446, 0.0
      %vm10119 = vcmp.ge.f32.partialorder %v9447, 0.0
      %vm10120 = vcmp.ge.f32.partialorder %v9448, 0.0
      %vm10121 = vcmp.ge.f32.partialorder %v9449, 0.0
      %vm10122 = vcmp.ge.f32.partialorder %v9450, 0.0
      %vm10123 = vcmp.ge.f32.partialorder %v9451, 0.0
      %vm10124 = vcmp.ge.f32.partialorder %v9452, 0.0
      %vm10125 = vcmp.ge.f32.partialorder %v9453, 0.0
      %vm10126 = vcmp.ge.f32.partialorder %v9454, 0.0
      %vm10127 = vcmp.ge.f32.partialorder %v9455, 0.0
      %vm10128 = vcmp.ge.f32.partialorder %v9456, 0.0
      %vm10129 = vcmp.ge.f32.partialorder %v9457, 0.0
      %vm10130 = vcmp.ge.f32.partialorder %v9458, 0.0
      %vm10131 = vcmp.ge.f32.partialorder %v9459, 0.0
      %vm10132 = vcmp.ge.f32.partialorder %v9460, 0.0
      %vm10133 = vcmp.ge.f32.partialorder %v9461, 0.0
      %vm10134 = vcmp.ge.f32.partialorder %v9462, 0.0
      %vm10135 = vcmp.ge.f32.partialorder %v9463, 0.0
      %vm10136 = vcmp.ge.f32.partialorder %v9464, 0.0
      %vm10137 = vcmp.ge.f32.partialorder %v9465, 0.0
      %vm10138 = vcmp.ge.f32.partialorder %v9466, 0.0
      %vm10139 = vcmp.ge.f32.partialorder %v9467, 0.0
      %vm10140 = vcmp.ge.f32.partialorder %v9468, 0.0
      %vm10141 = vcmp.ge.f32.partialorder %v9469, 0.0
      %vm10142 = vcmp.ge.f32.partialorder %v9470, 0.0
      %vm10143 = vcmp.ge.f32.partialorder %v9471, 0.0
      %vm10144 = vcmp.ge.f32.partialorder %v9472, 0.0
      %vm10145 = vcmp.ge.f32.partialorder %v9473, 0.0
      %vm10146 = vcmp.ge.f32.partialorder %v9474, 0.0
      %vm10147 = vcmp.ge.f32.partialorder %v9475, 0.0
      %vm10148 = vcmp.ge.f32.partialorder %v9476, 0.0
      %v10149 = vsub.f32 0.0, %v10085
      %v10150 = vsub.f32 0.0, %v10086
      %v10151 = vsub.f32 0.0, %v10087
      %v10152 = vsub.f32 0.0, %v10088
      %v10153 = vsub.f32 0.0, %v10089
      %v10154 = vsub.f32 0.0, %v10090
      %v10155 = vsub.f32 0.0, %v10091
      %v10156 = vsub.f32 0.0, %v10092
      %v10157 = vsub.f32 0.0, %v10093
      %v10158 = vsub.f32 0.0, %v10094
      %v10159 = vsub.f32 0.0, %v10095
      %v10160 = vsub.f32 0.0, %v10096
      %v10161 = vsub.f32 0.0, %v10097
      %v10162 = vsub.f32 0.0, %v10098
      %v10163 = vsub.f32 0.0, %v10099
      %v10164 = vsub.f32 0.0, %v10100
      %v10165 = vsub.f32 0.0, %v10101
      %v10166 = vsub.f32 0.0, %v10102
      %v10167 = vsub.f32 0.0, %v10103
      %v10168 = vsub.f32 0.0, %v10104
      %v10169 = vsub.f32 0.0, %v10105
      %v10170 = vsub.f32 0.0, %v10106
      %v10171 = vsub.f32 0.0, %v10107
      %v10172 = vsub.f32 0.0, %v10108
      %v10173 = vsub.f32 0.0, %v10109
      %v10174 = vsub.f32 0.0, %v10110
      %v10175 = vsub.f32 0.0, %v10111
      %v10176 = vsub.f32 0.0, %v10112
      %v10177 = vsub.f32 0.0, %v10113
      %v10178 = vsub.f32 0.0, %v10114
      %v10179 = vsub.f32 0.0, %v10115
      %v10180 = vsub.f32 0.0, %v10116
      %v10181 = vsel %vm10117, %v10085, %v10149
      %v10182 = vsel %vm10118, %v10086, %v10150
      %v10183 = vsel %vm10119, %v10087, %v10151
      %v10184 = vsel %vm10120, %v10088, %v10152
      %v10185 = vsel %vm10121, %v10089, %v10153
      %v10186 = vsel %vm10122, %v10090, %v10154
      %v10187 = vsel %vm10123, %v10091, %v10155
      %v10188 = vsel %vm10124, %v10092, %v10156
      %v10189 = vsel %vm10125, %v10093, %v10157
      %v10190 = vsel %vm10126, %v10094, %v10158
      %v10191 = vsel %vm10127, %v10095, %v10159
      %v10192 = vsel %vm10128, %v10096, %v10160
      %v10193 = vsel %vm10129, %v10097, %v10161
      %v10194 = vsel %vm10130, %v10098, %v10162
      %v10195 = vsel %vm10131, %v10099, %v10163
      %v10196 = vsel %vm10132, %v10100, %v10164
      %v10197 = vsel %vm10133, %v10101, %v10165
      %v10198 = vsel %vm10134, %v10102, %v10166
      %v10199 = vsel %vm10135, %v10103, %v10167
      %v10200 = vsel %vm10136, %v10104, %v10168
      %v10201 = vsel %vm10137, %v10105, %v10169
      %v10202 = vsel %vm10138, %v10106, %v10170
      %v10203 = vsel %vm10139, %v10107, %v10171
      %v10204 = vsel %vm10140, %v10108, %v10172
      %v10205 = vsel %vm10141, %v10109, %v10173
      %v10206 = vsel %vm10142, %v10110, %v10174
      %v10207 = vsel %vm10143, %v10111, %v10175
      %v10208 = vsel %vm10144, %v10112, %v10176
      %v10209 = vsel %vm10145, %v10113, %v10177
      %v10210 = vsel %vm10146, %v10114, %v10178
      %v10211 = vsel %vm10147, %v10115, %v10179
      %v10212 = vsel %vm10148, %v10116, %v10180
      %v10213 = vadd.f32 %v10181, 1.0
      %v10214 = vadd.f32 %v10182, 1.0
      %v10215 = vadd.f32 %v10183, 1.0
      %v10216 = vadd.f32 %v10184, 1.0
      %v10217 = vadd.f32 %v10185, 1.0
      %v10218 = vadd.f32 %v10186, 1.0
      %v10219 = vadd.f32 %v10187, 1.0
      %v10220 = vadd.f32 %v10188, 1.0
      %v10221 = vadd.f32 %v10189, 1.0
      %v10222 = vadd.f32 %v10190, 1.0
      %v10223 = vadd.f32 %v10191, 1.0
      %v10224 = vadd.f32 %v10192, 1.0
      %v10225 = vadd.f32 %v10193, 1.0
      %v10226 = vadd.f32 %v10194, 1.0
      %v10227 = vadd.f32 %v10195, 1.0
      %v10228 = vadd.f32 %v10196, 1.0
      %v10229 = vadd.f32 %v10197, 1.0
      %v10230 = vadd.f32 %v10198, 1.0
      %v10231 = vadd.f32 %v10199, 1.0
      %v10232 = vadd.f32 %v10200, 1.0
      %v10233 = vadd.f32 %v10201, 1.0
      %v10234 = vadd.f32 %v10202, 1.0
      %v10235 = vadd.f32 %v10203, 1.0
      %v10236 = vadd.f32 %v10204, 1.0
      %v10237 = vadd.f32 %v10205, 1.0
      %v10238 = vadd.f32 %v10206, 1.0
      %v10239 = vadd.f32 %v10207, 1.0
      %v10240 = vadd.f32 %v10208, 1.0
      %v10241 = vadd.f32 %v10209, 1.0
      %v10242 = vadd.f32 %v10210, 1.0
      %v10243 = vadd.f32 %v10211, 1.0
      %v10244 = vadd.f32 %v10212, 1.0
      %v10245 = vmul.f32 %v9413, %v10213
      %v10246 = vmul.f32 %v9414, %v10214
      %v10247 = vmul.f32 %v9415, %v10215
      %v10248 = vmul.f32 %v9416, %v10216
      %v10249 = vmul.f32 %v9417, %v10217
      %v10250 = vmul.f32 %v9418, %v10218
      %v10251 = vmul.f32 %v9419, %v10219
      %v10252 = vmul.f32 %v9420, %v10220
      %v10253 = vmul.f32 %v9421, %v10221
      %v10254 = vmul.f32 %v9422, %v10222
      %v10255 = vmul.f32 %v9423, %v10223
      %v10256 = vmul.f32 %v9424, %v10224
      %v10257 = vmul.f32 %v9425, %v10225
      %v10258 = vmul.f32 %v9426, %v10226
      %v10259 = vmul.f32 %v9427, %v10227
      %v10260 = vmul.f32 %v9428, %v10228
      %v10261 = vmul.f32 %v9429, %v10229
      %v10262 = vmul.f32 %v9430, %v10230
      %v10263 = vmul.f32 %v9431, %v10231
      %v10264 = vmul.f32 %v9432, %v10232
      %v10265 = vmul.f32 %v9433, %v10233
      %v10266 = vmul.f32 %v9434, %v10234
      %v10267 = vmul.f32 %v9435, %v10235
      %v10268 = vmul.f32 %v9436, %v10236
      %v10269 = vmul.f32 %v9437, %v10237
      %v10270 = vmul.f32 %v9438, %v10238
      %v10271 = vmul.f32 %v9439, %v10239
      %v10272 = vmul.f32 %v9440, %v10240
      %v10273 = vmul.f32 %v9441, %v10241
      %v10274 = vmul.f32 %v9442, %v10242
      %v10275 = vmul.f32 %v9443, %v10243
      %v10276 = vmul.f32 %v9444, %v10244
      %v10277 = vpack.c.bf16 %v10246, %v10245
      %v10278 = vpack.c.bf16 %v10248, %v10247
      %v10279 = vpack.c.bf16 %v10250, %v10249
      %v10280 = vpack.c.bf16 %v10252, %v10251
      %v10281 = vpack.c.bf16 %v10254, %v10253
      %v10282 = vpack.c.bf16 %v10256, %v10255
      %v10283 = vpack.c.bf16 %v10258, %v10257
      %v10284 = vpack.c.bf16 %v10260, %v10259
      %v10285 = vpack.c.bf16 %v10262, %v10261
      %v10286 = vpack.c.bf16 %v10264, %v10263
      %v10287 = vpack.c.bf16 %v10266, %v10265
      %v10288 = vpack.c.bf16 %v10268, %v10267
      %v10289 = vpack.c.bf16 %v10270, %v10269
      %v10290 = vpack.c.bf16 %v10272, %v10271
      %v10291 = vpack.c.bf16 %v10274, %v10273
      %v10292 = vpack.c.bf16 %v10276, %v10275
      %v10293 = vld [vmem:[%s443] sm:$0xf]
      %v10294 = vld [vmem:[%s443 + $0x4] sm:$0xf]
      %v10295 = vld [vmem:[%s443 + $0x8] sm:$0xf]
      %v10296 = vld [vmem:[%s443 + $0xc] sm:$0xf]
      %v10297 = vld [vmem:[%s443 + $0x10] sm:$0xf]
      %v10298 = vld [vmem:[%s443 + $0x14] sm:$0xf]
      %v10299 = vld [vmem:[%s443 + $0x18] sm:$0xf]
      %v10300 = vld [vmem:[%s443 + $0x1c] sm:$0xf]
      %v10301 = vld [vmem:[%s443 + $0x20] sm:$0xf]
      %v10302 = vld [vmem:[%s443 + $0x24] sm:$0xf]
      %v10303 = vld [vmem:[%s443 + $0x28] sm:$0xf]
      %v10304 = vld [vmem:[%s443 + $0x2c] sm:$0xf]
      %v10305 = vld [vmem:[%s443 + $0x30] sm:$0xf]
      %v10306 = vld [vmem:[%s443 + $0x34] sm:$0xf]
      %v10307 = vld [vmem:[%s443 + $0x38] sm:$0xf]
      %v10308 = vld [vmem:[%s443 + $0x3c] sm:$0xf]
      %v10309 = vlaneseq
      %v10310 = vshrl.u32 %v10309, 7
      %v10311 = vsub.s32 6, %v10310
      %v10312 = vrot.slane %v553, %v10311
      %v10329 = vunpack.c.l.b16 %v10293
      %v10330 = vunpack.c.l.b16 %v10294
      %v10331 = vunpack.c.l.b16 %v10295
      %v10332 = vunpack.c.l.b16 %v10296
      %v10333 = vunpack.c.l.b16 %v10297
      %v10334 = vunpack.c.l.b16 %v10298
      %v10335 = vunpack.c.l.b16 %v10299
      %v10336 = vunpack.c.l.b16 %v10300
      %v10337 = vunpack.c.l.b16 %v10301
      %v10338 = vunpack.c.l.b16 %v10302
      %v10339 = vunpack.c.l.b16 %v10303
      %v10340 = vunpack.c.l.b16 %v10304
      %v10341 = vunpack.c.l.b16 %v10305
      %v10342 = vunpack.c.l.b16 %v10306
      %v10343 = vunpack.c.l.b16 %v10307
      %v10344 = vunpack.c.l.b16 %v10308
      %v10345 = vpack.c.b16 %v10330, %v10329
      %v10346 = vpack.c.b16 %v10332, %v10331
      %v10347 = vpack.c.b16 %v10334, %v10333
      %v10348 = vpack.c.b16 %v10336, %v10335
      %v10349 = vpack.c.b16 %v10338, %v10337
      %v10350 = vpack.c.b16 %v10340, %v10339
      %v10351 = vpack.c.b16 %v10342, %v10341
      %v10352 = vpack.c.b16 %v10344, %v10343
      %10361 = vmatprep.subr.bf16.mxu0 0
      %10362 = vmatpush1.bf16.msra.mxu0 %v10345
      %10363 = vmatprep.subr.bf16.mxu0 0
      %10364 = vmatpush1.bf16.msra.mxu0 %v10346
      %10365 = vmatprep.subr.bf16.mxu0 0
      %10366 = vmatpush1.bf16.msra.mxu0 %v10347
      %10367 = vmatprep.subr.bf16.mxu0 0
      %10368 = vmatpush1.bf16.msra.mxu0 %v10348
      %10369 = vmatprep.subr.bf16.mxu0 0
      %10370 = vmatpush1.bf16.msra.mxu0 %v10349
      %10371 = vmatprep.subr.bf16.mxu0 0
      %10372 = vmatpush1.bf16.msra.mxu0 %v10350
      %10373 = vmatprep.subr.bf16.mxu0 0
      %10374 = vmatpush1.bf16.msra.mxu0 %v10351
      %10375 = vmatprep.subr.bf16.mxu0 0
      %10376 = vmatpush1.bf16.msra.mxu0 %v10352
      %10377 = vmatprep.subr.bf16.mxu0 0
      %10378 = vmatpush1.bf16.msra.mxu0 0
      %10379 = vmatprep.subr.bf16.mxu0 0
      %10380 = vmatpush1.bf16.msra.mxu0 0
      %10381 = vmatprep.subr.bf16.mxu0 0
      %10382 = vmatpush1.bf16.msra.mxu0 0
      %10383 = vmatprep.subr.bf16.mxu0 0
      %10384 = vmatpush1.bf16.msra.mxu0 0
      %10385 = vmatprep.subr.bf16.mxu0 0
      %10386 = vmatpush1.bf16.msra.mxu0 0
      %10387 = vmatprep.subr.bf16.mxu0 0
      %10388 = vmatpush1.bf16.msra.mxu0 0
      %10389 = vmatprep.subr.bf16.mxu0 0
      %10390 = vmatpush1.bf16.msra.mxu0 0
      %10391 = vmatprep.subr.bf16.mxu0 0
      %10392 = vmatpush1.bf16.msra.mxu0 0
      %10393 = vmatprep.mubr.bf16.mxu0 0
      %10394 = vmatmul.mubr.bf16.gmra.mrb[0].mxu0 %v10277
      %v10395 = vpop.f32.mrb[0].mxu0
      %v10396 = vadd.f32 %v10312, %v10395
      %v10397 = vpop.f32.mrb[0].mxu0
      %v10398 = vpop.f32.mrb[0].mxu0
      %v10399 = vadd.f32 %v10312, %v10398
      %v10400 = vpop.f32.mrb[0].mxu0
      %10401 = vmatprep.mubr.bf16.mxu0 0
      %10402 = vmatmul.mubr.bf16.gmra.mrb[0].mxu0 %v10278
      %v10403 = vpop.f32.mrb[0].mxu0
      %v10404 = vadd.f32 %v10312, %v10403
      %v10405 = vpop.f32.mrb[0].mxu0
      %v10406 = vpop.f32.mrb[0].mxu0
      %v10407 = vadd.f32 %v10312, %v10406
      %v10408 = vpop.f32.mrb[0].mxu0
      %10409 = vmatprep.mubr.bf16.mxu0 0
      %10410 = vmatmul.mubr.bf16.gmra.mrb[0].mxu0 %v10279
      %v10411 = vpop.f32.mrb[0].mxu0
      %v10412 = vadd.f32 %v10312, %v10411
      %v10413 = vpop.f32.mrb[0].mxu0
      %v10414 = vpop.f32.mrb[0].mxu0
      %v10415 = vadd.f32 %v10312, %v10414
      %v10416 = vpop.f32.mrb[0].mxu0
      %10417 = vmatprep.mubr.bf16.mxu0 0
      %10418 = vmatmul.mubr.bf16.gmra.mrb[0].mxu0 %v10280
      %v10419 = vpop.f32.mrb[0].mxu0
      %v10420 = vadd.f32 %v10312, %v10419
      %v10421 = vpop.f32.mrb[0].mxu0
      %v10422 = vpop.f32.mrb[0].mxu0
      %v10423 = vadd.f32 %v10312, %v10422
      %v10424 = vpop.f32.mrb[0].mxu0
      %10425 = vmatprep.mubr.bf16.mxu0 0
      %10426 = vmatmul.mubr.bf16.gmra.mrb[0].mxu0 %v10281
      %v10427 = vpop.f32.mrb[0].mxu0
      %v10428 = vadd.f32 %v10312, %v10427
      %v10429 = vpop.f32.mrb[0].mxu0
      %v10430 = vpop.f32.mrb[0].mxu0
      %v10431 = vadd.f32 %v10312, %v10430
      %v10432 = vpop.f32.mrb[0].mxu0
      %10433 = vmatprep.mubr.bf16.mxu0 0
      %10434 = vmatmul.mubr.bf16.gmra.mrb[0].mxu0 %v10282
      %v10435 = vpop.f32.mrb[0].mxu0
      %v10436 = vadd.f32 %v10312, %v10435
      %v10437 = vpop.f32.mrb[0].mxu0
      %v10438 = vpop.f32.mrb[0].mxu0
      %v10439 = vadd.f32 %v10312, %v10438
      %v10440 = vpop.f32.mrb[0].mxu0
      %10441 = vmatprep.mubr.bf16.mxu0 0
      %10442 = vmatmul.mubr.bf16.gmra.mrb[0].mxu0 %v10283
      %v10443 = vpop.f32.mrb[0].mxu0
      %v10444 = vadd.f32 %v10312, %v10443
      %v10445 = vpop.f32.mrb[0].mxu0
      %v10446 = vpop.f32.mrb[0].mxu0
      %v10447 = vadd.f32 %v10312, %v10446
      %v10448 = vpop.f32.mrb[0].mxu0
      %10449 = vmatprep.mubr.bf16.mxu0 0
      %10450 = vmatmul.mubr.bf16.gmra.mrb[0].mxu0 %v10284
      %v10451 = vpop.f32.mrb[0].mxu0
      %v10452 = vadd.f32 %v10312, %v10451
      %v10453 = vpop.f32.mrb[0].mxu0
      %v10454 = vpop.f32.mrb[0].mxu0
      %v10455 = vadd.f32 %v10312, %v10454
      %v10456 = vpop.f32.mrb[0].mxu0
      %10457 = vmatprep.mubr.bf16.mxu0 0
      %10458 = vmatmul.mubr.bf16.gmra.mrb[0].mxu0 %v10285
      %v10459 = vpop.f32.mrb[0].mxu0
      %v10460 = vadd.f32 %v10312, %v10459
      %v10461 = vpop.f32.mrb[0].mxu0
      %v10462 = vpop.f32.mrb[0].mxu0
      %v10463 = vadd.f32 %v10312, %v10462
      %v10464 = vpop.f32.mrb[0].mxu0
      %10465 = vmatprep.mubr.bf16.mxu0 0
      %10466 = vmatmul.mubr.bf16.gmra.mrb[0].mxu0 %v10286
      %v10467 = vpop.f32.mrb[0].mxu0
      %v10468 = vadd.f32 %v10312, %v10467
      %v10469 = vpop.f32.mrb[0].mxu0
      %v10470 = vpop.f32.mrb[0].mxu0
      %v10471 = vadd.f32 %v10312, %v10470
      %v10472 = vpop.f32.mrb[0].mxu0
      %10473 = vmatprep.mubr.bf16.mxu0 0
      %10474 = vmatmul.mubr.bf16.gmra.mrb[0].mxu0 %v10287
      %v10475 = vpop.f32.mrb[0].mxu0
      %v10476 = vadd.f32 %v10312, %v10475
      %v10477 = vpop.f32.mrb[0].mxu0
      %v10478 = vpop.f32.mrb[0].mxu0
      %v10479 = vadd.f32 %v10312, %v10478
      %v10480 = vpop.f32.mrb[0].mxu0
      %10481 = vmatprep.mubr.bf16.mxu0 0
      %10482 = vmatmul.mubr.bf16.gmra.mrb[0].mxu0 %v10288
      %v10483 = vpop.f32.mrb[0].mxu0
      %v10484 = vadd.f32 %v10312, %v10483
      %v10485 = vpop.f32.mrb[0].mxu0
      %v10486 = vpop.f32.mrb[0].mxu0
      %v10487 = vadd.f32 %v10312, %v10486
      %v10488 = vpop.f32.mrb[0].mxu0
      %10489 = vmatprep.mubr.bf16.mxu0 0
      %10490 = vmatmul.mubr.bf16.gmra.mrb[0].mxu0 %v10289
      %v10491 = vpop.f32.mrb[0].mxu0
      %v10492 = vadd.f32 %v10312, %v10491
      %v10493 = vpop.f32.mrb[0].mxu0
      %v10494 = vpop.f32.mrb[0].mxu0
      %v10495 = vadd.f32 %v10312, %v10494
      %v10496 = vpop.f32.mrb[0].mxu0
      %10497 = vmatprep.mubr.bf16.mxu0 0
      %10498 = vmatmul.mubr.bf16.gmra.mrb[0].mxu0 %v10290
      %v10499 = vpop.f32.mrb[0].mxu0
      %v10500 = vadd.f32 %v10312, %v10499
      %v10501 = vpop.f32.mrb[0].mxu0
      %v10502 = vpop.f32.mrb[0].mxu0
      %v10503 = vadd.f32 %v10312, %v10502
      %v10504 = vpop.f32.mrb[0].mxu0
      %10505 = vmatprep.mubr.bf16.mxu0 0
      %10506 = vmatmul.mubr.bf16.gmra.mrb[0].mxu0 %v10291
      %v10507 = vpop.f32.mrb[0].mxu0
      %v10508 = vadd.f32 %v10312, %v10507
      %v10509 = vpop.f32.mrb[0].mxu0
      %v10510 = vpop.f32.mrb[0].mxu0
      %v10511 = vadd.f32 %v10312, %v10510
      %v10512 = vpop.f32.mrb[0].mxu0
      %10513 = vmatprep.mubr.bf16.mxu0 0
      %10514 = vmatmul.mubr.bf16.gmra.mrb[0].mxu0 %v10292
      %v10515 = vpop.f32.mrb[0].mxu0
      %v10516 = vadd.f32 %v10312, %v10515
      %v10517 = vpop.f32.mrb[0].mxu0
      %v10518 = vpop.f32.mrb[0].mxu0
      %v10519 = vadd.f32 %v10312, %v10518
      %v10520 = vpop.f32.mrb[0].mxu0
      %10521 = vdwg.mxu0
      %v10522 = vlaneseq
      %v10523 = vshrl.u32 %v10522, 7
      %v10524 = vsub.s32 7, %v10523
      %v10525 = vrot.slane %v553, %v10524
      %v10526 = vmul.f32 %v10396, %v10525
      %v10527 = vmul.f32 %v10399, %v10525
      %v10528 = vmul.f32 %v10404, %v10525
      %v10529 = vmul.f32 %v10407, %v10525
      %v10530 = vmul.f32 %v10412, %v10525
      %v10531 = vmul.f32 %v10415, %v10525
      %v10532 = vmul.f32 %v10420, %v10525
      %v10533 = vmul.f32 %v10423, %v10525
      %v10534 = vmul.f32 %v10428, %v10525
      %v10535 = vmul.f32 %v10431, %v10525
      %v10536 = vmul.f32 %v10436, %v10525
      %v10537 = vmul.f32 %v10439, %v10525
      %v10538 = vmul.f32 %v10444, %v10525
      %v10539 = vmul.f32 %v10447, %v10525
      %v10540 = vmul.f32 %v10452, %v10525
      %v10541 = vmul.f32 %v10455, %v10525
      %v10542 = vmul.f32 %v10460, %v10525
      %v10543 = vmul.f32 %v10463, %v10525
      %v10544 = vmul.f32 %v10468, %v10525
      %v10545 = vmul.f32 %v10471, %v10525
      %v10546 = vmul.f32 %v10476, %v10525
      %v10547 = vmul.f32 %v10479, %v10525
      %v10548 = vmul.f32 %v10484, %v10525
      %v10549 = vmul.f32 %v10487, %v10525
      %v10550 = vmul.f32 %v10492, %v10525
      %v10551 = vmul.f32 %v10495, %v10525
      %v10552 = vmul.f32 %v10500, %v10525
      %v10553 = vmul.f32 %v10503, %v10525
      %v10554 = vmul.f32 %v10508, %v10525
      %v10555 = vmul.f32 %v10511, %v10525
      %v10556 = vmul.f32 %v10516, %v10525
      %v10557 = vmul.f32 %v10519, %v10525
      %v10558 = vadd.f32 %v8613, %v10526
      %v10559 = vadd.f32 %v8614, %v10527
      %v10560 = vadd.f32 %v8615, %v10528
      %v10561 = vadd.f32 %v8616, %v10529
      %v10562 = vadd.f32 %v8617, %v10530
      %v10563 = vadd.f32 %v8618, %v10531
      %v10564 = vadd.f32 %v8619, %v10532
      %v10565 = vadd.f32 %v8620, %v10533
      %v10566 = vadd.f32 %v8621, %v10534
      %v10567 = vadd.f32 %v8622, %v10535
      %v10568 = vadd.f32 %v8623, %v10536
      %v10569 = vadd.f32 %v8624, %v10537
      %v10570 = vadd.f32 %v8625, %v10538
      %v10571 = vadd.f32 %v8626, %v10539
      %v10572 = vadd.f32 %v8627, %v10540
      %v10573 = vadd.f32 %v8628, %v10541
      %v10574 = vadd.f32 %v8629, %v10542
      %v10575 = vadd.f32 %v8630, %v10543
      %v10576 = vadd.f32 %v8631, %v10544
      %v10577 = vadd.f32 %v8632, %v10545
      %v10578 = vadd.f32 %v8633, %v10546
      %v10579 = vadd.f32 %v8634, %v10547
      %v10580 = vadd.f32 %v8635, %v10548
      %v10581 = vadd.f32 %v8636, %v10549
      %v10582 = vadd.f32 %v8637, %v10550
      %v10583 = vadd.f32 %v8638, %v10551
      %v10584 = vadd.f32 %v8639, %v10552
      %v10585 = vadd.f32 %v8640, %v10553
      %v10586 = vadd.f32 %v8641, %v10554
      %v10587 = vadd.f32 %v8642, %v10555
      %v10588 = vadd.f32 %v8643, %v10556
      %v10589 = vadd.f32 %v8644, %v10557
      %10590 = vst [vmem:[#allocation2] sm:$0xff] %v10558
      %10591 = vst [vmem:[#allocation2 + $0x8] sm:$0xff] %v10559
      %10592 = vst [vmem:[#allocation2 + $0x10] sm:$0xff] %v10560
      %10593 = vst [vmem:[#allocation2 + $0x18] sm:$0xff] %v10561
      %10594 = vst [vmem:[#allocation2 + $0x20] sm:$0xff] %v10562
      %10595 = vst [vmem:[#allocation2 + $0x28] sm:$0xff] %v10563
      %10596 = vst [vmem:[#allocation2 + $0x30] sm:$0xff] %v10564
      %10597 = vst [vmem:[#allocation2 + $0x38] sm:$0xff] %v10565
      %10598 = vst [vmem:[#allocation2 + $0x40] sm:$0xff] %v10566
      %10599 = vst [vmem:[#allocation2 + $0x48] sm:$0xff] %v10567
      %10600 = vst [vmem:[#allocation2 + $0x50] sm:$0xff] %v10568
      %10601 = vst [vmem:[#allocation2 + $0x58] sm:$0xff] %v10569
      %10602 = vst [vmem:[#allocation2 + $0x60] sm:$0xff] %v10570
      %10603 = vst [vmem:[#allocation2 + $0x68] sm:$0xff] %v10571
      %10604 = vst [vmem:[#allocation2 + $0x70] sm:$0xff] %v10572
      %10605 = vst [vmem:[#allocation2 + $0x78] sm:$0xff] %v10573
      %10606 = vst [vmem:[#allocation2 + $0x80] sm:$0xff] %v10574
      %10607 = vst [vmem:[#allocation2 + $0x88] sm:$0xff] %v10575
      %10608 = vst [vmem:[#allocation2 + $0x90] sm:$0xff] %v10576
      %10609 = vst [vmem:[#allocation2 + $0x98] sm:$0xff] %v10577
      %10610 = vst [vmem:[#allocation2 + $0xa0] sm:$0xff] %v10578
      %10611 = vst [vmem:[#allocation2 + $0xa8] sm:$0xff] %v10579
      %10612 = vst [vmem:[#allocation2 + $0xb0] sm:$0xff] %v10580
      %10613 = vst [vmem:[#allocation2 + $0xb8] sm:$0xff] %v10581
      %10614 = vst [vmem:[#allocation2 + $0xc0] sm:$0xff] %v10582
      %10615 = vst [vmem:[#allocation2 + $0xc8] sm:$0xff] %v10583
      %10616 = vst [vmem:[#allocation2 + $0xd0] sm:$0xff] %v10584
      %10617 = vst [vmem:[#allocation2 + $0xd8] sm:$0xff] %v10585
      %10618 = vst [vmem:[#allocation2 + $0xe0] sm:$0xff] %v10586
      %10619 = vst [vmem:[#allocation2 + $0xe8] sm:$0xff] %v10587
      %10620 = vst [vmem:[#allocation2 + $0xf0] sm:$0xff] %v10588
      %10621 = vst [vmem:[#allocation2 + $0xf8] sm:$0xff] %v10589
      %p10622 = scmp.eq.s32.totalorder %s20, 1
      // Predicated region
      $region61: #{transformer_forward.1} parent=55 // pred_check
        %p10623 = pneg %p10622
      $region62: #{transformer_forward.1} parent=55 // pred_check_branch
        %10625 = sbr.rel (%p10623) target = $region64
      $region63: #{transformer_forward.1} parent=55 // pred_region
        %10626 = vst [vmem:[%s9] sm:$0xff] %v10558
        %10627 = vst [vmem:[%s9 + $0x8] sm:$0xff] %v10559
        %10628 = vst [vmem:[%s9 + $0x10] sm:$0xff] %v10560
        %10629 = vst [vmem:[%s9 + $0x18] sm:$0xff] %v10561
        %10630 = vst [vmem:[%s9 + $0x20] sm:$0xff] %v10562
        %10631 = vst [vmem:[%s9 + $0x28] sm:$0xff] %v10563
        %10632 = vst [vmem:[%s9 + $0x30] sm:$0xff] %v10564
        %10633 = vst [vmem:[%s9 + $0x38] sm:$0xff] %v10565
        %10634 = vst [vmem:[%s9 + $0x40] sm:$0xff] %v10566
        %10635 = vst [vmem:[%s9 + $0x48] sm:$0xff] %v10567
        %10636 = vst [vmem:[%s9 + $0x50] sm:$0xff] %v10568
        %10637 = vst [vmem:[%s9 + $0x58] sm:$0xff] %v10569
        %10638 = vst [vmem:[%s9 + $0x60] sm:$0xff] %v10570
        %10639 = vst [vmem:[%s9 + $0x68] sm:$0xff] %v10571
        %10640 = vst [vmem:[%s9 + $0x70] sm:$0xff] %v10572
        %10641 = vst [vmem:[%s9 + $0x78] sm:$0xff] %v10573
        %10642 = vst [vmem:[%s9 + $0x80] sm:$0xff] %v10574
        %10643 = vst [vmem:[%s9 + $0x88] sm:$0xff] %v10575
        %10644 = vst [vmem:[%s9 + $0x90] sm:$0xff] %v10576
        %10645 = vst [vmem:[%s9 + $0x98] sm:$0xff] %v10577
        %10646 = vst [vmem:[%s9 + $0xa0] sm:$0xff] %v10578
        %10647 = vst [vmem:[%s9 + $0xa8] sm:$0xff] %v10579
        %10648 = vst [vmem:[%s9 + $0xb0] sm:$0xff] %v10580
        %10649 = vst [vmem:[%s9 + $0xb8] sm:$0xff] %v10581
        %10650 = vst [vmem:[%s9 + $0xc0] sm:$0xff] %v10582
        %10651 = vst [vmem:[%s9 + $0xc8] sm:$0xff] %v10583
        %10652 = vst [vmem:[%s9 + $0xd0] sm:$0xff] %v10584
        %10653 = vst [vmem:[%s9 + $0xd8] sm:$0xff] %v10585
        %10654 = vst [vmem:[%s9 + $0xe0] sm:$0xff] %v10586
        %10655 = vst [vmem:[%s9 + $0xe8] sm:$0xff] %v10587
        %10656 = vst [vmem:[%s9 + $0xf0] sm:$0xff] %v10588
        %10657 = vst [vmem:[%s9 + $0xf8] sm:$0xff] %v10589
      $region64: #{transformer_forward.1} parent=55 // pred_fallthru
        _
      // Predicated region
      $region65: #{transformer_forward.1} parent=55 // pred_check
        %p10658 = pneg %p262
      $region66: #{transformer_forward.1} parent=55 // pred_check_branch
        %10660 = sbr.rel (%p10658) target = $region68
      $region67: #{transformer_forward.1} parent=55 // pred_region
        _
      $region68: #{transformer_forward.1} parent=55 // pred_fallthru
        _
      // Predicated region
      $region69: #{transformer_forward.1} parent=55 // pred_check
        %p10661 = pneg %p262
      $region70: #{transformer_forward.1} parent=55 // pred_check_branch
        %10663 = sbr.rel (%p10661) target = $region72
      $region71: #{transformer_forward.1} parent=55 // pred_region
        _
      $region72: #{transformer_forward.1} parent=55 // pred_fallthru
        _
    $region56: #{transformer_forward.1} parent=5 // pred_fallthru
      _
    %p10664 = scmp.le.s32.totalorder 2, %s15
    // Predicated region
    $region73: #{transformer_forward.1} parent=5 // pred_check
      %p10665 = pneg %p10664
    $region74: #{transformer_forward.1} parent=5 // pred_check_branch
      %10667 = sbr.rel (%p10665) target = $region76
    $region75: #{transformer_forward.1} parent=5 // pred_region
      %s10668 = ssub.s32 %s15, 2
    $region76: #{transformer_forward.1} parent=5 // pred_fallthru
      _
  $region6: #{transformer_forward.1} parent=0 // loop_footer
    %s19 = sadd.s32 1, %s15
  $region7: #{transformer_forward.1} parent=0 // loop_footer_branch
    %14 = sbr.rel target = $region3
  $region8: #{transformer_forward.1} parent=0 // loop_exit
    _

</llo_original>
